<compile_context>
chip_gen: v7x
topology: tpu7x:2x2x1
jax: 0.10.0
libtpu: 0.0.40
codegen_flags: <defaults>
</compile_context>

<pallas_src>
from math import sqrt

import jax
import jax.numpy as jnp
from jax.experimental import pallas as pl
from jax.experimental.pallas import tpu as pltpu

D = 384          # model width (matches the torch file: d = 384)
HID = 4 * D      # 1536 hidden width


# ---------------------------- Pallas kernel ----------------------------------
def ffnn_kernel(x_ref, w1_ref, b1_ref, w2_ref, b2_ref, o_ref):
    # x_ref: [tm, D] bf16   w1: [D, HID] bf16   b1: [1, HID] f32
    # w2: [HID, D] bf16     b2: [1, D]   f32    o_ref: [tm, D] bf16
    x = x_ref[...]
    h = jnp.dot(x, w1_ref[...], preferred_element_type=jnp.float32)   # [tm, HID] f32
    h = h + b1_ref[...]
    # torch.nn.GELU() default = exact erf formulation (f32 on the VPU)
    h = 0.5 * h * (1.0 + jax.lax.erf(h * (1.0 / sqrt(2.0))))
    h = h.astype(w2_ref.dtype)                                         # bf16 for MXU
    y = jnp.dot(h, w2_ref[...], preferred_element_type=jnp.float32)   # [tm, D] f32
    y = y + b2_ref[...]
    # Dropout -> identity (inference)
    o_ref[...] = y.astype(o_ref.dtype)


# ---------------------------- wrapper -----------------------------------------
def _row_tile(m):
    # Biggest tile wins for the HBM roofline (measured: 512-1024 rows ~85% of
    # roofline vs ~29% at 128), but keep >=2 grid steps when possible so the
    # "parallel" axis can be split across v7x's 2 TensorCores.
    for tm in (1024, 512, 256, 128, 64, 32, 16, 8):
        if m % tm == 0 and m // tm >= 2:
            return tm
    return m


def ffnn_forward(x, w1, b1, w2, b2):
    """x: [..., D] (any leading dims). Returns same shape, bf16."""
    lead = x.shape[:-1]
    d = x.shape[-1]
    m = 1
    for s in lead:
        m *= s
    x2 = x.reshape(m, d).astype(jnp.bfloat16)
    tm = _row_tile(m)

    out = pl.pallas_call(
        ffnn_kernel,
        out_shape=jax.ShapeDtypeStruct((m, d), jnp.bfloat16),
        grid=(m // tm,),
        in_specs=[
            pl.BlockSpec((tm, d), lambda i: (i, 0)),        # activation row-tile
            pl.BlockSpec((d, HID), lambda i: (0, 0)),       # w1 (resident)
            pl.BlockSpec((1, HID), lambda i: (0, 0)),       # b1 (resident)
            pl.BlockSpec((HID, d), lambda i: (0, 0)),       # w2 (resident)
            pl.BlockSpec((1, d), lambda i: (0, 0)),         # b2 (resident)
        ],
        out_specs=pl.BlockSpec((tm, d), lambda i: (i, 0)),
        compiler_params=pltpu.CompilerParams(
            dimension_semantics=("parallel",),
        ),
    )(
        x2,
        w1.astype(jnp.bfloat16),
        b1.astype(jnp.float32).reshape(1, HID),
        w2.astype(jnp.bfloat16),
        b2.astype(jnp.float32).reshape(1, d),
    )
    return out.reshape(*lead, d)


# ---------------------------- pure-JAX reference -------------------------------
def ffnn_reference(x, w1, b1, w2, b2):
    x = x.astype(jnp.bfloat16)
    h = jnp.dot(x, w1.astype(jnp.bfloat16),
                preferred_element_type=jnp.float32) + b1.astype(jnp.float32)
    h = 0.5 * h * (1.0 + jax.lax.erf(h * (1.0 / sqrt(2.0))))
    h = h.astype(jnp.bfloat16)
    y = jnp.dot(h, w2.astype(jnp.bfloat16),
                preferred_element_type=jnp.float32) + b2.astype(jnp.float32)
    return y.astype(jnp.bfloat16)


# ---------------------------- main ---------------------------------------------
if __name__ == "__main__":
    key = jax.random.PRNGKey(0)
    kx, kw1, kb1, kw2, kb2 = jax.random.split(key, 5)

    B, T = 4, 128                      # 512 activation rows, D=384 features
    x = jax.random.normal(kx, (B, T, D), jnp.float32)
    w1 = jax.random.normal(kw1, (D, HID), jnp.float32) * (1.0 / sqrt(D))
    b1 = jax.random.normal(kb1, (HID,), jnp.float32) * 0.01
    w2 = jax.random.normal(kw2, (HID, D), jnp.float32) * (1.0 / sqrt(HID))
    b2 = jax.random.normal(kb2, (D,), jnp.float32) * 0.01

    out = jax.jit(ffnn_forward)(x, w1, b1, w2, b2)
    jax.block_until_ready(out)

    assert out.shape == (B, T, D)
    out_f32 = out.astype(jnp.float32)
    assert bool(jnp.all(jnp.isfinite(out_f32)))

    ref = ffnn_reference(x, w1, b1, w2, b2).astype(jnp.float32)
    assert bool(jnp.allclose(out_f32, ref, atol=5e-2, rtol=5e-2)), "mismatch vs reference"

    print("KERNEL_OK")
</pallas_src>

<mosaic_0001>
module attributes {stable_mosaic.version = 11 : i64} {
  func.func @ffnn_kernel(%arg0: i32, %arg1: memref<256x384xbf16, #tpu.memory_space<vmem>>, %arg2: memref<384x1536xbf16, #tpu.memory_space<vmem>>, %arg3: memref<1x1536xf32, #tpu.memory_space<vmem>>, %arg4: memref<1536x384xbf16, #tpu.memory_space<vmem>>, %arg5: memref<1x384xf32, #tpu.memory_space<vmem>>, %arg6: memref<256x384xbf16, #tpu.memory_space<vmem>>) attributes {dimension_semantics = [#tpu.dimension_semantics<parallel>], iteration_bounds = array<i64: 2>, scalar_prefetch = 0 : i64, scratch_operands = 0 : i64, tpu.core_type = #tpu.core_type<tc>, window_params = [{transform_indices = @transform_0, window_bounds = array<i64: 256, 384>}, {pipeline_mode = #tpu.pipeline_mode<synchronous>, transform_indices = @transform_1, window_bounds = array<i64: 384, 1536>}, {pipeline_mode = #tpu.pipeline_mode<synchronous>, transform_indices = @transform_2, window_bounds = array<i64: 1, 1536>}, {pipeline_mode = #tpu.pipeline_mode<synchronous>, transform_indices = @transform_3, window_bounds = array<i64: 1536, 384>}, {pipeline_mode = #tpu.pipeline_mode<synchronous>, transform_indices = @transform_4, window_bounds = array<i64: 1, 384>}, {transform_indices = @transform_5, window_bounds = array<i64: 256, 384>}]} {
    %c0 = arith.constant 0 : index
    %c0_0 = arith.constant 0 : index
    %0 = vector.load %arg1[%c0, %c0_0] : memref<256x384xbf16, #tpu.memory_space<vmem>>, vector<256x384xbf16>
    %c0_1 = arith.constant 0 : index
    %c0_2 = arith.constant 0 : index
    %1 = vector.load %arg2[%c0_1, %c0_2] : memref<384x1536xbf16, #tpu.memory_space<vmem>>, vector<384x1536xbf16>
    %cst = arith.constant dense<0.000000e+00> : vector<256x1536xf32>
    %2 = tpu.matmul %0, %1, %cst {dimension_numbers = #tpu.dot_dimension_numbers<[1], [0], [0], [1], [0, 0, 1, 1], [], []>} : vector<256x384xbf16>, vector<384x1536xbf16>, vector<256x1536xf32> -> vector<256x1536xf32>
    %c0_3 = arith.constant 0 : index
    %c0_4 = arith.constant 0 : index
    %3 = vector.load %arg3[%c0_3, %c0_4] : memref<1x1536xf32, #tpu.memory_space<vmem>>, vector<1x1536xf32>
    %4 = vector.broadcast %3 : vector<1x1536xf32> to vector<256x1536xf32>
    %5 = arith.addf %2, %4 : vector<256x1536xf32>
    %cst_5 = arith.constant 5.000000e-01 : f32
    %6 = vector.broadcast %cst_5 : f32 to vector<256x1536xf32>
    %7 = arith.mulf %6, %5 : vector<256x1536xf32>
    %cst_6 = arith.constant 0.707106769 : f32
    %8 = vector.broadcast %cst_6 : f32 to vector<256x1536xf32>
    %9 = arith.mulf %5, %8 : vector<256x1536xf32>
    %10 = math.erf %9 : vector<256x1536xf32>
    %cst_7 = arith.constant 1.000000e+00 : f32
    %11 = vector.broadcast %cst_7 : f32 to vector<256x1536xf32>
    %12 = arith.addf %11, %10 : vector<256x1536xf32>
    %13 = arith.mulf %7, %12 : vector<256x1536xf32>
    %14 = arith.truncf %13 : vector<256x1536xf32> to vector<256x1536xbf16>
    %c0_8 = arith.constant 0 : index
    %c0_9 = arith.constant 0 : index
    %15 = vector.load %arg4[%c0_8, %c0_9] : memref<1536x384xbf16, #tpu.memory_space<vmem>>, vector<1536x384xbf16>
    %cst_10 = arith.constant dense<0.000000e+00> : vector<256x384xf32>
    %16 = tpu.matmul %14, %15, %cst_10 {dimension_numbers = #tpu.dot_dimension_numbers<[1], [0], [0], [1], [0, 0, 1, 1], [], []>} : vector<256x1536xbf16>, vector<1536x384xbf16>, vector<256x384xf32> -> vector<256x384xf32>
    %c0_11 = arith.constant 0 : index
    %c0_12 = arith.constant 0 : index
    %17 = vector.load %arg5[%c0_11, %c0_12] : memref<1x384xf32, #tpu.memory_space<vmem>>, vector<1x384xf32>
    %18 = vector.broadcast %17 : vector<1x384xf32> to vector<256x384xf32>
    %19 = arith.addf %16, %18 : vector<256x384xf32>
    %20 = arith.truncf %19 : vector<256x384xf32> to vector<256x384xbf16>
    %c0_13 = arith.constant 0 : index
    %c0_14 = arith.constant 0 : index
    %21 = vector.load %arg6[%c0_13, %c0_14] : memref<256x384xbf16, #tpu.memory_space<vmem>>, vector<256x384xbf16>
    tpu.vector_store %arg6[%c0_13, %c0_14], %20 {strides = array<i32>} : memref<256x384xbf16, #tpu.memory_space<vmem>>, vector<256x384xbf16>,
    return
  }
  func.func @transform_0(%arg0: i32) -> (i32, i32) {
    %c0_i32 = arith.constant 0 : i32
    %c0_i32_0 = arith.constant 0 : i32
    return %arg0, %c0_i32 : i32, i32
  }
  func.func @transform_1(%arg0: i32) -> (i32, i32) {
    %c0_i32 = arith.constant 0 : i32
    %c0_i32_0 = arith.constant 0 : i32
    %c0_i32_1 = arith.constant 0 : i32
    return %c0_i32, %c0_i32_0 : i32, i32
  }
  func.func @transform_2(%arg0: i32) -> (i32, i32) {
    %c0_i32 = arith.constant 0 : i32
    %c0_i32_0 = arith.constant 0 : i32
    %c0_i32_1 = arith.constant 0 : i32
    return %c0_i32, %c0_i32_0 : i32, i32
  }
  func.func @transform_3(%arg0: i32) -> (i32, i32) {
    %c0_i32 = arith.constant 0 : i32
    %c0_i32_0 = arith.constant 0 : i32
    %c0_i32_1 = arith.constant 0 : i32
    return %c0_i32, %c0_i32_0 : i32, i32
  }
  func.func @transform_4(%arg0: i32) -> (i32, i32) {
    %c0_i32 = arith.constant 0 : i32
    %c0_i32_0 = arith.constant 0 : i32
    %c0_i32_1 = arith.constant 0 : i32
    return %c0_i32, %c0_i32_0 : i32, i32
  }
  func.func @transform_5(%arg0: i32) -> (i32, i32) {
    %c0_i32 = arith.constant 0 : i32
    %c0_i32_0 = arith.constant 0 : i32
    return %arg0, %c0_i32 : i32, i32
  }
}

</mosaic_0001>

<llo_original>
// kernel: ffnn_forward.1
$region0: #{ffnn_forward.1}
  #allocation0 [shape = 'u32[]', space=smem, size = 0x4, offset = 0x4, fixed_abs, tag = 'smem constant byte address 0x4 - core index']
  #allocation1 [shape = 'u32[144,128]{1,0:T(1,128)}', space=vmem, size = 0x12000, scoped, tag = 'internal scratch']
  %s0 = inlined_call_operand.vmem [shape: bf16[512,384], index: 0, kind: input, shape index: {}]
  %s1 = inlined_call_operand.vmem [shape: bf16[384,1536], index: 1, kind: input, shape index: {}]
  %s2 = inlined_call_operand.vmem [shape: f32[1,1536], index: 2, kind: input, shape index: {}]
  %s3 = inlined_call_operand.vmem [shape: bf16[1536,384], index: 3, kind: input, shape index: {}]
  %s4 = inlined_call_operand.vmem [shape: f32[1,384], index: 4, kind: input, shape index: {}]
  %s5 = inlined_call_operand.hbm [shape: bf16[512,384], index: 5, kind: output, shape index: {}]
  %s6 = sld [smem:[#allocation0]]
  $region53: #{ffnn_forward.1} parent=0
    _
  %s8 = ssub.s32 1, %s6
  %s9 = scalar_select 0, %s8, %s6
  $region1: #{ffnn_forward.1} parent=0
    #allocation2 [shape = 'u8[393216]{0}', space=vmem, size = 0x60000, scoped, tag = 'output window, operand 0']
    #allocation3 [shape = 's32[2]{0}', space=sflag, size = 0x8, scoped, tag = 'scoped memory for ffnn_forward.1']
    %10 = vsyncpa [#allocation3], 0
    %s11 = scalar_lea.sflag [#allocation3], 1
    %12 = vsyncpa %s11, 0
    loop: start=0, step=1, limit=4
    $region2: #{ffnn_forward.1} parent=1 // loop_pre_header
      _
    $region3: #{ffnn_forward.1} parent=1 // loop_header
      %s14 = sphi 0, %s18
      %p15 = scmp.ge.s32.totalorder %s14, 4
      %s24 = sphi 0, %s26
      %s27 = sphi 0, %s24
      %s28 = sphi 0, %s27
      %s44 = sphi 0, %s28
      %s48 = sphi 0, %s48
      %s50 = sphi 0, %s48
      %s51 = sphi 0, %s50
      %s65 = sphi 0, %s51
      %s69 = sphi 0, %s69
      %s71 = sphi 0, %s69
      %s72 = sphi 0, %s71
      %s86 = sphi 0, %s72
      %s90 = sphi 0, %s90
      %s92 = sphi 0, %s90
      %s93 = sphi 0, %s92
      %s107 = sphi 0, %s93
      %s111 = sphi 0, %s111
      %s113 = sphi 0, %s111
      %s114 = sphi 0, %s113
      %s128 = sphi 0, %s114
      %s134 = sphi 0, %s136
      %s137 = sphi 0, %s134
      %s138 = sphi 0, %s137
      %s154 = sphi 0, %s138
    $region4: #{ffnn_forward.1} parent=1 // loop_header_branch
      %17 = sbr.rel (%p15) target = $region8
    $region5: #{ffnn_forward.1} parent=1 // loop_body
      %s19 = ssub.s32 %s14, 1
      %s20 = ssub.s32 %s14, 2
      %s21 = sadd.s32 %s14, 1
      %s22 = ssub.s32 %s14, %s21
      %p23 = scmp.eq.s32.totalorder %s22, 0
      %s25 = sadd.s32 %s24, 1
      %s26 = scalar_select %p23, %s24, %s25
      %p29 = pneg %p23
      %p30 = scmp.eq.s32.totalorder %s14, 1
      %p31 = por %p29, %p30
      %p32 = scmp.ne.s32.totalorder %s24, %s27
      %p33 = scmp.eq.s32.totalorder %s14, 0
      %p34 = por %p32, %p33
      %p35 = scmp.ne.s32.totalorder %s24, %s27
      %p36 = scmp.eq.s32.totalorder %s19, 1
      %p37 = por %p35, %p36
      %p38 = scmp.ne.s32.totalorder %s27, %s28
      %p39 = scmp.eq.s32.totalorder %s19, 0
      %p40 = por %p38, %p39
      %p41 = scmp.ne.s32.totalorder %s27, %s28
      %p42 = scmp.eq.s32.totalorder %s20, 1
      %p43 = por %p41, %p42
      %p45 = scmp.ne.s32.totalorder %s28, %s44
      %p46 = scmp.eq.s32.totalorder %s20, 0
      %p47 = por %p45, %p46
      %s49 = sadd.s32 %s48, 1
      %p52 = scmp.eq.s32.totalorder %s14, 1
      %p53 = scmp.ne.s32.totalorder %s48, %s50
      %p54 = scmp.eq.s32.totalorder %s14, 0
      %p55 = por %p53, %p54
      %p56 = scmp.ne.s32.totalorder %s48, %s50
      %p57 = scmp.eq.s32.totalorder %s19, 1
      %p58 = por %p56, %p57
      %p59 = scmp.ne.s32.totalorder %s50, %s51
      %p60 = scmp.eq.s32.totalorder %s19, 0
      %p61 = por %p59, %p60
      %p62 = scmp.ne.s32.totalorder %s50, %s51
      %p63 = scmp.eq.s32.totalorder %s20, 1
      %p64 = por %p62, %p63
      %p66 = scmp.ne.s32.totalorder %s51, %s65
      %p67 = scmp.eq.s32.totalorder %s20, 0
      %p68 = por %p66, %p67
      %s70 = sadd.s32 %s69, 1
      %p73 = scmp.eq.s32.totalorder %s14, 1
      %p74 = scmp.ne.s32.totalorder %s69, %s71
      %p75 = scmp.eq.s32.totalorder %s14, 0
      %p76 = por %p74, %p75
      %p77 = scmp.ne.s32.totalorder %s69, %s71
      %p78 = scmp.eq.s32.totalorder %s19, 1
      %p79 = por %p77, %p78
      %p80 = scmp.ne.s32.totalorder %s71, %s72
      %p81 = scmp.eq.s32.totalorder %s19, 0
      %p82 = por %p80, %p81
      %p83 = scmp.ne.s32.totalorder %s71, %s72
      %p84 = scmp.eq.s32.totalorder %s20, 1
      %p85 = por %p83, %p84
      %p87 = scmp.ne.s32.totalorder %s72, %s86
      %p88 = scmp.eq.s32.totalorder %s20, 0
      %p89 = por %p87, %p88
      %s91 = sadd.s32 %s90, 1
      %p94 = scmp.eq.s32.totalorder %s14, 1
      %p95 = scmp.ne.s32.totalorder %s90, %s92
      %p96 = scmp.eq.s32.totalorder %s14, 0
      %p97 = por %p95, %p96
      %p98 = scmp.ne.s32.totalorder %s90, %s92
      %p99 = scmp.eq.s32.totalorder %s19, 1
      %p100 = por %p98, %p99
      %p101 = scmp.ne.s32.totalorder %s92, %s93
      %p102 = scmp.eq.s32.totalorder %s19, 0
      %p103 = por %p101, %p102
      %p104 = scmp.ne.s32.totalorder %s92, %s93
      %p105 = scmp.eq.s32.totalorder %s20, 1
      %p106 = por %p104, %p105
      %p108 = scmp.ne.s32.totalorder %s93, %s107
      %p109 = scmp.eq.s32.totalorder %s20, 0
      %p110 = por %p108, %p109
      %s112 = sadd.s32 %s111, 1
      %p115 = scmp.eq.s32.totalorder %s14, 1
      %p116 = scmp.ne.s32.totalorder %s111, %s113
      %p117 = scmp.eq.s32.totalorder %s14, 0
      %p118 = por %p116, %p117
      %p119 = scmp.ne.s32.totalorder %s111, %s113
      %p120 = scmp.eq.s32.totalorder %s19, 1
      %p121 = por %p119, %p120
      %p122 = scmp.ne.s32.totalorder %s113, %s114
      %p123 = scmp.eq.s32.totalorder %s19, 0
      %p124 = por %p122, %p123
      %p125 = scmp.ne.s32.totalorder %s113, %s114
      %p126 = scmp.eq.s32.totalorder %s20, 1
      %p127 = por %p125, %p126
      %p129 = scmp.ne.s32.totalorder %s114, %s128
      %p130 = scmp.eq.s32.totalorder %s20, 0
      %p131 = por %p129, %p130
      %s132 = ssub.s32 %s14, %s21
      %p133 = scmp.eq.s32.totalorder %s132, 0
      %s135 = sadd.s32 %s134, 1
      %s136 = scalar_select %p133, %s134, %s135
      %p139 = pneg %p133
      %p140 = scmp.eq.s32.totalorder %s14, 1
      %p141 = por %p139, %p140
      %p142 = scmp.ne.s32.totalorder %s134, %s137
      %p143 = scmp.eq.s32.totalorder %s14, 0
      %p144 = por %p142, %p143
      %p145 = scmp.ne.s32.totalorder %s134, %s137
      %p146 = scmp.eq.s32.totalorder %s19, 1
      %p147 = por %p145, %p146
      %p148 = scmp.ne.s32.totalorder %s137, %s138
      %p149 = scmp.eq.s32.totalorder %s19, 0
      %p150 = por %p148, %p149
      %p151 = scmp.ne.s32.totalorder %s137, %s138
      %p152 = scmp.eq.s32.totalorder %s20, 1
      %p153 = por %p151, %p152
      %p155 = scmp.ne.s32.totalorder %s138, %s154
      %p156 = scmp.eq.s32.totalorder %s20, 0
      %p157 = por %p155, %p156
      %p158 = scmp.le.s32.totalorder 1, %s14
      %p159 = scmp.lt.s32.totalorder %s14, 3
      %p160 = pnand %p158, %p159
      %p161 = pneg %p160
      // Predicated region
      $region9: #{ffnn_forward.1} parent=5 // pred_check
        _
      $region10: #{ffnn_forward.1} parent=5 // pred_check_branch
        %163 = sbr.rel (%p160) target = $region12
      $region11: #{ffnn_forward.1} parent=5 // pred_region
        %s164 = ssub.s32 %s14, 1
        // Predicated region
        $region13: #{ffnn_forward.1} parent=11 // pred_check
          %p165 = pneg %p61
        $region14: #{ffnn_forward.1} parent=11 // pred_check_branch
          %167 = sbr.rel (%p165) target = $region16
        $region15: #{ffnn_forward.1} parent=11 // pred_region
          _
        $region16: #{ffnn_forward.1} parent=11 // pred_fallthru
          _
        // Predicated region
        $region17: #{ffnn_forward.1} parent=11 // pred_check
          %p168 = pneg %p82
        $region18: #{ffnn_forward.1} parent=11 // pred_check_branch
          %170 = sbr.rel (%p168) target = $region20
        $region19: #{ffnn_forward.1} parent=11 // pred_region
          _
        $region20: #{ffnn_forward.1} parent=11 // pred_fallthru
          _
        // Predicated region
        $region21: #{ffnn_forward.1} parent=11 // pred_check
          %p171 = pneg %p103
        $region22: #{ffnn_forward.1} parent=11 // pred_check_branch
          %173 = sbr.rel (%p171) target = $region24
        $region23: #{ffnn_forward.1} parent=11 // pred_region
          _
        $region24: #{ffnn_forward.1} parent=11 // pred_fallthru
          _
        // Predicated region
        $region25: #{ffnn_forward.1} parent=11 // pred_check
          %p174 = pneg %p124
        $region26: #{ffnn_forward.1} parent=11 // pred_check_branch
          %176 = sbr.rel (%p174) target = $region28
        $region27: #{ffnn_forward.1} parent=11 // pred_region
          _
        $region28: #{ffnn_forward.1} parent=11 // pred_fallthru
          _
      $region12: #{ffnn_forward.1} parent=5 // pred_fallthru
        _
      %p177 = scmp.lt.s32.totalorder %s14, 2
      // Predicated region
      $region29: #{ffnn_forward.1} parent=5 // pred_check
        %p178 = pneg %p177
      $region30: #{ffnn_forward.1} parent=5 // pred_check_branch
        %180 = sbr.rel (%p178) target = $region32
      $region31: #{ffnn_forward.1} parent=5 // pred_region
        // Predicated region
        $region33: #{ffnn_forward.1} parent=31 // pred_check
          %p181 = pneg %p34
        $region34: #{ffnn_forward.1} parent=31 // pred_check_branch
          %183 = sbr.rel (%p181) target = $region36
        $region35: #{ffnn_forward.1} parent=31 // pred_region
          %s184 = smul.u32 32, %s14
          %p185 = scmp.lt.s32.totalorder %s184, 63
          %s186 = scalar_select %p185, %s184, 63
          %s187 = smul.addr %s186, 3
          %s188 = smul.addr %s187, 4
          %s189 = scalar_lea.vmem %s0, %s188
          %s190 = smul.u32 32, %s14
        $region36: #{ffnn_forward.1} parent=31 // pred_fallthru
          _
      $region32: #{ffnn_forward.1} parent=5 // pred_fallthru
        _
      %p191 = scmp.le.s32.totalorder 1, %s14
      %p192 = scmp.lt.s32.totalorder %s14, 3
      %p193 = pnand %p191, %p192
      %p194 = pneg %p193
      // Predicated region
      $region37: #{ffnn_forward.1} parent=5 // pred_check
        _
      $region38: #{ffnn_forward.1} parent=5 // pred_check_branch
        %196 = sbr.rel (%p193) target = $region40
      $region39: #{ffnn_forward.1} parent=5 // pred_region
        %s197 = ssub.s32 %s14, 1
        %s198 = smul.u32 32, %s19
        %p199 = scmp.lt.s32.totalorder %s198, 63
        %s200 = scalar_select %p199, %s198, 63
        %s201 = smul.addr %s200, 3
        %s202 = smul.addr %s201, 4
        %s203 = scalar_lea.vmem %s0, %s202
        %p204 = pneg %p40
        %p205 = pneg %p37
        %p206 = pneg %p61
        %p207 = pneg %p58
        %p208 = pneg %p82
        %p209 = pneg %p79
        %p210 = pneg %p103
        %p211 = pneg %p100
        %p212 = pneg %p124
        %p213 = pneg %p121
        %p214 = pneg %p150
        %p215 = pneg %p147
        %s216 = sand.u32 %s137, 1
        %s217 = scalar_lea.sflag [#allocation3], %s216
        %s218 = sand.u32 %s137, 1
        %s219 = smul.addr %s218, 384
        %s220 = scalar_lea.vmem [#allocation2], %s219
        %s221 = smul.u32 32, %s19
        %p222 = scmp.lt.s32.totalorder %s221, 63
        %s223 = scalar_select %p222, %s221, 63
        %s224 = smul.addr %s223, 3
        %s225 = smul.addr %s224, 4
        %s226 = scalar_lea.vmem %s0, %s225
        %s227 = smul.u32 32, %s19
        %s228 = smul.u32 32, %s19
        %v230 = vld [vmem:[%s226] sm:$0xff]
        %v231 = vld [vmem:[%s226 + $0x8] sm:$0xf]
        %v232 = vld [vmem:[%s226 + $0xc] sm:$0xff]
        %v233 = vld [vmem:[%s226 + $0x14] sm:$0xf]
        %v234 = vld [vmem:[%s226 + $0x18] sm:$0xff]
        %v235 = vld [vmem:[%s226 + $0x20] sm:$0xf]
        %v236 = vld [vmem:[%s226 + $0x24] sm:$0xff]
        %v237 = vld [vmem:[%s226 + $0x2c] sm:$0xf]
        %v238 = vld [vmem:[%s226 + $0x30] sm:$0xff]
        %v239 = vld [vmem:[%s226 + $0x38] sm:$0xf]
        %v240 = vld [vmem:[%s226 + $0x3c] sm:$0xff]
        %v241 = vld [vmem:[%s226 + $0x44] sm:$0xf]
        %v242 = vld [vmem:[%s226 + $0x48] sm:$0xff]
        %v243 = vld [vmem:[%s226 + $0x50] sm:$0xf]
        %v244 = vld [vmem:[%s226 + $0x54] sm:$0xff]
        %v245 = vld [vmem:[%s226 + $0x5c] sm:$0xf]
        %v246 = vld [vmem:[%s226 + $0x60] sm:$0xff]
        %v247 = vld [vmem:[%s226 + $0x68] sm:$0xf]
        %v248 = vld [vmem:[%s226 + $0x6c] sm:$0xff]
        %v249 = vld [vmem:[%s226 + $0x74] sm:$0xf]
        %v250 = vld [vmem:[%s226 + $0x78] sm:$0xff]
        %v251 = vld [vmem:[%s226 + $0x80] sm:$0xf]
        %v252 = vld [vmem:[%s226 + $0x84] sm:$0xff]
        %v253 = vld [vmem:[%s226 + $0x8c] sm:$0xf]
        %v254 = vld [vmem:[%s226 + $0x90] sm:$0xff]
        %v255 = vld [vmem:[%s226 + $0x98] sm:$0xf]
        %v256 = vld [vmem:[%s226 + $0x9c] sm:$0xff]
        %v257 = vld [vmem:[%s226 + $0xa4] sm:$0xf]
        %v258 = vld [vmem:[%s226 + $0xa8] sm:$0xff]
        %v259 = vld [vmem:[%s226 + $0xb0] sm:$0xf]
        %v260 = vld [vmem:[%s226 + $0xb4] sm:$0xff]
        %v261 = vld [vmem:[%s226 + $0xbc] sm:$0xf]
        %v262 = vld [vmem:[%s226 + $0xc0] sm:$0xff]
        %v263 = vld [vmem:[%s226 + $0xc8] sm:$0xf]
        %v264 = vld [vmem:[%s226 + $0xcc] sm:$0xff]
        %v265 = vld [vmem:[%s226 + $0xd4] sm:$0xf]
        %v266 = vld [vmem:[%s226 + $0xd8] sm:$0xff]
        %v267 = vld [vmem:[%s226 + $0xe0] sm:$0xf]
        %v268 = vld [vmem:[%s226 + $0xe4] sm:$0xff]
        %v269 = vld [vmem:[%s226 + $0xec] sm:$0xf]
        %v270 = vld [vmem:[%s226 + $0xf0] sm:$0xff]
        %v271 = vld [vmem:[%s226 + $0xf8] sm:$0xf]
        %v272 = vld [vmem:[%s226 + $0xfc] sm:$0xff]
        %v273 = vld [vmem:[%s226 + $0x104] sm:$0xf]
        %v274 = vld [vmem:[%s226 + $0x108] sm:$0xff]
        %v275 = vld [vmem:[%s226 + $0x110] sm:$0xf]
        %v276 = vld [vmem:[%s226 + $0x114] sm:$0xff]
        %v277 = vld [vmem:[%s226 + $0x11c] sm:$0xf]
        %v278 = vld [vmem:[%s226 + $0x120] sm:$0xff]
        %v279 = vld [vmem:[%s226 + $0x128] sm:$0xf]
        %v280 = vld [vmem:[%s226 + $0x12c] sm:$0xff]
        %v281 = vld [vmem:[%s226 + $0x134] sm:$0xf]
        %v282 = vld [vmem:[%s226 + $0x138] sm:$0xff]
        %v283 = vld [vmem:[%s226 + $0x140] sm:$0xf]
        %v284 = vld [vmem:[%s226 + $0x144] sm:$0xff]
        %v285 = vld [vmem:[%s226 + $0x14c] sm:$0xf]
        %v286 = vld [vmem:[%s226 + $0x150] sm:$0xff]
        %v287 = vld [vmem:[%s226 + $0x158] sm:$0xf]
        %v288 = vld [vmem:[%s226 + $0x15c] sm:$0xff]
        %v289 = vld [vmem:[%s226 + $0x164] sm:$0xf]
        %v290 = vld [vmem:[%s226 + $0x168] sm:$0xff]
        %v291 = vld [vmem:[%s226 + $0x170] sm:$0xf]
        %v292 = vld [vmem:[%s226 + $0x174] sm:$0xff]
        %v293 = vld [vmem:[%s226 + $0x17c] sm:$0xf]
        %v294 = vld [vmem:[%s1] sm:$0xff]
        %v295 = vld [vmem:[%s1 + $0x8] sm:$0xff]
        %v296 = vld [vmem:[%s1 + $0x10] sm:$0xff]
        %v297 = vld [vmem:[%s1 + $0x18] sm:$0xff]
        %v298 = vld [vmem:[%s1 + $0x20] sm:$0xff]
        %v299 = vld [vmem:[%s1 + $0x28] sm:$0xff]
        %v300 = vld [vmem:[%s1 + $0x30] sm:$0xff]
        %v301 = vld [vmem:[%s1 + $0x38] sm:$0xff]
        %v302 = vld [vmem:[%s1 + $0x40] sm:$0xff]
        %v303 = vld [vmem:[%s1 + $0x48] sm:$0xff]
        %v304 = vld [vmem:[%s1 + $0x50] sm:$0xff]
        %v305 = vld [vmem:[%s1 + $0x58] sm:$0xff]
        %v306 = vld [vmem:[%s1 + $0x60] sm:$0xff]
        %v307 = vld [vmem:[%s1 + $0x68] sm:$0xff]
        %v308 = vld [vmem:[%s1 + $0x70] sm:$0xff]
        %v309 = vld [vmem:[%s1 + $0x78] sm:$0xff]
        %v310 = vld [vmem:[%s1 + $0x80] sm:$0xff]
        %v311 = vld [vmem:[%s1 + $0x88] sm:$0xff]
        %v312 = vld [vmem:[%s1 + $0x90] sm:$0xff]
        %v313 = vld [vmem:[%s1 + $0x98] sm:$0xff]
        %v314 = vld [vmem:[%s1 + $0xa0] sm:$0xff]
        %v315 = vld [vmem:[%s1 + $0xa8] sm:$0xff]
        %v316 = vld [vmem:[%s1 + $0xb0] sm:$0xff]
        %v317 = vld [vmem:[%s1 + $0xb8] sm:$0xff]
        %v318 = vld [vmem:[%s1 + $0xc0] sm:$0xff]
        %v319 = vld [vmem:[%s1 + $0xc8] sm:$0xff]
        %v320 = vld [vmem:[%s1 + $0xd0] sm:$0xff]
        %v321 = vld [vmem:[%s1 + $0xd8] sm:$0xff]
        %v322 = vld [vmem:[%s1 + $0xe0] sm:$0xff]
        %v323 = vld [vmem:[%s1 + $0xe8] sm:$0xff]
        %v324 = vld [vmem:[%s1 + $0xf0] sm:$0xff]
        %v325 = vld [vmem:[%s1 + $0xf8] sm:$0xff]
        %v326 = vld [vmem:[%s1 + $0x100] sm:$0xff]
        %v327 = vld [vmem:[%s1 + $0x108] sm:$0xff]
        %v328 = vld [vmem:[%s1 + $0x110] sm:$0xff]
        %v329 = vld [vmem:[%s1 + $0x118] sm:$0xff]
        %v330 = vld [vmem:[%s1 + $0x120] sm:$0xff]
        %v331 = vld [vmem:[%s1 + $0x128] sm:$0xff]
        %v332 = vld [vmem:[%s1 + $0x130] sm:$0xff]
        %v333 = vld [vmem:[%s1 + $0x138] sm:$0xff]
        %v334 = vld [vmem:[%s1 + $0x140] sm:$0xff]
        %v335 = vld [vmem:[%s1 + $0x148] sm:$0xff]
        %v336 = vld [vmem:[%s1 + $0x150] sm:$0xff]
        %v337 = vld [vmem:[%s1 + $0x158] sm:$0xff]
        %v338 = vld [vmem:[%s1 + $0x160] sm:$0xff]
        %v339 = vld [vmem:[%s1 + $0x168] sm:$0xff]
        %v340 = vld [vmem:[%s1 + $0x170] sm:$0xff]
        %v341 = vld [vmem:[%s1 + $0x178] sm:$0xff]
        %v342 = vld [vmem:[%s1 + $0x180] sm:$0xff]
        %v343 = vld [vmem:[%s1 + $0x188] sm:$0xff]
        %v344 = vld [vmem:[%s1 + $0x190] sm:$0xff]
        %v345 = vld [vmem:[%s1 + $0x198] sm:$0xff]
        %v346 = vld [vmem:[%s1 + $0x1a0] sm:$0xff]
        %v347 = vld [vmem:[%s1 + $0x1a8] sm:$0xff]
        %v348 = vld [vmem:[%s1 + $0x1b0] sm:$0xff]
        %v349 = vld [vmem:[%s1 + $0x1b8] sm:$0xff]
        %v350 = vld [vmem:[%s1 + $0x1c0] sm:$0xff]
        %v351 = vld [vmem:[%s1 + $0x1c8] sm:$0xff]
        %v352 = vld [vmem:[%s1 + $0x1d0] sm:$0xff]
        %v353 = vld [vmem:[%s1 + $0x1d8] sm:$0xff]
        %v354 = vld [vmem:[%s1 + $0x1e0] sm:$0xff]
        %v355 = vld [vmem:[%s1 + $0x1e8] sm:$0xff]
        %v356 = vld [vmem:[%s1 + $0x1f0] sm:$0xff]
        %v357 = vld [vmem:[%s1 + $0x1f8] sm:$0xff]
        %v358 = vld [vmem:[%s1 + $0x200] sm:$0xff]
        %v359 = vld [vmem:[%s1 + $0x208] sm:$0xff]
        %v360 = vld [vmem:[%s1 + $0x210] sm:$0xff]
        %v361 = vld [vmem:[%s1 + $0x218] sm:$0xff]
        %v362 = vld [vmem:[%s1 + $0x220] sm:$0xff]
        %v363 = vld [vmem:[%s1 + $0x228] sm:$0xff]
        %v364 = vld [vmem:[%s1 + $0x230] sm:$0xff]
        %v365 = vld [vmem:[%s1 + $0x238] sm:$0xff]
        %v366 = vld [vmem:[%s1 + $0x240] sm:$0xff]
        %v367 = vld [vmem:[%s1 + $0x248] sm:$0xff]
        %v368 = vld [vmem:[%s1 + $0x250] sm:$0xff]
        %v369 = vld [vmem:[%s1 + $0x258] sm:$0xff]
        %v370 = vld [vmem:[%s1 + $0x260] sm:$0xff]
        %v371 = vld [vmem:[%s1 + $0x268] sm:$0xff]
        %v372 = vld [vmem:[%s1 + $0x270] sm:$0xff]
        %v373 = vld [vmem:[%s1 + $0x278] sm:$0xff]
        %v374 = vld [vmem:[%s1 + $0x280] sm:$0xff]
        %v375 = vld [vmem:[%s1 + $0x288] sm:$0xff]
        %v376 = vld [vmem:[%s1 + $0x290] sm:$0xff]
        %v377 = vld [vmem:[%s1 + $0x298] sm:$0xff]
        %v378 = vld [vmem:[%s1 + $0x2a0] sm:$0xff]
        %v379 = vld [vmem:[%s1 + $0x2a8] sm:$0xff]
        %v380 = vld [vmem:[%s1 + $0x2b0] sm:$0xff]
        %v381 = vld [vmem:[%s1 + $0x2b8] sm:$0xff]
        %v382 = vld [vmem:[%s1 + $0x2c0] sm:$0xff]
        %v383 = vld [vmem:[%s1 + $0x2c8] sm:$0xff]
        %v384 = vld [vmem:[%s1 + $0x2d0] sm:$0xff]
        %v385 = vld [vmem:[%s1 + $0x2d8] sm:$0xff]
        %v386 = vld [vmem:[%s1 + $0x2e0] sm:$0xff]
        %v387 = vld [vmem:[%s1 + $0x2e8] sm:$0xff]
        %v388 = vld [vmem:[%s1 + $0x2f0] sm:$0xff]
        %v389 = vld [vmem:[%s1 + $0x2f8] sm:$0xff]
        %v390 = vld [vmem:[%s1 + $0x300] sm:$0xff]
        %v391 = vld [vmem:[%s1 + $0x308] sm:$0xff]
        %v392 = vld [vmem:[%s1 + $0x310] sm:$0xff]
        %v393 = vld [vmem:[%s1 + $0x318] sm:$0xff]
        %v394 = vld [vmem:[%s1 + $0x320] sm:$0xff]
        %v395 = vld [vmem:[%s1 + $0x328] sm:$0xff]
        %v396 = vld [vmem:[%s1 + $0x330] sm:$0xff]
        %v397 = vld [vmem:[%s1 + $0x338] sm:$0xff]
        %v398 = vld [vmem:[%s1 + $0x340] sm:$0xff]
        %v399 = vld [vmem:[%s1 + $0x348] sm:$0xff]
        %v400 = vld [vmem:[%s1 + $0x350] sm:$0xff]
        %v401 = vld [vmem:[%s1 + $0x358] sm:$0xff]
        %v402 = vld [vmem:[%s1 + $0x360] sm:$0xff]
        %v403 = vld [vmem:[%s1 + $0x368] sm:$0xff]
        %v404 = vld [vmem:[%s1 + $0x370] sm:$0xff]
        %v405 = vld [vmem:[%s1 + $0x378] sm:$0xff]
        %v406 = vld [vmem:[%s1 + $0x380] sm:$0xff]
        %v407 = vld [vmem:[%s1 + $0x388] sm:$0xff]
        %v408 = vld [vmem:[%s1 + $0x390] sm:$0xff]
        %v409 = vld [vmem:[%s1 + $0x398] sm:$0xff]
        %v410 = vld [vmem:[%s1 + $0x3a0] sm:$0xff]
        %v411 = vld [vmem:[%s1 + $0x3a8] sm:$0xff]
        %v412 = vld [vmem:[%s1 + $0x3b0] sm:$0xff]
        %v413 = vld [vmem:[%s1 + $0x3b8] sm:$0xff]
        %v414 = vld [vmem:[%s1 + $0x3c0] sm:$0xff]
        %v415 = vld [vmem:[%s1 + $0x3c8] sm:$0xff]
        %v416 = vld [vmem:[%s1 + $0x3d0] sm:$0xff]
        %v417 = vld [vmem:[%s1 + $0x3d8] sm:$0xff]
        %v418 = vld [vmem:[%s1 + $0x3e0] sm:$0xff]
        %v419 = vld [vmem:[%s1 + $0x3e8] sm:$0xff]
        %v420 = vld [vmem:[%s1 + $0x3f0] sm:$0xff]
        %v421 = vld [vmem:[%s1 + $0x3f8] sm:$0xff]
        %v422 = vld [vmem:[%s1 + $0x400] sm:$0xff]
        %v423 = vld [vmem:[%s1 + $0x408] sm:$0xff]
        %v424 = vld [vmem:[%s1 + $0x410] sm:$0xff]
        %v425 = vld [vmem:[%s1 + $0x418] sm:$0xff]
        %v426 = vld [vmem:[%s1 + $0x420] sm:$0xff]
        %v427 = vld [vmem:[%s1 + $0x428] sm:$0xff]
        %v428 = vld [vmem:[%s1 + $0x430] sm:$0xff]
        %v429 = vld [vmem:[%s1 + $0x438] sm:$0xff]
        %v430 = vld [vmem:[%s1 + $0x440] sm:$0xff]
        %v431 = vld [vmem:[%s1 + $0x448] sm:$0xff]
        %v432 = vld [vmem:[%s1 + $0x450] sm:$0xff]
        %v433 = vld [vmem:[%s1 + $0x458] sm:$0xff]
        %v434 = vld [vmem:[%s1 + $0x460] sm:$0xff]
        %v435 = vld [vmem:[%s1 + $0x468] sm:$0xff]
        %v436 = vld [vmem:[%s1 + $0x470] sm:$0xff]
        %v437 = vld [vmem:[%s1 + $0x478] sm:$0xff]
        %v438 = vld [vmem:[%s1 + $0x480] sm:$0xff]
        %v439 = vld [vmem:[%s1 + $0x488] sm:$0xff]
        %v440 = vld [vmem:[%s1 + $0x490] sm:$0xff]
        %v441 = vld [vmem:[%s1 + $0x498] sm:$0xff]
        %v442 = vld [vmem:[%s1 + $0x4a0] sm:$0xff]
        %v443 = vld [vmem:[%s1 + $0x4a8] sm:$0xff]
        %v444 = vld [vmem:[%s1 + $0x4b0] sm:$0xff]
        %v445 = vld [vmem:[%s1 + $0x4b8] sm:$0xff]
        %v446 = vld [vmem:[%s1 + $0x4c0] sm:$0xff]
        %v447 = vld [vmem:[%s1 + $0x4c8] sm:$0xff]
        %v448 = vld [vmem:[%s1 + $0x4d0] sm:$0xff]
        %v449 = vld [vmem:[%s1 + $0x4d8] sm:$0xff]
        %v450 = vld [vmem:[%s1 + $0x4e0] sm:$0xff]
        %v451 = vld [vmem:[%s1 + $0x4e8] sm:$0xff]
        %v452 = vld [vmem:[%s1 + $0x4f0] sm:$0xff]
        %v453 = vld [vmem:[%s1 + $0x4f8] sm:$0xff]
        %v454 = vld [vmem:[%s1 + $0x500] sm:$0xff]
        %v455 = vld [vmem:[%s1 + $0x508] sm:$0xff]
        %v456 = vld [vmem:[%s1 + $0x510] sm:$0xff]
        %v457 = vld [vmem:[%s1 + $0x518] sm:$0xff]
        %v458 = vld [vmem:[%s1 + $0x520] sm:$0xff]
        %v459 = vld [vmem:[%s1 + $0x528] sm:$0xff]
        %v460 = vld [vmem:[%s1 + $0x530] sm:$0xff]
        %v461 = vld [vmem:[%s1 + $0x538] sm:$0xff]
        %v462 = vld [vmem:[%s1 + $0x540] sm:$0xff]
        %v463 = vld [vmem:[%s1 + $0x548] sm:$0xff]
        %v464 = vld [vmem:[%s1 + $0x550] sm:$0xff]
        %v465 = vld [vmem:[%s1 + $0x558] sm:$0xff]
        %v466 = vld [vmem:[%s1 + $0x560] sm:$0xff]
        %v467 = vld [vmem:[%s1 + $0x568] sm:$0xff]
        %v468 = vld [vmem:[%s1 + $0x570] sm:$0xff]
        %v469 = vld [vmem:[%s1 + $0x578] sm:$0xff]
        %v470 = vld [vmem:[%s1 + $0x580] sm:$0xff]
        %v471 = vld [vmem:[%s1 + $0x588] sm:$0xff]
        %v472 = vld [vmem:[%s1 + $0x590] sm:$0xff]
        %v473 = vld [vmem:[%s1 + $0x598] sm:$0xff]
        %v474 = vld [vmem:[%s1 + $0x5a0] sm:$0xff]
        %v475 = vld [vmem:[%s1 + $0x5a8] sm:$0xff]
        %v476 = vld [vmem:[%s1 + $0x5b0] sm:$0xff]
        %v477 = vld [vmem:[%s1 + $0x5b8] sm:$0xff]
        %v478 = vld [vmem:[%s1 + $0x5c0] sm:$0xff]
        %v479 = vld [vmem:[%s1 + $0x5c8] sm:$0xff]
        %v480 = vld [vmem:[%s1 + $0x5d0] sm:$0xff]
        %v481 = vld [vmem:[%s1 + $0x5d8] sm:$0xff]
        %v482 = vld [vmem:[%s1 + $0x5e0] sm:$0xff]
        %v483 = vld [vmem:[%s1 + $0x5e8] sm:$0xff]
        %v484 = vld [vmem:[%s1 + $0x5f0] sm:$0xff]
        %v485 = vld [vmem:[%s1 + $0x5f8] sm:$0xff]
        %v486 = vld [vmem:[%s1 + $0x600] sm:$0xff]
        %v487 = vld [vmem:[%s1 + $0x608] sm:$0xff]
        %v488 = vld [vmem:[%s1 + $0x610] sm:$0xff]
        %v489 = vld [vmem:[%s1 + $0x618] sm:$0xff]
        %v490 = vld [vmem:[%s1 + $0x620] sm:$0xff]
        %v491 = vld [vmem:[%s1 + $0x628] sm:$0xff]
        %v492 = vld [vmem:[%s1 + $0x630] sm:$0xff]
        %v493 = vld [vmem:[%s1 + $0x638] sm:$0xff]
        %v494 = vld [vmem:[%s1 + $0x640] sm:$0xff]
        %v495 = vld [vmem:[%s1 + $0x648] sm:$0xff]
        %v496 = vld [vmem:[%s1 + $0x650] sm:$0xff]
        %v497 = vld [vmem:[%s1 + $0x658] sm:$0xff]
        %v498 = vld [vmem:[%s1 + $0x660] sm:$0xff]
        %v499 = vld [vmem:[%s1 + $0x668] sm:$0xff]
        %v500 = vld [vmem:[%s1 + $0x670] sm:$0xff]
        %v501 = vld [vmem:[%s1 + $0x678] sm:$0xff]
        %v502 = vld [vmem:[%s1 + $0x680] sm:$0xff]
        %v503 = vld [vmem:[%s1 + $0x688] sm:$0xff]
        %v504 = vld [vmem:[%s1 + $0x690] sm:$0xff]
        %v505 = vld [vmem:[%s1 + $0x698] sm:$0xff]
        %v506 = vld [vmem:[%s1 + $0x6a0] sm:$0xff]
        %v507 = vld [vmem:[%s1 + $0x6a8] sm:$0xff]
        %v508 = vld [vmem:[%s1 + $0x6b0] sm:$0xff]
        %v509 = vld [vmem:[%s1 + $0x6b8] sm:$0xff]
        %v510 = vld [vmem:[%s1 + $0x6c0] sm:$0xff]
        %v511 = vld [vmem:[%s1 + $0x6c8] sm:$0xff]
        %v512 = vld [vmem:[%s1 + $0x6d0] sm:$0xff]
        %v513 = vld [vmem:[%s1 + $0x6d8] sm:$0xff]
        %v514 = vld [vmem:[%s1 + $0x6e0] sm:$0xff]
        %v515 = vld [vmem:[%s1 + $0x6e8] sm:$0xff]
        %v516 = vld [vmem:[%s1 + $0x6f0] sm:$0xff]
        %v517 = vld [vmem:[%s1 + $0x6f8] sm:$0xff]
        %v518 = vld [vmem:[%s1 + $0x700] sm:$0xff]
        %v519 = vld [vmem:[%s1 + $0x708] sm:$0xff]
        %v520 = vld [vmem:[%s1 + $0x710] sm:$0xff]
        %v521 = vld [vmem:[%s1 + $0x718] sm:$0xff]
        %v522 = vld [vmem:[%s1 + $0x720] sm:$0xff]
        %v523 = vld [vmem:[%s1 + $0x728] sm:$0xff]
        %v524 = vld [vmem:[%s1 + $0x730] sm:$0xff]
        %v525 = vld [vmem:[%s1 + $0x738] sm:$0xff]
        %v526 = vld [vmem:[%s1 + $0x740] sm:$0xff]
        %v527 = vld [vmem:[%s1 + $0x748] sm:$0xff]
        %v528 = vld [vmem:[%s1 + $0x750] sm:$0xff]
        %v529 = vld [vmem:[%s1 + $0x758] sm:$0xff]
        %v530 = vld [vmem:[%s1 + $0x760] sm:$0xff]
        %v531 = vld [vmem:[%s1 + $0x768] sm:$0xff]
        %v532 = vld [vmem:[%s1 + $0x770] sm:$0xff]
        %v533 = vld [vmem:[%s1 + $0x778] sm:$0xff]
        %v534 = vld [vmem:[%s1 + $0x780] sm:$0xff]
        %v535 = vld [vmem:[%s1 + $0x788] sm:$0xff]
        %v536 = vld [vmem:[%s1 + $0x790] sm:$0xff]
        %v537 = vld [vmem:[%s1 + $0x798] sm:$0xff]
        %v538 = vld [vmem:[%s1 + $0x7a0] sm:$0xff]
        %v539 = vld [vmem:[%s1 + $0x7a8] sm:$0xff]
        %v540 = vld [vmem:[%s1 + $0x7b0] sm:$0xff]
        %v541 = vld [vmem:[%s1 + $0x7b8] sm:$0xff]
        %v542 = vld [vmem:[%s1 + $0x7c0] sm:$0xff]
        %v543 = vld [vmem:[%s1 + $0x7c8] sm:$0xff]
        %v544 = vld [vmem:[%s1 + $0x7d0] sm:$0xff]
        %v545 = vld [vmem:[%s1 + $0x7d8] sm:$0xff]
        %v546 = vld [vmem:[%s1 + $0x7e0] sm:$0xff]
        %v547 = vld [vmem:[%s1 + $0x7e8] sm:$0xff]
        %v548 = vld [vmem:[%s1 + $0x7f0] sm:$0xff]
        %v549 = vld [vmem:[%s1 + $0x7f8] sm:$0xff]
        %v550 = vld [vmem:[%s1 + $0x800] sm:$0xff]
        %v551 = vld [vmem:[%s1 + $0x808] sm:$0xff]
        %v552 = vld [vmem:[%s1 + $0x810] sm:$0xff]
        %v553 = vld [vmem:[%s1 + $0x818] sm:$0xff]
        %v554 = vld [vmem:[%s1 + $0x820] sm:$0xff]
        %v555 = vld [vmem:[%s1 + $0x828] sm:$0xff]
        %v556 = vld [vmem:[%s1 + $0x830] sm:$0xff]
        %v557 = vld [vmem:[%s1 + $0x838] sm:$0xff]
        %v558 = vld [vmem:[%s1 + $0x840] sm:$0xff]
        %v559 = vld [vmem:[%s1 + $0x848] sm:$0xff]
        %v560 = vld [vmem:[%s1 + $0x850] sm:$0xff]
        %v561 = vld [vmem:[%s1 + $0x858] sm:$0xff]
        %v562 = vld [vmem:[%s1 + $0x860] sm:$0xff]
        %v563 = vld [vmem:[%s1 + $0x868] sm:$0xff]
        %v564 = vld [vmem:[%s1 + $0x870] sm:$0xff]
        %v565 = vld [vmem:[%s1 + $0x878] sm:$0xff]
        %v566 = vld [vmem:[%s1 + $0x880] sm:$0xff]
        %v567 = vld [vmem:[%s1 + $0x888] sm:$0xff]
        %v568 = vld [vmem:[%s1 + $0x890] sm:$0xff]
        %v569 = vld [vmem:[%s1 + $0x898] sm:$0xff]
        %v570 = vld [vmem:[%s1 + $0x8a0] sm:$0xff]
        %v571 = vld [vmem:[%s1 + $0x8a8] sm:$0xff]
        %v572 = vld [vmem:[%s1 + $0x8b0] sm:$0xff]
        %v573 = vld [vmem:[%s1 + $0x8b8] sm:$0xff]
        %v574 = vld [vmem:[%s1 + $0x8c0] sm:$0xff]
        %v575 = vld [vmem:[%s1 + $0x8c8] sm:$0xff]
        %v576 = vld [vmem:[%s1 + $0x8d0] sm:$0xff]
        %v577 = vld [vmem:[%s1 + $0x8d8] sm:$0xff]
        %v578 = vld [vmem:[%s1 + $0x8e0] sm:$0xff]
        %v579 = vld [vmem:[%s1 + $0x8e8] sm:$0xff]
        %v580 = vld [vmem:[%s1 + $0x8f0] sm:$0xff]
        %v581 = vld [vmem:[%s1 + $0x8f8] sm:$0xff]
        %v582 = vld [vmem:[%s2] sm:$0xff]
        %v583 = vld [vmem:[%s2 + $0x8] sm:$0xf]
        %v586 = vlaneseq
        %v587 = vshrl.u32 %v586, 7
        %v588 = vsub.s32 0, %v587
        %v589 = vrot.slane %v582, %v588
        %v590 = vlaneseq
        %v591 = vshrl.u32 %v590, 7
        %v592 = vsub.s32 1, %v591
        %v593 = vrot.slane %v582, %v592
        %v594 = vlaneseq
        %v595 = vshrl.u32 %v594, 7
        %v596 = vsub.s32 2, %v595
        %v597 = vrot.slane %v582, %v596
        %v598 = vlaneseq
        %v599 = vshrl.u32 %v598, 7
        %v600 = vsub.s32 3, %v599
        %v601 = vrot.slane %v582, %v600
        %v602 = vlaneseq
        %v603 = vshrl.u32 %v602, 7
        %v604 = vsub.s32 4, %v603
        %v605 = vrot.slane %v582, %v604
        %v606 = vlaneseq
        %v607 = vshrl.u32 %v606, 7
        %v608 = vsub.s32 5, %v607
        %v609 = vrot.slane %v582, %v608
        %v610 = vlaneseq
        %v611 = vshrl.u32 %v610, 7
        %v612 = vsub.s32 6, %v611
        %v613 = vrot.slane %v582, %v612
        %v614 = vlaneseq
        %v615 = vshrl.u32 %v614, 7
        %v616 = vsub.s32 7, %v615
        %v617 = vrot.slane %v582, %v616
        %v618 = vlaneseq
        %v619 = vshrl.u32 %v618, 7
        %v620 = vsub.s32 0, %v619
        %v621 = vrot.slane %v583, %v620
        %v622 = vlaneseq
        %v623 = vshrl.u32 %v622, 7
        %v624 = vsub.s32 1, %v623
        %v625 = vrot.slane %v583, %v624
        %v626 = vlaneseq
        %v627 = vshrl.u32 %v626, 7
        %v628 = vsub.s32 2, %v627
        %v629 = vrot.slane %v583, %v628
        %v630 = vlaneseq
        %v631 = vshrl.u32 %v630, 7
        %v632 = vsub.s32 3, %v631
        %v633 = vrot.slane %v583, %v632
        %v710 = vunpack.c.l.b16 %v230
        %v711 = vunpack.c.h.b16 %v230
        %v712 = vunpack.c.l.b16 %v231
        %v713 = vunpack.c.l.b16 %v232
        %v714 = vunpack.c.h.b16 %v232
        %v715 = vunpack.c.l.b16 %v233
        %v716 = vunpack.c.l.b16 %v234
        %v717 = vunpack.c.h.b16 %v234
        %v718 = vunpack.c.l.b16 %v235
        %v719 = vunpack.c.l.b16 %v236
        %v720 = vunpack.c.h.b16 %v236
        %v721 = vunpack.c.l.b16 %v237
        %v722 = vunpack.c.l.b16 %v238
        %v723 = vunpack.c.h.b16 %v238
        %v724 = vunpack.c.l.b16 %v239
        %v725 = vunpack.c.l.b16 %v240
        %v726 = vunpack.c.h.b16 %v240
        %v727 = vunpack.c.l.b16 %v241
        %v728 = vunpack.c.l.b16 %v242
        %v729 = vunpack.c.h.b16 %v242
        %v730 = vunpack.c.l.b16 %v243
        %v731 = vunpack.c.l.b16 %v244
        %v732 = vunpack.c.h.b16 %v244
        %v733 = vunpack.c.l.b16 %v245
        %v734 = vunpack.c.l.b16 %v246
        %v735 = vunpack.c.h.b16 %v246
        %v736 = vunpack.c.l.b16 %v247
        %v737 = vunpack.c.l.b16 %v248
        %v738 = vunpack.c.h.b16 %v248
        %v739 = vunpack.c.l.b16 %v249
        %v740 = vunpack.c.l.b16 %v250
        %v741 = vunpack.c.h.b16 %v250
        %v742 = vunpack.c.l.b16 %v251
        %v743 = vunpack.c.l.b16 %v252
        %v744 = vunpack.c.h.b16 %v252
        %v745 = vunpack.c.l.b16 %v253
        %v746 = vunpack.c.l.b16 %v254
        %v747 = vunpack.c.h.b16 %v254
        %v748 = vunpack.c.l.b16 %v255
        %v749 = vunpack.c.l.b16 %v256
        %v750 = vunpack.c.h.b16 %v256
        %v751 = vunpack.c.l.b16 %v257
        %v752 = vunpack.c.l.b16 %v258
        %v753 = vunpack.c.h.b16 %v258
        %v754 = vunpack.c.l.b16 %v259
        %v755 = vunpack.c.l.b16 %v260
        %v756 = vunpack.c.h.b16 %v260
        %v757 = vunpack.c.l.b16 %v261
        %v758 = vunpack.c.l.b16 %v262
        %v759 = vunpack.c.h.b16 %v262
        %v760 = vunpack.c.l.b16 %v263
        %v761 = vunpack.c.l.b16 %v264
        %v762 = vunpack.c.h.b16 %v264
        %v763 = vunpack.c.l.b16 %v265
        %v764 = vunpack.c.l.b16 %v266
        %v765 = vunpack.c.h.b16 %v266
        %v766 = vunpack.c.l.b16 %v267
        %v767 = vunpack.c.l.b16 %v268
        %v768 = vunpack.c.h.b16 %v268
        %v769 = vunpack.c.l.b16 %v269
        %v770 = vunpack.c.l.b16 %v270
        %v771 = vunpack.c.h.b16 %v270
        %v772 = vunpack.c.l.b16 %v271
        %v773 = vunpack.c.l.b16 %v272
        %v774 = vunpack.c.h.b16 %v272
        %v775 = vunpack.c.l.b16 %v273
        %v776 = vunpack.c.l.b16 %v274
        %v777 = vunpack.c.h.b16 %v274
        %v778 = vunpack.c.l.b16 %v275
        %v779 = vunpack.c.l.b16 %v276
        %v780 = vunpack.c.h.b16 %v276
        %v781 = vunpack.c.l.b16 %v277
        %v782 = vunpack.c.l.b16 %v278
        %v783 = vunpack.c.h.b16 %v278
        %v784 = vunpack.c.l.b16 %v279
        %v785 = vunpack.c.l.b16 %v280
        %v786 = vunpack.c.h.b16 %v280
        %v787 = vunpack.c.l.b16 %v281
        %v788 = vunpack.c.l.b16 %v282
        %v789 = vunpack.c.h.b16 %v282
        %v790 = vunpack.c.l.b16 %v283
        %v791 = vunpack.c.l.b16 %v284
        %v792 = vunpack.c.h.b16 %v284
        %v793 = vunpack.c.l.b16 %v285
        %v794 = vunpack.c.l.b16 %v286
        %v795 = vunpack.c.h.b16 %v286
        %v796 = vunpack.c.l.b16 %v287
        %v797 = vunpack.c.l.b16 %v288
        %v798 = vunpack.c.h.b16 %v288
        %v799 = vunpack.c.l.b16 %v289
        %v800 = vunpack.c.l.b16 %v290
        %v801 = vunpack.c.h.b16 %v290
        %v802 = vunpack.c.l.b16 %v291
        %v803 = vunpack.c.l.b16 %v292
        %v804 = vunpack.c.h.b16 %v292
        %v805 = vunpack.c.l.b16 %v293
        %v806 = vpack.c.b16 %v713, %v710
        %v807 = vpack.c.b16 %v714, %v711
        %v808 = vpack.c.b16 %v715, %v712
        %v809 = vpack.c.b16 %v719, %v716
        %v810 = vpack.c.b16 %v720, %v717
        %v811 = vpack.c.b16 %v721, %v718
        %v812 = vpack.c.b16 %v725, %v722
        %v813 = vpack.c.b16 %v726, %v723
        %v814 = vpack.c.b16 %v727, %v724
        %v815 = vpack.c.b16 %v731, %v728
        %v816 = vpack.c.b16 %v732, %v729
        %v817 = vpack.c.b16 %v733, %v730
        %v818 = vpack.c.b16 %v737, %v734
        %v819 = vpack.c.b16 %v738, %v735
        %v820 = vpack.c.b16 %v739, %v736
        %v821 = vpack.c.b16 %v743, %v740
        %v822 = vpack.c.b16 %v744, %v741
        %v823 = vpack.c.b16 %v745, %v742
        %v824 = vpack.c.b16 %v749, %v746
        %v825 = vpack.c.b16 %v750, %v747
        %v826 = vpack.c.b16 %v751, %v748
        %v827 = vpack.c.b16 %v755, %v752
        %v828 = vpack.c.b16 %v756, %v753
        %v829 = vpack.c.b16 %v757, %v754
        %v830 = vpack.c.b16 %v761, %v758
        %v831 = vpack.c.b16 %v762, %v759
        %v832 = vpack.c.b16 %v763, %v760
        %v833 = vpack.c.b16 %v767, %v764
        %v834 = vpack.c.b16 %v768, %v765
        %v835 = vpack.c.b16 %v769, %v766
        %v836 = vpack.c.b16 %v773, %v770
        %v837 = vpack.c.b16 %v774, %v771
        %v838 = vpack.c.b16 %v775, %v772
        %v839 = vpack.c.b16 %v779, %v776
        %v840 = vpack.c.b16 %v780, %v777
        %v841 = vpack.c.b16 %v781, %v778
        %v842 = vpack.c.b16 %v785, %v782
        %v843 = vpack.c.b16 %v786, %v783
        %v844 = vpack.c.b16 %v787, %v784
        %v845 = vpack.c.b16 %v791, %v788
        %v846 = vpack.c.b16 %v792, %v789
        %v847 = vpack.c.b16 %v793, %v790
        %v848 = vpack.c.b16 %v797, %v794
        %v849 = vpack.c.b16 %v798, %v795
        %v850 = vpack.c.b16 %v799, %v796
        %v851 = vpack.c.b16 %v803, %v800
        %v852 = vpack.c.b16 %v804, %v801
        %v853 = vpack.c.b16 %v805, %v802
        %v1190 = vunpack.c.l.b16 %v294
        %v1191 = vunpack.c.h.b16 %v294
        %v1192 = vunpack.c.l.b16 %v295
        %v1193 = vunpack.c.h.b16 %v295
        %v1194 = vunpack.c.l.b16 %v296
        %v1195 = vunpack.c.h.b16 %v296
        %v1196 = vunpack.c.l.b16 %v297
        %v1197 = vunpack.c.h.b16 %v297
        %v1198 = vunpack.c.l.b16 %v298
        %v1199 = vunpack.c.h.b16 %v298
        %v1200 = vunpack.c.l.b16 %v299
        %v1201 = vunpack.c.h.b16 %v299
        %v1202 = vunpack.c.l.b16 %v300
        %v1203 = vunpack.c.h.b16 %v300
        %v1204 = vunpack.c.l.b16 %v301
        %v1205 = vunpack.c.h.b16 %v301
        %v1206 = vunpack.c.l.b16 %v302
        %v1207 = vunpack.c.h.b16 %v302
        %v1208 = vunpack.c.l.b16 %v303
        %v1209 = vunpack.c.h.b16 %v303
        %v1210 = vunpack.c.l.b16 %v304
        %v1211 = vunpack.c.h.b16 %v304
        %v1212 = vunpack.c.l.b16 %v305
        %v1213 = vunpack.c.h.b16 %v305
        %v1214 = vunpack.c.l.b16 %v306
        %v1215 = vunpack.c.h.b16 %v306
        %v1216 = vunpack.c.l.b16 %v307
        %v1217 = vunpack.c.h.b16 %v307
        %v1218 = vunpack.c.l.b16 %v308
        %v1219 = vunpack.c.h.b16 %v308
        %v1220 = vunpack.c.l.b16 %v309
        %v1221 = vunpack.c.h.b16 %v309
        %v1222 = vunpack.c.l.b16 %v310
        %v1223 = vunpack.c.h.b16 %v310
        %v1224 = vunpack.c.l.b16 %v311
        %v1225 = vunpack.c.h.b16 %v311
        %v1226 = vunpack.c.l.b16 %v312
        %v1227 = vunpack.c.h.b16 %v312
        %v1228 = vunpack.c.l.b16 %v313
        %v1229 = vunpack.c.h.b16 %v313
        %v1230 = vunpack.c.l.b16 %v314
        %v1231 = vunpack.c.h.b16 %v314
        %v1232 = vunpack.c.l.b16 %v315
        %v1233 = vunpack.c.h.b16 %v315
        %v1234 = vunpack.c.l.b16 %v316
        %v1235 = vunpack.c.h.b16 %v316
        %v1236 = vunpack.c.l.b16 %v317
        %v1237 = vunpack.c.h.b16 %v317
        %v1238 = vunpack.c.l.b16 %v318
        %v1239 = vunpack.c.h.b16 %v318
        %v1240 = vunpack.c.l.b16 %v319
        %v1241 = vunpack.c.h.b16 %v319
        %v1242 = vunpack.c.l.b16 %v320
        %v1243 = vunpack.c.h.b16 %v320
        %v1244 = vunpack.c.l.b16 %v321
        %v1245 = vunpack.c.h.b16 %v321
        %v1246 = vunpack.c.l.b16 %v322
        %v1247 = vunpack.c.h.b16 %v322
        %v1248 = vunpack.c.l.b16 %v323
        %v1249 = vunpack.c.h.b16 %v323
        %v1250 = vunpack.c.l.b16 %v324
        %v1251 = vunpack.c.h.b16 %v324
        %v1252 = vunpack.c.l.b16 %v325
        %v1253 = vunpack.c.h.b16 %v325
        %v1254 = vunpack.c.l.b16 %v326
        %v1255 = vunpack.c.h.b16 %v326
        %v1256 = vunpack.c.l.b16 %v327
        %v1257 = vunpack.c.h.b16 %v327
        %v1258 = vunpack.c.l.b16 %v328
        %v1259 = vunpack.c.h.b16 %v328
        %v1260 = vunpack.c.l.b16 %v329
        %v1261 = vunpack.c.h.b16 %v329
        %v1262 = vunpack.c.l.b16 %v330
        %v1263 = vunpack.c.h.b16 %v330
        %v1264 = vunpack.c.l.b16 %v331
        %v1265 = vunpack.c.h.b16 %v331
        %v1266 = vunpack.c.l.b16 %v332
        %v1267 = vunpack.c.h.b16 %v332
        %v1268 = vunpack.c.l.b16 %v333
        %v1269 = vunpack.c.h.b16 %v333
        %v1270 = vunpack.c.l.b16 %v334
        %v1271 = vunpack.c.h.b16 %v334
        %v1272 = vunpack.c.l.b16 %v335
        %v1273 = vunpack.c.h.b16 %v335
        %v1274 = vunpack.c.l.b16 %v336
        %v1275 = vunpack.c.h.b16 %v336
        %v1276 = vunpack.c.l.b16 %v337
        %v1277 = vunpack.c.h.b16 %v337
        %v1278 = vunpack.c.l.b16 %v338
        %v1279 = vunpack.c.h.b16 %v338
        %v1280 = vunpack.c.l.b16 %v339
        %v1281 = vunpack.c.h.b16 %v339
        %v1282 = vunpack.c.l.b16 %v340
        %v1283 = vunpack.c.h.b16 %v340
        %v1284 = vunpack.c.l.b16 %v341
        %v1285 = vunpack.c.h.b16 %v341
        %v1286 = vunpack.c.l.b16 %v342
        %v1287 = vunpack.c.h.b16 %v342
        %v1288 = vunpack.c.l.b16 %v343
        %v1289 = vunpack.c.h.b16 %v343
        %v1290 = vunpack.c.l.b16 %v344
        %v1291 = vunpack.c.h.b16 %v344
        %v1292 = vunpack.c.l.b16 %v345
        %v1293 = vunpack.c.h.b16 %v345
        %v1294 = vunpack.c.l.b16 %v346
        %v1295 = vunpack.c.h.b16 %v346
        %v1296 = vunpack.c.l.b16 %v347
        %v1297 = vunpack.c.h.b16 %v347
        %v1298 = vunpack.c.l.b16 %v348
        %v1299 = vunpack.c.h.b16 %v348
        %v1300 = vunpack.c.l.b16 %v349
        %v1301 = vunpack.c.h.b16 %v349
        %v1302 = vunpack.c.l.b16 %v350
        %v1303 = vunpack.c.h.b16 %v350
        %v1304 = vunpack.c.l.b16 %v351
        %v1305 = vunpack.c.h.b16 %v351
        %v1306 = vunpack.c.l.b16 %v352
        %v1307 = vunpack.c.h.b16 %v352
        %v1308 = vunpack.c.l.b16 %v353
        %v1309 = vunpack.c.h.b16 %v353
        %v1310 = vunpack.c.l.b16 %v354
        %v1311 = vunpack.c.h.b16 %v354
        %v1312 = vunpack.c.l.b16 %v355
        %v1313 = vunpack.c.h.b16 %v355
        %v1314 = vunpack.c.l.b16 %v356
        %v1315 = vunpack.c.h.b16 %v356
        %v1316 = vunpack.c.l.b16 %v357
        %v1317 = vunpack.c.h.b16 %v357
        %v1318 = vunpack.c.l.b16 %v358
        %v1319 = vunpack.c.h.b16 %v358
        %v1320 = vunpack.c.l.b16 %v359
        %v1321 = vunpack.c.h.b16 %v359
        %v1322 = vunpack.c.l.b16 %v360
        %v1323 = vunpack.c.h.b16 %v360
        %v1324 = vunpack.c.l.b16 %v361
        %v1325 = vunpack.c.h.b16 %v361
        %v1326 = vunpack.c.l.b16 %v362
        %v1327 = vunpack.c.h.b16 %v362
        %v1328 = vunpack.c.l.b16 %v363
        %v1329 = vunpack.c.h.b16 %v363
        %v1330 = vunpack.c.l.b16 %v364
        %v1331 = vunpack.c.h.b16 %v364
        %v1332 = vunpack.c.l.b16 %v365
        %v1333 = vunpack.c.h.b16 %v365
        %v1334 = vunpack.c.l.b16 %v366
        %v1335 = vunpack.c.h.b16 %v366
        %v1336 = vunpack.c.l.b16 %v367
        %v1337 = vunpack.c.h.b16 %v367
        %v1338 = vunpack.c.l.b16 %v368
        %v1339 = vunpack.c.h.b16 %v368
        %v1340 = vunpack.c.l.b16 %v369
        %v1341 = vunpack.c.h.b16 %v369
        %v1342 = vunpack.c.l.b16 %v370
        %v1343 = vunpack.c.h.b16 %v370
        %v1344 = vunpack.c.l.b16 %v371
        %v1345 = vunpack.c.h.b16 %v371
        %v1346 = vunpack.c.l.b16 %v372
        %v1347 = vunpack.c.h.b16 %v372
        %v1348 = vunpack.c.l.b16 %v373
        %v1349 = vunpack.c.h.b16 %v373
        %v1350 = vunpack.c.l.b16 %v374
        %v1351 = vunpack.c.h.b16 %v374
        %v1352 = vunpack.c.l.b16 %v375
        %v1353 = vunpack.c.h.b16 %v375
        %v1354 = vunpack.c.l.b16 %v376
        %v1355 = vunpack.c.h.b16 %v376
        %v1356 = vunpack.c.l.b16 %v377
        %v1357 = vunpack.c.h.b16 %v377
        %v1358 = vunpack.c.l.b16 %v378
        %v1359 = vunpack.c.h.b16 %v378
        %v1360 = vunpack.c.l.b16 %v379
        %v1361 = vunpack.c.h.b16 %v379
        %v1362 = vunpack.c.l.b16 %v380
        %v1363 = vunpack.c.h.b16 %v380
        %v1364 = vunpack.c.l.b16 %v381
        %v1365 = vunpack.c.h.b16 %v381
        %v1366 = vunpack.c.l.b16 %v382
        %v1367 = vunpack.c.h.b16 %v382
        %v1368 = vunpack.c.l.b16 %v383
        %v1369 = vunpack.c.h.b16 %v383
        %v1370 = vunpack.c.l.b16 %v384
        %v1371 = vunpack.c.h.b16 %v384
        %v1372 = vunpack.c.l.b16 %v385
        %v1373 = vunpack.c.h.b16 %v385
        %v1374 = vunpack.c.l.b16 %v386
        %v1375 = vunpack.c.h.b16 %v386
        %v1376 = vunpack.c.l.b16 %v387
        %v1377 = vunpack.c.h.b16 %v387
        %v1378 = vunpack.c.l.b16 %v388
        %v1379 = vunpack.c.h.b16 %v388
        %v1380 = vunpack.c.l.b16 %v389
        %v1381 = vunpack.c.h.b16 %v389
        %v1382 = vunpack.c.l.b16 %v390
        %v1383 = vunpack.c.h.b16 %v390
        %v1384 = vunpack.c.l.b16 %v391
        %v1385 = vunpack.c.h.b16 %v391
        %v1386 = vunpack.c.l.b16 %v392
        %v1387 = vunpack.c.h.b16 %v392
        %v1388 = vunpack.c.l.b16 %v393
        %v1389 = vunpack.c.h.b16 %v393
        %v1390 = vunpack.c.l.b16 %v394
        %v1391 = vunpack.c.h.b16 %v394
        %v1392 = vunpack.c.l.b16 %v395
        %v1393 = vunpack.c.h.b16 %v395
        %v1394 = vunpack.c.l.b16 %v396
        %v1395 = vunpack.c.h.b16 %v396
        %v1396 = vunpack.c.l.b16 %v397
        %v1397 = vunpack.c.h.b16 %v397
        %v1398 = vunpack.c.l.b16 %v398
        %v1399 = vunpack.c.h.b16 %v398
        %v1400 = vunpack.c.l.b16 %v399
        %v1401 = vunpack.c.h.b16 %v399
        %v1402 = vunpack.c.l.b16 %v400
        %v1403 = vunpack.c.h.b16 %v400
        %v1404 = vunpack.c.l.b16 %v401
        %v1405 = vunpack.c.h.b16 %v401
        %v1406 = vunpack.c.l.b16 %v402
        %v1407 = vunpack.c.h.b16 %v402
        %v1408 = vunpack.c.l.b16 %v403
        %v1409 = vunpack.c.h.b16 %v403
        %v1410 = vunpack.c.l.b16 %v404
        %v1411 = vunpack.c.h.b16 %v404
        %v1412 = vunpack.c.l.b16 %v405
        %v1413 = vunpack.c.h.b16 %v405
        %v1414 = vunpack.c.l.b16 %v406
        %v1415 = vunpack.c.h.b16 %v406
        %v1416 = vunpack.c.l.b16 %v407
        %v1417 = vunpack.c.h.b16 %v407
        %v1418 = vunpack.c.l.b16 %v408
        %v1419 = vunpack.c.h.b16 %v408
        %v1420 = vunpack.c.l.b16 %v409
        %v1421 = vunpack.c.h.b16 %v409
        %v1422 = vunpack.c.l.b16 %v410
        %v1423 = vunpack.c.h.b16 %v410
        %v1424 = vunpack.c.l.b16 %v411
        %v1425 = vunpack.c.h.b16 %v411
        %v1426 = vunpack.c.l.b16 %v412
        %v1427 = vunpack.c.h.b16 %v412
        %v1428 = vunpack.c.l.b16 %v413
        %v1429 = vunpack.c.h.b16 %v413
        %v1430 = vunpack.c.l.b16 %v414
        %v1431 = vunpack.c.h.b16 %v414
        %v1432 = vunpack.c.l.b16 %v415
        %v1433 = vunpack.c.h.b16 %v415
        %v1434 = vunpack.c.l.b16 %v416
        %v1435 = vunpack.c.h.b16 %v416
        %v1436 = vunpack.c.l.b16 %v417
        %v1437 = vunpack.c.h.b16 %v417
        %v1438 = vunpack.c.l.b16 %v418
        %v1439 = vunpack.c.h.b16 %v418
        %v1440 = vunpack.c.l.b16 %v419
        %v1441 = vunpack.c.h.b16 %v419
        %v1442 = vunpack.c.l.b16 %v420
        %v1443 = vunpack.c.h.b16 %v420
        %v1444 = vunpack.c.l.b16 %v421
        %v1445 = vunpack.c.h.b16 %v421
        %v1446 = vunpack.c.l.b16 %v422
        %v1447 = vunpack.c.h.b16 %v422
        %v1448 = vunpack.c.l.b16 %v423
        %v1449 = vunpack.c.h.b16 %v423
        %v1450 = vunpack.c.l.b16 %v424
        %v1451 = vunpack.c.h.b16 %v424
        %v1452 = vunpack.c.l.b16 %v425
        %v1453 = vunpack.c.h.b16 %v425
        %v1454 = vunpack.c.l.b16 %v426
        %v1455 = vunpack.c.h.b16 %v426
        %v1456 = vunpack.c.l.b16 %v427
        %v1457 = vunpack.c.h.b16 %v427
        %v1458 = vunpack.c.l.b16 %v428
        %v1459 = vunpack.c.h.b16 %v428
        %v1460 = vunpack.c.l.b16 %v429
        %v1461 = vunpack.c.h.b16 %v429
        %v1462 = vunpack.c.l.b16 %v430
        %v1463 = vunpack.c.h.b16 %v430
        %v1464 = vunpack.c.l.b16 %v431
        %v1465 = vunpack.c.h.b16 %v431
        %v1466 = vunpack.c.l.b16 %v432
        %v1467 = vunpack.c.h.b16 %v432
        %v1468 = vunpack.c.l.b16 %v433
        %v1469 = vunpack.c.h.b16 %v433
        %v1470 = vunpack.c.l.b16 %v434
        %v1471 = vunpack.c.h.b16 %v434
        %v1472 = vunpack.c.l.b16 %v435
        %v1473 = vunpack.c.h.b16 %v435
        %v1474 = vunpack.c.l.b16 %v436
        %v1475 = vunpack.c.h.b16 %v436
        %v1476 = vunpack.c.l.b16 %v437
        %v1477 = vunpack.c.h.b16 %v437
        %v1478 = vunpack.c.l.b16 %v438
        %v1479 = vunpack.c.h.b16 %v438
        %v1480 = vunpack.c.l.b16 %v439
        %v1481 = vunpack.c.h.b16 %v439
        %v1482 = vunpack.c.l.b16 %v440
        %v1483 = vunpack.c.h.b16 %v440
        %v1484 = vunpack.c.l.b16 %v441
        %v1485 = vunpack.c.h.b16 %v441
        %v1486 = vunpack.c.l.b16 %v442
        %v1487 = vunpack.c.h.b16 %v442
        %v1488 = vunpack.c.l.b16 %v443
        %v1489 = vunpack.c.h.b16 %v443
        %v1490 = vunpack.c.l.b16 %v444
        %v1491 = vunpack.c.h.b16 %v444
        %v1492 = vunpack.c.l.b16 %v445
        %v1493 = vunpack.c.h.b16 %v445
        %v1494 = vunpack.c.l.b16 %v446
        %v1495 = vunpack.c.h.b16 %v446
        %v1496 = vunpack.c.l.b16 %v447
        %v1497 = vunpack.c.h.b16 %v447
        %v1498 = vunpack.c.l.b16 %v448
        %v1499 = vunpack.c.h.b16 %v448
        %v1500 = vunpack.c.l.b16 %v449
        %v1501 = vunpack.c.h.b16 %v449
        %v1502 = vunpack.c.l.b16 %v450
        %v1503 = vunpack.c.h.b16 %v450
        %v1504 = vunpack.c.l.b16 %v451
        %v1505 = vunpack.c.h.b16 %v451
        %v1506 = vunpack.c.l.b16 %v452
        %v1507 = vunpack.c.h.b16 %v452
        %v1508 = vunpack.c.l.b16 %v453
        %v1509 = vunpack.c.h.b16 %v453
        %v1510 = vunpack.c.l.b16 %v454
        %v1511 = vunpack.c.h.b16 %v454
        %v1512 = vunpack.c.l.b16 %v455
        %v1513 = vunpack.c.h.b16 %v455
        %v1514 = vunpack.c.l.b16 %v456
        %v1515 = vunpack.c.h.b16 %v456
        %v1516 = vunpack.c.l.b16 %v457
        %v1517 = vunpack.c.h.b16 %v457
        %v1518 = vunpack.c.l.b16 %v458
        %v1519 = vunpack.c.h.b16 %v458
        %v1520 = vunpack.c.l.b16 %v459
        %v1521 = vunpack.c.h.b16 %v459
        %v1522 = vunpack.c.l.b16 %v460
        %v1523 = vunpack.c.h.b16 %v460
        %v1524 = vunpack.c.l.b16 %v461
        %v1525 = vunpack.c.h.b16 %v461
        %v1526 = vunpack.c.l.b16 %v462
        %v1527 = vunpack.c.h.b16 %v462
        %v1528 = vunpack.c.l.b16 %v463
        %v1529 = vunpack.c.h.b16 %v463
        %v1530 = vunpack.c.l.b16 %v464
        %v1531 = vunpack.c.h.b16 %v464
        %v1532 = vunpack.c.l.b16 %v465
        %v1533 = vunpack.c.h.b16 %v465
        %v1534 = vunpack.c.l.b16 %v466
        %v1535 = vunpack.c.h.b16 %v466
        %v1536 = vunpack.c.l.b16 %v467
        %v1537 = vunpack.c.h.b16 %v467
        %v1538 = vunpack.c.l.b16 %v468
        %v1539 = vunpack.c.h.b16 %v468
        %v1540 = vunpack.c.l.b16 %v469
        %v1541 = vunpack.c.h.b16 %v469
        %v1542 = vunpack.c.l.b16 %v470
        %v1543 = vunpack.c.h.b16 %v470
        %v1544 = vunpack.c.l.b16 %v471
        %v1545 = vunpack.c.h.b16 %v471
        %v1546 = vunpack.c.l.b16 %v472
        %v1547 = vunpack.c.h.b16 %v472
        %v1548 = vunpack.c.l.b16 %v473
        %v1549 = vunpack.c.h.b16 %v473
        %v1550 = vunpack.c.l.b16 %v474
        %v1551 = vunpack.c.h.b16 %v474
        %v1552 = vunpack.c.l.b16 %v475
        %v1553 = vunpack.c.h.b16 %v475
        %v1554 = vunpack.c.l.b16 %v476
        %v1555 = vunpack.c.h.b16 %v476
        %v1556 = vunpack.c.l.b16 %v477
        %v1557 = vunpack.c.h.b16 %v477
        %v1558 = vunpack.c.l.b16 %v478
        %v1559 = vunpack.c.h.b16 %v478
        %v1560 = vunpack.c.l.b16 %v479
        %v1561 = vunpack.c.h.b16 %v479
        %v1562 = vunpack.c.l.b16 %v480
        %v1563 = vunpack.c.h.b16 %v480
        %v1564 = vunpack.c.l.b16 %v481
        %v1565 = vunpack.c.h.b16 %v481
        %v1566 = vunpack.c.l.b16 %v482
        %v1567 = vunpack.c.h.b16 %v482
        %v1568 = vunpack.c.l.b16 %v483
        %v1569 = vunpack.c.h.b16 %v483
        %v1570 = vunpack.c.l.b16 %v484
        %v1571 = vunpack.c.h.b16 %v484
        %v1572 = vunpack.c.l.b16 %v485
        %v1573 = vunpack.c.h.b16 %v485
        %v1574 = vunpack.c.l.b16 %v486
        %v1575 = vunpack.c.h.b16 %v486
        %v1576 = vunpack.c.l.b16 %v487
        %v1577 = vunpack.c.h.b16 %v487
        %v1578 = vunpack.c.l.b16 %v488
        %v1579 = vunpack.c.h.b16 %v488
        %v1580 = vunpack.c.l.b16 %v489
        %v1581 = vunpack.c.h.b16 %v489
        %v1582 = vunpack.c.l.b16 %v490
        %v1583 = vunpack.c.h.b16 %v490
        %v1584 = vunpack.c.l.b16 %v491
        %v1585 = vunpack.c.h.b16 %v491
        %v1586 = vunpack.c.l.b16 %v492
        %v1587 = vunpack.c.h.b16 %v492
        %v1588 = vunpack.c.l.b16 %v493
        %v1589 = vunpack.c.h.b16 %v493
        %v1590 = vunpack.c.l.b16 %v494
        %v1591 = vunpack.c.h.b16 %v494
        %v1592 = vunpack.c.l.b16 %v495
        %v1593 = vunpack.c.h.b16 %v495
        %v1594 = vunpack.c.l.b16 %v496
        %v1595 = vunpack.c.h.b16 %v496
        %v1596 = vunpack.c.l.b16 %v497
        %v1597 = vunpack.c.h.b16 %v497
        %v1598 = vunpack.c.l.b16 %v498
        %v1599 = vunpack.c.h.b16 %v498
        %v1600 = vunpack.c.l.b16 %v499
        %v1601 = vunpack.c.h.b16 %v499
        %v1602 = vunpack.c.l.b16 %v500
        %v1603 = vunpack.c.h.b16 %v500
        %v1604 = vunpack.c.l.b16 %v501
        %v1605 = vunpack.c.h.b16 %v501
        %v1606 = vunpack.c.l.b16 %v502
        %v1607 = vunpack.c.h.b16 %v502
        %v1608 = vunpack.c.l.b16 %v503
        %v1609 = vunpack.c.h.b16 %v503
        %v1610 = vunpack.c.l.b16 %v504
        %v1611 = vunpack.c.h.b16 %v504
        %v1612 = vunpack.c.l.b16 %v505
        %v1613 = vunpack.c.h.b16 %v505
        %v1614 = vunpack.c.l.b16 %v506
        %v1615 = vunpack.c.h.b16 %v506
        %v1616 = vunpack.c.l.b16 %v507
        %v1617 = vunpack.c.h.b16 %v507
        %v1618 = vunpack.c.l.b16 %v508
        %v1619 = vunpack.c.h.b16 %v508
        %v1620 = vunpack.c.l.b16 %v509
        %v1621 = vunpack.c.h.b16 %v509
        %v1622 = vunpack.c.l.b16 %v510
        %v1623 = vunpack.c.h.b16 %v510
        %v1624 = vunpack.c.l.b16 %v511
        %v1625 = vunpack.c.h.b16 %v511
        %v1626 = vunpack.c.l.b16 %v512
        %v1627 = vunpack.c.h.b16 %v512
        %v1628 = vunpack.c.l.b16 %v513
        %v1629 = vunpack.c.h.b16 %v513
        %v1630 = vunpack.c.l.b16 %v514
        %v1631 = vunpack.c.h.b16 %v514
        %v1632 = vunpack.c.l.b16 %v515
        %v1633 = vunpack.c.h.b16 %v515
        %v1634 = vunpack.c.l.b16 %v516
        %v1635 = vunpack.c.h.b16 %v516
        %v1636 = vunpack.c.l.b16 %v517
        %v1637 = vunpack.c.h.b16 %v517
        %v1638 = vunpack.c.l.b16 %v518
        %v1639 = vunpack.c.h.b16 %v518
        %v1640 = vunpack.c.l.b16 %v519
        %v1641 = vunpack.c.h.b16 %v519
        %v1642 = vunpack.c.l.b16 %v520
        %v1643 = vunpack.c.h.b16 %v520
        %v1644 = vunpack.c.l.b16 %v521
        %v1645 = vunpack.c.h.b16 %v521
        %v1646 = vunpack.c.l.b16 %v522
        %v1647 = vunpack.c.h.b16 %v522
        %v1648 = vunpack.c.l.b16 %v523
        %v1649 = vunpack.c.h.b16 %v523
        %v1650 = vunpack.c.l.b16 %v524
        %v1651 = vunpack.c.h.b16 %v524
        %v1652 = vunpack.c.l.b16 %v525
        %v1653 = vunpack.c.h.b16 %v525
        %v1654 = vunpack.c.l.b16 %v526
        %v1655 = vunpack.c.h.b16 %v526
        %v1656 = vunpack.c.l.b16 %v527
        %v1657 = vunpack.c.h.b16 %v527
        %v1658 = vunpack.c.l.b16 %v528
        %v1659 = vunpack.c.h.b16 %v528
        %v1660 = vunpack.c.l.b16 %v529
        %v1661 = vunpack.c.h.b16 %v529
        %v1662 = vunpack.c.l.b16 %v530
        %v1663 = vunpack.c.h.b16 %v530
        %v1664 = vunpack.c.l.b16 %v531
        %v1665 = vunpack.c.h.b16 %v531
        %v1666 = vunpack.c.l.b16 %v532
        %v1667 = vunpack.c.h.b16 %v532
        %v1668 = vunpack.c.l.b16 %v533
        %v1669 = vunpack.c.h.b16 %v533
        %v1670 = vunpack.c.l.b16 %v534
        %v1671 = vunpack.c.h.b16 %v534
        %v1672 = vunpack.c.l.b16 %v535
        %v1673 = vunpack.c.h.b16 %v535
        %v1674 = vunpack.c.l.b16 %v536
        %v1675 = vunpack.c.h.b16 %v536
        %v1676 = vunpack.c.l.b16 %v537
        %v1677 = vunpack.c.h.b16 %v537
        %v1678 = vunpack.c.l.b16 %v538
        %v1679 = vunpack.c.h.b16 %v538
        %v1680 = vunpack.c.l.b16 %v539
        %v1681 = vunpack.c.h.b16 %v539
        %v1682 = vunpack.c.l.b16 %v540
        %v1683 = vunpack.c.h.b16 %v540
        %v1684 = vunpack.c.l.b16 %v541
        %v1685 = vunpack.c.h.b16 %v541
        %v1686 = vunpack.c.l.b16 %v542
        %v1687 = vunpack.c.h.b16 %v542
        %v1688 = vunpack.c.l.b16 %v543
        %v1689 = vunpack.c.h.b16 %v543
        %v1690 = vunpack.c.l.b16 %v544
        %v1691 = vunpack.c.h.b16 %v544
        %v1692 = vunpack.c.l.b16 %v545
        %v1693 = vunpack.c.h.b16 %v545
        %v1694 = vunpack.c.l.b16 %v546
        %v1695 = vunpack.c.h.b16 %v546
        %v1696 = vunpack.c.l.b16 %v547
        %v1697 = vunpack.c.h.b16 %v547
        %v1698 = vunpack.c.l.b16 %v548
        %v1699 = vunpack.c.h.b16 %v548
        %v1700 = vunpack.c.l.b16 %v549
        %v1701 = vunpack.c.h.b16 %v549
        %v1702 = vunpack.c.l.b16 %v550
        %v1703 = vunpack.c.h.b16 %v550
        %v1704 = vunpack.c.l.b16 %v551
        %v1705 = vunpack.c.h.b16 %v551
        %v1706 = vunpack.c.l.b16 %v552
        %v1707 = vunpack.c.h.b16 %v552
        %v1708 = vunpack.c.l.b16 %v553
        %v1709 = vunpack.c.h.b16 %v553
        %v1710 = vunpack.c.l.b16 %v554
        %v1711 = vunpack.c.h.b16 %v554
        %v1712 = vunpack.c.l.b16 %v555
        %v1713 = vunpack.c.h.b16 %v555
        %v1714 = vunpack.c.l.b16 %v556
        %v1715 = vunpack.c.h.b16 %v556
        %v1716 = vunpack.c.l.b16 %v557
        %v1717 = vunpack.c.h.b16 %v557
        %v1718 = vunpack.c.l.b16 %v558
        %v1719 = vunpack.c.h.b16 %v558
        %v1720 = vunpack.c.l.b16 %v559
        %v1721 = vunpack.c.h.b16 %v559
        %v1722 = vunpack.c.l.b16 %v560
        %v1723 = vunpack.c.h.b16 %v560
        %v1724 = vunpack.c.l.b16 %v561
        %v1725 = vunpack.c.h.b16 %v561
        %v1726 = vunpack.c.l.b16 %v562
        %v1727 = vunpack.c.h.b16 %v562
        %v1728 = vunpack.c.l.b16 %v563
        %v1729 = vunpack.c.h.b16 %v563
        %v1730 = vunpack.c.l.b16 %v564
        %v1731 = vunpack.c.h.b16 %v564
        %v1732 = vunpack.c.l.b16 %v565
        %v1733 = vunpack.c.h.b16 %v565
        %v1734 = vunpack.c.l.b16 %v566
        %v1735 = vunpack.c.h.b16 %v566
        %v1736 = vunpack.c.l.b16 %v567
        %v1737 = vunpack.c.h.b16 %v567
        %v1738 = vunpack.c.l.b16 %v568
        %v1739 = vunpack.c.h.b16 %v568
        %v1740 = vunpack.c.l.b16 %v569
        %v1741 = vunpack.c.h.b16 %v569
        %v1742 = vunpack.c.l.b16 %v570
        %v1743 = vunpack.c.h.b16 %v570
        %v1744 = vunpack.c.l.b16 %v571
        %v1745 = vunpack.c.h.b16 %v571
        %v1746 = vunpack.c.l.b16 %v572
        %v1747 = vunpack.c.h.b16 %v572
        %v1748 = vunpack.c.l.b16 %v573
        %v1749 = vunpack.c.h.b16 %v573
        %v1750 = vunpack.c.l.b16 %v574
        %v1751 = vunpack.c.h.b16 %v574
        %v1752 = vunpack.c.l.b16 %v575
        %v1753 = vunpack.c.h.b16 %v575
        %v1754 = vunpack.c.l.b16 %v576
        %v1755 = vunpack.c.h.b16 %v576
        %v1756 = vunpack.c.l.b16 %v577
        %v1757 = vunpack.c.h.b16 %v577
        %v1758 = vunpack.c.l.b16 %v578
        %v1759 = vunpack.c.h.b16 %v578
        %v1760 = vunpack.c.l.b16 %v579
        %v1761 = vunpack.c.h.b16 %v579
        %v1762 = vunpack.c.l.b16 %v580
        %v1763 = vunpack.c.h.b16 %v580
        %v1764 = vunpack.c.l.b16 %v581
        %v1765 = vunpack.c.h.b16 %v581
        %v1766 = vpack.c.b16 %v1202, %v1190
        %v1767 = vpack.c.b16 %v1203, %v1191
        %v1768 = vpack.c.b16 %v1204, %v1192
        %v1769 = vpack.c.b16 %v1205, %v1193
        %v1770 = vpack.c.b16 %v1206, %v1194
        %v1771 = vpack.c.b16 %v1207, %v1195
        %v1772 = vpack.c.b16 %v1208, %v1196
        %v1773 = vpack.c.b16 %v1209, %v1197
        %v1774 = vpack.c.b16 %v1210, %v1198
        %v1775 = vpack.c.b16 %v1211, %v1199
        %v1776 = vpack.c.b16 %v1212, %v1200
        %v1777 = vpack.c.b16 %v1213, %v1201
        %v1778 = vpack.c.b16 %v1226, %v1214
        %v1779 = vpack.c.b16 %v1227, %v1215
        %v1780 = vpack.c.b16 %v1228, %v1216
        %v1781 = vpack.c.b16 %v1229, %v1217
        %v1782 = vpack.c.b16 %v1230, %v1218
        %v1783 = vpack.c.b16 %v1231, %v1219
        %v1784 = vpack.c.b16 %v1232, %v1220
        %v1785 = vpack.c.b16 %v1233, %v1221
        %v1786 = vpack.c.b16 %v1234, %v1222
        %v1787 = vpack.c.b16 %v1235, %v1223
        %v1788 = vpack.c.b16 %v1236, %v1224
        %v1789 = vpack.c.b16 %v1237, %v1225
        %v1790 = vpack.c.b16 %v1250, %v1238
        %v1791 = vpack.c.b16 %v1251, %v1239
        %v1792 = vpack.c.b16 %v1252, %v1240
        %v1793 = vpack.c.b16 %v1253, %v1241
        %v1794 = vpack.c.b16 %v1254, %v1242
        %v1795 = vpack.c.b16 %v1255, %v1243
        %v1796 = vpack.c.b16 %v1256, %v1244
        %v1797 = vpack.c.b16 %v1257, %v1245
        %v1798 = vpack.c.b16 %v1258, %v1246
        %v1799 = vpack.c.b16 %v1259, %v1247
        %v1800 = vpack.c.b16 %v1260, %v1248
        %v1801 = vpack.c.b16 %v1261, %v1249
        %v1802 = vpack.c.b16 %v1274, %v1262
        %v1803 = vpack.c.b16 %v1275, %v1263
        %v1804 = vpack.c.b16 %v1276, %v1264
        %v1805 = vpack.c.b16 %v1277, %v1265
        %v1806 = vpack.c.b16 %v1278, %v1266
        %v1807 = vpack.c.b16 %v1279, %v1267
        %v1808 = vpack.c.b16 %v1280, %v1268
        %v1809 = vpack.c.b16 %v1281, %v1269
        %v1810 = vpack.c.b16 %v1282, %v1270
        %v1811 = vpack.c.b16 %v1283, %v1271
        %v1812 = vpack.c.b16 %v1284, %v1272
        %v1813 = vpack.c.b16 %v1285, %v1273
        %v1814 = vpack.c.b16 %v1298, %v1286
        %v1815 = vpack.c.b16 %v1299, %v1287
        %v1816 = vpack.c.b16 %v1300, %v1288
        %v1817 = vpack.c.b16 %v1301, %v1289
        %v1818 = vpack.c.b16 %v1302, %v1290
        %v1819 = vpack.c.b16 %v1303, %v1291
        %v1820 = vpack.c.b16 %v1304, %v1292
        %v1821 = vpack.c.b16 %v1305, %v1293
        %v1822 = vpack.c.b16 %v1306, %v1294
        %v1823 = vpack.c.b16 %v1307, %v1295
        %v1824 = vpack.c.b16 %v1308, %v1296
        %v1825 = vpack.c.b16 %v1309, %v1297
        %v1826 = vpack.c.b16 %v1322, %v1310
        %v1827 = vpack.c.b16 %v1323, %v1311
        %v1828 = vpack.c.b16 %v1324, %v1312
        %v1829 = vpack.c.b16 %v1325, %v1313
        %v1830 = vpack.c.b16 %v1326, %v1314
        %v1831 = vpack.c.b16 %v1327, %v1315
        %v1832 = vpack.c.b16 %v1328, %v1316
        %v1833 = vpack.c.b16 %v1329, %v1317
        %v1834 = vpack.c.b16 %v1330, %v1318
        %v1835 = vpack.c.b16 %v1331, %v1319
        %v1836 = vpack.c.b16 %v1332, %v1320
        %v1837 = vpack.c.b16 %v1333, %v1321
        %v1838 = vpack.c.b16 %v1346, %v1334
        %v1839 = vpack.c.b16 %v1347, %v1335
        %v1840 = vpack.c.b16 %v1348, %v1336
        %v1841 = vpack.c.b16 %v1349, %v1337
        %v1842 = vpack.c.b16 %v1350, %v1338
        %v1843 = vpack.c.b16 %v1351, %v1339
        %v1844 = vpack.c.b16 %v1352, %v1340
        %v1845 = vpack.c.b16 %v1353, %v1341
        %v1846 = vpack.c.b16 %v1354, %v1342
        %v1847 = vpack.c.b16 %v1355, %v1343
        %v1848 = vpack.c.b16 %v1356, %v1344
        %v1849 = vpack.c.b16 %v1357, %v1345
        %v1850 = vpack.c.b16 %v1370, %v1358
        %v1851 = vpack.c.b16 %v1371, %v1359
        %v1852 = vpack.c.b16 %v1372, %v1360
        %v1853 = vpack.c.b16 %v1373, %v1361
        %v1854 = vpack.c.b16 %v1374, %v1362
        %v1855 = vpack.c.b16 %v1375, %v1363
        %v1856 = vpack.c.b16 %v1376, %v1364
        %v1857 = vpack.c.b16 %v1377, %v1365
        %v1858 = vpack.c.b16 %v1378, %v1366
        %v1859 = vpack.c.b16 %v1379, %v1367
        %v1860 = vpack.c.b16 %v1380, %v1368
        %v1861 = vpack.c.b16 %v1381, %v1369
        %v1862 = vpack.c.b16 %v1394, %v1382
        %v1863 = vpack.c.b16 %v1395, %v1383
        %v1864 = vpack.c.b16 %v1396, %v1384
        %v1865 = vpack.c.b16 %v1397, %v1385
        %v1866 = vpack.c.b16 %v1398, %v1386
        %v1867 = vpack.c.b16 %v1399, %v1387
        %v1868 = vpack.c.b16 %v1400, %v1388
        %v1869 = vpack.c.b16 %v1401, %v1389
        %v1870 = vpack.c.b16 %v1402, %v1390
        %v1871 = vpack.c.b16 %v1403, %v1391
        %v1872 = vpack.c.b16 %v1404, %v1392
        %v1873 = vpack.c.b16 %v1405, %v1393
        %v1874 = vpack.c.b16 %v1418, %v1406
        %v1875 = vpack.c.b16 %v1419, %v1407
        %v1876 = vpack.c.b16 %v1420, %v1408
        %v1877 = vpack.c.b16 %v1421, %v1409
        %v1878 = vpack.c.b16 %v1422, %v1410
        %v1879 = vpack.c.b16 %v1423, %v1411
        %v1880 = vpack.c.b16 %v1424, %v1412
        %v1881 = vpack.c.b16 %v1425, %v1413
        %v1882 = vpack.c.b16 %v1426, %v1414
        %v1883 = vpack.c.b16 %v1427, %v1415
        %v1884 = vpack.c.b16 %v1428, %v1416
        %v1885 = vpack.c.b16 %v1429, %v1417
        %v1886 = vpack.c.b16 %v1442, %v1430
        %v1887 = vpack.c.b16 %v1443, %v1431
        %v1888 = vpack.c.b16 %v1444, %v1432
        %v1889 = vpack.c.b16 %v1445, %v1433
        %v1890 = vpack.c.b16 %v1446, %v1434
        %v1891 = vpack.c.b16 %v1447, %v1435
        %v1892 = vpack.c.b16 %v1448, %v1436
        %v1893 = vpack.c.b16 %v1449, %v1437
        %v1894 = vpack.c.b16 %v1450, %v1438
        %v1895 = vpack.c.b16 %v1451, %v1439
        %v1896 = vpack.c.b16 %v1452, %v1440
        %v1897 = vpack.c.b16 %v1453, %v1441
        %v1898 = vpack.c.b16 %v1466, %v1454
        %v1899 = vpack.c.b16 %v1467, %v1455
        %v1900 = vpack.c.b16 %v1468, %v1456
        %v1901 = vpack.c.b16 %v1469, %v1457
        %v1902 = vpack.c.b16 %v1470, %v1458
        %v1903 = vpack.c.b16 %v1471, %v1459
        %v1904 = vpack.c.b16 %v1472, %v1460
        %v1905 = vpack.c.b16 %v1473, %v1461
        %v1906 = vpack.c.b16 %v1474, %v1462
        %v1907 = vpack.c.b16 %v1475, %v1463
        %v1908 = vpack.c.b16 %v1476, %v1464
        %v1909 = vpack.c.b16 %v1477, %v1465
        %v1910 = vpack.c.b16 %v1490, %v1478
        %v1911 = vpack.c.b16 %v1491, %v1479
        %v1912 = vpack.c.b16 %v1492, %v1480
        %v1913 = vpack.c.b16 %v1493, %v1481
        %v1914 = vpack.c.b16 %v1494, %v1482
        %v1915 = vpack.c.b16 %v1495, %v1483
        %v1916 = vpack.c.b16 %v1496, %v1484
        %v1917 = vpack.c.b16 %v1497, %v1485
        %v1918 = vpack.c.b16 %v1498, %v1486
        %v1919 = vpack.c.b16 %v1499, %v1487
        %v1920 = vpack.c.b16 %v1500, %v1488
        %v1921 = vpack.c.b16 %v1501, %v1489
        %v1922 = vpack.c.b16 %v1514, %v1502
        %v1923 = vpack.c.b16 %v1515, %v1503
        %v1924 = vpack.c.b16 %v1516, %v1504
        %v1925 = vpack.c.b16 %v1517, %v1505
        %v1926 = vpack.c.b16 %v1518, %v1506
        %v1927 = vpack.c.b16 %v1519, %v1507
        %v1928 = vpack.c.b16 %v1520, %v1508
        %v1929 = vpack.c.b16 %v1521, %v1509
        %v1930 = vpack.c.b16 %v1522, %v1510
        %v1931 = vpack.c.b16 %v1523, %v1511
        %v1932 = vpack.c.b16 %v1524, %v1512
        %v1933 = vpack.c.b16 %v1525, %v1513
        %v1934 = vpack.c.b16 %v1538, %v1526
        %v1935 = vpack.c.b16 %v1539, %v1527
        %v1936 = vpack.c.b16 %v1540, %v1528
        %v1937 = vpack.c.b16 %v1541, %v1529
        %v1938 = vpack.c.b16 %v1542, %v1530
        %v1939 = vpack.c.b16 %v1543, %v1531
        %v1940 = vpack.c.b16 %v1544, %v1532
        %v1941 = vpack.c.b16 %v1545, %v1533
        %v1942 = vpack.c.b16 %v1546, %v1534
        %v1943 = vpack.c.b16 %v1547, %v1535
        %v1944 = vpack.c.b16 %v1548, %v1536
        %v1945 = vpack.c.b16 %v1549, %v1537
        %v1946 = vpack.c.b16 %v1562, %v1550
        %v1947 = vpack.c.b16 %v1563, %v1551
        %v1948 = vpack.c.b16 %v1564, %v1552
        %v1949 = vpack.c.b16 %v1565, %v1553
        %v1950 = vpack.c.b16 %v1566, %v1554
        %v1951 = vpack.c.b16 %v1567, %v1555
        %v1952 = vpack.c.b16 %v1568, %v1556
        %v1953 = vpack.c.b16 %v1569, %v1557
        %v1954 = vpack.c.b16 %v1570, %v1558
        %v1955 = vpack.c.b16 %v1571, %v1559
        %v1956 = vpack.c.b16 %v1572, %v1560
        %v1957 = vpack.c.b16 %v1573, %v1561
        %v1958 = vpack.c.b16 %v1586, %v1574
        %v1959 = vpack.c.b16 %v1587, %v1575
        %v1960 = vpack.c.b16 %v1588, %v1576
        %v1961 = vpack.c.b16 %v1589, %v1577
        %v1962 = vpack.c.b16 %v1590, %v1578
        %v1963 = vpack.c.b16 %v1591, %v1579
        %v1964 = vpack.c.b16 %v1592, %v1580
        %v1965 = vpack.c.b16 %v1593, %v1581
        %v1966 = vpack.c.b16 %v1594, %v1582
        %v1967 = vpack.c.b16 %v1595, %v1583
        %v1968 = vpack.c.b16 %v1596, %v1584
        %v1969 = vpack.c.b16 %v1597, %v1585
        %v1970 = vpack.c.b16 %v1610, %v1598
        %v1971 = vpack.c.b16 %v1611, %v1599
        %v1972 = vpack.c.b16 %v1612, %v1600
        %v1973 = vpack.c.b16 %v1613, %v1601
        %v1974 = vpack.c.b16 %v1614, %v1602
        %v1975 = vpack.c.b16 %v1615, %v1603
        %v1976 = vpack.c.b16 %v1616, %v1604
        %v1977 = vpack.c.b16 %v1617, %v1605
        %v1978 = vpack.c.b16 %v1618, %v1606
        %v1979 = vpack.c.b16 %v1619, %v1607
        %v1980 = vpack.c.b16 %v1620, %v1608
        %v1981 = vpack.c.b16 %v1621, %v1609
        %v1982 = vpack.c.b16 %v1634, %v1622
        %v1983 = vpack.c.b16 %v1635, %v1623
        %v1984 = vpack.c.b16 %v1636, %v1624
        %v1985 = vpack.c.b16 %v1637, %v1625
        %v1986 = vpack.c.b16 %v1638, %v1626
        %v1987 = vpack.c.b16 %v1639, %v1627
        %v1988 = vpack.c.b16 %v1640, %v1628
        %v1989 = vpack.c.b16 %v1641, %v1629
        %v1990 = vpack.c.b16 %v1642, %v1630
        %v1991 = vpack.c.b16 %v1643, %v1631
        %v1992 = vpack.c.b16 %v1644, %v1632
        %v1993 = vpack.c.b16 %v1645, %v1633
        %v1994 = vpack.c.b16 %v1658, %v1646
        %v1995 = vpack.c.b16 %v1659, %v1647
        %v1996 = vpack.c.b16 %v1660, %v1648
        %v1997 = vpack.c.b16 %v1661, %v1649
        %v1998 = vpack.c.b16 %v1662, %v1650
        %v1999 = vpack.c.b16 %v1663, %v1651
        %v2000 = vpack.c.b16 %v1664, %v1652
        %v2001 = vpack.c.b16 %v1665, %v1653
        %v2002 = vpack.c.b16 %v1666, %v1654
        %v2003 = vpack.c.b16 %v1667, %v1655
        %v2004 = vpack.c.b16 %v1668, %v1656
        %v2005 = vpack.c.b16 %v1669, %v1657
        %v2006 = vpack.c.b16 %v1682, %v1670
        %v2007 = vpack.c.b16 %v1683, %v1671
        %v2008 = vpack.c.b16 %v1684, %v1672
        %v2009 = vpack.c.b16 %v1685, %v1673
        %v2010 = vpack.c.b16 %v1686, %v1674
        %v2011 = vpack.c.b16 %v1687, %v1675
        %v2012 = vpack.c.b16 %v1688, %v1676
        %v2013 = vpack.c.b16 %v1689, %v1677
        %v2014 = vpack.c.b16 %v1690, %v1678
        %v2015 = vpack.c.b16 %v1691, %v1679
        %v2016 = vpack.c.b16 %v1692, %v1680
        %v2017 = vpack.c.b16 %v1693, %v1681
        %v2018 = vpack.c.b16 %v1706, %v1694
        %v2019 = vpack.c.b16 %v1707, %v1695
        %v2020 = vpack.c.b16 %v1708, %v1696
        %v2021 = vpack.c.b16 %v1709, %v1697
        %v2022 = vpack.c.b16 %v1710, %v1698
        %v2023 = vpack.c.b16 %v1711, %v1699
        %v2024 = vpack.c.b16 %v1712, %v1700
        %v2025 = vpack.c.b16 %v1713, %v1701
        %v2026 = vpack.c.b16 %v1714, %v1702
        %v2027 = vpack.c.b16 %v1715, %v1703
        %v2028 = vpack.c.b16 %v1716, %v1704
        %v2029 = vpack.c.b16 %v1717, %v1705
        %v2030 = vpack.c.b16 %v1730, %v1718
        %v2031 = vpack.c.b16 %v1731, %v1719
        %v2032 = vpack.c.b16 %v1732, %v1720
        %v2033 = vpack.c.b16 %v1733, %v1721
        %v2034 = vpack.c.b16 %v1734, %v1722
        %v2035 = vpack.c.b16 %v1735, %v1723
        %v2036 = vpack.c.b16 %v1736, %v1724
        %v2037 = vpack.c.b16 %v1737, %v1725
        %v2038 = vpack.c.b16 %v1738, %v1726
        %v2039 = vpack.c.b16 %v1739, %v1727
        %v2040 = vpack.c.b16 %v1740, %v1728
        %v2041 = vpack.c.b16 %v1741, %v1729
        %v2042 = vpack.c.b16 %v1754, %v1742
        %v2043 = vpack.c.b16 %v1755, %v1743
        %v2044 = vpack.c.b16 %v1756, %v1744
        %v2045 = vpack.c.b16 %v1757, %v1745
        %v2046 = vpack.c.b16 %v1758, %v1746
        %v2047 = vpack.c.b16 %v1759, %v1747
        %v2048 = vpack.c.b16 %v1760, %v1748
        %v2049 = vpack.c.b16 %v1761, %v1749
        %v2050 = vpack.c.b16 %v1762, %v1750
        %v2051 = vpack.c.b16 %v1763, %v1751
        %v2052 = vpack.c.b16 %v1764, %v1752
        %v2053 = vpack.c.b16 %v1765, %v1753
        %2342 = vmatprep.subr.bf16.mxu0 %v1767
        %2343 = vmatpush1.bf16.msra.mxu0 %v1766
        %2344 = vmatprep.subr.bf16.mxu0 %v1779
        %2345 = vmatpush1.bf16.msra.mxu0 %v1778
        %2346 = vmatprep.subr.bf16.mxu0 %v1791
        %2347 = vmatpush1.bf16.msra.mxu0 %v1790
        %2348 = vmatprep.subr.bf16.mxu0 %v1803
        %2349 = vmatpush1.bf16.msra.mxu0 %v1802
        %2350 = vmatprep.subr.bf16.mxu0 %v1815
        %2351 = vmatpush1.bf16.msra.mxu0 %v1814
        %2352 = vmatprep.subr.bf16.mxu0 %v1827
        %2353 = vmatpush1.bf16.msra.mxu0 %v1826
        %2354 = vmatprep.subr.bf16.mxu0 %v1839
        %2355 = vmatpush1.bf16.msra.mxu0 %v1838
        %2356 = vmatprep.subr.bf16.mxu0 %v1851
        %2357 = vmatpush1.bf16.msra.mxu0 %v1850
        %2358 = vmatprep.subr.bf16.mxu0 %v1863
        %2359 = vmatpush1.bf16.msra.mxu0 %v1862
        %2360 = vmatprep.subr.bf16.mxu0 %v1875
        %2361 = vmatpush1.bf16.msra.mxu0 %v1874
        %2362 = vmatprep.subr.bf16.mxu0 %v1887
        %2363 = vmatpush1.bf16.msra.mxu0 %v1886
        %2364 = vmatprep.subr.bf16.mxu0 %v1899
        %2365 = vmatpush1.bf16.msra.mxu0 %v1898
        %2366 = vmatprep.subr.bf16.mxu0 %v1911
        %2367 = vmatpush1.bf16.msra.mxu0 %v1910
        %2368 = vmatprep.subr.bf16.mxu0 %v1923
        %2369 = vmatpush1.bf16.msra.mxu0 %v1922
        %2370 = vmatprep.subr.bf16.mxu0 %v1935
        %2371 = vmatpush1.bf16.msra.mxu0 %v1934
        %2372 = vmatprep.subr.bf16.mxu0 %v1947
        %2373 = vmatpush1.bf16.msra.mxu0 %v1946
        %2374 = vmatprep.mubr.bf16.mxu0 %v807
        %2375 = vmatmul.mubr.bf16.gmra.mrb[0].mxu0 %v806
        %v2376 = vpop.f32.mrb[0].mxu0
        %v2377 = vadd.f32 %v589, %v2376
        %v2378 = vpop.f32.mrb[0].mxu0
        %v2379 = vadd.f32 %v593, %v2378
        %v2380 = vpop.f32.mrb[0].mxu0
        %v2381 = vadd.f32 %v589, %v2380
        %v2382 = vpop.f32.mrb[0].mxu0
        %v2383 = vadd.f32 %v593, %v2382
        %2384 = vmatprep.mubr.bf16.mxu0 %v810
        %2385 = vmatmul.mubr.bf16.gmra.mrb[0].mxu0 %v809
        %v2386 = vpop.f32.mrb[0].mxu0
        %v2387 = vadd.f32 %v589, %v2386
        %v2388 = vpop.f32.mrb[0].mxu0
        %v2389 = vadd.f32 %v593, %v2388
        %v2390 = vpop.f32.mrb[0].mxu0
        %v2391 = vadd.f32 %v589, %v2390
        %v2392 = vpop.f32.mrb[0].mxu0
        %v2393 = vadd.f32 %v593, %v2392
        %2394 = vmatprep.mubr.bf16.mxu0 %v813
        %2395 = vmatmul.mubr.bf16.gmra.mrb[0].mxu0 %v812
        %v2396 = vpop.f32.mrb[0].mxu0
        %v2397 = vadd.f32 %v589, %v2396
        %v2398 = vpop.f32.mrb[0].mxu0
        %v2399 = vadd.f32 %v593, %v2398
        %v2400 = vpop.f32.mrb[0].mxu0
        %v2401 = vadd.f32 %v589, %v2400
        %v2402 = vpop.f32.mrb[0].mxu0
        %v2403 = vadd.f32 %v593, %v2402
        %2404 = vmatprep.mubr.bf16.mxu0 %v816
        %2405 = vmatmul.mubr.bf16.gmra.mrb[0].mxu0 %v815
        %v2406 = vpop.f32.mrb[0].mxu0
        %v2407 = vadd.f32 %v589, %v2406
        %v2408 = vpop.f32.mrb[0].mxu0
        %v2409 = vadd.f32 %v593, %v2408
        %v2410 = vpop.f32.mrb[0].mxu0
        %v2411 = vadd.f32 %v589, %v2410
        %v2412 = vpop.f32.mrb[0].mxu0
        %v2413 = vadd.f32 %v593, %v2412
        %2414 = vmatprep.mubr.bf16.mxu0 %v819
        %2415 = vmatmul.mubr.bf16.gmra.mrb[0].mxu0 %v818
        %v2416 = vpop.f32.mrb[0].mxu0
        %v2417 = vadd.f32 %v589, %v2416
        %v2418 = vpop.f32.mrb[0].mxu0
        %v2419 = vadd.f32 %v593, %v2418
        %v2420 = vpop.f32.mrb[0].mxu0
        %v2421 = vadd.f32 %v589, %v2420
        %v2422 = vpop.f32.mrb[0].mxu0
        %v2423 = vadd.f32 %v593, %v2422
        %2424 = vmatprep.mubr.bf16.mxu0 %v822
        %2425 = vmatmul.mubr.bf16.gmra.mrb[0].mxu0 %v821
        %v2426 = vpop.f32.mrb[0].mxu0
        %v2427 = vadd.f32 %v589, %v2426
        %v2428 = vpop.f32.mrb[0].mxu0
        %v2429 = vadd.f32 %v593, %v2428
        %v2430 = vpop.f32.mrb[0].mxu0
        %v2431 = vadd.f32 %v589, %v2430
        %v2432 = vpop.f32.mrb[0].mxu0
        %v2433 = vadd.f32 %v593, %v2432
        %2434 = vmatprep.mubr.bf16.mxu0 %v825
        %2435 = vmatmul.mubr.bf16.gmra.mrb[0].mxu0 %v824
        %v2436 = vpop.f32.mrb[0].mxu0
        %v2437 = vadd.f32 %v589, %v2436
        %v2438 = vpop.f32.mrb[0].mxu0
        %v2439 = vadd.f32 %v593, %v2438
        %v2440 = vpop.f32.mrb[0].mxu0
        %v2441 = vadd.f32 %v589, %v2440
        %v2442 = vpop.f32.mrb[0].mxu0
        %v2443 = vadd.f32 %v593, %v2442
        %2444 = vmatprep.mubr.bf16.mxu0 %v828
        %2445 = vmatmul.mubr.bf16.gmra.mrb[0].mxu0 %v827
        %v2446 = vpop.f32.mrb[0].mxu0
        %v2447 = vadd.f32 %v589, %v2446
        %v2448 = vpop.f32.mrb[0].mxu0
        %v2449 = vadd.f32 %v593, %v2448
        %v2450 = vpop.f32.mrb[0].mxu0
        %v2451 = vadd.f32 %v589, %v2450
        %v2452 = vpop.f32.mrb[0].mxu0
        %v2453 = vadd.f32 %v593, %v2452
        %2454 = vmatprep.mubr.bf16.mxu0 %v831
        %2455 = vmatmul.mubr.bf16.gmra.mrb[0].mxu0 %v830
        %v2456 = vpop.f32.mrb[0].mxu0
        %v2457 = vadd.f32 %v589, %v2456
        %v2458 = vpop.f32.mrb[0].mxu0
        %v2459 = vadd.f32 %v593, %v2458
        %v2460 = vpop.f32.mrb[0].mxu0
        %v2461 = vadd.f32 %v589, %v2460
        %v2462 = vpop.f32.mrb[0].mxu0
        %v2463 = vadd.f32 %v593, %v2462
        %2464 = vmatprep.mubr.bf16.mxu0 %v834
        %2465 = vmatmul.mubr.bf16.gmra.mrb[0].mxu0 %v833
        %v2466 = vpop.f32.mrb[0].mxu0
        %v2467 = vadd.f32 %v589, %v2466
        %v2468 = vpop.f32.mrb[0].mxu0
        %v2469 = vadd.f32 %v593, %v2468
        %v2470 = vpop.f32.mrb[0].mxu0
        %v2471 = vadd.f32 %v589, %v2470
        %v2472 = vpop.f32.mrb[0].mxu0
        %v2473 = vadd.f32 %v593, %v2472
        %2474 = vmatprep.mubr.bf16.mxu0 %v837
        %2475 = vmatmul.mubr.bf16.gmra.mrb[0].mxu0 %v836
        %v2476 = vpop.f32.mrb[0].mxu0
        %v2477 = vadd.f32 %v589, %v2476
        %v2478 = vpop.f32.mrb[0].mxu0
        %v2479 = vadd.f32 %v593, %v2478
        %v2480 = vpop.f32.mrb[0].mxu0
        %v2481 = vadd.f32 %v589, %v2480
        %v2482 = vpop.f32.mrb[0].mxu0
        %v2483 = vadd.f32 %v593, %v2482
        %2484 = vmatprep.mubr.bf16.mxu0 %v840
        %2485 = vmatmul.mubr.bf16.gmra.mrb[0].mxu0 %v839
        %v2486 = vpop.f32.mrb[0].mxu0
        %v2487 = vadd.f32 %v589, %v2486
        %v2488 = vpop.f32.mrb[0].mxu0
        %v2489 = vadd.f32 %v593, %v2488
        %v2490 = vpop.f32.mrb[0].mxu0
        %v2491 = vadd.f32 %v589, %v2490
        %v2492 = vpop.f32.mrb[0].mxu0
        %v2493 = vadd.f32 %v593, %v2492
        %2494 = vmatprep.mubr.bf16.mxu0 %v843
        %2495 = vmatmul.mubr.bf16.gmra.mrb[0].mxu0 %v842
        %v2496 = vpop.f32.mrb[0].mxu0
        %v2497 = vadd.f32 %v589, %v2496
        %v2498 = vpop.f32.mrb[0].mxu0
        %v2499 = vadd.f32 %v593, %v2498
        %v2500 = vpop.f32.mrb[0].mxu0
        %v2501 = vadd.f32 %v589, %v2500
        %v2502 = vpop.f32.mrb[0].mxu0
        %v2503 = vadd.f32 %v593, %v2502
        %2504 = vmatprep.mubr.bf16.mxu0 %v846
        %2505 = vmatmul.mubr.bf16.gmra.mrb[0].mxu0 %v845
        %v2506 = vpop.f32.mrb[0].mxu0
        %v2507 = vadd.f32 %v589, %v2506
        %v2508 = vpop.f32.mrb[0].mxu0
        %v2509 = vadd.f32 %v593, %v2508
        %v2510 = vpop.f32.mrb[0].mxu0
        %v2511 = vadd.f32 %v589, %v2510
        %v2512 = vpop.f32.mrb[0].mxu0
        %v2513 = vadd.f32 %v593, %v2512
        %2514 = vmatprep.mubr.bf16.mxu0 %v849
        %2515 = vmatmul.mubr.bf16.gmra.mrb[0].mxu0 %v848
        %v2516 = vpop.f32.mrb[0].mxu0
        %v2517 = vadd.f32 %v589, %v2516
        %v2518 = vpop.f32.mrb[0].mxu0
        %v2519 = vadd.f32 %v593, %v2518
        %v2520 = vpop.f32.mrb[0].mxu0
        %v2521 = vadd.f32 %v589, %v2520
        %v2522 = vpop.f32.mrb[0].mxu0
        %v2523 = vadd.f32 %v593, %v2522
        %2524 = vmatprep.mubr.bf16.mxu0 %v852
        %2525 = vmatmul.mubr.bf16.gmra.mrb[0].mxu0 %v851
        %v2526 = vpop.f32.mrb[0].mxu0
        %v2527 = vadd.f32 %v589, %v2526
        %v2528 = vpop.f32.mrb[0].mxu0
        %v2529 = vadd.f32 %v593, %v2528
        %v2530 = vpop.f32.mrb[0].mxu0
        %v2531 = vadd.f32 %v589, %v2530
        %v2532 = vpop.f32.mrb[0].mxu0
        %v2533 = vadd.f32 %v593, %v2532
        %2534 = vdwg.mxu0
        %2535 = vmatprep.subr.bf16.mxu0 %v1959
        %2536 = vmatpush1.bf16.msra.mxu0 %v1958
        %2537 = vmatprep.subr.bf16.mxu0 %v1971
        %2538 = vmatpush1.bf16.msra.mxu0 %v1970
        %2539 = vmatprep.subr.bf16.mxu0 %v1983
        %2540 = vmatpush1.bf16.msra.mxu0 %v1982
        %2541 = vmatprep.subr.bf16.mxu0 %v1995
        %2542 = vmatpush1.bf16.msra.mxu0 %v1994
        %2543 = vmatprep.subr.bf16.mxu0 %v2007
        %2544 = vmatpush1.bf16.msra.mxu0 %v2006
        %2545 = vmatprep.subr.bf16.mxu0 %v2019
        %2546 = vmatpush1.bf16.msra.mxu0 %v2018
        %2547 = vmatprep.subr.bf16.mxu0 %v2031
        %2548 = vmatpush1.bf16.msra.mxu0 %v2030
        %2549 = vmatprep.subr.bf16.mxu0 %v2043
        %2550 = vmatpush1.bf16.msra.mxu0 %v2042
        %2551 = vmatprep.subr.bf16.mxu0 0
        %2552 = vmatpush1.bf16.msra.mxu0 0
        %2553 = vmatprep.subr.bf16.mxu0 0
        %2554 = vmatpush1.bf16.msra.mxu0 0
        %2555 = vmatprep.subr.bf16.mxu0 0
        %2556 = vmatpush1.bf16.msra.mxu0 0
        %2557 = vmatprep.subr.bf16.mxu0 0
        %2558 = vmatpush1.bf16.msra.mxu0 0
        %2559 = vmatprep.subr.bf16.mxu0 0
        %2560 = vmatpush1.bf16.msra.mxu0 0
        %2561 = vmatprep.subr.bf16.mxu0 0
        %2562 = vmatpush1.bf16.msra.mxu0 0
        %2563 = vmatprep.subr.bf16.mxu0 0
        %2564 = vmatpush1.bf16.msra.mxu0 0
        %2565 = vmatprep.subr.bf16.mxu0 0
        %2566 = vmatpush1.bf16.msra.mxu0 0
        %2567 = vmatprep.mubr.bf16.mxu0 0
        %2568 = vmatmul.mubr.bf16.gmra.mrb[0].mxu0 %v808
        %v2569 = vpop.f32.mrb[0].mxu0
        %v2570 = vadd.f32 %v2377, %v2569
        %v2571 = vpop.f32.mrb[0].mxu0
        %v2572 = vadd.f32 %v2379, %v2571
        %v2573 = vpop.f32.mrb[0].mxu0
        %v2574 = vadd.f32 %v2381, %v2573
        %v2575 = vpop.f32.mrb[0].mxu0
        %v2576 = vadd.f32 %v2383, %v2575
        %2577 = vmatprep.mubr.bf16.mxu0 0
        %2578 = vmatmul.mubr.bf16.gmra.mrb[0].mxu0 %v811
        %v2579 = vpop.f32.mrb[0].mxu0
        %v2580 = vadd.f32 %v2387, %v2579
        %v2581 = vpop.f32.mrb[0].mxu0
        %v2582 = vadd.f32 %v2389, %v2581
        %v2583 = vpop.f32.mrb[0].mxu0
        %v2584 = vadd.f32 %v2391, %v2583
        %v2585 = vpop.f32.mrb[0].mxu0
        %v2586 = vadd.f32 %v2393, %v2585
        %2587 = vmatprep.mubr.bf16.mxu0 0
        %2588 = vmatmul.mubr.bf16.gmra.mrb[0].mxu0 %v814
        %v2589 = vpop.f32.mrb[0].mxu0
        %v2590 = vadd.f32 %v2397, %v2589
        %v2591 = vpop.f32.mrb[0].mxu0
        %v2592 = vadd.f32 %v2399, %v2591
        %v2593 = vpop.f32.mrb[0].mxu0
        %v2594 = vadd.f32 %v2401, %v2593
        %v2595 = vpop.f32.mrb[0].mxu0
        %v2596 = vadd.f32 %v2403, %v2595
        %2597 = vmatprep.mubr.bf16.mxu0 0
        %2598 = vmatmul.mubr.bf16.gmra.mrb[0].mxu0 %v817
        %v2599 = vpop.f32.mrb[0].mxu0
        %v2600 = vadd.f32 %v2407, %v2599
        %v2601 = vpop.f32.mrb[0].mxu0
        %v2602 = vadd.f32 %v2409, %v2601
        %v2603 = vpop.f32.mrb[0].mxu0
        %v2604 = vadd.f32 %v2411, %v2603
        %v2605 = vpop.f32.mrb[0].mxu0
        %v2606 = vadd.f32 %v2413, %v2605
        %2607 = vmatprep.mubr.bf16.mxu0 0
        %2608 = vmatmul.mubr.bf16.gmra.mrb[0].mxu0 %v820
        %v2609 = vpop.f32.mrb[0].mxu0
        %v2610 = vadd.f32 %v2417, %v2609
        %v2611 = vpop.f32.mrb[0].mxu0
        %v2612 = vadd.f32 %v2419, %v2611
        %v2613 = vpop.f32.mrb[0].mxu0
        %v2614 = vadd.f32 %v2421, %v2613
        %v2615 = vpop.f32.mrb[0].mxu0
        %v2616 = vadd.f32 %v2423, %v2615
        %2617 = vmatprep.mubr.bf16.mxu0 0
        %2618 = vmatmul.mubr.bf16.gmra.mrb[0].mxu0 %v823
        %v2619 = vpop.f32.mrb[0].mxu0
        %v2620 = vadd.f32 %v2427, %v2619
        %v2621 = vpop.f32.mrb[0].mxu0
        %v2622 = vadd.f32 %v2429, %v2621
        %v2623 = vpop.f32.mrb[0].mxu0
        %v2624 = vadd.f32 %v2431, %v2623
        %v2625 = vpop.f32.mrb[0].mxu0
        %v2626 = vadd.f32 %v2433, %v2625
        %2627 = vmatprep.mubr.bf16.mxu0 0
        %2628 = vmatmul.mubr.bf16.gmra.mrb[0].mxu0 %v826
        %v2629 = vpop.f32.mrb[0].mxu0
        %v2630 = vadd.f32 %v2437, %v2629
        %v2631 = vpop.f32.mrb[0].mxu0
        %v2632 = vadd.f32 %v2439, %v2631
        %v2633 = vpop.f32.mrb[0].mxu0
        %v2634 = vadd.f32 %v2441, %v2633
        %v2635 = vpop.f32.mrb[0].mxu0
        %v2636 = vadd.f32 %v2443, %v2635
        %2637 = vmatprep.mubr.bf16.mxu0 0
        %2638 = vmatmul.mubr.bf16.gmra.mrb[0].mxu0 %v829
        %v2639 = vpop.f32.mrb[0].mxu0
        %v2640 = vadd.f32 %v2447, %v2639
        %v2641 = vpop.f32.mrb[0].mxu0
        %v2642 = vadd.f32 %v2449, %v2641
        %v2643 = vpop.f32.mrb[0].mxu0
        %v2644 = vadd.f32 %v2451, %v2643
        %v2645 = vpop.f32.mrb[0].mxu0
        %v2646 = vadd.f32 %v2453, %v2645
        %2647 = vmatprep.mubr.bf16.mxu0 0
        %2648 = vmatmul.mubr.bf16.gmra.mrb[0].mxu0 %v832
        %v2649 = vpop.f32.mrb[0].mxu0
        %v2650 = vadd.f32 %v2457, %v2649
        %v2651 = vpop.f32.mrb[0].mxu0
        %v2652 = vadd.f32 %v2459, %v2651
        %v2653 = vpop.f32.mrb[0].mxu0
        %v2654 = vadd.f32 %v2461, %v2653
        %v2655 = vpop.f32.mrb[0].mxu0
        %v2656 = vadd.f32 %v2463, %v2655
        %2657 = vmatprep.mubr.bf16.mxu0 0
        %2658 = vmatmul.mubr.bf16.gmra.mrb[0].mxu0 %v835
        %v2659 = vpop.f32.mrb[0].mxu0
        %v2660 = vadd.f32 %v2467, %v2659
        %v2661 = vpop.f32.mrb[0].mxu0
        %v2662 = vadd.f32 %v2469, %v2661
        %v2663 = vpop.f32.mrb[0].mxu0
        %v2664 = vadd.f32 %v2471, %v2663
        %v2665 = vpop.f32.mrb[0].mxu0
        %v2666 = vadd.f32 %v2473, %v2665
        %2667 = vmatprep.mubr.bf16.mxu0 0
        %2668 = vmatmul.mubr.bf16.gmra.mrb[0].mxu0 %v838
        %v2669 = vpop.f32.mrb[0].mxu0
        %v2670 = vadd.f32 %v2477, %v2669
        %v2671 = vpop.f32.mrb[0].mxu0
        %v2672 = vadd.f32 %v2479, %v2671
        %v2673 = vpop.f32.mrb[0].mxu0
        %v2674 = vadd.f32 %v2481, %v2673
        %v2675 = vpop.f32.mrb[0].mxu0
        %v2676 = vadd.f32 %v2483, %v2675
        %2677 = vmatprep.mubr.bf16.mxu0 0
        %2678 = vmatmul.mubr.bf16.gmra.mrb[0].mxu0 %v841
        %v2679 = vpop.f32.mrb[0].mxu0
        %v2680 = vadd.f32 %v2487, %v2679
        %v2681 = vpop.f32.mrb[0].mxu0
        %v2682 = vadd.f32 %v2489, %v2681
        %v2683 = vpop.f32.mrb[0].mxu0
        %v2684 = vadd.f32 %v2491, %v2683
        %v2685 = vpop.f32.mrb[0].mxu0
        %v2686 = vadd.f32 %v2493, %v2685
        %2687 = vmatprep.mubr.bf16.mxu0 0
        %2688 = vmatmul.mubr.bf16.gmra.mrb[0].mxu0 %v844
        %v2689 = vpop.f32.mrb[0].mxu0
        %v2690 = vadd.f32 %v2497, %v2689
        %v2691 = vpop.f32.mrb[0].mxu0
        %v2692 = vadd.f32 %v2499, %v2691
        %v2693 = vpop.f32.mrb[0].mxu0
        %v2694 = vadd.f32 %v2501, %v2693
        %v2695 = vpop.f32.mrb[0].mxu0
        %v2696 = vadd.f32 %v2503, %v2695
        %2697 = vmatprep.mubr.bf16.mxu0 0
        %2698 = vmatmul.mubr.bf16.gmra.mrb[0].mxu0 %v847
        %v2699 = vpop.f32.mrb[0].mxu0
        %v2700 = vadd.f32 %v2507, %v2699
        %v2701 = vpop.f32.mrb[0].mxu0
        %v2702 = vadd.f32 %v2509, %v2701
        %v2703 = vpop.f32.mrb[0].mxu0
        %v2704 = vadd.f32 %v2511, %v2703
        %v2705 = vpop.f32.mrb[0].mxu0
        %v2706 = vadd.f32 %v2513, %v2705
        %2707 = vmatprep.mubr.bf16.mxu0 0
        %2708 = vmatmul.mubr.bf16.gmra.mrb[0].mxu0 %v850
        %v2709 = vpop.f32.mrb[0].mxu0
        %v2710 = vadd.f32 %v2517, %v2709
        %v2711 = vpop.f32.mrb[0].mxu0
        %v2712 = vadd.f32 %v2519, %v2711
        %v2713 = vpop.f32.mrb[0].mxu0
        %v2714 = vadd.f32 %v2521, %v2713
        %v2715 = vpop.f32.mrb[0].mxu0
        %v2716 = vadd.f32 %v2523, %v2715
        %2717 = vmatprep.mubr.bf16.mxu0 0
        %2718 = vmatmul.mubr.bf16.gmra.mrb[0].mxu0 %v853
        %v2719 = vpop.f32.mrb[0].mxu0
        %v2720 = vadd.f32 %v2527, %v2719
        %v2721 = vpop.f32.mrb[0].mxu0
        %v2722 = vadd.f32 %v2529, %v2721
        %v2723 = vpop.f32.mrb[0].mxu0
        %v2724 = vadd.f32 %v2531, %v2723
        %v2725 = vpop.f32.mrb[0].mxu0
        %v2726 = vadd.f32 %v2533, %v2725
        %2727 = vdwg.mxu0
        %2728 = vmatprep.subr.bf16.mxu0 %v1769
        %2729 = vmatpush1.bf16.msra.mxu0 %v1768
        %2730 = vmatprep.subr.bf16.mxu0 %v1781
        %2731 = vmatpush1.bf16.msra.mxu0 %v1780
        %2732 = vmatprep.subr.bf16.mxu0 %v1793
        %2733 = vmatpush1.bf16.msra.mxu0 %v1792
        %2734 = vmatprep.subr.bf16.mxu0 %v1805
        %2735 = vmatpush1.bf16.msra.mxu0 %v1804
        %2736 = vmatprep.subr.bf16.mxu0 %v1817
        %2737 = vmatpush1.bf16.msra.mxu0 %v1816
        %2738 = vmatprep.subr.bf16.mxu0 %v1829
        %2739 = vmatpush1.bf16.msra.mxu0 %v1828
        %2740 = vmatprep.subr.bf16.mxu0 %v1841
        %2741 = vmatpush1.bf16.msra.mxu0 %v1840
        %2742 = vmatprep.subr.bf16.mxu0 %v1853
        %2743 = vmatpush1.bf16.msra.mxu0 %v1852
        %2744 = vmatprep.subr.bf16.mxu0 %v1865
        %2745 = vmatpush1.bf16.msra.mxu0 %v1864
        %2746 = vmatprep.subr.bf16.mxu0 %v1877
        %2747 = vmatpush1.bf16.msra.mxu0 %v1876
        %2748 = vmatprep.subr.bf16.mxu0 %v1889
        %2749 = vmatpush1.bf16.msra.mxu0 %v1888
        %2750 = vmatprep.subr.bf16.mxu0 %v1901
        %2751 = vmatpush1.bf16.msra.mxu0 %v1900
        %2752 = vmatprep.subr.bf16.mxu0 %v1913
        %2753 = vmatpush1.bf16.msra.mxu0 %v1912
        %2754 = vmatprep.subr.bf16.mxu0 %v1925
        %2755 = vmatpush1.bf16.msra.mxu0 %v1924
        %2756 = vmatprep.subr.bf16.mxu0 %v1937
        %2757 = vmatpush1.bf16.msra.mxu0 %v1936
        %2758 = vmatprep.subr.bf16.mxu0 %v1949
        %2759 = vmatpush1.bf16.msra.mxu0 %v1948
        %2760 = vmatprep.mubr.bf16.mxu0 %v807
        %2761 = vmatmul.mubr.bf16.gmra.mrb[0].mxu0 %v806
        %v2762 = vpop.f32.mrb[0].mxu0
        %v2763 = vadd.f32 %v597, %v2762
        %v2764 = vpop.f32.mrb[0].mxu0
        %v2765 = vadd.f32 %v601, %v2764
        %v2766 = vpop.f32.mrb[0].mxu0
        %v2767 = vadd.f32 %v597, %v2766
        %v2768 = vpop.f32.mrb[0].mxu0
        %v2769 = vadd.f32 %v601, %v2768
        %2770 = vmatprep.mubr.bf16.mxu0 %v810
        %2771 = vmatmul.mubr.bf16.gmra.mrb[0].mxu0 %v809
        %v2772 = vpop.f32.mrb[0].mxu0
        %v2773 = vadd.f32 %v597, %v2772
        %v2774 = vpop.f32.mrb[0].mxu0
        %v2775 = vadd.f32 %v601, %v2774
        %v2776 = vpop.f32.mrb[0].mxu0
        %v2777 = vadd.f32 %v597, %v2776
        %v2778 = vpop.f32.mrb[0].mxu0
        %v2779 = vadd.f32 %v601, %v2778
        %2780 = vmatprep.mubr.bf16.mxu0 %v813
        %2781 = vmatmul.mubr.bf16.gmra.mrb[0].mxu0 %v812
        %v2782 = vpop.f32.mrb[0].mxu0
        %v2783 = vadd.f32 %v597, %v2782
        %v2784 = vpop.f32.mrb[0].mxu0
        %v2785 = vadd.f32 %v601, %v2784
        %v2786 = vpop.f32.mrb[0].mxu0
        %v2787 = vadd.f32 %v597, %v2786
        %v2788 = vpop.f32.mrb[0].mxu0
        %v2789 = vadd.f32 %v601, %v2788
        %2790 = vmatprep.mubr.bf16.mxu0 %v816
        %2791 = vmatmul.mubr.bf16.gmra.mrb[0].mxu0 %v815
        %v2792 = vpop.f32.mrb[0].mxu0
        %v2793 = vadd.f32 %v597, %v2792
        %v2794 = vpop.f32.mrb[0].mxu0
        %v2795 = vadd.f32 %v601, %v2794
        %v2796 = vpop.f32.mrb[0].mxu0
        %v2797 = vadd.f32 %v597, %v2796
        %v2798 = vpop.f32.mrb[0].mxu0
        %v2799 = vadd.f32 %v601, %v2798
        %2800 = vmatprep.mubr.bf16.mxu0 %v819
        %2801 = vmatmul.mubr.bf16.gmra.mrb[0].mxu0 %v818
        %v2802 = vpop.f32.mrb[0].mxu0
        %v2803 = vadd.f32 %v597, %v2802
        %v2804 = vpop.f32.mrb[0].mxu0
        %v2805 = vadd.f32 %v601, %v2804
        %v2806 = vpop.f32.mrb[0].mxu0
        %v2807 = vadd.f32 %v597, %v2806
        %v2808 = vpop.f32.mrb[0].mxu0
        %v2809 = vadd.f32 %v601, %v2808
        %2810 = vmatprep.mubr.bf16.mxu0 %v822
        %2811 = vmatmul.mubr.bf16.gmra.mrb[0].mxu0 %v821
        %v2812 = vpop.f32.mrb[0].mxu0
        %v2813 = vadd.f32 %v597, %v2812
        %v2814 = vpop.f32.mrb[0].mxu0
        %v2815 = vadd.f32 %v601, %v2814
        %v2816 = vpop.f32.mrb[0].mxu0
        %v2817 = vadd.f32 %v597, %v2816
        %v2818 = vpop.f32.mrb[0].mxu0
        %v2819 = vadd.f32 %v601, %v2818
        %2820 = vmatprep.mubr.bf16.mxu0 %v825
        %2821 = vmatmul.mubr.bf16.gmra.mrb[0].mxu0 %v824
        %v2822 = vpop.f32.mrb[0].mxu0
        %v2823 = vadd.f32 %v597, %v2822
        %v2824 = vpop.f32.mrb[0].mxu0
        %v2825 = vadd.f32 %v601, %v2824
        %v2826 = vpop.f32.mrb[0].mxu0
        %v2827 = vadd.f32 %v597, %v2826
        %v2828 = vpop.f32.mrb[0].mxu0
        %v2829 = vadd.f32 %v601, %v2828
        %2830 = vmatprep.mubr.bf16.mxu0 %v828
        %2831 = vmatmul.mubr.bf16.gmra.mrb[0].mxu0 %v827
        %v2832 = vpop.f32.mrb[0].mxu0
        %v2833 = vadd.f32 %v597, %v2832
        %v2834 = vpop.f32.mrb[0].mxu0
        %v2835 = vadd.f32 %v601, %v2834
        %v2836 = vpop.f32.mrb[0].mxu0
        %v2837 = vadd.f32 %v597, %v2836
        %v2838 = vpop.f32.mrb[0].mxu0
        %v2839 = vadd.f32 %v601, %v2838
        %2840 = vmatprep.mubr.bf16.mxu0 %v831
        %2841 = vmatmul.mubr.bf16.gmra.mrb[0].mxu0 %v830
        %v2842 = vpop.f32.mrb[0].mxu0
        %v2843 = vadd.f32 %v597, %v2842
        %v2844 = vpop.f32.mrb[0].mxu0
        %v2845 = vadd.f32 %v601, %v2844
        %v2846 = vpop.f32.mrb[0].mxu0
        %v2847 = vadd.f32 %v597, %v2846
        %v2848 = vpop.f32.mrb[0].mxu0
        %v2849 = vadd.f32 %v601, %v2848
        %2850 = vmatprep.mubr.bf16.mxu0 %v834
        %2851 = vmatmul.mubr.bf16.gmra.mrb[0].mxu0 %v833
        %v2852 = vpop.f32.mrb[0].mxu0
        %v2853 = vadd.f32 %v597, %v2852
        %v2854 = vpop.f32.mrb[0].mxu0
        %v2855 = vadd.f32 %v601, %v2854
        %v2856 = vpop.f32.mrb[0].mxu0
        %v2857 = vadd.f32 %v597, %v2856
        %v2858 = vpop.f32.mrb[0].mxu0
        %v2859 = vadd.f32 %v601, %v2858
        %2860 = vmatprep.mubr.bf16.mxu0 %v837
        %2861 = vmatmul.mubr.bf16.gmra.mrb[0].mxu0 %v836
        %v2862 = vpop.f32.mrb[0].mxu0
        %v2863 = vadd.f32 %v597, %v2862
        %v2864 = vpop.f32.mrb[0].mxu0
        %v2865 = vadd.f32 %v601, %v2864
        %v2866 = vpop.f32.mrb[0].mxu0
        %v2867 = vadd.f32 %v597, %v2866
        %v2868 = vpop.f32.mrb[0].mxu0
        %v2869 = vadd.f32 %v601, %v2868
        %2870 = vmatprep.mubr.bf16.mxu0 %v840
        %2871 = vmatmul.mubr.bf16.gmra.mrb[0].mxu0 %v839
        %v2872 = vpop.f32.mrb[0].mxu0
        %v2873 = vadd.f32 %v597, %v2872
        %v2874 = vpop.f32.mrb[0].mxu0
        %v2875 = vadd.f32 %v601, %v2874
        %v2876 = vpop.f32.mrb[0].mxu0
        %v2877 = vadd.f32 %v597, %v2876
        %v2878 = vpop.f32.mrb[0].mxu0
        %v2879 = vadd.f32 %v601, %v2878
        %2880 = vmatprep.mubr.bf16.mxu0 %v843
        %2881 = vmatmul.mubr.bf16.gmra.mrb[0].mxu0 %v842
        %v2882 = vpop.f32.mrb[0].mxu0
        %v2883 = vadd.f32 %v597, %v2882
        %v2884 = vpop.f32.mrb[0].mxu0
        %v2885 = vadd.f32 %v601, %v2884
        %v2886 = vpop.f32.mrb[0].mxu0
        %v2887 = vadd.f32 %v597, %v2886
        %v2888 = vpop.f32.mrb[0].mxu0
        %v2889 = vadd.f32 %v601, %v2888
        %2890 = vmatprep.mubr.bf16.mxu0 %v846
        %2891 = vmatmul.mubr.bf16.gmra.mrb[0].mxu0 %v845
        %v2892 = vpop.f32.mrb[0].mxu0
        %v2893 = vadd.f32 %v597, %v2892
        %v2894 = vpop.f32.mrb[0].mxu0
        %v2895 = vadd.f32 %v601, %v2894
        %v2896 = vpop.f32.mrb[0].mxu0
        %v2897 = vadd.f32 %v597, %v2896
        %v2898 = vpop.f32.mrb[0].mxu0
        %v2899 = vadd.f32 %v601, %v2898
        %2900 = vmatprep.mubr.bf16.mxu0 %v849
        %2901 = vmatmul.mubr.bf16.gmra.mrb[0].mxu0 %v848
        %v2902 = vpop.f32.mrb[0].mxu0
        %v2903 = vadd.f32 %v597, %v2902
        %v2904 = vpop.f32.mrb[0].mxu0
        %v2905 = vadd.f32 %v601, %v2904
        %v2906 = vpop.f32.mrb[0].mxu0
        %v2907 = vadd.f32 %v597, %v2906
        %v2908 = vpop.f32.mrb[0].mxu0
        %v2909 = vadd.f32 %v601, %v2908
        %2910 = vmatprep.mubr.bf16.mxu0 %v852
        %2911 = vmatmul.mubr.bf16.gmra.mrb[0].mxu0 %v851
        %v2912 = vpop.f32.mrb[0].mxu0
        %v2913 = vadd.f32 %v597, %v2912
        %v2914 = vpop.f32.mrb[0].mxu0
        %v2915 = vadd.f32 %v601, %v2914
        %v2916 = vpop.f32.mrb[0].mxu0
        %v2917 = vadd.f32 %v597, %v2916
        %v2918 = vpop.f32.mrb[0].mxu0
        %v2919 = vadd.f32 %v601, %v2918
        %2920 = vdwg.mxu0
        %2921 = vmatprep.subr.bf16.mxu0 %v1961
        %2922 = vmatpush1.bf16.msra.mxu0 %v1960
        %2923 = vmatprep.subr.bf16.mxu0 %v1973
        %2924 = vmatpush1.bf16.msra.mxu0 %v1972
        %2925 = vmatprep.subr.bf16.mxu0 %v1985
        %2926 = vmatpush1.bf16.msra.mxu0 %v1984
        %2927 = vmatprep.subr.bf16.mxu0 %v1997
        %2928 = vmatpush1.bf16.msra.mxu0 %v1996
        %2929 = vmatprep.subr.bf16.mxu0 %v2009
        %2930 = vmatpush1.bf16.msra.mxu0 %v2008
        %2931 = vmatprep.subr.bf16.mxu0 %v2021
        %2932 = vmatpush1.bf16.msra.mxu0 %v2020
        %2933 = vmatprep.subr.bf16.mxu0 %v2033
        %2934 = vmatpush1.bf16.msra.mxu0 %v2032
        %2935 = vmatprep.subr.bf16.mxu0 %v2045
        %2936 = vmatpush1.bf16.msra.mxu0 %v2044
        %2937 = vmatprep.subr.bf16.mxu0 0
        %2938 = vmatpush1.bf16.msra.mxu0 0
        %2939 = vmatprep.subr.bf16.mxu0 0
        %2940 = vmatpush1.bf16.msra.mxu0 0
        %2941 = vmatprep.subr.bf16.mxu0 0
        %2942 = vmatpush1.bf16.msra.mxu0 0
        %2943 = vmatprep.subr.bf16.mxu0 0
        %2944 = vmatpush1.bf16.msra.mxu0 0
        %2945 = vmatprep.subr.bf16.mxu0 0
        %2946 = vmatpush1.bf16.msra.mxu0 0
        %2947 = vmatprep.subr.bf16.mxu0 0
        %2948 = vmatpush1.bf16.msra.mxu0 0
        %2949 = vmatprep.subr.bf16.mxu0 0
        %2950 = vmatpush1.bf16.msra.mxu0 0
        %2951 = vmatprep.subr.bf16.mxu0 0
        %2952 = vmatpush1.bf16.msra.mxu0 0
        %2953 = vmatprep.mubr.bf16.mxu0 0
        %2954 = vmatmul.mubr.bf16.gmra.mrb[0].mxu0 %v808
        %v2955 = vpop.f32.mrb[0].mxu0
        %v2956 = vadd.f32 %v2763, %v2955
        %v2957 = vpop.f32.mrb[0].mxu0
        %v2958 = vadd.f32 %v2765, %v2957
        %v2959 = vpop.f32.mrb[0].mxu0
        %v2960 = vadd.f32 %v2767, %v2959
        %v2961 = vpop.f32.mrb[0].mxu0
        %v2962 = vadd.f32 %v2769, %v2961
        %2963 = vmatprep.mubr.bf16.mxu0 0
        %2964 = vmatmul.mubr.bf16.gmra.mrb[0].mxu0 %v811
        %v2965 = vpop.f32.mrb[0].mxu0
        %v2966 = vadd.f32 %v2773, %v2965
        %v2967 = vpop.f32.mrb[0].mxu0
        %v2968 = vadd.f32 %v2775, %v2967
        %v2969 = vpop.f32.mrb[0].mxu0
        %v2970 = vadd.f32 %v2777, %v2969
        %v2971 = vpop.f32.mrb[0].mxu0
        %v2972 = vadd.f32 %v2779, %v2971
        %2973 = vmatprep.mubr.bf16.mxu0 0
        %2974 = vmatmul.mubr.bf16.gmra.mrb[0].mxu0 %v814
        %v2975 = vpop.f32.mrb[0].mxu0
        %v2976 = vadd.f32 %v2783, %v2975
        %v2977 = vpop.f32.mrb[0].mxu0
        %v2978 = vadd.f32 %v2785, %v2977
        %v2979 = vpop.f32.mrb[0].mxu0
        %v2980 = vadd.f32 %v2787, %v2979
        %v2981 = vpop.f32.mrb[0].mxu0
        %v2982 = vadd.f32 %v2789, %v2981
        %2983 = vmatprep.mubr.bf16.mxu0 0
        %2984 = vmatmul.mubr.bf16.gmra.mrb[0].mxu0 %v817
        %v2985 = vpop.f32.mrb[0].mxu0
        %v2986 = vadd.f32 %v2793, %v2985
        %v2987 = vpop.f32.mrb[0].mxu0
        %v2988 = vadd.f32 %v2795, %v2987
        %v2989 = vpop.f32.mrb[0].mxu0
        %v2990 = vadd.f32 %v2797, %v2989
        %v2991 = vpop.f32.mrb[0].mxu0
        %v2992 = vadd.f32 %v2799, %v2991
        %2993 = vmatprep.mubr.bf16.mxu0 0
        %2994 = vmatmul.mubr.bf16.gmra.mrb[0].mxu0 %v820
        %v2995 = vpop.f32.mrb[0].mxu0
        %v2996 = vadd.f32 %v2803, %v2995
        %v2997 = vpop.f32.mrb[0].mxu0
        %v2998 = vadd.f32 %v2805, %v2997
        %v2999 = vpop.f32.mrb[0].mxu0
        %v3000 = vadd.f32 %v2807, %v2999
        %v3001 = vpop.f32.mrb[0].mxu0
        %v3002 = vadd.f32 %v2809, %v3001
        %3003 = vmatprep.mubr.bf16.mxu0 0
        %3004 = vmatmul.mubr.bf16.gmra.mrb[0].mxu0 %v823
        %v3005 = vpop.f32.mrb[0].mxu0
        %v3006 = vadd.f32 %v2813, %v3005
        %v3007 = vpop.f32.mrb[0].mxu0
        %v3008 = vadd.f32 %v2815, %v3007
        %v3009 = vpop.f32.mrb[0].mxu0
        %v3010 = vadd.f32 %v2817, %v3009
        %v3011 = vpop.f32.mrb[0].mxu0
        %v3012 = vadd.f32 %v2819, %v3011
        %3013 = vmatprep.mubr.bf16.mxu0 0
        %3014 = vmatmul.mubr.bf16.gmra.mrb[0].mxu0 %v826
        %v3015 = vpop.f32.mrb[0].mxu0
        %v3016 = vadd.f32 %v2823, %v3015
        %v3017 = vpop.f32.mrb[0].mxu0
        %v3018 = vadd.f32 %v2825, %v3017
        %v3019 = vpop.f32.mrb[0].mxu0
        %v3020 = vadd.f32 %v2827, %v3019
        %v3021 = vpop.f32.mrb[0].mxu0
        %v3022 = vadd.f32 %v2829, %v3021
        %3023 = vmatprep.mubr.bf16.mxu0 0
        %3024 = vmatmul.mubr.bf16.gmra.mrb[0].mxu0 %v829
        %v3025 = vpop.f32.mrb[0].mxu0
        %v3026 = vadd.f32 %v2833, %v3025
        %v3027 = vpop.f32.mrb[0].mxu0
        %v3028 = vadd.f32 %v2835, %v3027
        %v3029 = vpop.f32.mrb[0].mxu0
        %v3030 = vadd.f32 %v2837, %v3029
        %v3031 = vpop.f32.mrb[0].mxu0
        %v3032 = vadd.f32 %v2839, %v3031
        %3033 = vmatprep.mubr.bf16.mxu0 0
        %3034 = vmatmul.mubr.bf16.gmra.mrb[0].mxu0 %v832
        %v3035 = vpop.f32.mrb[0].mxu0
        %v3036 = vadd.f32 %v2843, %v3035
        %v3037 = vpop.f32.mrb[0].mxu0
        %v3038 = vadd.f32 %v2845, %v3037
        %v3039 = vpop.f32.mrb[0].mxu0
        %v3040 = vadd.f32 %v2847, %v3039
        %v3041 = vpop.f32.mrb[0].mxu0
        %v3042 = vadd.f32 %v2849, %v3041
        %3043 = vmatprep.mubr.bf16.mxu0 0
        %3044 = vmatmul.mubr.bf16.gmra.mrb[0].mxu0 %v835
        %v3045 = vpop.f32.mrb[0].mxu0
        %v3046 = vadd.f32 %v2853, %v3045
        %v3047 = vpop.f32.mrb[0].mxu0
        %v3048 = vadd.f32 %v2855, %v3047
        %v3049 = vpop.f32.mrb[0].mxu0
        %v3050 = vadd.f32 %v2857, %v3049
        %v3051 = vpop.f32.mrb[0].mxu0
        %v3052 = vadd.f32 %v2859, %v3051
        %3053 = vmatprep.mubr.bf16.mxu0 0
        %3054 = vmatmul.mubr.bf16.gmra.mrb[0].mxu0 %v838
        %v3055 = vpop.f32.mrb[0].mxu0
        %v3056 = vadd.f32 %v2863, %v3055
        %v3057 = vpop.f32.mrb[0].mxu0
        %v3058 = vadd.f32 %v2865, %v3057
        %v3059 = vpop.f32.mrb[0].mxu0
        %v3060 = vadd.f32 %v2867, %v3059
        %v3061 = vpop.f32.mrb[0].mxu0
        %v3062 = vadd.f32 %v2869, %v3061
        %3063 = vmatprep.mubr.bf16.mxu0 0
        %3064 = vmatmul.mubr.bf16.gmra.mrb[0].mxu0 %v841
        %v3065 = vpop.f32.mrb[0].mxu0
        %v3066 = vadd.f32 %v2873, %v3065
        %v3067 = vpop.f32.mrb[0].mxu0
        %v3068 = vadd.f32 %v2875, %v3067
        %v3069 = vpop.f32.mrb[0].mxu0
        %v3070 = vadd.f32 %v2877, %v3069
        %v3071 = vpop.f32.mrb[0].mxu0
        %v3072 = vadd.f32 %v2879, %v3071
        %3073 = vmatprep.mubr.bf16.mxu0 0
        %3074 = vmatmul.mubr.bf16.gmra.mrb[0].mxu0 %v844
        %v3075 = vpop.f32.mrb[0].mxu0
        %v3076 = vadd.f32 %v2883, %v3075
        %v3077 = vpop.f32.mrb[0].mxu0
        %v3078 = vadd.f32 %v2885, %v3077
        %v3079 = vpop.f32.mrb[0].mxu0
        %v3080 = vadd.f32 %v2887, %v3079
        %v3081 = vpop.f32.mrb[0].mxu0
        %v3082 = vadd.f32 %v2889, %v3081
        %3083 = vmatprep.mubr.bf16.mxu0 0
        %3084 = vmatmul.mubr.bf16.gmra.mrb[0].mxu0 %v847
        %v3085 = vpop.f32.mrb[0].mxu0
        %v3086 = vadd.f32 %v2893, %v3085
        %v3087 = vpop.f32.mrb[0].mxu0
        %v3088 = vadd.f32 %v2895, %v3087
        %v3089 = vpop.f32.mrb[0].mxu0
        %v3090 = vadd.f32 %v2897, %v3089
        %v3091 = vpop.f32.mrb[0].mxu0
        %v3092 = vadd.f32 %v2899, %v3091
        %3093 = vmatprep.mubr.bf16.mxu0 0
        %3094 = vmatmul.mubr.bf16.gmra.mrb[0].mxu0 %v850
        %v3095 = vpop.f32.mrb[0].mxu0
        %v3096 = vadd.f32 %v2903, %v3095
        %v3097 = vpop.f32.mrb[0].mxu0
        %v3098 = vadd.f32 %v2905, %v3097
        %v3099 = vpop.f32.mrb[0].mxu0
        %v3100 = vadd.f32 %v2907, %v3099
        %v3101 = vpop.f32.mrb[0].mxu0
        %v3102 = vadd.f32 %v2909, %v3101
        %3103 = vmatprep.mubr.bf16.mxu0 0
        %3104 = vmatmul.mubr.bf16.gmra.mrb[0].mxu0 %v853
        %v3105 = vpop.f32.mrb[0].mxu0
        %v3106 = vadd.f32 %v2913, %v3105
        %v3107 = vpop.f32.mrb[0].mxu0
        %v3108 = vadd.f32 %v2915, %v3107
        %v3109 = vpop.f32.mrb[0].mxu0
        %v3110 = vadd.f32 %v2917, %v3109
        %v3111 = vpop.f32.mrb[0].mxu0
        %v3112 = vadd.f32 %v2919, %v3111
        %3113 = vdwg.mxu0
        %3114 = vmatprep.subr.bf16.mxu0 %v1771
        %3115 = vmatpush1.bf16.msra.mxu0 %v1770
        %3116 = vmatprep.subr.bf16.mxu0 %v1783
        %3117 = vmatpush1.bf16.msra.mxu0 %v1782
        %3118 = vmatprep.subr.bf16.mxu0 %v1795
        %3119 = vmatpush1.bf16.msra.mxu0 %v1794
        %3120 = vmatprep.subr.bf16.mxu0 %v1807
        %3121 = vmatpush1.bf16.msra.mxu0 %v1806
        %3122 = vmatprep.subr.bf16.mxu0 %v1819
        %3123 = vmatpush1.bf16.msra.mxu0 %v1818
        %3124 = vmatprep.subr.bf16.mxu0 %v1831
        %3125 = vmatpush1.bf16.msra.mxu0 %v1830
        %3126 = vmatprep.subr.bf16.mxu0 %v1843
        %3127 = vmatpush1.bf16.msra.mxu0 %v1842
        %3128 = vmatprep.subr.bf16.mxu0 %v1855
        %3129 = vmatpush1.bf16.msra.mxu0 %v1854
        %3130 = vmatprep.subr.bf16.mxu0 %v1867
        %3131 = vmatpush1.bf16.msra.mxu0 %v1866
        %3132 = vmatprep.subr.bf16.mxu0 %v1879
        %3133 = vmatpush1.bf16.msra.mxu0 %v1878
        %3134 = vmatprep.subr.bf16.mxu0 %v1891
        %3135 = vmatpush1.bf16.msra.mxu0 %v1890
        %3136 = vmatprep.subr.bf16.mxu0 %v1903
        %3137 = vmatpush1.bf16.msra.mxu0 %v1902
        %3138 = vmatprep.subr.bf16.mxu0 %v1915
        %3139 = vmatpush1.bf16.msra.mxu0 %v1914
        %3140 = vmatprep.subr.bf16.mxu0 %v1927
        %3141 = vmatpush1.bf16.msra.mxu0 %v1926
        %3142 = vmatprep.subr.bf16.mxu0 %v1939
        %3143 = vmatpush1.bf16.msra.mxu0 %v1938
        %3144 = vmatprep.subr.bf16.mxu0 %v1951
        %3145 = vmatpush1.bf16.msra.mxu0 %v1950
        %3146 = vmatprep.mubr.bf16.mxu0 %v807
        %3147 = vmatmul.mubr.bf16.gmra.mrb[0].mxu0 %v806
        %v3148 = vpop.f32.mrb[0].mxu0
        %v3149 = vadd.f32 %v605, %v3148
        %v3150 = vpop.f32.mrb[0].mxu0
        %v3151 = vadd.f32 %v609, %v3150
        %v3152 = vpop.f32.mrb[0].mxu0
        %v3153 = vadd.f32 %v605, %v3152
        %v3154 = vpop.f32.mrb[0].mxu0
        %v3155 = vadd.f32 %v609, %v3154
        %3156 = vmatprep.mubr.bf16.mxu0 %v810
        %3157 = vmatmul.mubr.bf16.gmra.mrb[0].mxu0 %v809
        %v3158 = vpop.f32.mrb[0].mxu0
        %v3159 = vadd.f32 %v605, %v3158
        %v3160 = vpop.f32.mrb[0].mxu0
        %v3161 = vadd.f32 %v609, %v3160
        %v3162 = vpop.f32.mrb[0].mxu0
        %v3163 = vadd.f32 %v605, %v3162
        %v3164 = vpop.f32.mrb[0].mxu0
        %v3165 = vadd.f32 %v609, %v3164
        %3166 = vmatprep.mubr.bf16.mxu0 %v813
        %3167 = vmatmul.mubr.bf16.gmra.mrb[0].mxu0 %v812
        %v3168 = vpop.f32.mrb[0].mxu0
        %v3169 = vadd.f32 %v605, %v3168
        %v3170 = vpop.f32.mrb[0].mxu0
        %v3171 = vadd.f32 %v609, %v3170
        %v3172 = vpop.f32.mrb[0].mxu0
        %v3173 = vadd.f32 %v605, %v3172
        %v3174 = vpop.f32.mrb[0].mxu0
        %v3175 = vadd.f32 %v609, %v3174
        %3176 = vmatprep.mubr.bf16.mxu0 %v816
        %3177 = vmatmul.mubr.bf16.gmra.mrb[0].mxu0 %v815
        %v3178 = vpop.f32.mrb[0].mxu0
        %v3179 = vadd.f32 %v605, %v3178
        %v3180 = vpop.f32.mrb[0].mxu0
        %v3181 = vadd.f32 %v609, %v3180
        %v3182 = vpop.f32.mrb[0].mxu0
        %v3183 = vadd.f32 %v605, %v3182
        %v3184 = vpop.f32.mrb[0].mxu0
        %v3185 = vadd.f32 %v609, %v3184
        %3186 = vmatprep.mubr.bf16.mxu0 %v819
        %3187 = vmatmul.mubr.bf16.gmra.mrb[0].mxu0 %v818
        %v3188 = vpop.f32.mrb[0].mxu0
        %v3189 = vadd.f32 %v605, %v3188
        %v3190 = vpop.f32.mrb[0].mxu0
        %v3191 = vadd.f32 %v609, %v3190
        %v3192 = vpop.f32.mrb[0].mxu0
        %v3193 = vadd.f32 %v605, %v3192
        %v3194 = vpop.f32.mrb[0].mxu0
        %v3195 = vadd.f32 %v609, %v3194
        %3196 = vmatprep.mubr.bf16.mxu0 %v822
        %3197 = vmatmul.mubr.bf16.gmra.mrb[0].mxu0 %v821
        %v3198 = vpop.f32.mrb[0].mxu0
        %v3199 = vadd.f32 %v605, %v3198
        %v3200 = vpop.f32.mrb[0].mxu0
        %v3201 = vadd.f32 %v609, %v3200
        %v3202 = vpop.f32.mrb[0].mxu0
        %v3203 = vadd.f32 %v605, %v3202
        %v3204 = vpop.f32.mrb[0].mxu0
        %v3205 = vadd.f32 %v609, %v3204
        %3206 = vmatprep.mubr.bf16.mxu0 %v825
        %3207 = vmatmul.mubr.bf16.gmra.mrb[0].mxu0 %v824
        %v3208 = vpop.f32.mrb[0].mxu0
        %v3209 = vadd.f32 %v605, %v3208
        %v3210 = vpop.f32.mrb[0].mxu0
        %v3211 = vadd.f32 %v609, %v3210
        %v3212 = vpop.f32.mrb[0].mxu0
        %v3213 = vadd.f32 %v605, %v3212
        %v3214 = vpop.f32.mrb[0].mxu0
        %v3215 = vadd.f32 %v609, %v3214
        %3216 = vmatprep.mubr.bf16.mxu0 %v828
        %3217 = vmatmul.mubr.bf16.gmra.mrb[0].mxu0 %v827
        %v3218 = vpop.f32.mrb[0].mxu0
        %v3219 = vadd.f32 %v605, %v3218
        %v3220 = vpop.f32.mrb[0].mxu0
        %v3221 = vadd.f32 %v609, %v3220
        %v3222 = vpop.f32.mrb[0].mxu0
        %v3223 = vadd.f32 %v605, %v3222
        %v3224 = vpop.f32.mrb[0].mxu0
        %v3225 = vadd.f32 %v609, %v3224
        %3226 = vmatprep.mubr.bf16.mxu0 %v831
        %3227 = vmatmul.mubr.bf16.gmra.mrb[0].mxu0 %v830
        %v3228 = vpop.f32.mrb[0].mxu0
        %v3229 = vadd.f32 %v605, %v3228
        %v3230 = vpop.f32.mrb[0].mxu0
        %v3231 = vadd.f32 %v609, %v3230
        %v3232 = vpop.f32.mrb[0].mxu0
        %v3233 = vadd.f32 %v605, %v3232
        %v3234 = vpop.f32.mrb[0].mxu0
        %v3235 = vadd.f32 %v609, %v3234
        %3236 = vmatprep.mubr.bf16.mxu0 %v834
        %3237 = vmatmul.mubr.bf16.gmra.mrb[0].mxu0 %v833
        %v3238 = vpop.f32.mrb[0].mxu0
        %v3239 = vadd.f32 %v605, %v3238
        %v3240 = vpop.f32.mrb[0].mxu0
        %v3241 = vadd.f32 %v609, %v3240
        %v3242 = vpop.f32.mrb[0].mxu0
        %v3243 = vadd.f32 %v605, %v3242
        %v3244 = vpop.f32.mrb[0].mxu0
        %v3245 = vadd.f32 %v609, %v3244
        %3246 = vmatprep.mubr.bf16.mxu0 %v837
        %3247 = vmatmul.mubr.bf16.gmra.mrb[0].mxu0 %v836
        %v3248 = vpop.f32.mrb[0].mxu0
        %v3249 = vadd.f32 %v605, %v3248
        %v3250 = vpop.f32.mrb[0].mxu0
        %v3251 = vadd.f32 %v609, %v3250
        %v3252 = vpop.f32.mrb[0].mxu0
        %v3253 = vadd.f32 %v605, %v3252
        %v3254 = vpop.f32.mrb[0].mxu0
        %v3255 = vadd.f32 %v609, %v3254
        %3256 = vmatprep.mubr.bf16.mxu0 %v840
        %3257 = vmatmul.mubr.bf16.gmra.mrb[0].mxu0 %v839
        %v3258 = vpop.f32.mrb[0].mxu0
        %v3259 = vadd.f32 %v605, %v3258
        %v3260 = vpop.f32.mrb[0].mxu0
        %v3261 = vadd.f32 %v609, %v3260
        %v3262 = vpop.f32.mrb[0].mxu0
        %v3263 = vadd.f32 %v605, %v3262
        %v3264 = vpop.f32.mrb[0].mxu0
        %v3265 = vadd.f32 %v609, %v3264
        %3266 = vmatprep.mubr.bf16.mxu0 %v843
        %3267 = vmatmul.mubr.bf16.gmra.mrb[0].mxu0 %v842
        %v3268 = vpop.f32.mrb[0].mxu0
        %v3269 = vadd.f32 %v605, %v3268
        %v3270 = vpop.f32.mrb[0].mxu0
        %v3271 = vadd.f32 %v609, %v3270
        %v3272 = vpop.f32.mrb[0].mxu0
        %v3273 = vadd.f32 %v605, %v3272
        %v3274 = vpop.f32.mrb[0].mxu0
        %v3275 = vadd.f32 %v609, %v3274
        %3276 = vmatprep.mubr.bf16.mxu0 %v846
        %3277 = vmatmul.mubr.bf16.gmra.mrb[0].mxu0 %v845
        %v3278 = vpop.f32.mrb[0].mxu0
        %v3279 = vadd.f32 %v605, %v3278
        %v3280 = vpop.f32.mrb[0].mxu0
        %v3281 = vadd.f32 %v609, %v3280
        %v3282 = vpop.f32.mrb[0].mxu0
        %v3283 = vadd.f32 %v605, %v3282
        %v3284 = vpop.f32.mrb[0].mxu0
        %v3285 = vadd.f32 %v609, %v3284
        %3286 = vmatprep.mubr.bf16.mxu0 %v849
        %3287 = vmatmul.mubr.bf16.gmra.mrb[0].mxu0 %v848
        %v3288 = vpop.f32.mrb[0].mxu0
        %v3289 = vadd.f32 %v605, %v3288
        %v3290 = vpop.f32.mrb[0].mxu0
        %v3291 = vadd.f32 %v609, %v3290
        %v3292 = vpop.f32.mrb[0].mxu0
        %v3293 = vadd.f32 %v605, %v3292
        %v3294 = vpop.f32.mrb[0].mxu0
        %v3295 = vadd.f32 %v609, %v3294
        %3296 = vmatprep.mubr.bf16.mxu0 %v852
        %3297 = vmatmul.mubr.bf16.gmra.mrb[0].mxu0 %v851
        %v3298 = vpop.f32.mrb[0].mxu0
        %v3299 = vadd.f32 %v605, %v3298
        %v3300 = vpop.f32.mrb[0].mxu0
        %v3301 = vadd.f32 %v609, %v3300
        %v3302 = vpop.f32.mrb[0].mxu0
        %v3303 = vadd.f32 %v605, %v3302
        %v3304 = vpop.f32.mrb[0].mxu0
        %v3305 = vadd.f32 %v609, %v3304
        %3306 = vdwg.mxu0
        %3307 = vmatprep.subr.bf16.mxu0 %v1963
        %3308 = vmatpush1.bf16.msra.mxu0 %v1962
        %3309 = vmatprep.subr.bf16.mxu0 %v1975
        %3310 = vmatpush1.bf16.msra.mxu0 %v1974
        %3311 = vmatprep.subr.bf16.mxu0 %v1987
        %3312 = vmatpush1.bf16.msra.mxu0 %v1986
        %3313 = vmatprep.subr.bf16.mxu0 %v1999
        %3314 = vmatpush1.bf16.msra.mxu0 %v1998
        %3315 = vmatprep.subr.bf16.mxu0 %v2011
        %3316 = vmatpush1.bf16.msra.mxu0 %v2010
        %3317 = vmatprep.subr.bf16.mxu0 %v2023
        %3318 = vmatpush1.bf16.msra.mxu0 %v2022
        %3319 = vmatprep.subr.bf16.mxu0 %v2035
        %3320 = vmatpush1.bf16.msra.mxu0 %v2034
        %3321 = vmatprep.subr.bf16.mxu0 %v2047
        %3322 = vmatpush1.bf16.msra.mxu0 %v2046
        %3323 = vmatprep.subr.bf16.mxu0 0
        %3324 = vmatpush1.bf16.msra.mxu0 0
        %3325 = vmatprep.subr.bf16.mxu0 0
        %3326 = vmatpush1.bf16.msra.mxu0 0
        %3327 = vmatprep.subr.bf16.mxu0 0
        %3328 = vmatpush1.bf16.msra.mxu0 0
        %3329 = vmatprep.subr.bf16.mxu0 0
        %3330 = vmatpush1.bf16.msra.mxu0 0
        %3331 = vmatprep.subr.bf16.mxu0 0
        %3332 = vmatpush1.bf16.msra.mxu0 0
        %3333 = vmatprep.subr.bf16.mxu0 0
        %3334 = vmatpush1.bf16.msra.mxu0 0
        %3335 = vmatprep.subr.bf16.mxu0 0
        %3336 = vmatpush1.bf16.msra.mxu0 0
        %3337 = vmatprep.subr.bf16.mxu0 0
        %3338 = vmatpush1.bf16.msra.mxu0 0
        %3339 = vmatprep.mubr.bf16.mxu0 0
        %3340 = vmatmul.mubr.bf16.gmra.mrb[0].mxu0 %v808
        %v3341 = vpop.f32.mrb[0].mxu0
        %v3342 = vadd.f32 %v3149, %v3341
        %v3343 = vpop.f32.mrb[0].mxu0
        %v3344 = vadd.f32 %v3151, %v3343
        %v3345 = vpop.f32.mrb[0].mxu0
        %v3346 = vadd.f32 %v3153, %v3345
        %v3347 = vpop.f32.mrb[0].mxu0
        %v3348 = vadd.f32 %v3155, %v3347
        %3349 = vmatprep.mubr.bf16.mxu0 0
        %3350 = vmatmul.mubr.bf16.gmra.mrb[0].mxu0 %v811
        %v3351 = vpop.f32.mrb[0].mxu0
        %v3352 = vadd.f32 %v3159, %v3351
        %v3353 = vpop.f32.mrb[0].mxu0
        %v3354 = vadd.f32 %v3161, %v3353
        %v3355 = vpop.f32.mrb[0].mxu0
        %v3356 = vadd.f32 %v3163, %v3355
        %v3357 = vpop.f32.mrb[0].mxu0
        %v3358 = vadd.f32 %v3165, %v3357
        %3359 = vmatprep.mubr.bf16.mxu0 0
        %3360 = vmatmul.mubr.bf16.gmra.mrb[0].mxu0 %v814
        %v3361 = vpop.f32.mrb[0].mxu0
        %v3362 = vadd.f32 %v3169, %v3361
        %v3363 = vpop.f32.mrb[0].mxu0
        %v3364 = vadd.f32 %v3171, %v3363
        %v3365 = vpop.f32.mrb[0].mxu0
        %v3366 = vadd.f32 %v3173, %v3365
        %v3367 = vpop.f32.mrb[0].mxu0
        %v3368 = vadd.f32 %v3175, %v3367
        %3369 = vmatprep.mubr.bf16.mxu0 0
        %3370 = vmatmul.mubr.bf16.gmra.mrb[0].mxu0 %v817
        %v3371 = vpop.f32.mrb[0].mxu0
        %v3372 = vadd.f32 %v3179, %v3371
        %v3373 = vpop.f32.mrb[0].mxu0
        %v3374 = vadd.f32 %v3181, %v3373
        %v3375 = vpop.f32.mrb[0].mxu0
        %v3376 = vadd.f32 %v3183, %v3375
        %v3377 = vpop.f32.mrb[0].mxu0
        %v3378 = vadd.f32 %v3185, %v3377
        %3379 = vmatprep.mubr.bf16.mxu0 0
        %3380 = vmatmul.mubr.bf16.gmra.mrb[0].mxu0 %v820
        %v3381 = vpop.f32.mrb[0].mxu0
        %v3382 = vadd.f32 %v3189, %v3381
        %v3383 = vpop.f32.mrb[0].mxu0
        %v3384 = vadd.f32 %v3191, %v3383
        %v3385 = vpop.f32.mrb[0].mxu0
        %v3386 = vadd.f32 %v3193, %v3385
        %v3387 = vpop.f32.mrb[0].mxu0
        %v3388 = vadd.f32 %v3195, %v3387
        %3389 = vmatprep.mubr.bf16.mxu0 0
        %3390 = vmatmul.mubr.bf16.gmra.mrb[0].mxu0 %v823
        %v3391 = vpop.f32.mrb[0].mxu0
        %v3392 = vadd.f32 %v3199, %v3391
        %v3393 = vpop.f32.mrb[0].mxu0
        %v3394 = vadd.f32 %v3201, %v3393
        %v3395 = vpop.f32.mrb[0].mxu0
        %v3396 = vadd.f32 %v3203, %v3395
        %v3397 = vpop.f32.mrb[0].mxu0
        %v3398 = vadd.f32 %v3205, %v3397
        %3399 = vmatprep.mubr.bf16.mxu0 0
        %3400 = vmatmul.mubr.bf16.gmra.mrb[0].mxu0 %v826
        %v3401 = vpop.f32.mrb[0].mxu0
        %v3402 = vadd.f32 %v3209, %v3401
        %v3403 = vpop.f32.mrb[0].mxu0
        %v3404 = vadd.f32 %v3211, %v3403
        %v3405 = vpop.f32.mrb[0].mxu0
        %v3406 = vadd.f32 %v3213, %v3405
        %v3407 = vpop.f32.mrb[0].mxu0
        %v3408 = vadd.f32 %v3215, %v3407
        %3409 = vmatprep.mubr.bf16.mxu0 0
        %3410 = vmatmul.mubr.bf16.gmra.mrb[0].mxu0 %v829
        %v3411 = vpop.f32.mrb[0].mxu0
        %v3412 = vadd.f32 %v3219, %v3411
        %v3413 = vpop.f32.mrb[0].mxu0
        %v3414 = vadd.f32 %v3221, %v3413
        %v3415 = vpop.f32.mrb[0].mxu0
        %v3416 = vadd.f32 %v3223, %v3415
        %v3417 = vpop.f32.mrb[0].mxu0
        %v3418 = vadd.f32 %v3225, %v3417
        %3419 = vmatprep.mubr.bf16.mxu0 0
        %3420 = vmatmul.mubr.bf16.gmra.mrb[0].mxu0 %v832
        %v3421 = vpop.f32.mrb[0].mxu0
        %v3422 = vadd.f32 %v3229, %v3421
        %v3423 = vpop.f32.mrb[0].mxu0
        %v3424 = vadd.f32 %v3231, %v3423
        %v3425 = vpop.f32.mrb[0].mxu0
        %v3426 = vadd.f32 %v3233, %v3425
        %v3427 = vpop.f32.mrb[0].mxu0
        %v3428 = vadd.f32 %v3235, %v3427
        %3429 = vmatprep.mubr.bf16.mxu0 0
        %3430 = vmatmul.mubr.bf16.gmra.mrb[0].mxu0 %v835
        %v3431 = vpop.f32.mrb[0].mxu0
        %v3432 = vadd.f32 %v3239, %v3431
        %v3433 = vpop.f32.mrb[0].mxu0
        %v3434 = vadd.f32 %v3241, %v3433
        %v3435 = vpop.f32.mrb[0].mxu0
        %v3436 = vadd.f32 %v3243, %v3435
        %v3437 = vpop.f32.mrb[0].mxu0
        %v3438 = vadd.f32 %v3245, %v3437
        %3439 = vmatprep.mubr.bf16.mxu0 0
        %3440 = vmatmul.mubr.bf16.gmra.mrb[0].mxu0 %v838
        %v3441 = vpop.f32.mrb[0].mxu0
        %v3442 = vadd.f32 %v3249, %v3441
        %v3443 = vpop.f32.mrb[0].mxu0
        %v3444 = vadd.f32 %v3251, %v3443
        %v3445 = vpop.f32.mrb[0].mxu0
        %v3446 = vadd.f32 %v3253, %v3445
        %v3447 = vpop.f32.mrb[0].mxu0
        %v3448 = vadd.f32 %v3255, %v3447
        %3449 = vmatprep.mubr.bf16.mxu0 0
        %3450 = vmatmul.mubr.bf16.gmra.mrb[0].mxu0 %v841
        %v3451 = vpop.f32.mrb[0].mxu0
        %v3452 = vadd.f32 %v3259, %v3451
        %v3453 = vpop.f32.mrb[0].mxu0
        %v3454 = vadd.f32 %v3261, %v3453
        %v3455 = vpop.f32.mrb[0].mxu0
        %v3456 = vadd.f32 %v3263, %v3455
        %v3457 = vpop.f32.mrb[0].mxu0
        %v3458 = vadd.f32 %v3265, %v3457
        %3459 = vmatprep.mubr.bf16.mxu0 0
        %3460 = vmatmul.mubr.bf16.gmra.mrb[0].mxu0 %v844
        %v3461 = vpop.f32.mrb[0].mxu0
        %v3462 = vadd.f32 %v3269, %v3461
        %v3463 = vpop.f32.mrb[0].mxu0
        %v3464 = vadd.f32 %v3271, %v3463
        %v3465 = vpop.f32.mrb[0].mxu0
        %v3466 = vadd.f32 %v3273, %v3465
        %v3467 = vpop.f32.mrb[0].mxu0
        %v3468 = vadd.f32 %v3275, %v3467
        %3469 = vmatprep.mubr.bf16.mxu0 0
        %3470 = vmatmul.mubr.bf16.gmra.mrb[0].mxu0 %v847
        %v3471 = vpop.f32.mrb[0].mxu0
        %v3472 = vadd.f32 %v3279, %v3471
        %v3473 = vpop.f32.mrb[0].mxu0
        %v3474 = vadd.f32 %v3281, %v3473
        %v3475 = vpop.f32.mrb[0].mxu0
        %v3476 = vadd.f32 %v3283, %v3475
        %v3477 = vpop.f32.mrb[0].mxu0
        %v3478 = vadd.f32 %v3285, %v3477
        %3479 = vmatprep.mubr.bf16.mxu0 0
        %3480 = vmatmul.mubr.bf16.gmra.mrb[0].mxu0 %v850
        %v3481 = vpop.f32.mrb[0].mxu0
        %v3482 = vadd.f32 %v3289, %v3481
        %v3483 = vpop.f32.mrb[0].mxu0
        %v3484 = vadd.f32 %v3291, %v3483
        %v3485 = vpop.f32.mrb[0].mxu0
        %v3486 = vadd.f32 %v3293, %v3485
        %v3487 = vpop.f32.mrb[0].mxu0
        %v3488 = vadd.f32 %v3295, %v3487
        %3489 = vmatprep.mubr.bf16.mxu0 0
        %3490 = vmatmul.mubr.bf16.gmra.mrb[0].mxu0 %v853
        %v3491 = vpop.f32.mrb[0].mxu0
        %v3492 = vadd.f32 %v3299, %v3491
        %v3493 = vpop.f32.mrb[0].mxu0
        %v3494 = vadd.f32 %v3301, %v3493
        %v3495 = vpop.f32.mrb[0].mxu0
        %v3496 = vadd.f32 %v3303, %v3495
        %v3497 = vpop.f32.mrb[0].mxu0
        %v3498 = vadd.f32 %v3305, %v3497
        %3499 = vdwg.mxu0
        %3500 = vmatprep.subr.bf16.mxu0 %v1773
        %3501 = vmatpush1.bf16.msra.mxu0 %v1772
        %3502 = vmatprep.subr.bf16.mxu0 %v1785
        %3503 = vmatpush1.bf16.msra.mxu0 %v1784
        %3504 = vmatprep.subr.bf16.mxu0 %v1797
        %3505 = vmatpush1.bf16.msra.mxu0 %v1796
        %3506 = vmatprep.subr.bf16.mxu0 %v1809
        %3507 = vmatpush1.bf16.msra.mxu0 %v1808
        %3508 = vmatprep.subr.bf16.mxu0 %v1821
        %3509 = vmatpush1.bf16.msra.mxu0 %v1820
        %3510 = vmatprep.subr.bf16.mxu0 %v1833
        %3511 = vmatpush1.bf16.msra.mxu0 %v1832
        %3512 = vmatprep.subr.bf16.mxu0 %v1845
        %3513 = vmatpush1.bf16.msra.mxu0 %v1844
        %3514 = vmatprep.subr.bf16.mxu0 %v1857
        %3515 = vmatpush1.bf16.msra.mxu0 %v1856
        %3516 = vmatprep.subr.bf16.mxu0 %v1869
        %3517 = vmatpush1.bf16.msra.mxu0 %v1868
        %3518 = vmatprep.subr.bf16.mxu0 %v1881
        %3519 = vmatpush1.bf16.msra.mxu0 %v1880
        %3520 = vmatprep.subr.bf16.mxu0 %v1893
        %3521 = vmatpush1.bf16.msra.mxu0 %v1892
        %3522 = vmatprep.subr.bf16.mxu0 %v1905
        %3523 = vmatpush1.bf16.msra.mxu0 %v1904
        %3524 = vmatprep.subr.bf16.mxu0 %v1917
        %3525 = vmatpush1.bf16.msra.mxu0 %v1916
        %3526 = vmatprep.subr.bf16.mxu0 %v1929
        %3527 = vmatpush1.bf16.msra.mxu0 %v1928
        %3528 = vmatprep.subr.bf16.mxu0 %v1941
        %3529 = vmatpush1.bf16.msra.mxu0 %v1940
        %3530 = vmatprep.subr.bf16.mxu0 %v1953
        %3531 = vmatpush1.bf16.msra.mxu0 %v1952
        %3532 = vmatprep.mubr.bf16.mxu0 %v807
        %3533 = vmatmul.mubr.bf16.gmra.mrb[0].mxu0 %v806
        %v3534 = vpop.f32.mrb[0].mxu0
        %v3535 = vadd.f32 %v613, %v3534
        %v3536 = vpop.f32.mrb[0].mxu0
        %v3537 = vadd.f32 %v617, %v3536
        %v3538 = vpop.f32.mrb[0].mxu0
        %v3539 = vadd.f32 %v613, %v3538
        %v3540 = vpop.f32.mrb[0].mxu0
        %v3541 = vadd.f32 %v617, %v3540
        %3542 = vmatprep.mubr.bf16.mxu0 %v810
        %3543 = vmatmul.mubr.bf16.gmra.mrb[0].mxu0 %v809
        %v3544 = vpop.f32.mrb[0].mxu0
        %v3545 = vadd.f32 %v613, %v3544
        %v3546 = vpop.f32.mrb[0].mxu0
        %v3547 = vadd.f32 %v617, %v3546
        %v3548 = vpop.f32.mrb[0].mxu0
        %v3549 = vadd.f32 %v613, %v3548
        %v3550 = vpop.f32.mrb[0].mxu0
        %v3551 = vadd.f32 %v617, %v3550
        %3552 = vmatprep.mubr.bf16.mxu0 %v813
        %3553 = vmatmul.mubr.bf16.gmra.mrb[0].mxu0 %v812
        %v3554 = vpop.f32.mrb[0].mxu0
        %v3555 = vadd.f32 %v613, %v3554
        %v3556 = vpop.f32.mrb[0].mxu0
        %v3557 = vadd.f32 %v617, %v3556
        %v3558 = vpop.f32.mrb[0].mxu0
        %v3559 = vadd.f32 %v613, %v3558
        %v3560 = vpop.f32.mrb[0].mxu0
        %v3561 = vadd.f32 %v617, %v3560
        %3562 = vmatprep.mubr.bf16.mxu0 %v816
        %3563 = vmatmul.mubr.bf16.gmra.mrb[0].mxu0 %v815
        %v3564 = vpop.f32.mrb[0].mxu0
        %v3565 = vadd.f32 %v613, %v3564
        %v3566 = vpop.f32.mrb[0].mxu0
        %v3567 = vadd.f32 %v617, %v3566
        %v3568 = vpop.f32.mrb[0].mxu0
        %v3569 = vadd.f32 %v613, %v3568
        %v3570 = vpop.f32.mrb[0].mxu0
        %v3571 = vadd.f32 %v617, %v3570
        %3572 = vmatprep.mubr.bf16.mxu0 %v819
        %3573 = vmatmul.mubr.bf16.gmra.mrb[0].mxu0 %v818
        %v3574 = vpop.f32.mrb[0].mxu0
        %v3575 = vadd.f32 %v613, %v3574
        %v3576 = vpop.f32.mrb[0].mxu0
        %v3577 = vadd.f32 %v617, %v3576
        %v3578 = vpop.f32.mrb[0].mxu0
        %v3579 = vadd.f32 %v613, %v3578
        %v3580 = vpop.f32.mrb[0].mxu0
        %v3581 = vadd.f32 %v617, %v3580
        %3582 = vmatprep.mubr.bf16.mxu0 %v822
        %3583 = vmatmul.mubr.bf16.gmra.mrb[0].mxu0 %v821
        %v3584 = vpop.f32.mrb[0].mxu0
        %v3585 = vadd.f32 %v613, %v3584
        %v3586 = vpop.f32.mrb[0].mxu0
        %v3587 = vadd.f32 %v617, %v3586
        %v3588 = vpop.f32.mrb[0].mxu0
        %v3589 = vadd.f32 %v613, %v3588
        %v3590 = vpop.f32.mrb[0].mxu0
        %v3591 = vadd.f32 %v617, %v3590
        %3592 = vmatprep.mubr.bf16.mxu0 %v825
        %3593 = vmatmul.mubr.bf16.gmra.mrb[0].mxu0 %v824
        %v3594 = vpop.f32.mrb[0].mxu0
        %v3595 = vadd.f32 %v613, %v3594
        %v3596 = vpop.f32.mrb[0].mxu0
        %v3597 = vadd.f32 %v617, %v3596
        %v3598 = vpop.f32.mrb[0].mxu0
        %v3599 = vadd.f32 %v613, %v3598
        %v3600 = vpop.f32.mrb[0].mxu0
        %v3601 = vadd.f32 %v617, %v3600
        %3602 = vmatprep.mubr.bf16.mxu0 %v828
        %3603 = vmatmul.mubr.bf16.gmra.mrb[0].mxu0 %v827
        %v3604 = vpop.f32.mrb[0].mxu0
        %v3605 = vadd.f32 %v613, %v3604
        %v3606 = vpop.f32.mrb[0].mxu0
        %v3607 = vadd.f32 %v617, %v3606
        %v3608 = vpop.f32.mrb[0].mxu0
        %v3609 = vadd.f32 %v613, %v3608
        %v3610 = vpop.f32.mrb[0].mxu0
        %v3611 = vadd.f32 %v617, %v3610
        %3612 = vmatprep.mubr.bf16.mxu0 %v831
        %3613 = vmatmul.mubr.bf16.gmra.mrb[0].mxu0 %v830
        %v3614 = vpop.f32.mrb[0].mxu0
        %v3615 = vadd.f32 %v613, %v3614
        %v3616 = vpop.f32.mrb[0].mxu0
        %v3617 = vadd.f32 %v617, %v3616
        %v3618 = vpop.f32.mrb[0].mxu0
        %v3619 = vadd.f32 %v613, %v3618
        %v3620 = vpop.f32.mrb[0].mxu0
        %v3621 = vadd.f32 %v617, %v3620
        %3622 = vmatprep.mubr.bf16.mxu0 %v834
        %3623 = vmatmul.mubr.bf16.gmra.mrb[0].mxu0 %v833
        %v3624 = vpop.f32.mrb[0].mxu0
        %v3625 = vadd.f32 %v613, %v3624
        %v3626 = vpop.f32.mrb[0].mxu0
        %v3627 = vadd.f32 %v617, %v3626
        %v3628 = vpop.f32.mrb[0].mxu0
        %v3629 = vadd.f32 %v613, %v3628
        %v3630 = vpop.f32.mrb[0].mxu0
        %v3631 = vadd.f32 %v617, %v3630
        %3632 = vmatprep.mubr.bf16.mxu0 %v837
        %3633 = vmatmul.mubr.bf16.gmra.mrb[0].mxu0 %v836
        %v3634 = vpop.f32.mrb[0].mxu0
        %v3635 = vadd.f32 %v613, %v3634
        %v3636 = vpop.f32.mrb[0].mxu0
        %v3637 = vadd.f32 %v617, %v3636
        %v3638 = vpop.f32.mrb[0].mxu0
        %v3639 = vadd.f32 %v613, %v3638
        %v3640 = vpop.f32.mrb[0].mxu0
        %v3641 = vadd.f32 %v617, %v3640
        %3642 = vmatprep.mubr.bf16.mxu0 %v840
        %3643 = vmatmul.mubr.bf16.gmra.mrb[0].mxu0 %v839
        %v3644 = vpop.f32.mrb[0].mxu0
        %v3645 = vadd.f32 %v613, %v3644
        %v3646 = vpop.f32.mrb[0].mxu0
        %v3647 = vadd.f32 %v617, %v3646
        %v3648 = vpop.f32.mrb[0].mxu0
        %v3649 = vadd.f32 %v613, %v3648
        %v3650 = vpop.f32.mrb[0].mxu0
        %v3651 = vadd.f32 %v617, %v3650
        %3652 = vmatprep.mubr.bf16.mxu0 %v843
        %3653 = vmatmul.mubr.bf16.gmra.mrb[0].mxu0 %v842
        %v3654 = vpop.f32.mrb[0].mxu0
        %v3655 = vadd.f32 %v613, %v3654
        %v3656 = vpop.f32.mrb[0].mxu0
        %v3657 = vadd.f32 %v617, %v3656
        %v3658 = vpop.f32.mrb[0].mxu0
        %v3659 = vadd.f32 %v613, %v3658
        %v3660 = vpop.f32.mrb[0].mxu0
        %v3661 = vadd.f32 %v617, %v3660
        %3662 = vmatprep.mubr.bf16.mxu0 %v846
        %3663 = vmatmul.mubr.bf16.gmra.mrb[0].mxu0 %v845
        %v3664 = vpop.f32.mrb[0].mxu0
        %v3665 = vadd.f32 %v613, %v3664
        %v3666 = vpop.f32.mrb[0].mxu0
        %v3667 = vadd.f32 %v617, %v3666
        %v3668 = vpop.f32.mrb[0].mxu0
        %v3669 = vadd.f32 %v613, %v3668
        %v3670 = vpop.f32.mrb[0].mxu0
        %v3671 = vadd.f32 %v617, %v3670
        %3672 = vmatprep.mubr.bf16.mxu0 %v849
        %3673 = vmatmul.mubr.bf16.gmra.mrb[0].mxu0 %v848
        %v3674 = vpop.f32.mrb[0].mxu0
        %v3675 = vadd.f32 %v613, %v3674
        %v3676 = vpop.f32.mrb[0].mxu0
        %v3677 = vadd.f32 %v617, %v3676
        %v3678 = vpop.f32.mrb[0].mxu0
        %v3679 = vadd.f32 %v613, %v3678
        %v3680 = vpop.f32.mrb[0].mxu0
        %v3681 = vadd.f32 %v617, %v3680
        %3682 = vmatprep.mubr.bf16.mxu0 %v852
        %3683 = vmatmul.mubr.bf16.gmra.mrb[0].mxu0 %v851
        %v3684 = vpop.f32.mrb[0].mxu0
        %v3685 = vadd.f32 %v613, %v3684
        %v3686 = vpop.f32.mrb[0].mxu0
        %v3687 = vadd.f32 %v617, %v3686
        %v3688 = vpop.f32.mrb[0].mxu0
        %v3689 = vadd.f32 %v613, %v3688
        %v3690 = vpop.f32.mrb[0].mxu0
        %v3691 = vadd.f32 %v617, %v3690
        %3692 = vdwg.mxu0
        %3693 = vmatprep.subr.bf16.mxu0 %v1965
        %3694 = vmatpush1.bf16.msra.mxu0 %v1964
        %3695 = vmatprep.subr.bf16.mxu0 %v1977
        %3696 = vmatpush1.bf16.msra.mxu0 %v1976
        %3697 = vmatprep.subr.bf16.mxu0 %v1989
        %3698 = vmatpush1.bf16.msra.mxu0 %v1988
        %3699 = vmatprep.subr.bf16.mxu0 %v2001
        %3700 = vmatpush1.bf16.msra.mxu0 %v2000
        %3701 = vmatprep.subr.bf16.mxu0 %v2013
        %3702 = vmatpush1.bf16.msra.mxu0 %v2012
        %3703 = vmatprep.subr.bf16.mxu0 %v2025
        %3704 = vmatpush1.bf16.msra.mxu0 %v2024
        %3705 = vmatprep.subr.bf16.mxu0 %v2037
        %3706 = vmatpush1.bf16.msra.mxu0 %v2036
        %3707 = vmatprep.subr.bf16.mxu0 %v2049
        %3708 = vmatpush1.bf16.msra.mxu0 %v2048
        %3709 = vmatprep.subr.bf16.mxu0 0
        %3710 = vmatpush1.bf16.msra.mxu0 0
        %3711 = vmatprep.subr.bf16.mxu0 0
        %3712 = vmatpush1.bf16.msra.mxu0 0
        %3713 = vmatprep.subr.bf16.mxu0 0
        %3714 = vmatpush1.bf16.msra.mxu0 0
        %3715 = vmatprep.subr.bf16.mxu0 0
        %3716 = vmatpush1.bf16.msra.mxu0 0
        %3717 = vmatprep.subr.bf16.mxu0 0
        %3718 = vmatpush1.bf16.msra.mxu0 0
        %3719 = vmatprep.subr.bf16.mxu0 0
        %3720 = vmatpush1.bf16.msra.mxu0 0
        %3721 = vmatprep.subr.bf16.mxu0 0
        %3722 = vmatpush1.bf16.msra.mxu0 0
        %3723 = vmatprep.subr.bf16.mxu0 0
        %3724 = vmatpush1.bf16.msra.mxu0 0
        %3725 = vmatprep.mubr.bf16.mxu0 0
        %3726 = vmatmul.mubr.bf16.gmra.mrb[0].mxu0 %v808
        %v3727 = vpop.f32.mrb[0].mxu0
        %v3728 = vadd.f32 %v3535, %v3727
        %v3729 = vpop.f32.mrb[0].mxu0
        %v3730 = vadd.f32 %v3537, %v3729
        %v3731 = vpop.f32.mrb[0].mxu0
        %v3732 = vadd.f32 %v3539, %v3731
        %v3733 = vpop.f32.mrb[0].mxu0
        %v3734 = vadd.f32 %v3541, %v3733
        %3735 = vmatprep.mubr.bf16.mxu0 0
        %3736 = vmatmul.mubr.bf16.gmra.mrb[0].mxu0 %v811
        %v3737 = vpop.f32.mrb[0].mxu0
        %v3738 = vadd.f32 %v3545, %v3737
        %v3739 = vpop.f32.mrb[0].mxu0
        %v3740 = vadd.f32 %v3547, %v3739
        %v3741 = vpop.f32.mrb[0].mxu0
        %v3742 = vadd.f32 %v3549, %v3741
        %v3743 = vpop.f32.mrb[0].mxu0
        %v3744 = vadd.f32 %v3551, %v3743
        %3745 = vmatprep.mubr.bf16.mxu0 0
        %3746 = vmatmul.mubr.bf16.gmra.mrb[0].mxu0 %v814
        %v3747 = vpop.f32.mrb[0].mxu0
        %v3748 = vadd.f32 %v3555, %v3747
        %v3749 = vpop.f32.mrb[0].mxu0
        %v3750 = vadd.f32 %v3557, %v3749
        %v3751 = vpop.f32.mrb[0].mxu0
        %v3752 = vadd.f32 %v3559, %v3751
        %v3753 = vpop.f32.mrb[0].mxu0
        %v3754 = vadd.f32 %v3561, %v3753
        %3755 = vmatprep.mubr.bf16.mxu0 0
        %3756 = vmatmul.mubr.bf16.gmra.mrb[0].mxu0 %v817
        %v3757 = vpop.f32.mrb[0].mxu0
        %v3758 = vadd.f32 %v3565, %v3757
        %v3759 = vpop.f32.mrb[0].mxu0
        %v3760 = vadd.f32 %v3567, %v3759
        %v3761 = vpop.f32.mrb[0].mxu0
        %v3762 = vadd.f32 %v3569, %v3761
        %v3763 = vpop.f32.mrb[0].mxu0
        %v3764 = vadd.f32 %v3571, %v3763
        %3765 = vmatprep.mubr.bf16.mxu0 0
        %3766 = vmatmul.mubr.bf16.gmra.mrb[0].mxu0 %v820
        %v3767 = vpop.f32.mrb[0].mxu0
        %v3768 = vadd.f32 %v3575, %v3767
        %v3769 = vpop.f32.mrb[0].mxu0
        %v3770 = vadd.f32 %v3577, %v3769
        %v3771 = vpop.f32.mrb[0].mxu0
        %v3772 = vadd.f32 %v3579, %v3771
        %v3773 = vpop.f32.mrb[0].mxu0
        %v3774 = vadd.f32 %v3581, %v3773
        %3775 = vmatprep.mubr.bf16.mxu0 0
        %3776 = vmatmul.mubr.bf16.gmra.mrb[0].mxu0 %v823
        %v3777 = vpop.f32.mrb[0].mxu0
        %v3778 = vadd.f32 %v3585, %v3777
        %v3779 = vpop.f32.mrb[0].mxu0
        %v3780 = vadd.f32 %v3587, %v3779
        %v3781 = vpop.f32.mrb[0].mxu0
        %v3782 = vadd.f32 %v3589, %v3781
        %v3783 = vpop.f32.mrb[0].mxu0
        %v3784 = vadd.f32 %v3591, %v3783
        %3785 = vmatprep.mubr.bf16.mxu0 0
        %3786 = vmatmul.mubr.bf16.gmra.mrb[0].mxu0 %v826
        %v3787 = vpop.f32.mrb[0].mxu0
        %v3788 = vadd.f32 %v3595, %v3787
        %v3789 = vpop.f32.mrb[0].mxu0
        %v3790 = vadd.f32 %v3597, %v3789
        %v3791 = vpop.f32.mrb[0].mxu0
        %v3792 = vadd.f32 %v3599, %v3791
        %v3793 = vpop.f32.mrb[0].mxu0
        %v3794 = vadd.f32 %v3601, %v3793
        %3795 = vmatprep.mubr.bf16.mxu0 0
        %3796 = vmatmul.mubr.bf16.gmra.mrb[0].mxu0 %v829
        %v3797 = vpop.f32.mrb[0].mxu0
        %v3798 = vadd.f32 %v3605, %v3797
        %v3799 = vpop.f32.mrb[0].mxu0
        %v3800 = vadd.f32 %v3607, %v3799
        %v3801 = vpop.f32.mrb[0].mxu0
        %v3802 = vadd.f32 %v3609, %v3801
        %v3803 = vpop.f32.mrb[0].mxu0
        %v3804 = vadd.f32 %v3611, %v3803
        %3805 = vmatprep.mubr.bf16.mxu0 0
        %3806 = vmatmul.mubr.bf16.gmra.mrb[0].mxu0 %v832
        %v3807 = vpop.f32.mrb[0].mxu0
        %v3808 = vadd.f32 %v3615, %v3807
        %v3809 = vpop.f32.mrb[0].mxu0
        %v3810 = vadd.f32 %v3617, %v3809
        %v3811 = vpop.f32.mrb[0].mxu0
        %v3812 = vadd.f32 %v3619, %v3811
        %v3813 = vpop.f32.mrb[0].mxu0
        %v3814 = vadd.f32 %v3621, %v3813
        %3815 = vmatprep.mubr.bf16.mxu0 0
        %3816 = vmatmul.mubr.bf16.gmra.mrb[0].mxu0 %v835
        %v3817 = vpop.f32.mrb[0].mxu0
        %v3818 = vadd.f32 %v3625, %v3817
        %v3819 = vpop.f32.mrb[0].mxu0
        %v3820 = vadd.f32 %v3627, %v3819
        %v3821 = vpop.f32.mrb[0].mxu0
        %v3822 = vadd.f32 %v3629, %v3821
        %v3823 = vpop.f32.mrb[0].mxu0
        %v3824 = vadd.f32 %v3631, %v3823
        %3825 = vmatprep.mubr.bf16.mxu0 0
        %3826 = vmatmul.mubr.bf16.gmra.mrb[0].mxu0 %v838
        %v3827 = vpop.f32.mrb[0].mxu0
        %v3828 = vadd.f32 %v3635, %v3827
        %v3829 = vpop.f32.mrb[0].mxu0
        %v3830 = vadd.f32 %v3637, %v3829
        %v3831 = vpop.f32.mrb[0].mxu0
        %v3832 = vadd.f32 %v3639, %v3831
        %v3833 = vpop.f32.mrb[0].mxu0
        %v3834 = vadd.f32 %v3641, %v3833
        %3835 = vmatprep.mubr.bf16.mxu0 0
        %3836 = vmatmul.mubr.bf16.gmra.mrb[0].mxu0 %v841
        %v3837 = vpop.f32.mrb[0].mxu0
        %v3838 = vadd.f32 %v3645, %v3837
        %v3839 = vpop.f32.mrb[0].mxu0
        %v3840 = vadd.f32 %v3647, %v3839
        %v3841 = vpop.f32.mrb[0].mxu0
        %v3842 = vadd.f32 %v3649, %v3841
        %v3843 = vpop.f32.mrb[0].mxu0
        %v3844 = vadd.f32 %v3651, %v3843
        %3845 = vmatprep.mubr.bf16.mxu0 0
        %3846 = vmatmul.mubr.bf16.gmra.mrb[0].mxu0 %v844
        %v3847 = vpop.f32.mrb[0].mxu0
        %v3848 = vadd.f32 %v3655, %v3847
        %v3849 = vpop.f32.mrb[0].mxu0
        %v3850 = vadd.f32 %v3657, %v3849
        %v3851 = vpop.f32.mrb[0].mxu0
        %v3852 = vadd.f32 %v3659, %v3851
        %v3853 = vpop.f32.mrb[0].mxu0
        %v3854 = vadd.f32 %v3661, %v3853
        %3855 = vmatprep.mubr.bf16.mxu0 0
        %3856 = vmatmul.mubr.bf16.gmra.mrb[0].mxu0 %v847
        %v3857 = vpop.f32.mrb[0].mxu0
        %v3858 = vadd.f32 %v3665, %v3857
        %v3859 = vpop.f32.mrb[0].mxu0
        %v3860 = vadd.f32 %v3667, %v3859
        %v3861 = vpop.f32.mrb[0].mxu0
        %v3862 = vadd.f32 %v3669, %v3861
        %v3863 = vpop.f32.mrb[0].mxu0
        %v3864 = vadd.f32 %v3671, %v3863
        %3865 = vmatprep.mubr.bf16.mxu0 0
        %3866 = vmatmul.mubr.bf16.gmra.mrb[0].mxu0 %v850
        %v3867 = vpop.f32.mrb[0].mxu0
        %v3868 = vadd.f32 %v3675, %v3867
        %v3869 = vpop.f32.mrb[0].mxu0
        %v3870 = vadd.f32 %v3677, %v3869
        %v3871 = vpop.f32.mrb[0].mxu0
        %v3872 = vadd.f32 %v3679, %v3871
        %v3873 = vpop.f32.mrb[0].mxu0
        %v3874 = vadd.f32 %v3681, %v3873
        %3875 = vmatprep.mubr.bf16.mxu0 0
        %3876 = vmatmul.mubr.bf16.gmra.mrb[0].mxu0 %v853
        %v3877 = vpop.f32.mrb[0].mxu0
        %v3878 = vadd.f32 %v3685, %v3877
        %v3879 = vpop.f32.mrb[0].mxu0
        %v3880 = vadd.f32 %v3687, %v3879
        %v3881 = vpop.f32.mrb[0].mxu0
        %v3882 = vadd.f32 %v3689, %v3881
        %v3883 = vpop.f32.mrb[0].mxu0
        %v3884 = vadd.f32 %v3691, %v3883
        %3885 = vdwg.mxu0
        %3886 = vmatprep.subr.bf16.mxu0 %v1775
        %3887 = vmatpush1.bf16.msra.mxu0 %v1774
        %3888 = vmatprep.subr.bf16.mxu0 %v1787
        %3889 = vmatpush1.bf16.msra.mxu0 %v1786
        %3890 = vmatprep.subr.bf16.mxu0 %v1799
        %3891 = vmatpush1.bf16.msra.mxu0 %v1798
        %3892 = vmatprep.subr.bf16.mxu0 %v1811
        %3893 = vmatpush1.bf16.msra.mxu0 %v1810
        %3894 = vmatprep.subr.bf16.mxu0 %v1823
        %3895 = vmatpush1.bf16.msra.mxu0 %v1822
        %3896 = vmatprep.subr.bf16.mxu0 %v1835
        %3897 = vmatpush1.bf16.msra.mxu0 %v1834
        %3898 = vmatprep.subr.bf16.mxu0 %v1847
        %3899 = vmatpush1.bf16.msra.mxu0 %v1846
        %3900 = vmatprep.subr.bf16.mxu0 %v1859
        %3901 = vmatpush1.bf16.msra.mxu0 %v1858
        %3902 = vmatprep.subr.bf16.mxu0 %v1871
        %3903 = vmatpush1.bf16.msra.mxu0 %v1870
        %3904 = vmatprep.subr.bf16.mxu0 %v1883
        %3905 = vmatpush1.bf16.msra.mxu0 %v1882
        %3906 = vmatprep.subr.bf16.mxu0 %v1895
        %3907 = vmatpush1.bf16.msra.mxu0 %v1894
        %3908 = vmatprep.subr.bf16.mxu0 %v1907
        %3909 = vmatpush1.bf16.msra.mxu0 %v1906
        %3910 = vmatprep.subr.bf16.mxu0 %v1919
        %3911 = vmatpush1.bf16.msra.mxu0 %v1918
        %3912 = vmatprep.subr.bf16.mxu0 %v1931
        %3913 = vmatpush1.bf16.msra.mxu0 %v1930
        %3914 = vmatprep.subr.bf16.mxu0 %v1943
        %3915 = vmatpush1.bf16.msra.mxu0 %v1942
        %3916 = vmatprep.subr.bf16.mxu0 %v1955
        %3917 = vmatpush1.bf16.msra.mxu0 %v1954
        %3918 = vmatprep.mubr.bf16.mxu0 %v807
        %3919 = vmatmul.mubr.bf16.gmra.mrb[0].mxu0 %v806
        %v3920 = vpop.f32.mrb[0].mxu0
        %v3921 = vadd.f32 %v621, %v3920
        %v3922 = vpop.f32.mrb[0].mxu0
        %v3923 = vadd.f32 %v625, %v3922
        %v3924 = vpop.f32.mrb[0].mxu0
        %v3925 = vadd.f32 %v621, %v3924
        %v3926 = vpop.f32.mrb[0].mxu0
        %v3927 = vadd.f32 %v625, %v3926
        %3928 = vmatprep.mubr.bf16.mxu0 %v810
        %3929 = vmatmul.mubr.bf16.gmra.mrb[0].mxu0 %v809
        %v3930 = vpop.f32.mrb[0].mxu0
        %v3931 = vadd.f32 %v621, %v3930
        %v3932 = vpop.f32.mrb[0].mxu0
        %v3933 = vadd.f32 %v625, %v3932
        %v3934 = vpop.f32.mrb[0].mxu0
        %v3935 = vadd.f32 %v621, %v3934
        %v3936 = vpop.f32.mrb[0].mxu0
        %v3937 = vadd.f32 %v625, %v3936
        %3938 = vmatprep.mubr.bf16.mxu0 %v813
        %3939 = vmatmul.mubr.bf16.gmra.mrb[0].mxu0 %v812
        %v3940 = vpop.f32.mrb[0].mxu0
        %v3941 = vadd.f32 %v621, %v3940
        %v3942 = vpop.f32.mrb[0].mxu0
        %v3943 = vadd.f32 %v625, %v3942
        %v3944 = vpop.f32.mrb[0].mxu0
        %v3945 = vadd.f32 %v621, %v3944
        %v3946 = vpop.f32.mrb[0].mxu0
        %v3947 = vadd.f32 %v625, %v3946
        %3948 = vmatprep.mubr.bf16.mxu0 %v816
        %3949 = vmatmul.mubr.bf16.gmra.mrb[0].mxu0 %v815
        %v3950 = vpop.f32.mrb[0].mxu0
        %v3951 = vadd.f32 %v621, %v3950
        %v3952 = vpop.f32.mrb[0].mxu0
        %v3953 = vadd.f32 %v625, %v3952
        %v3954 = vpop.f32.mrb[0].mxu0
        %v3955 = vadd.f32 %v621, %v3954
        %v3956 = vpop.f32.mrb[0].mxu0
        %v3957 = vadd.f32 %v625, %v3956
        %3958 = vmatprep.mubr.bf16.mxu0 %v819
        %3959 = vmatmul.mubr.bf16.gmra.mrb[0].mxu0 %v818
        %v3960 = vpop.f32.mrb[0].mxu0
        %v3961 = vadd.f32 %v621, %v3960
        %v3962 = vpop.f32.mrb[0].mxu0
        %v3963 = vadd.f32 %v625, %v3962
        %v3964 = vpop.f32.mrb[0].mxu0
        %v3965 = vadd.f32 %v621, %v3964
        %v3966 = vpop.f32.mrb[0].mxu0
        %v3967 = vadd.f32 %v625, %v3966
        %3968 = vmatprep.mubr.bf16.mxu0 %v822
        %3969 = vmatmul.mubr.bf16.gmra.mrb[0].mxu0 %v821
        %v3970 = vpop.f32.mrb[0].mxu0
        %v3971 = vadd.f32 %v621, %v3970
        %v3972 = vpop.f32.mrb[0].mxu0
        %v3973 = vadd.f32 %v625, %v3972
        %v3974 = vpop.f32.mrb[0].mxu0
        %v3975 = vadd.f32 %v621, %v3974
        %v3976 = vpop.f32.mrb[0].mxu0
        %v3977 = vadd.f32 %v625, %v3976
        %3978 = vmatprep.mubr.bf16.mxu0 %v825
        %3979 = vmatmul.mubr.bf16.gmra.mrb[0].mxu0 %v824
        %v3980 = vpop.f32.mrb[0].mxu0
        %v3981 = vadd.f32 %v621, %v3980
        %v3982 = vpop.f32.mrb[0].mxu0
        %v3983 = vadd.f32 %v625, %v3982
        %v3984 = vpop.f32.mrb[0].mxu0
        %v3985 = vadd.f32 %v621, %v3984
        %v3986 = vpop.f32.mrb[0].mxu0
        %v3987 = vadd.f32 %v625, %v3986
        %3988 = vmatprep.mubr.bf16.mxu0 %v828
        %3989 = vmatmul.mubr.bf16.gmra.mrb[0].mxu0 %v827
        %v3990 = vpop.f32.mrb[0].mxu0
        %v3991 = vadd.f32 %v621, %v3990
        %v3992 = vpop.f32.mrb[0].mxu0
        %v3993 = vadd.f32 %v625, %v3992
        %v3994 = vpop.f32.mrb[0].mxu0
        %v3995 = vadd.f32 %v621, %v3994
        %v3996 = vpop.f32.mrb[0].mxu0
        %v3997 = vadd.f32 %v625, %v3996
        %3998 = vmatprep.mubr.bf16.mxu0 %v831
        %3999 = vmatmul.mubr.bf16.gmra.mrb[0].mxu0 %v830
        %v4000 = vpop.f32.mrb[0].mxu0
        %v4001 = vadd.f32 %v621, %v4000
        %v4002 = vpop.f32.mrb[0].mxu0
        %v4003 = vadd.f32 %v625, %v4002
        %v4004 = vpop.f32.mrb[0].mxu0
        %v4005 = vadd.f32 %v621, %v4004
        %v4006 = vpop.f32.mrb[0].mxu0
        %v4007 = vadd.f32 %v625, %v4006
        %4008 = vmatprep.mubr.bf16.mxu0 %v834
        %4009 = vmatmul.mubr.bf16.gmra.mrb[0].mxu0 %v833
        %v4010 = vpop.f32.mrb[0].mxu0
        %v4011 = vadd.f32 %v621, %v4010
        %v4012 = vpop.f32.mrb[0].mxu0
        %v4013 = vadd.f32 %v625, %v4012
        %v4014 = vpop.f32.mrb[0].mxu0
        %v4015 = vadd.f32 %v621, %v4014
        %v4016 = vpop.f32.mrb[0].mxu0
        %v4017 = vadd.f32 %v625, %v4016
        %4018 = vmatprep.mubr.bf16.mxu0 %v837
        %4019 = vmatmul.mubr.bf16.gmra.mrb[0].mxu0 %v836
        %v4020 = vpop.f32.mrb[0].mxu0
        %v4021 = vadd.f32 %v621, %v4020
        %v4022 = vpop.f32.mrb[0].mxu0
        %v4023 = vadd.f32 %v625, %v4022
        %v4024 = vpop.f32.mrb[0].mxu0
        %v4025 = vadd.f32 %v621, %v4024
        %v4026 = vpop.f32.mrb[0].mxu0
        %v4027 = vadd.f32 %v625, %v4026
        %4028 = vmatprep.mubr.bf16.mxu0 %v840
        %4029 = vmatmul.mubr.bf16.gmra.mrb[0].mxu0 %v839
        %v4030 = vpop.f32.mrb[0].mxu0
        %v4031 = vadd.f32 %v621, %v4030
        %v4032 = vpop.f32.mrb[0].mxu0
        %v4033 = vadd.f32 %v625, %v4032
        %v4034 = vpop.f32.mrb[0].mxu0
        %v4035 = vadd.f32 %v621, %v4034
        %v4036 = vpop.f32.mrb[0].mxu0
        %v4037 = vadd.f32 %v625, %v4036
        %4038 = vmatprep.mubr.bf16.mxu0 %v843
        %4039 = vmatmul.mubr.bf16.gmra.mrb[0].mxu0 %v842
        %v4040 = vpop.f32.mrb[0].mxu0
        %v4041 = vadd.f32 %v621, %v4040
        %v4042 = vpop.f32.mrb[0].mxu0
        %v4043 = vadd.f32 %v625, %v4042
        %v4044 = vpop.f32.mrb[0].mxu0
        %v4045 = vadd.f32 %v621, %v4044
        %v4046 = vpop.f32.mrb[0].mxu0
        %v4047 = vadd.f32 %v625, %v4046
        %4048 = vmatprep.mubr.bf16.mxu0 %v846
        %4049 = vmatmul.mubr.bf16.gmra.mrb[0].mxu0 %v845
        %v4050 = vpop.f32.mrb[0].mxu0
        %v4051 = vadd.f32 %v621, %v4050
        %v4052 = vpop.f32.mrb[0].mxu0
        %v4053 = vadd.f32 %v625, %v4052
        %v4054 = vpop.f32.mrb[0].mxu0
        %v4055 = vadd.f32 %v621, %v4054
        %v4056 = vpop.f32.mrb[0].mxu0
        %v4057 = vadd.f32 %v625, %v4056
        %4058 = vmatprep.mubr.bf16.mxu0 %v849
        %4059 = vmatmul.mubr.bf16.gmra.mrb[0].mxu0 %v848
        %v4060 = vpop.f32.mrb[0].mxu0
        %v4061 = vadd.f32 %v621, %v4060
        %v4062 = vpop.f32.mrb[0].mxu0
        %v4063 = vadd.f32 %v625, %v4062
        %v4064 = vpop.f32.mrb[0].mxu0
        %v4065 = vadd.f32 %v621, %v4064
        %v4066 = vpop.f32.mrb[0].mxu0
        %v4067 = vadd.f32 %v625, %v4066
        %4068 = vmatprep.mubr.bf16.mxu0 %v852
        %4069 = vmatmul.mubr.bf16.gmra.mrb[0].mxu0 %v851
        %v4070 = vpop.f32.mrb[0].mxu0
        %v4071 = vadd.f32 %v621, %v4070
        %v4072 = vpop.f32.mrb[0].mxu0
        %v4073 = vadd.f32 %v625, %v4072
        %v4074 = vpop.f32.mrb[0].mxu0
        %v4075 = vadd.f32 %v621, %v4074
        %v4076 = vpop.f32.mrb[0].mxu0
        %v4077 = vadd.f32 %v625, %v4076
        %4078 = vdwg.mxu0
        %4079 = vmatprep.subr.bf16.mxu0 %v1967
        %4080 = vmatpush1.bf16.msra.mxu0 %v1966
        %4081 = vmatprep.subr.bf16.mxu0 %v1979
        %4082 = vmatpush1.bf16.msra.mxu0 %v1978
        %4083 = vmatprep.subr.bf16.mxu0 %v1991
        %4084 = vmatpush1.bf16.msra.mxu0 %v1990
        %4085 = vmatprep.subr.bf16.mxu0 %v2003
        %4086 = vmatpush1.bf16.msra.mxu0 %v2002
        %4087 = vmatprep.subr.bf16.mxu0 %v2015
        %4088 = vmatpush1.bf16.msra.mxu0 %v2014
        %4089 = vmatprep.subr.bf16.mxu0 %v2027
        %4090 = vmatpush1.bf16.msra.mxu0 %v2026
        %4091 = vmatprep.subr.bf16.mxu0 %v2039
        %4092 = vmatpush1.bf16.msra.mxu0 %v2038
        %4093 = vmatprep.subr.bf16.mxu0 %v2051
        %4094 = vmatpush1.bf16.msra.mxu0 %v2050
        %4095 = vmatprep.subr.bf16.mxu0 0
        %4096 = vmatpush1.bf16.msra.mxu0 0
        %4097 = vmatprep.subr.bf16.mxu0 0
        %4098 = vmatpush1.bf16.msra.mxu0 0
        %4099 = vmatprep.subr.bf16.mxu0 0
        %4100 = vmatpush1.bf16.msra.mxu0 0
        %4101 = vmatprep.subr.bf16.mxu0 0
        %4102 = vmatpush1.bf16.msra.mxu0 0
        %4103 = vmatprep.subr.bf16.mxu0 0
        %4104 = vmatpush1.bf16.msra.mxu0 0
        %4105 = vmatprep.subr.bf16.mxu0 0
        %4106 = vmatpush1.bf16.msra.mxu0 0
        %4107 = vmatprep.subr.bf16.mxu0 0
        %4108 = vmatpush1.bf16.msra.mxu0 0
        %4109 = vmatprep.subr.bf16.mxu0 0
        %4110 = vmatpush1.bf16.msra.mxu0 0
        %4111 = vmatprep.mubr.bf16.mxu0 0
        %4112 = vmatmul.mubr.bf16.gmra.mrb[0].mxu0 %v808
        %v4113 = vpop.f32.mrb[0].mxu0
        %v4114 = vadd.f32 %v3921, %v4113
        %v4115 = vpop.f32.mrb[0].mxu0
        %v4116 = vadd.f32 %v3923, %v4115
        %v4117 = vpop.f32.mrb[0].mxu0
        %v4118 = vadd.f32 %v3925, %v4117
        %v4119 = vpop.f32.mrb[0].mxu0
        %v4120 = vadd.f32 %v3927, %v4119
        %4121 = vmatprep.mubr.bf16.mxu0 0
        %4122 = vmatmul.mubr.bf16.gmra.mrb[0].mxu0 %v811
        %v4123 = vpop.f32.mrb[0].mxu0
        %v4124 = vadd.f32 %v3931, %v4123
        %v4125 = vpop.f32.mrb[0].mxu0
        %v4126 = vadd.f32 %v3933, %v4125
        %v4127 = vpop.f32.mrb[0].mxu0
        %v4128 = vadd.f32 %v3935, %v4127
        %v4129 = vpop.f32.mrb[0].mxu0
        %v4130 = vadd.f32 %v3937, %v4129
        %4131 = vmatprep.mubr.bf16.mxu0 0
        %4132 = vmatmul.mubr.bf16.gmra.mrb[0].mxu0 %v814
        %v4133 = vpop.f32.mrb[0].mxu0
        %v4134 = vadd.f32 %v3941, %v4133
        %v4135 = vpop.f32.mrb[0].mxu0
        %v4136 = vadd.f32 %v3943, %v4135
        %v4137 = vpop.f32.mrb[0].mxu0
        %v4138 = vadd.f32 %v3945, %v4137
        %v4139 = vpop.f32.mrb[0].mxu0
        %v4140 = vadd.f32 %v3947, %v4139
        %4141 = vmatprep.mubr.bf16.mxu0 0
        %4142 = vmatmul.mubr.bf16.gmra.mrb[0].mxu0 %v817
        %v4143 = vpop.f32.mrb[0].mxu0
        %v4144 = vadd.f32 %v3951, %v4143
        %v4145 = vpop.f32.mrb[0].mxu0
        %v4146 = vadd.f32 %v3953, %v4145
        %v4147 = vpop.f32.mrb[0].mxu0
        %v4148 = vadd.f32 %v3955, %v4147
        %v4149 = vpop.f32.mrb[0].mxu0
        %v4150 = vadd.f32 %v3957, %v4149
        %4151 = vmatprep.mubr.bf16.mxu0 0
        %4152 = vmatmul.mubr.bf16.gmra.mrb[0].mxu0 %v820
        %v4153 = vpop.f32.mrb[0].mxu0
        %v4154 = vadd.f32 %v3961, %v4153
        %v4155 = vpop.f32.mrb[0].mxu0
        %v4156 = vadd.f32 %v3963, %v4155
        %v4157 = vpop.f32.mrb[0].mxu0
        %v4158 = vadd.f32 %v3965, %v4157
        %v4159 = vpop.f32.mrb[0].mxu0
        %v4160 = vadd.f32 %v3967, %v4159
        %4161 = vmatprep.mubr.bf16.mxu0 0
        %4162 = vmatmul.mubr.bf16.gmra.mrb[0].mxu0 %v823
        %v4163 = vpop.f32.mrb[0].mxu0
        %v4164 = vadd.f32 %v3971, %v4163
        %v4165 = vpop.f32.mrb[0].mxu0
        %v4166 = vadd.f32 %v3973, %v4165
        %v4167 = vpop.f32.mrb[0].mxu0
        %v4168 = vadd.f32 %v3975, %v4167
        %v4169 = vpop.f32.mrb[0].mxu0
        %v4170 = vadd.f32 %v3977, %v4169
        %4171 = vmatprep.mubr.bf16.mxu0 0
        %4172 = vmatmul.mubr.bf16.gmra.mrb[0].mxu0 %v826
        %v4173 = vpop.f32.mrb[0].mxu0
        %v4174 = vadd.f32 %v3981, %v4173
        %v4175 = vpop.f32.mrb[0].mxu0
        %v4176 = vadd.f32 %v3983, %v4175
        %v4177 = vpop.f32.mrb[0].mxu0
        %v4178 = vadd.f32 %v3985, %v4177
        %v4179 = vpop.f32.mrb[0].mxu0
        %v4180 = vadd.f32 %v3987, %v4179
        %4181 = vmatprep.mubr.bf16.mxu0 0
        %4182 = vmatmul.mubr.bf16.gmra.mrb[0].mxu0 %v829
        %v4183 = vpop.f32.mrb[0].mxu0
        %v4184 = vadd.f32 %v3991, %v4183
        %v4185 = vpop.f32.mrb[0].mxu0
        %v4186 = vadd.f32 %v3993, %v4185
        %v4187 = vpop.f32.mrb[0].mxu0
        %v4188 = vadd.f32 %v3995, %v4187
        %v4189 = vpop.f32.mrb[0].mxu0
        %v4190 = vadd.f32 %v3997, %v4189
        %4191 = vmatprep.mubr.bf16.mxu0 0
        %4192 = vmatmul.mubr.bf16.gmra.mrb[0].mxu0 %v832
        %v4193 = vpop.f32.mrb[0].mxu0
        %v4194 = vadd.f32 %v4001, %v4193
        %v4195 = vpop.f32.mrb[0].mxu0
        %v4196 = vadd.f32 %v4003, %v4195
        %v4197 = vpop.f32.mrb[0].mxu0
        %v4198 = vadd.f32 %v4005, %v4197
        %v4199 = vpop.f32.mrb[0].mxu0
        %v4200 = vadd.f32 %v4007, %v4199
        %4201 = vmatprep.mubr.bf16.mxu0 0
        %4202 = vmatmul.mubr.bf16.gmra.mrb[0].mxu0 %v835
        %v4203 = vpop.f32.mrb[0].mxu0
        %v4204 = vadd.f32 %v4011, %v4203
        %v4205 = vpop.f32.mrb[0].mxu0
        %v4206 = vadd.f32 %v4013, %v4205
        %v4207 = vpop.f32.mrb[0].mxu0
        %v4208 = vadd.f32 %v4015, %v4207
        %v4209 = vpop.f32.mrb[0].mxu0
        %v4210 = vadd.f32 %v4017, %v4209
        %4211 = vmatprep.mubr.bf16.mxu0 0
        %4212 = vmatmul.mubr.bf16.gmra.mrb[0].mxu0 %v838
        %v4213 = vpop.f32.mrb[0].mxu0
        %v4214 = vadd.f32 %v4021, %v4213
        %v4215 = vpop.f32.mrb[0].mxu0
        %v4216 = vadd.f32 %v4023, %v4215
        %v4217 = vpop.f32.mrb[0].mxu0
        %v4218 = vadd.f32 %v4025, %v4217
        %v4219 = vpop.f32.mrb[0].mxu0
        %v4220 = vadd.f32 %v4027, %v4219
        %4221 = vmatprep.mubr.bf16.mxu0 0
        %4222 = vmatmul.mubr.bf16.gmra.mrb[0].mxu0 %v841
        %v4223 = vpop.f32.mrb[0].mxu0
        %v4224 = vadd.f32 %v4031, %v4223
        %v4225 = vpop.f32.mrb[0].mxu0
        %v4226 = vadd.f32 %v4033, %v4225
        %v4227 = vpop.f32.mrb[0].mxu0
        %v4228 = vadd.f32 %v4035, %v4227
        %v4229 = vpop.f32.mrb[0].mxu0
        %v4230 = vadd.f32 %v4037, %v4229
        %4231 = vmatprep.mubr.bf16.mxu0 0
        %4232 = vmatmul.mubr.bf16.gmra.mrb[0].mxu0 %v844
        %v4233 = vpop.f32.mrb[0].mxu0
        %v4234 = vadd.f32 %v4041, %v4233
        %v4235 = vpop.f32.mrb[0].mxu0
        %v4236 = vadd.f32 %v4043, %v4235
        %v4237 = vpop.f32.mrb[0].mxu0
        %v4238 = vadd.f32 %v4045, %v4237
        %v4239 = vpop.f32.mrb[0].mxu0
        %v4240 = vadd.f32 %v4047, %v4239
        %4241 = vmatprep.mubr.bf16.mxu0 0
        %4242 = vmatmul.mubr.bf16.gmra.mrb[0].mxu0 %v847
        %v4243 = vpop.f32.mrb[0].mxu0
        %v4244 = vadd.f32 %v4051, %v4243
        %v4245 = vpop.f32.mrb[0].mxu0
        %v4246 = vadd.f32 %v4053, %v4245
        %v4247 = vpop.f32.mrb[0].mxu0
        %v4248 = vadd.f32 %v4055, %v4247
        %v4249 = vpop.f32.mrb[0].mxu0
        %v4250 = vadd.f32 %v4057, %v4249
        %4251 = vmatprep.mubr.bf16.mxu0 0
        %4252 = vmatmul.mubr.bf16.gmra.mrb[0].mxu0 %v850
        %v4253 = vpop.f32.mrb[0].mxu0
        %v4254 = vadd.f32 %v4061, %v4253
        %v4255 = vpop.f32.mrb[0].mxu0
        %v4256 = vadd.f32 %v4063, %v4255
        %v4257 = vpop.f32.mrb[0].mxu0
        %v4258 = vadd.f32 %v4065, %v4257
        %v4259 = vpop.f32.mrb[0].mxu0
        %v4260 = vadd.f32 %v4067, %v4259
        %4261 = vmatprep.mubr.bf16.mxu0 0
        %4262 = vmatmul.mubr.bf16.gmra.mrb[0].mxu0 %v853
        %v4263 = vpop.f32.mrb[0].mxu0
        %v4264 = vadd.f32 %v4071, %v4263
        %v4265 = vpop.f32.mrb[0].mxu0
        %v4266 = vadd.f32 %v4073, %v4265
        %v4267 = vpop.f32.mrb[0].mxu0
        %v4268 = vadd.f32 %v4075, %v4267
        %v4269 = vpop.f32.mrb[0].mxu0
        %v4270 = vadd.f32 %v4077, %v4269
        %4271 = vdwg.mxu0
        %4272 = vmatprep.subr.bf16.mxu0 %v1777
        %4273 = vmatpush1.bf16.msra.mxu0 %v1776
        %4274 = vmatprep.subr.bf16.mxu0 %v1789
        %4275 = vmatpush1.bf16.msra.mxu0 %v1788
        %4276 = vmatprep.subr.bf16.mxu0 %v1801
        %4277 = vmatpush1.bf16.msra.mxu0 %v1800
        %4278 = vmatprep.subr.bf16.mxu0 %v1813
        %4279 = vmatpush1.bf16.msra.mxu0 %v1812
        %4280 = vmatprep.subr.bf16.mxu0 %v1825
        %4281 = vmatpush1.bf16.msra.mxu0 %v1824
        %4282 = vmatprep.subr.bf16.mxu0 %v1837
        %4283 = vmatpush1.bf16.msra.mxu0 %v1836
        %4284 = vmatprep.subr.bf16.mxu0 %v1849
        %4285 = vmatpush1.bf16.msra.mxu0 %v1848
        %4286 = vmatprep.subr.bf16.mxu0 %v1861
        %4287 = vmatpush1.bf16.msra.mxu0 %v1860
        %4288 = vmatprep.subr.bf16.mxu0 %v1873
        %4289 = vmatpush1.bf16.msra.mxu0 %v1872
        %4290 = vmatprep.subr.bf16.mxu0 %v1885
        %4291 = vmatpush1.bf16.msra.mxu0 %v1884
        %4292 = vmatprep.subr.bf16.mxu0 %v1897
        %4293 = vmatpush1.bf16.msra.mxu0 %v1896
        %4294 = vmatprep.subr.bf16.mxu0 %v1909
        %4295 = vmatpush1.bf16.msra.mxu0 %v1908
        %4296 = vmatprep.subr.bf16.mxu0 %v1921
        %4297 = vmatpush1.bf16.msra.mxu0 %v1920
        %4298 = vmatprep.subr.bf16.mxu0 %v1933
        %4299 = vmatpush1.bf16.msra.mxu0 %v1932
        %4300 = vmatprep.subr.bf16.mxu0 %v1945
        %4301 = vmatpush1.bf16.msra.mxu0 %v1944
        %4302 = vmatprep.subr.bf16.mxu0 %v1957
        %4303 = vmatpush1.bf16.msra.mxu0 %v1956
        %4304 = vmatprep.mubr.bf16.mxu0 %v807
        %4305 = vmatmul.mubr.bf16.gmra.mrb[0].mxu0 %v806
        %v4306 = vpop.f32.mrb[0].mxu0
        %v4307 = vadd.f32 %v629, %v4306
        %v4308 = vpop.f32.mrb[0].mxu0
        %v4309 = vadd.f32 %v633, %v4308
        %v4310 = vpop.f32.mrb[0].mxu0
        %v4311 = vadd.f32 %v629, %v4310
        %v4312 = vpop.f32.mrb[0].mxu0
        %v4313 = vadd.f32 %v633, %v4312
        %4314 = vmatprep.mubr.bf16.mxu0 %v810
        %4315 = vmatmul.mubr.bf16.gmra.mrb[0].mxu0 %v809
        %v4316 = vpop.f32.mrb[0].mxu0
        %v4317 = vadd.f32 %v629, %v4316
        %v4318 = vpop.f32.mrb[0].mxu0
        %v4319 = vadd.f32 %v633, %v4318
        %v4320 = vpop.f32.mrb[0].mxu0
        %v4321 = vadd.f32 %v629, %v4320
        %v4322 = vpop.f32.mrb[0].mxu0
        %v4323 = vadd.f32 %v633, %v4322
        %4324 = vmatprep.mubr.bf16.mxu0 %v813
        %4325 = vmatmul.mubr.bf16.gmra.mrb[0].mxu0 %v812
        %v4326 = vpop.f32.mrb[0].mxu0
        %v4327 = vadd.f32 %v629, %v4326
        %v4328 = vpop.f32.mrb[0].mxu0
        %v4329 = vadd.f32 %v633, %v4328
        %v4330 = vpop.f32.mrb[0].mxu0
        %v4331 = vadd.f32 %v629, %v4330
        %v4332 = vpop.f32.mrb[0].mxu0
        %v4333 = vadd.f32 %v633, %v4332
        %4334 = vmatprep.mubr.bf16.mxu0 %v816
        %4335 = vmatmul.mubr.bf16.gmra.mrb[0].mxu0 %v815
        %v4336 = vpop.f32.mrb[0].mxu0
        %v4337 = vadd.f32 %v629, %v4336
        %v4338 = vpop.f32.mrb[0].mxu0
        %v4339 = vadd.f32 %v633, %v4338
        %v4340 = vpop.f32.mrb[0].mxu0
        %v4341 = vadd.f32 %v629, %v4340
        %v4342 = vpop.f32.mrb[0].mxu0
        %v4343 = vadd.f32 %v633, %v4342
        %4344 = vmatprep.mubr.bf16.mxu0 %v819
        %4345 = vmatmul.mubr.bf16.gmra.mrb[0].mxu0 %v818
        %v4346 = vpop.f32.mrb[0].mxu0
        %v4347 = vadd.f32 %v629, %v4346
        %v4348 = vpop.f32.mrb[0].mxu0
        %v4349 = vadd.f32 %v633, %v4348
        %v4350 = vpop.f32.mrb[0].mxu0
        %v4351 = vadd.f32 %v629, %v4350
        %v4352 = vpop.f32.mrb[0].mxu0
        %v4353 = vadd.f32 %v633, %v4352
        %4354 = vmatprep.mubr.bf16.mxu0 %v822
        %4355 = vmatmul.mubr.bf16.gmra.mrb[0].mxu0 %v821
        %v4356 = vpop.f32.mrb[0].mxu0
        %v4357 = vadd.f32 %v629, %v4356
        %v4358 = vpop.f32.mrb[0].mxu0
        %v4359 = vadd.f32 %v633, %v4358
        %v4360 = vpop.f32.mrb[0].mxu0
        %v4361 = vadd.f32 %v629, %v4360
        %v4362 = vpop.f32.mrb[0].mxu0
        %v4363 = vadd.f32 %v633, %v4362
        %4364 = vmatprep.mubr.bf16.mxu0 %v825
        %4365 = vmatmul.mubr.bf16.gmra.mrb[0].mxu0 %v824
        %v4366 = vpop.f32.mrb[0].mxu0
        %v4367 = vadd.f32 %v629, %v4366
        %v4368 = vpop.f32.mrb[0].mxu0
        %v4369 = vadd.f32 %v633, %v4368
        %v4370 = vpop.f32.mrb[0].mxu0
        %v4371 = vadd.f32 %v629, %v4370
        %v4372 = vpop.f32.mrb[0].mxu0
        %v4373 = vadd.f32 %v633, %v4372
        %4374 = vmatprep.mubr.bf16.mxu0 %v828
        %4375 = vmatmul.mubr.bf16.gmra.mrb[0].mxu0 %v827
        %v4376 = vpop.f32.mrb[0].mxu0
        %v4377 = vadd.f32 %v629, %v4376
        %v4378 = vpop.f32.mrb[0].mxu0
        %v4379 = vadd.f32 %v633, %v4378
        %v4380 = vpop.f32.mrb[0].mxu0
        %v4381 = vadd.f32 %v629, %v4380
        %v4382 = vpop.f32.mrb[0].mxu0
        %v4383 = vadd.f32 %v633, %v4382
        %4384 = vmatprep.mubr.bf16.mxu0 %v831
        %4385 = vmatmul.mubr.bf16.gmra.mrb[0].mxu0 %v830
        %v4386 = vpop.f32.mrb[0].mxu0
        %v4387 = vadd.f32 %v629, %v4386
        %v4388 = vpop.f32.mrb[0].mxu0
        %v4389 = vadd.f32 %v633, %v4388
        %v4390 = vpop.f32.mrb[0].mxu0
        %v4391 = vadd.f32 %v629, %v4390
        %v4392 = vpop.f32.mrb[0].mxu0
        %v4393 = vadd.f32 %v633, %v4392
        %4394 = vmatprep.mubr.bf16.mxu0 %v834
        %4395 = vmatmul.mubr.bf16.gmra.mrb[0].mxu0 %v833
        %v4396 = vpop.f32.mrb[0].mxu0
        %v4397 = vadd.f32 %v629, %v4396
        %v4398 = vpop.f32.mrb[0].mxu0
        %v4399 = vadd.f32 %v633, %v4398
        %v4400 = vpop.f32.mrb[0].mxu0
        %v4401 = vadd.f32 %v629, %v4400
        %v4402 = vpop.f32.mrb[0].mxu0
        %v4403 = vadd.f32 %v633, %v4402
        %4404 = vmatprep.mubr.bf16.mxu0 %v837
        %4405 = vmatmul.mubr.bf16.gmra.mrb[0].mxu0 %v836
        %v4406 = vpop.f32.mrb[0].mxu0
        %v4407 = vadd.f32 %v629, %v4406
        %v4408 = vpop.f32.mrb[0].mxu0
        %v4409 = vadd.f32 %v633, %v4408
        %v4410 = vpop.f32.mrb[0].mxu0
        %v4411 = vadd.f32 %v629, %v4410
        %v4412 = vpop.f32.mrb[0].mxu0
        %v4413 = vadd.f32 %v633, %v4412
        %4414 = vmatprep.mubr.bf16.mxu0 %v840
        %4415 = vmatmul.mubr.bf16.gmra.mrb[0].mxu0 %v839
        %v4416 = vpop.f32.mrb[0].mxu0
        %v4417 = vadd.f32 %v629, %v4416
        %v4418 = vpop.f32.mrb[0].mxu0
        %v4419 = vadd.f32 %v633, %v4418
        %v4420 = vpop.f32.mrb[0].mxu0
        %v4421 = vadd.f32 %v629, %v4420
        %v4422 = vpop.f32.mrb[0].mxu0
        %v4423 = vadd.f32 %v633, %v4422
        %4424 = vmatprep.mubr.bf16.mxu0 %v843
        %4425 = vmatmul.mubr.bf16.gmra.mrb[0].mxu0 %v842
        %v4426 = vpop.f32.mrb[0].mxu0
        %v4427 = vadd.f32 %v629, %v4426
        %v4428 = vpop.f32.mrb[0].mxu0
        %v4429 = vadd.f32 %v633, %v4428
        %v4430 = vpop.f32.mrb[0].mxu0
        %v4431 = vadd.f32 %v629, %v4430
        %v4432 = vpop.f32.mrb[0].mxu0
        %v4433 = vadd.f32 %v633, %v4432
        %4434 = vmatprep.mubr.bf16.mxu0 %v846
        %4435 = vmatmul.mubr.bf16.gmra.mrb[0].mxu0 %v845
        %v4436 = vpop.f32.mrb[0].mxu0
        %v4437 = vadd.f32 %v629, %v4436
        %v4438 = vpop.f32.mrb[0].mxu0
        %v4439 = vadd.f32 %v633, %v4438
        %v4440 = vpop.f32.mrb[0].mxu0
        %v4441 = vadd.f32 %v629, %v4440
        %v4442 = vpop.f32.mrb[0].mxu0
        %v4443 = vadd.f32 %v633, %v4442
        %4444 = vmatprep.mubr.bf16.mxu0 %v849
        %4445 = vmatmul.mubr.bf16.gmra.mrb[0].mxu0 %v848
        %v4446 = vpop.f32.mrb[0].mxu0
        %v4447 = vadd.f32 %v629, %v4446
        %v4448 = vpop.f32.mrb[0].mxu0
        %v4449 = vadd.f32 %v633, %v4448
        %v4450 = vpop.f32.mrb[0].mxu0
        %v4451 = vadd.f32 %v629, %v4450
        %v4452 = vpop.f32.mrb[0].mxu0
        %v4453 = vadd.f32 %v633, %v4452
        %4454 = vmatprep.mubr.bf16.mxu0 %v852
        %4455 = vmatmul.mubr.bf16.gmra.mrb[0].mxu0 %v851
        %v4456 = vpop.f32.mrb[0].mxu0
        %v4457 = vadd.f32 %v629, %v4456
        %v4458 = vpop.f32.mrb[0].mxu0
        %v4459 = vadd.f32 %v633, %v4458
        %v4460 = vpop.f32.mrb[0].mxu0
        %v4461 = vadd.f32 %v629, %v4460
        %v4462 = vpop.f32.mrb[0].mxu0
        %v4463 = vadd.f32 %v633, %v4462
        %4464 = vdwg.mxu0
        %4465 = vmatprep.subr.bf16.mxu0 %v1969
        %4466 = vmatpush1.bf16.msra.mxu0 %v1968
        %4467 = vmatprep.subr.bf16.mxu0 %v1981
        %4468 = vmatpush1.bf16.msra.mxu0 %v1980
        %4469 = vmatprep.subr.bf16.mxu0 %v1993
        %4470 = vmatpush1.bf16.msra.mxu0 %v1992
        %4471 = vmatprep.subr.bf16.mxu0 %v2005
        %4472 = vmatpush1.bf16.msra.mxu0 %v2004
        %4473 = vmatprep.subr.bf16.mxu0 %v2017
        %4474 = vmatpush1.bf16.msra.mxu0 %v2016
        %4475 = vmatprep.subr.bf16.mxu0 %v2029
        %4476 = vmatpush1.bf16.msra.mxu0 %v2028
        %4477 = vmatprep.subr.bf16.mxu0 %v2041
        %4478 = vmatpush1.bf16.msra.mxu0 %v2040
        %4479 = vmatprep.subr.bf16.mxu0 %v2053
        %4480 = vmatpush1.bf16.msra.mxu0 %v2052
        %4481 = vmatprep.subr.bf16.mxu0 0
        %4482 = vmatpush1.bf16.msra.mxu0 0
        %4483 = vmatprep.subr.bf16.mxu0 0
        %4484 = vmatpush1.bf16.msra.mxu0 0
        %4485 = vmatprep.subr.bf16.mxu0 0
        %4486 = vmatpush1.bf16.msra.mxu0 0
        %4487 = vmatprep.subr.bf16.mxu0 0
        %4488 = vmatpush1.bf16.msra.mxu0 0
        %4489 = vmatprep.subr.bf16.mxu0 0
        %4490 = vmatpush1.bf16.msra.mxu0 0
        %4491 = vmatprep.subr.bf16.mxu0 0
        %4492 = vmatpush1.bf16.msra.mxu0 0
        %4493 = vmatprep.subr.bf16.mxu0 0
        %4494 = vmatpush1.bf16.msra.mxu0 0
        %4495 = vmatprep.subr.bf16.mxu0 0
        %4496 = vmatpush1.bf16.msra.mxu0 0
        %4497 = vmatprep.mubr.bf16.mxu0 0
        %4498 = vmatmul.mubr.bf16.gmra.mrb[0].mxu0 %v808
        %v4499 = vpop.f32.mrb[0].mxu0
        %v4500 = vadd.f32 %v4307, %v4499
        %v4501 = vpop.f32.mrb[0].mxu0
        %v4502 = vadd.f32 %v4309, %v4501
        %v4503 = vpop.f32.mrb[0].mxu0
        %v4504 = vadd.f32 %v4311, %v4503
        %v4505 = vpop.f32.mrb[0].mxu0
        %v4506 = vadd.f32 %v4313, %v4505
        %4507 = vmatprep.mubr.bf16.mxu0 0
        %4508 = vmatmul.mubr.bf16.gmra.mrb[0].mxu0 %v811
        %v4509 = vpop.f32.mrb[0].mxu0
        %v4510 = vadd.f32 %v4317, %v4509
        %v4511 = vpop.f32.mrb[0].mxu0
        %v4512 = vadd.f32 %v4319, %v4511
        %v4513 = vpop.f32.mrb[0].mxu0
        %v4514 = vadd.f32 %v4321, %v4513
        %v4515 = vpop.f32.mrb[0].mxu0
        %v4516 = vadd.f32 %v4323, %v4515
        %4517 = vmatprep.mubr.bf16.mxu0 0
        %4518 = vmatmul.mubr.bf16.gmra.mrb[0].mxu0 %v814
        %v4519 = vpop.f32.mrb[0].mxu0
        %v4520 = vadd.f32 %v4327, %v4519
        %v4521 = vpop.f32.mrb[0].mxu0
        %v4522 = vadd.f32 %v4329, %v4521
        %v4523 = vpop.f32.mrb[0].mxu0
        %v4524 = vadd.f32 %v4331, %v4523
        %v4525 = vpop.f32.mrb[0].mxu0
        %v4526 = vadd.f32 %v4333, %v4525
        %4527 = vmatprep.mubr.bf16.mxu0 0
        %4528 = vmatmul.mubr.bf16.gmra.mrb[0].mxu0 %v817
        %v4529 = vpop.f32.mrb[0].mxu0
        %v4530 = vadd.f32 %v4337, %v4529
        %v4531 = vpop.f32.mrb[0].mxu0
        %v4532 = vadd.f32 %v4339, %v4531
        %v4533 = vpop.f32.mrb[0].mxu0
        %v4534 = vadd.f32 %v4341, %v4533
        %v4535 = vpop.f32.mrb[0].mxu0
        %v4536 = vadd.f32 %v4343, %v4535
        %4537 = vmatprep.mubr.bf16.mxu0 0
        %4538 = vmatmul.mubr.bf16.gmra.mrb[0].mxu0 %v820
        %v4539 = vpop.f32.mrb[0].mxu0
        %v4540 = vadd.f32 %v4347, %v4539
        %v4541 = vpop.f32.mrb[0].mxu0
        %v4542 = vadd.f32 %v4349, %v4541
        %v4543 = vpop.f32.mrb[0].mxu0
        %v4544 = vadd.f32 %v4351, %v4543
        %v4545 = vpop.f32.mrb[0].mxu0
        %v4546 = vadd.f32 %v4353, %v4545
        %4547 = vmatprep.mubr.bf16.mxu0 0
        %4548 = vmatmul.mubr.bf16.gmra.mrb[0].mxu0 %v823
        %v4549 = vpop.f32.mrb[0].mxu0
        %v4550 = vadd.f32 %v4357, %v4549
        %v4551 = vpop.f32.mrb[0].mxu0
        %v4552 = vadd.f32 %v4359, %v4551
        %v4553 = vpop.f32.mrb[0].mxu0
        %v4554 = vadd.f32 %v4361, %v4553
        %v4555 = vpop.f32.mrb[0].mxu0
        %v4556 = vadd.f32 %v4363, %v4555
        %4557 = vmatprep.mubr.bf16.mxu0 0
        %4558 = vmatmul.mubr.bf16.gmra.mrb[0].mxu0 %v826
        %v4559 = vpop.f32.mrb[0].mxu0
        %v4560 = vadd.f32 %v4367, %v4559
        %v4561 = vpop.f32.mrb[0].mxu0
        %v4562 = vadd.f32 %v4369, %v4561
        %v4563 = vpop.f32.mrb[0].mxu0
        %v4564 = vadd.f32 %v4371, %v4563
        %v4565 = vpop.f32.mrb[0].mxu0
        %v4566 = vadd.f32 %v4373, %v4565
        %4567 = vmatprep.mubr.bf16.mxu0 0
        %4568 = vmatmul.mubr.bf16.gmra.mrb[0].mxu0 %v829
        %v4569 = vpop.f32.mrb[0].mxu0
        %v4570 = vadd.f32 %v4377, %v4569
        %v4571 = vpop.f32.mrb[0].mxu0
        %v4572 = vadd.f32 %v4379, %v4571
        %v4573 = vpop.f32.mrb[0].mxu0
        %v4574 = vadd.f32 %v4381, %v4573
        %v4575 = vpop.f32.mrb[0].mxu0
        %v4576 = vadd.f32 %v4383, %v4575
        %4577 = vmatprep.mubr.bf16.mxu0 0
        %4578 = vmatmul.mubr.bf16.gmra.mrb[0].mxu0 %v832
        %v4579 = vpop.f32.mrb[0].mxu0
        %v4580 = vadd.f32 %v4387, %v4579
        %v4581 = vpop.f32.mrb[0].mxu0
        %v4582 = vadd.f32 %v4389, %v4581
        %v4583 = vpop.f32.mrb[0].mxu0
        %v4584 = vadd.f32 %v4391, %v4583
        %v4585 = vpop.f32.mrb[0].mxu0
        %v4586 = vadd.f32 %v4393, %v4585
        %4587 = vmatprep.mubr.bf16.mxu0 0
        %4588 = vmatmul.mubr.bf16.gmra.mrb[0].mxu0 %v835
        %v4589 = vpop.f32.mrb[0].mxu0
        %v4590 = vadd.f32 %v4397, %v4589
        %v4591 = vpop.f32.mrb[0].mxu0
        %v4592 = vadd.f32 %v4399, %v4591
        %v4593 = vpop.f32.mrb[0].mxu0
        %v4594 = vadd.f32 %v4401, %v4593
        %v4595 = vpop.f32.mrb[0].mxu0
        %v4596 = vadd.f32 %v4403, %v4595
        %4597 = vmatprep.mubr.bf16.mxu0 0
        %4598 = vmatmul.mubr.bf16.gmra.mrb[0].mxu0 %v838
        %v4599 = vpop.f32.mrb[0].mxu0
        %v4600 = vadd.f32 %v4407, %v4599
        %v4601 = vpop.f32.mrb[0].mxu0
        %v4602 = vadd.f32 %v4409, %v4601
        %v4603 = vpop.f32.mrb[0].mxu0
        %v4604 = vadd.f32 %v4411, %v4603
        %v4605 = vpop.f32.mrb[0].mxu0
        %v4606 = vadd.f32 %v4413, %v4605
        %4607 = vmatprep.mubr.bf16.mxu0 0
        %4608 = vmatmul.mubr.bf16.gmra.mrb[0].mxu0 %v841
        %v4609 = vpop.f32.mrb[0].mxu0
        %v4610 = vadd.f32 %v4417, %v4609
        %v4611 = vpop.f32.mrb[0].mxu0
        %v4612 = vadd.f32 %v4419, %v4611
        %v4613 = vpop.f32.mrb[0].mxu0
        %v4614 = vadd.f32 %v4421, %v4613
        %v4615 = vpop.f32.mrb[0].mxu0
        %v4616 = vadd.f32 %v4423, %v4615
        %4617 = vmatprep.mubr.bf16.mxu0 0
        %4618 = vmatmul.mubr.bf16.gmra.mrb[0].mxu0 %v844
        %v4619 = vpop.f32.mrb[0].mxu0
        %v4620 = vadd.f32 %v4427, %v4619
        %v4621 = vpop.f32.mrb[0].mxu0
        %v4622 = vadd.f32 %v4429, %v4621
        %v4623 = vpop.f32.mrb[0].mxu0
        %v4624 = vadd.f32 %v4431, %v4623
        %v4625 = vpop.f32.mrb[0].mxu0
        %v4626 = vadd.f32 %v4433, %v4625
        %4627 = vmatprep.mubr.bf16.mxu0 0
        %4628 = vmatmul.mubr.bf16.gmra.mrb[0].mxu0 %v847
        %v4629 = vpop.f32.mrb[0].mxu0
        %v4630 = vadd.f32 %v4437, %v4629
        %v4631 = vpop.f32.mrb[0].mxu0
        %v4632 = vadd.f32 %v4439, %v4631
        %v4633 = vpop.f32.mrb[0].mxu0
        %v4634 = vadd.f32 %v4441, %v4633
        %v4635 = vpop.f32.mrb[0].mxu0
        %v4636 = vadd.f32 %v4443, %v4635
        %4637 = vmatprep.mubr.bf16.mxu0 0
        %4638 = vmatmul.mubr.bf16.gmra.mrb[0].mxu0 %v850
        %v4639 = vpop.f32.mrb[0].mxu0
        %v4640 = vadd.f32 %v4447, %v4639
        %v4641 = vpop.f32.mrb[0].mxu0
        %v4642 = vadd.f32 %v4449, %v4641
        %v4643 = vpop.f32.mrb[0].mxu0
        %v4644 = vadd.f32 %v4451, %v4643
        %v4645 = vpop.f32.mrb[0].mxu0
        %v4646 = vadd.f32 %v4453, %v4645
        %4647 = vmatprep.mubr.bf16.mxu0 0
        %4648 = vmatmul.mubr.bf16.gmra.mrb[0].mxu0 %v853
        %v4649 = vpop.f32.mrb[0].mxu0
        %v4650 = vadd.f32 %v4457, %v4649
        %v4651 = vpop.f32.mrb[0].mxu0
        %v4652 = vadd.f32 %v4459, %v4651
        %v4653 = vpop.f32.mrb[0].mxu0
        %v4654 = vadd.f32 %v4461, %v4653
        %v4655 = vpop.f32.mrb[0].mxu0
        %v4656 = vadd.f32 %v4463, %v4655
        %4657 = vdwg.mxu0
        %v4658 = vmul.f32 %v2570, 0.5
        %v4659 = vmul.f32 %v2572, 0.5
        %v4660 = vmul.f32 %v2956, 0.5
        %v4661 = vmul.f32 %v2958, 0.5
        %v4662 = vmul.f32 %v3342, 0.5
        %v4663 = vmul.f32 %v3344, 0.5
        %v4664 = vmul.f32 %v3728, 0.5
        %v4665 = vmul.f32 %v3730, 0.5
        %v4666 = vmul.f32 %v4114, 0.5
        %v4667 = vmul.f32 %v4116, 0.5
        %v4668 = vmul.f32 %v4500, 0.5
        %v4669 = vmul.f32 %v4502, 0.5
        %v4670 = vmul.f32 %v2574, 0.5
        %v4671 = vmul.f32 %v2576, 0.5
        %v4672 = vmul.f32 %v2960, 0.5
        %v4673 = vmul.f32 %v2962, 0.5
        %v4674 = vmul.f32 %v3346, 0.5
        %v4675 = vmul.f32 %v3348, 0.5
        %v4676 = vmul.f32 %v3732, 0.5
        %v4677 = vmul.f32 %v3734, 0.5
        %v4678 = vmul.f32 %v4118, 0.5
        %v4679 = vmul.f32 %v4120, 0.5
        %v4680 = vmul.f32 %v4504, 0.5
        %v4681 = vmul.f32 %v4506, 0.5
        %v4682 = vmul.f32 %v2580, 0.5
        %v4683 = vmul.f32 %v2582, 0.5
        %v4684 = vmul.f32 %v2966, 0.5
        %v4685 = vmul.f32 %v2968, 0.5
        %v4686 = vmul.f32 %v3352, 0.5
        %v4687 = vmul.f32 %v3354, 0.5
        %v4688 = vmul.f32 %v3738, 0.5
        %v4689 = vmul.f32 %v3740, 0.5
        %v4690 = vmul.f32 %v4124, 0.5
        %v4691 = vmul.f32 %v4126, 0.5
        %v4692 = vmul.f32 %v4510, 0.5
        %v4693 = vmul.f32 %v4512, 0.5
        %v4694 = vmul.f32 %v2584, 0.5
        %v4695 = vmul.f32 %v2586, 0.5
        %v4696 = vmul.f32 %v2970, 0.5
        %v4697 = vmul.f32 %v2972, 0.5
        %v4698 = vmul.f32 %v3356, 0.5
        %v4699 = vmul.f32 %v3358, 0.5
        %v4700 = vmul.f32 %v3742, 0.5
        %v4701 = vmul.f32 %v3744, 0.5
        %v4702 = vmul.f32 %v4128, 0.5
        %v4703 = vmul.f32 %v4130, 0.5
        %v4704 = vmul.f32 %v4514, 0.5
        %v4705 = vmul.f32 %v4516, 0.5
        %v4706 = vmul.f32 %v2590, 0.5
        %v4707 = vmul.f32 %v2592, 0.5
        %v4708 = vmul.f32 %v2976, 0.5
        %v4709 = vmul.f32 %v2978, 0.5
        %v4710 = vmul.f32 %v3362, 0.5
        %v4711 = vmul.f32 %v3364, 0.5
        %v4712 = vmul.f32 %v3748, 0.5
        %v4713 = vmul.f32 %v3750, 0.5
        %v4714 = vmul.f32 %v4134, 0.5
        %v4715 = vmul.f32 %v4136, 0.5
        %v4716 = vmul.f32 %v4520, 0.5
        %v4717 = vmul.f32 %v4522, 0.5
        %v4718 = vmul.f32 %v2594, 0.5
        %v4719 = vmul.f32 %v2596, 0.5
        %v4720 = vmul.f32 %v2980, 0.5
        %v4721 = vmul.f32 %v2982, 0.5
        %v4722 = vmul.f32 %v3366, 0.5
        %v4723 = vmul.f32 %v3368, 0.5
        %v4724 = vmul.f32 %v3752, 0.5
        %v4725 = vmul.f32 %v3754, 0.5
        %v4726 = vmul.f32 %v4138, 0.5
        %v4727 = vmul.f32 %v4140, 0.5
        %v4728 = vmul.f32 %v4524, 0.5
        %v4729 = vmul.f32 %v4526, 0.5
        %v4730 = vmul.f32 %v2600, 0.5
        %v4731 = vmul.f32 %v2602, 0.5
        %v4732 = vmul.f32 %v2986, 0.5
        %v4733 = vmul.f32 %v2988, 0.5
        %v4734 = vmul.f32 %v3372, 0.5
        %v4735 = vmul.f32 %v3374, 0.5
        %v4736 = vmul.f32 %v3758, 0.5
        %v4737 = vmul.f32 %v3760, 0.5
        %v4738 = vmul.f32 %v4144, 0.5
        %v4739 = vmul.f32 %v4146, 0.5
        %v4740 = vmul.f32 %v4530, 0.5
        %v4741 = vmul.f32 %v4532, 0.5
        %v4742 = vmul.f32 %v2604, 0.5
        %v4743 = vmul.f32 %v2606, 0.5
        %v4744 = vmul.f32 %v2990, 0.5
        %v4745 = vmul.f32 %v2992, 0.5
        %v4746 = vmul.f32 %v3376, 0.5
        %v4747 = vmul.f32 %v3378, 0.5
        %v4748 = vmul.f32 %v3762, 0.5
        %v4749 = vmul.f32 %v3764, 0.5
        %v4750 = vmul.f32 %v4148, 0.5
        %v4751 = vmul.f32 %v4150, 0.5
        %v4752 = vmul.f32 %v4534, 0.5
        %v4753 = vmul.f32 %v4536, 0.5
        %v4754 = vmul.f32 %v2610, 0.5
        %v4755 = vmul.f32 %v2612, 0.5
        %v4756 = vmul.f32 %v2996, 0.5
        %v4757 = vmul.f32 %v2998, 0.5
        %v4758 = vmul.f32 %v3382, 0.5
        %v4759 = vmul.f32 %v3384, 0.5
        %v4760 = vmul.f32 %v3768, 0.5
        %v4761 = vmul.f32 %v3770, 0.5
        %v4762 = vmul.f32 %v4154, 0.5
        %v4763 = vmul.f32 %v4156, 0.5
        %v4764 = vmul.f32 %v4540, 0.5
        %v4765 = vmul.f32 %v4542, 0.5
        %v4766 = vmul.f32 %v2614, 0.5
        %v4767 = vmul.f32 %v2616, 0.5
        %v4768 = vmul.f32 %v3000, 0.5
        %v4769 = vmul.f32 %v3002, 0.5
        %v4770 = vmul.f32 %v3386, 0.5
        %v4771 = vmul.f32 %v3388, 0.5
        %v4772 = vmul.f32 %v3772, 0.5
        %v4773 = vmul.f32 %v3774, 0.5
        %v4774 = vmul.f32 %v4158, 0.5
        %v4775 = vmul.f32 %v4160, 0.5
        %v4776 = vmul.f32 %v4544, 0.5
        %v4777 = vmul.f32 %v4546, 0.5
        %v4778 = vmul.f32 %v2620, 0.5
        %v4779 = vmul.f32 %v2622, 0.5
        %v4780 = vmul.f32 %v3006, 0.5
        %v4781 = vmul.f32 %v3008, 0.5
        %v4782 = vmul.f32 %v3392, 0.5
        %v4783 = vmul.f32 %v3394, 0.5
        %v4784 = vmul.f32 %v3778, 0.5
        %v4785 = vmul.f32 %v3780, 0.5
        %v4786 = vmul.f32 %v4164, 0.5
        %v4787 = vmul.f32 %v4166, 0.5
        %v4788 = vmul.f32 %v4550, 0.5
        %v4789 = vmul.f32 %v4552, 0.5
        %v4790 = vmul.f32 %v2624, 0.5
        %v4791 = vmul.f32 %v2626, 0.5
        %v4792 = vmul.f32 %v3010, 0.5
        %v4793 = vmul.f32 %v3012, 0.5
        %v4794 = vmul.f32 %v3396, 0.5
        %v4795 = vmul.f32 %v3398, 0.5
        %v4796 = vmul.f32 %v3782, 0.5
        %v4797 = vmul.f32 %v3784, 0.5
        %v4798 = vmul.f32 %v4168, 0.5
        %v4799 = vmul.f32 %v4170, 0.5
        %v4800 = vmul.f32 %v4554, 0.5
        %v4801 = vmul.f32 %v4556, 0.5
        %v4802 = vmul.f32 %v2630, 0.5
        %v4803 = vmul.f32 %v2632, 0.5
        %v4804 = vmul.f32 %v3016, 0.5
        %v4805 = vmul.f32 %v3018, 0.5
        %v4806 = vmul.f32 %v3402, 0.5
        %v4807 = vmul.f32 %v3404, 0.5
        %v4808 = vmul.f32 %v3788, 0.5
        %v4809 = vmul.f32 %v3790, 0.5
        %v4810 = vmul.f32 %v4174, 0.5
        %v4811 = vmul.f32 %v4176, 0.5
        %v4812 = vmul.f32 %v4560, 0.5
        %v4813 = vmul.f32 %v4562, 0.5
        %v4814 = vmul.f32 %v2634, 0.5
        %v4815 = vmul.f32 %v2636, 0.5
        %v4816 = vmul.f32 %v3020, 0.5
        %v4817 = vmul.f32 %v3022, 0.5
        %v4818 = vmul.f32 %v3406, 0.5
        %v4819 = vmul.f32 %v3408, 0.5
        %v4820 = vmul.f32 %v3792, 0.5
        %v4821 = vmul.f32 %v3794, 0.5
        %v4822 = vmul.f32 %v4178, 0.5
        %v4823 = vmul.f32 %v4180, 0.5
        %v4824 = vmul.f32 %v4564, 0.5
        %v4825 = vmul.f32 %v4566, 0.5
        %v4826 = vmul.f32 %v2640, 0.5
        %v4827 = vmul.f32 %v2642, 0.5
        %v4828 = vmul.f32 %v3026, 0.5
        %v4829 = vmul.f32 %v3028, 0.5
        %v4830 = vmul.f32 %v3412, 0.5
        %v4831 = vmul.f32 %v3414, 0.5
        %v4832 = vmul.f32 %v3798, 0.5
        %v4833 = vmul.f32 %v3800, 0.5
        %v4834 = vmul.f32 %v4184, 0.5
        %v4835 = vmul.f32 %v4186, 0.5
        %v4836 = vmul.f32 %v4570, 0.5
        %v4837 = vmul.f32 %v4572, 0.5
        %v4838 = vmul.f32 %v2644, 0.5
        %v4839 = vmul.f32 %v2646, 0.5
        %v4840 = vmul.f32 %v3030, 0.5
        %v4841 = vmul.f32 %v3032, 0.5
        %v4842 = vmul.f32 %v3416, 0.5
        %v4843 = vmul.f32 %v3418, 0.5
        %v4844 = vmul.f32 %v3802, 0.5
        %v4845 = vmul.f32 %v3804, 0.5
        %v4846 = vmul.f32 %v4188, 0.5
        %v4847 = vmul.f32 %v4190, 0.5
        %v4848 = vmul.f32 %v4574, 0.5
        %v4849 = vmul.f32 %v4576, 0.5
        %v4850 = vmul.f32 %v2650, 0.5
        %v4851 = vmul.f32 %v2652, 0.5
        %v4852 = vmul.f32 %v3036, 0.5
        %v4853 = vmul.f32 %v3038, 0.5
        %v4854 = vmul.f32 %v3422, 0.5
        %v4855 = vmul.f32 %v3424, 0.5
        %v4856 = vmul.f32 %v3808, 0.5
        %v4857 = vmul.f32 %v3810, 0.5
        %v4858 = vmul.f32 %v4194, 0.5
        %v4859 = vmul.f32 %v4196, 0.5
        %v4860 = vmul.f32 %v4580, 0.5
        %v4861 = vmul.f32 %v4582, 0.5
        %v4862 = vmul.f32 %v2654, 0.5
        %v4863 = vmul.f32 %v2656, 0.5
        %v4864 = vmul.f32 %v3040, 0.5
        %v4865 = vmul.f32 %v3042, 0.5
        %v4866 = vmul.f32 %v3426, 0.5
        %v4867 = vmul.f32 %v3428, 0.5
        %v4868 = vmul.f32 %v3812, 0.5
        %v4869 = vmul.f32 %v3814, 0.5
        %v4870 = vmul.f32 %v4198, 0.5
        %v4871 = vmul.f32 %v4200, 0.5
        %v4872 = vmul.f32 %v4584, 0.5
        %v4873 = vmul.f32 %v4586, 0.5
        %v4874 = vmul.f32 %v2660, 0.5
        %v4875 = vmul.f32 %v2662, 0.5
        %v4876 = vmul.f32 %v3046, 0.5
        %v4877 = vmul.f32 %v3048, 0.5
        %v4878 = vmul.f32 %v3432, 0.5
        %v4879 = vmul.f32 %v3434, 0.5
        %v4880 = vmul.f32 %v3818, 0.5
        %v4881 = vmul.f32 %v3820, 0.5
        %v4882 = vmul.f32 %v4204, 0.5
        %v4883 = vmul.f32 %v4206, 0.5
        %v4884 = vmul.f32 %v4590, 0.5
        %v4885 = vmul.f32 %v4592, 0.5
        %v4886 = vmul.f32 %v2664, 0.5
        %v4887 = vmul.f32 %v2666, 0.5
        %v4888 = vmul.f32 %v3050, 0.5
        %v4889 = vmul.f32 %v3052, 0.5
        %v4890 = vmul.f32 %v3436, 0.5
        %v4891 = vmul.f32 %v3438, 0.5
        %v4892 = vmul.f32 %v3822, 0.5
        %v4893 = vmul.f32 %v3824, 0.5
        %v4894 = vmul.f32 %v4208, 0.5
        %v4895 = vmul.f32 %v4210, 0.5
        %v4896 = vmul.f32 %v4594, 0.5
        %v4897 = vmul.f32 %v4596, 0.5
        %v4898 = vmul.f32 %v2670, 0.5
        %v4899 = vmul.f32 %v2672, 0.5
        %v4900 = vmul.f32 %v3056, 0.5
        %v4901 = vmul.f32 %v3058, 0.5
        %v4902 = vmul.f32 %v3442, 0.5
        %v4903 = vmul.f32 %v3444, 0.5
        %v4904 = vmul.f32 %v3828, 0.5
        %v4905 = vmul.f32 %v3830, 0.5
        %v4906 = vmul.f32 %v4214, 0.5
        %v4907 = vmul.f32 %v4216, 0.5
        %v4908 = vmul.f32 %v4600, 0.5
        %v4909 = vmul.f32 %v4602, 0.5
        %v4910 = vmul.f32 %v2674, 0.5
        %v4911 = vmul.f32 %v2676, 0.5
        %v4912 = vmul.f32 %v3060, 0.5
        %v4913 = vmul.f32 %v3062, 0.5
        %v4914 = vmul.f32 %v3446, 0.5
        %v4915 = vmul.f32 %v3448, 0.5
        %v4916 = vmul.f32 %v3832, 0.5
        %v4917 = vmul.f32 %v3834, 0.5
        %v4918 = vmul.f32 %v4218, 0.5
        %v4919 = vmul.f32 %v4220, 0.5
        %v4920 = vmul.f32 %v4604, 0.5
        %v4921 = vmul.f32 %v4606, 0.5
        %v4922 = vmul.f32 %v2680, 0.5
        %v4923 = vmul.f32 %v2682, 0.5
        %v4924 = vmul.f32 %v3066, 0.5
        %v4925 = vmul.f32 %v3068, 0.5
        %v4926 = vmul.f32 %v3452, 0.5
        %v4927 = vmul.f32 %v3454, 0.5
        %v4928 = vmul.f32 %v3838, 0.5
        %v4929 = vmul.f32 %v3840, 0.5
        %v4930 = vmul.f32 %v4224, 0.5
        %v4931 = vmul.f32 %v4226, 0.5
        %v4932 = vmul.f32 %v4610, 0.5
        %v4933 = vmul.f32 %v4612, 0.5
        %v4934 = vmul.f32 %v2684, 0.5
        %v4935 = vmul.f32 %v2686, 0.5
        %v4936 = vmul.f32 %v3070, 0.5
        %v4937 = vmul.f32 %v3072, 0.5
        %v4938 = vmul.f32 %v3456, 0.5
        %v4939 = vmul.f32 %v3458, 0.5
        %v4940 = vmul.f32 %v3842, 0.5
        %v4941 = vmul.f32 %v3844, 0.5
        %v4942 = vmul.f32 %v4228, 0.5
        %v4943 = vmul.f32 %v4230, 0.5
        %v4944 = vmul.f32 %v4614, 0.5
        %v4945 = vmul.f32 %v4616, 0.5
        %v4946 = vmul.f32 %v2690, 0.5
        %v4947 = vmul.f32 %v2692, 0.5
        %v4948 = vmul.f32 %v3076, 0.5
        %v4949 = vmul.f32 %v3078, 0.5
        %v4950 = vmul.f32 %v3462, 0.5
        %v4951 = vmul.f32 %v3464, 0.5
        %v4952 = vmul.f32 %v3848, 0.5
        %v4953 = vmul.f32 %v3850, 0.5
        %v4954 = vmul.f32 %v4234, 0.5
        %v4955 = vmul.f32 %v4236, 0.5
        %v4956 = vmul.f32 %v4620, 0.5
        %v4957 = vmul.f32 %v4622, 0.5
        %v4958 = vmul.f32 %v2694, 0.5
        %v4959 = vmul.f32 %v2696, 0.5
        %v4960 = vmul.f32 %v3080, 0.5
        %v4961 = vmul.f32 %v3082, 0.5
        %v4962 = vmul.f32 %v3466, 0.5
        %v4963 = vmul.f32 %v3468, 0.5
        %v4964 = vmul.f32 %v3852, 0.5
        %v4965 = vmul.f32 %v3854, 0.5
        %v4966 = vmul.f32 %v4238, 0.5
        %v4967 = vmul.f32 %v4240, 0.5
        %v4968 = vmul.f32 %v4624, 0.5
        %v4969 = vmul.f32 %v4626, 0.5
        %v4970 = vmul.f32 %v2700, 0.5
        %v4971 = vmul.f32 %v2702, 0.5
        %v4972 = vmul.f32 %v3086, 0.5
        %v4973 = vmul.f32 %v3088, 0.5
        %v4974 = vmul.f32 %v3472, 0.5
        %v4975 = vmul.f32 %v3474, 0.5
        %v4976 = vmul.f32 %v3858, 0.5
        %v4977 = vmul.f32 %v3860, 0.5
        %v4978 = vmul.f32 %v4244, 0.5
        %v4979 = vmul.f32 %v4246, 0.5
        %v4980 = vmul.f32 %v4630, 0.5
        %v4981 = vmul.f32 %v4632, 0.5
        %v4982 = vmul.f32 %v2704, 0.5
        %v4983 = vmul.f32 %v2706, 0.5
        %v4984 = vmul.f32 %v3090, 0.5
        %v4985 = vmul.f32 %v3092, 0.5
        %v4986 = vmul.f32 %v3476, 0.5
        %v4987 = vmul.f32 %v3478, 0.5
        %v4988 = vmul.f32 %v3862, 0.5
        %v4989 = vmul.f32 %v3864, 0.5
        %v4990 = vmul.f32 %v4248, 0.5
        %v4991 = vmul.f32 %v4250, 0.5
        %v4992 = vmul.f32 %v4634, 0.5
        %v4993 = vmul.f32 %v4636, 0.5
        %v4994 = vmul.f32 %v2710, 0.5
        %v4995 = vmul.f32 %v2712, 0.5
        %v4996 = vmul.f32 %v3096, 0.5
        %v4997 = vmul.f32 %v3098, 0.5
        %v4998 = vmul.f32 %v3482, 0.5
        %v4999 = vmul.f32 %v3484, 0.5
        %v5000 = vmul.f32 %v3868, 0.5
        %v5001 = vmul.f32 %v3870, 0.5
        %v5002 = vmul.f32 %v4254, 0.5
        %v5003 = vmul.f32 %v4256, 0.5
        %v5004 = vmul.f32 %v4640, 0.5
        %v5005 = vmul.f32 %v4642, 0.5
        %v5006 = vmul.f32 %v2714, 0.5
        %v5007 = vmul.f32 %v2716, 0.5
        %v5008 = vmul.f32 %v3100, 0.5
        %v5009 = vmul.f32 %v3102, 0.5
        %v5010 = vmul.f32 %v3486, 0.5
        %v5011 = vmul.f32 %v3488, 0.5
        %v5012 = vmul.f32 %v3872, 0.5
        %v5013 = vmul.f32 %v3874, 0.5
        %v5014 = vmul.f32 %v4258, 0.5
        %v5015 = vmul.f32 %v4260, 0.5
        %v5016 = vmul.f32 %v4644, 0.5
        %v5017 = vmul.f32 %v4646, 0.5
        %v5018 = vmul.f32 %v2720, 0.5
        %v5019 = vmul.f32 %v2722, 0.5
        %v5020 = vmul.f32 %v3106, 0.5
        %v5021 = vmul.f32 %v3108, 0.5
        %v5022 = vmul.f32 %v3492, 0.5
        %v5023 = vmul.f32 %v3494, 0.5
        %v5024 = vmul.f32 %v3878, 0.5
        %v5025 = vmul.f32 %v3880, 0.5
        %v5026 = vmul.f32 %v4264, 0.5
        %v5027 = vmul.f32 %v4266, 0.5
        %v5028 = vmul.f32 %v4650, 0.5
        %v5029 = vmul.f32 %v4652, 0.5
        %v5030 = vmul.f32 %v2724, 0.5
        %v5031 = vmul.f32 %v2726, 0.5
        %v5032 = vmul.f32 %v3110, 0.5
        %v5033 = vmul.f32 %v3112, 0.5
        %v5034 = vmul.f32 %v3496, 0.5
        %v5035 = vmul.f32 %v3498, 0.5
        %v5036 = vmul.f32 %v3882, 0.5
        %v5037 = vmul.f32 %v3884, 0.5
        %v5038 = vmul.f32 %v4268, 0.5
        %v5039 = vmul.f32 %v4270, 0.5
        %v5040 = vmul.f32 %v4654, 0.5
        %v5041 = vmul.f32 %v4656, 0.5
        %v5042 = vmul.f32 %v2570, 0.70710677
        %v5043 = vmul.f32 %v2572, 0.70710677
        %v5044 = vmul.f32 %v2956, 0.70710677
        %v5045 = vmul.f32 %v2958, 0.70710677
        %v5046 = vmul.f32 %v3342, 0.70710677
        %v5047 = vmul.f32 %v3344, 0.70710677
        %v5048 = vmul.f32 %v3728, 0.70710677
        %v5049 = vmul.f32 %v3730, 0.70710677
        %v5050 = vmul.f32 %v4114, 0.70710677
        %v5051 = vmul.f32 %v4116, 0.70710677
        %v5052 = vmul.f32 %v4500, 0.70710677
        %v5053 = vmul.f32 %v4502, 0.70710677
        %v5054 = vmul.f32 %v2574, 0.70710677
        %v5055 = vmul.f32 %v2576, 0.70710677
        %v5056 = vmul.f32 %v2960, 0.70710677
        %v5057 = vmul.f32 %v2962, 0.70710677
        %v5058 = vmul.f32 %v3346, 0.70710677
        %v5059 = vmul.f32 %v3348, 0.70710677
        %v5060 = vmul.f32 %v3732, 0.70710677
        %v5061 = vmul.f32 %v3734, 0.70710677
        %v5062 = vmul.f32 %v4118, 0.70710677
        %v5063 = vmul.f32 %v4120, 0.70710677
        %v5064 = vmul.f32 %v4504, 0.70710677
        %v5065 = vmul.f32 %v4506, 0.70710677
        %v5066 = vmul.f32 %v2580, 0.70710677
        %v5067 = vmul.f32 %v2582, 0.70710677
        %v5068 = vmul.f32 %v2966, 0.70710677
        %v5069 = vmul.f32 %v2968, 0.70710677
        %v5070 = vmul.f32 %v3352, 0.70710677
        %v5071 = vmul.f32 %v3354, 0.70710677
        %v5072 = vmul.f32 %v3738, 0.70710677
        %v5073 = vmul.f32 %v3740, 0.70710677
        %v5074 = vmul.f32 %v4124, 0.70710677
        %v5075 = vmul.f32 %v4126, 0.70710677
        %v5076 = vmul.f32 %v4510, 0.70710677
        %v5077 = vmul.f32 %v4512, 0.70710677
        %v5078 = vmul.f32 %v2584, 0.70710677
        %v5079 = vmul.f32 %v2586, 0.70710677
        %v5080 = vmul.f32 %v2970, 0.70710677
        %v5081 = vmul.f32 %v2972, 0.70710677
        %v5082 = vmul.f32 %v3356, 0.70710677
        %v5083 = vmul.f32 %v3358, 0.70710677
        %v5084 = vmul.f32 %v3742, 0.70710677
        %v5085 = vmul.f32 %v3744, 0.70710677
        %v5086 = vmul.f32 %v4128, 0.70710677
        %v5087 = vmul.f32 %v4130, 0.70710677
        %v5088 = vmul.f32 %v4514, 0.70710677
        %v5089 = vmul.f32 %v4516, 0.70710677
        %v5090 = vmul.f32 %v2590, 0.70710677
        %v5091 = vmul.f32 %v2592, 0.70710677
        %v5092 = vmul.f32 %v2976, 0.70710677
        %v5093 = vmul.f32 %v2978, 0.70710677
        %v5094 = vmul.f32 %v3362, 0.70710677
        %v5095 = vmul.f32 %v3364, 0.70710677
        %v5096 = vmul.f32 %v3748, 0.70710677
        %v5097 = vmul.f32 %v3750, 0.70710677
        %v5098 = vmul.f32 %v4134, 0.70710677
        %v5099 = vmul.f32 %v4136, 0.70710677
        %v5100 = vmul.f32 %v4520, 0.70710677
        %v5101 = vmul.f32 %v4522, 0.70710677
        %v5102 = vmul.f32 %v2594, 0.70710677
        %v5103 = vmul.f32 %v2596, 0.70710677
        %v5104 = vmul.f32 %v2980, 0.70710677
        %v5105 = vmul.f32 %v2982, 0.70710677
        %v5106 = vmul.f32 %v3366, 0.70710677
        %v5107 = vmul.f32 %v3368, 0.70710677
        %v5108 = vmul.f32 %v3752, 0.70710677
        %v5109 = vmul.f32 %v3754, 0.70710677
        %v5110 = vmul.f32 %v4138, 0.70710677
        %v5111 = vmul.f32 %v4140, 0.70710677
        %v5112 = vmul.f32 %v4524, 0.70710677
        %v5113 = vmul.f32 %v4526, 0.70710677
        %v5114 = vmul.f32 %v2600, 0.70710677
        %v5115 = vmul.f32 %v2602, 0.70710677
        %v5116 = vmul.f32 %v2986, 0.70710677
        %v5117 = vmul.f32 %v2988, 0.70710677
        %v5118 = vmul.f32 %v3372, 0.70710677
        %v5119 = vmul.f32 %v3374, 0.70710677
        %v5120 = vmul.f32 %v3758, 0.70710677
        %v5121 = vmul.f32 %v3760, 0.70710677
        %v5122 = vmul.f32 %v4144, 0.70710677
        %v5123 = vmul.f32 %v4146, 0.70710677
        %v5124 = vmul.f32 %v4530, 0.70710677
        %v5125 = vmul.f32 %v4532, 0.70710677
        %v5126 = vmul.f32 %v2604, 0.70710677
        %v5127 = vmul.f32 %v2606, 0.70710677
        %v5128 = vmul.f32 %v2990, 0.70710677
        %v5129 = vmul.f32 %v2992, 0.70710677
        %v5130 = vmul.f32 %v3376, 0.70710677
        %v5131 = vmul.f32 %v3378, 0.70710677
        %v5132 = vmul.f32 %v3762, 0.70710677
        %v5133 = vmul.f32 %v3764, 0.70710677
        %v5134 = vmul.f32 %v4148, 0.70710677
        %v5135 = vmul.f32 %v4150, 0.70710677
        %v5136 = vmul.f32 %v4534, 0.70710677
        %v5137 = vmul.f32 %v4536, 0.70710677
        %v5138 = vmul.f32 %v2610, 0.70710677
        %v5139 = vmul.f32 %v2612, 0.70710677
        %v5140 = vmul.f32 %v2996, 0.70710677
        %v5141 = vmul.f32 %v2998, 0.70710677
        %v5142 = vmul.f32 %v3382, 0.70710677
        %v5143 = vmul.f32 %v3384, 0.70710677
        %v5144 = vmul.f32 %v3768, 0.70710677
        %v5145 = vmul.f32 %v3770, 0.70710677
        %v5146 = vmul.f32 %v4154, 0.70710677
        %v5147 = vmul.f32 %v4156, 0.70710677
        %v5148 = vmul.f32 %v4540, 0.70710677
        %v5149 = vmul.f32 %v4542, 0.70710677
        %v5150 = vmul.f32 %v2614, 0.70710677
        %v5151 = vmul.f32 %v2616, 0.70710677
        %v5152 = vmul.f32 %v3000, 0.70710677
        %v5153 = vmul.f32 %v3002, 0.70710677
        %v5154 = vmul.f32 %v3386, 0.70710677
        %v5155 = vmul.f32 %v3388, 0.70710677
        %v5156 = vmul.f32 %v3772, 0.70710677
        %v5157 = vmul.f32 %v3774, 0.70710677
        %v5158 = vmul.f32 %v4158, 0.70710677
        %v5159 = vmul.f32 %v4160, 0.70710677
        %v5160 = vmul.f32 %v4544, 0.70710677
        %v5161 = vmul.f32 %v4546, 0.70710677
        %v5162 = vmul.f32 %v2620, 0.70710677
        %v5163 = vmul.f32 %v2622, 0.70710677
        %v5164 = vmul.f32 %v3006, 0.70710677
        %v5165 = vmul.f32 %v3008, 0.70710677
        %v5166 = vmul.f32 %v3392, 0.70710677
        %v5167 = vmul.f32 %v3394, 0.70710677
        %v5168 = vmul.f32 %v3778, 0.70710677
        %v5169 = vmul.f32 %v3780, 0.70710677
        %v5170 = vmul.f32 %v4164, 0.70710677
        %v5171 = vmul.f32 %v4166, 0.70710677
        %v5172 = vmul.f32 %v4550, 0.70710677
        %v5173 = vmul.f32 %v4552, 0.70710677
        %v5174 = vmul.f32 %v2624, 0.70710677
        %v5175 = vmul.f32 %v2626, 0.70710677
        %v5176 = vmul.f32 %v3010, 0.70710677
        %v5177 = vmul.f32 %v3012, 0.70710677
        %v5178 = vmul.f32 %v3396, 0.70710677
        %v5179 = vmul.f32 %v3398, 0.70710677
        %v5180 = vmul.f32 %v3782, 0.70710677
        %v5181 = vmul.f32 %v3784, 0.70710677
        %v5182 = vmul.f32 %v4168, 0.70710677
        %v5183 = vmul.f32 %v4170, 0.70710677
        %v5184 = vmul.f32 %v4554, 0.70710677
        %v5185 = vmul.f32 %v4556, 0.70710677
        %v5186 = vmul.f32 %v2630, 0.70710677
        %v5187 = vmul.f32 %v2632, 0.70710677
        %v5188 = vmul.f32 %v3016, 0.70710677
        %v5189 = vmul.f32 %v3018, 0.70710677
        %v5190 = vmul.f32 %v3402, 0.70710677
        %v5191 = vmul.f32 %v3404, 0.70710677
        %v5192 = vmul.f32 %v3788, 0.70710677
        %v5193 = vmul.f32 %v3790, 0.70710677
        %v5194 = vmul.f32 %v4174, 0.70710677
        %v5195 = vmul.f32 %v4176, 0.70710677
        %v5196 = vmul.f32 %v4560, 0.70710677
        %v5197 = vmul.f32 %v4562, 0.70710677
        %v5198 = vmul.f32 %v2634, 0.70710677
        %v5199 = vmul.f32 %v2636, 0.70710677
        %v5200 = vmul.f32 %v3020, 0.70710677
        %v5201 = vmul.f32 %v3022, 0.70710677
        %v5202 = vmul.f32 %v3406, 0.70710677
        %v5203 = vmul.f32 %v3408, 0.70710677
        %v5204 = vmul.f32 %v3792, 0.70710677
        %v5205 = vmul.f32 %v3794, 0.70710677
        %v5206 = vmul.f32 %v4178, 0.70710677
        %v5207 = vmul.f32 %v4180, 0.70710677
        %v5208 = vmul.f32 %v4564, 0.70710677
        %v5209 = vmul.f32 %v4566, 0.70710677
        %v5210 = vmul.f32 %v2640, 0.70710677
        %v5211 = vmul.f32 %v2642, 0.70710677
        %v5212 = vmul.f32 %v3026, 0.70710677
        %v5213 = vmul.f32 %v3028, 0.70710677
        %v5214 = vmul.f32 %v3412, 0.70710677
        %v5215 = vmul.f32 %v3414, 0.70710677
        %v5216 = vmul.f32 %v3798, 0.70710677
        %v5217 = vmul.f32 %v3800, 0.70710677
        %v5218 = vmul.f32 %v4184, 0.70710677
        %v5219 = vmul.f32 %v4186, 0.70710677
        %v5220 = vmul.f32 %v4570, 0.70710677
        %v5221 = vmul.f32 %v4572, 0.70710677
        %v5222 = vmul.f32 %v2644, 0.70710677
        %v5223 = vmul.f32 %v2646, 0.70710677
        %v5224 = vmul.f32 %v3030, 0.70710677
        %v5225 = vmul.f32 %v3032, 0.70710677
        %v5226 = vmul.f32 %v3416, 0.70710677
        %v5227 = vmul.f32 %v3418, 0.70710677
        %v5228 = vmul.f32 %v3802, 0.70710677
        %v5229 = vmul.f32 %v3804, 0.70710677
        %v5230 = vmul.f32 %v4188, 0.70710677
        %v5231 = vmul.f32 %v4190, 0.70710677
        %v5232 = vmul.f32 %v4574, 0.70710677
        %v5233 = vmul.f32 %v4576, 0.70710677
        %v5234 = vmul.f32 %v2650, 0.70710677
        %v5235 = vmul.f32 %v2652, 0.70710677
        %v5236 = vmul.f32 %v3036, 0.70710677
        %v5237 = vmul.f32 %v3038, 0.70710677
        %v5238 = vmul.f32 %v3422, 0.70710677
        %v5239 = vmul.f32 %v3424, 0.70710677
        %v5240 = vmul.f32 %v3808, 0.70710677
        %v5241 = vmul.f32 %v3810, 0.70710677
        %v5242 = vmul.f32 %v4194, 0.70710677
        %v5243 = vmul.f32 %v4196, 0.70710677
        %v5244 = vmul.f32 %v4580, 0.70710677
        %v5245 = vmul.f32 %v4582, 0.70710677
        %v5246 = vmul.f32 %v2654, 0.70710677
        %v5247 = vmul.f32 %v2656, 0.70710677
        %v5248 = vmul.f32 %v3040, 0.70710677
        %v5249 = vmul.f32 %v3042, 0.70710677
        %v5250 = vmul.f32 %v3426, 0.70710677
        %v5251 = vmul.f32 %v3428, 0.70710677
        %v5252 = vmul.f32 %v3812, 0.70710677
        %v5253 = vmul.f32 %v3814, 0.70710677
        %v5254 = vmul.f32 %v4198, 0.70710677
        %v5255 = vmul.f32 %v4200, 0.70710677
        %v5256 = vmul.f32 %v4584, 0.70710677
        %v5257 = vmul.f32 %v4586, 0.70710677
        %v5258 = vmul.f32 %v2660, 0.70710677
        %v5259 = vmul.f32 %v2662, 0.70710677
        %v5260 = vmul.f32 %v3046, 0.70710677
        %v5261 = vmul.f32 %v3048, 0.70710677
        %v5262 = vmul.f32 %v3432, 0.70710677
        %v5263 = vmul.f32 %v3434, 0.70710677
        %v5264 = vmul.f32 %v3818, 0.70710677
        %v5265 = vmul.f32 %v3820, 0.70710677
        %v5266 = vmul.f32 %v4204, 0.70710677
        %v5267 = vmul.f32 %v4206, 0.70710677
        %v5268 = vmul.f32 %v4590, 0.70710677
        %v5269 = vmul.f32 %v4592, 0.70710677
        %v5270 = vmul.f32 %v2664, 0.70710677
        %v5271 = vmul.f32 %v2666, 0.70710677
        %v5272 = vmul.f32 %v3050, 0.70710677
        %v5273 = vmul.f32 %v3052, 0.70710677
        %v5274 = vmul.f32 %v3436, 0.70710677
        %v5275 = vmul.f32 %v3438, 0.70710677
        %v5276 = vmul.f32 %v3822, 0.70710677
        %v5277 = vmul.f32 %v3824, 0.70710677
        %v5278 = vmul.f32 %v4208, 0.70710677
        %v5279 = vmul.f32 %v4210, 0.70710677
        %v5280 = vmul.f32 %v4594, 0.70710677
        %v5281 = vmul.f32 %v4596, 0.70710677
        %v5282 = vmul.f32 %v2670, 0.70710677
        %v5283 = vmul.f32 %v2672, 0.70710677
        %v5284 = vmul.f32 %v3056, 0.70710677
        %v5285 = vmul.f32 %v3058, 0.70710677
        %v5286 = vmul.f32 %v3442, 0.70710677
        %v5287 = vmul.f32 %v3444, 0.70710677
        %v5288 = vmul.f32 %v3828, 0.70710677
        %v5289 = vmul.f32 %v3830, 0.70710677
        %v5290 = vmul.f32 %v4214, 0.70710677
        %v5291 = vmul.f32 %v4216, 0.70710677
        %v5292 = vmul.f32 %v4600, 0.70710677
        %v5293 = vmul.f32 %v4602, 0.70710677
        %v5294 = vmul.f32 %v2674, 0.70710677
        %v5295 = vmul.f32 %v2676, 0.70710677
        %v5296 = vmul.f32 %v3060, 0.70710677
        %v5297 = vmul.f32 %v3062, 0.70710677
        %v5298 = vmul.f32 %v3446, 0.70710677
        %v5299 = vmul.f32 %v3448, 0.70710677
        %v5300 = vmul.f32 %v3832, 0.70710677
        %v5301 = vmul.f32 %v3834, 0.70710677
        %v5302 = vmul.f32 %v4218, 0.70710677
        %v5303 = vmul.f32 %v4220, 0.70710677
        %v5304 = vmul.f32 %v4604, 0.70710677
        %v5305 = vmul.f32 %v4606, 0.70710677
        %v5306 = vmul.f32 %v2680, 0.70710677
        %v5307 = vmul.f32 %v2682, 0.70710677
        %v5308 = vmul.f32 %v3066, 0.70710677
        %v5309 = vmul.f32 %v3068, 0.70710677
        %v5310 = vmul.f32 %v3452, 0.70710677
        %v5311 = vmul.f32 %v3454, 0.70710677
        %v5312 = vmul.f32 %v3838, 0.70710677
        %v5313 = vmul.f32 %v3840, 0.70710677
        %v5314 = vmul.f32 %v4224, 0.70710677
        %v5315 = vmul.f32 %v4226, 0.70710677
        %v5316 = vmul.f32 %v4610, 0.70710677
        %v5317 = vmul.f32 %v4612, 0.70710677
        %v5318 = vmul.f32 %v2684, 0.70710677
        %v5319 = vmul.f32 %v2686, 0.70710677
        %v5320 = vmul.f32 %v3070, 0.70710677
        %v5321 = vmul.f32 %v3072, 0.70710677
        %v5322 = vmul.f32 %v3456, 0.70710677
        %v5323 = vmul.f32 %v3458, 0.70710677
        %v5324 = vmul.f32 %v3842, 0.70710677
        %v5325 = vmul.f32 %v3844, 0.70710677
        %v5326 = vmul.f32 %v4228, 0.70710677
        %v5327 = vmul.f32 %v4230, 0.70710677
        %v5328 = vmul.f32 %v4614, 0.70710677
        %v5329 = vmul.f32 %v4616, 0.70710677
        %v5330 = vmul.f32 %v2690, 0.70710677
        %v5331 = vmul.f32 %v2692, 0.70710677
        %v5332 = vmul.f32 %v3076, 0.70710677
        %v5333 = vmul.f32 %v3078, 0.70710677
        %v5334 = vmul.f32 %v3462, 0.70710677
        %v5335 = vmul.f32 %v3464, 0.70710677
        %v5336 = vmul.f32 %v3848, 0.70710677
        %v5337 = vmul.f32 %v3850, 0.70710677
        %v5338 = vmul.f32 %v4234, 0.70710677
        %v5339 = vmul.f32 %v4236, 0.70710677
        %v5340 = vmul.f32 %v4620, 0.70710677
        %v5341 = vmul.f32 %v4622, 0.70710677
        %v5342 = vmul.f32 %v2694, 0.70710677
        %v5343 = vmul.f32 %v2696, 0.70710677
        %v5344 = vmul.f32 %v3080, 0.70710677
        %v5345 = vmul.f32 %v3082, 0.70710677
        %v5346 = vmul.f32 %v3466, 0.70710677
        %v5347 = vmul.f32 %v3468, 0.70710677
        %v5348 = vmul.f32 %v3852, 0.70710677
        %v5349 = vmul.f32 %v3854, 0.70710677
        %v5350 = vmul.f32 %v4238, 0.70710677
        %v5351 = vmul.f32 %v4240, 0.70710677
        %v5352 = vmul.f32 %v4624, 0.70710677
        %v5353 = vmul.f32 %v4626, 0.70710677
        %v5354 = vmul.f32 %v2700, 0.70710677
        %v5355 = vmul.f32 %v2702, 0.70710677
        %v5356 = vmul.f32 %v3086, 0.70710677
        %v5357 = vmul.f32 %v3088, 0.70710677
        %v5358 = vmul.f32 %v3472, 0.70710677
        %v5359 = vmul.f32 %v3474, 0.70710677
        %v5360 = vmul.f32 %v3858, 0.70710677
        %v5361 = vmul.f32 %v3860, 0.70710677
        %v5362 = vmul.f32 %v4244, 0.70710677
        %v5363 = vmul.f32 %v4246, 0.70710677
        %v5364 = vmul.f32 %v4630, 0.70710677
        %v5365 = vmul.f32 %v4632, 0.70710677
        %v5366 = vmul.f32 %v2704, 0.70710677
        %v5367 = vmul.f32 %v2706, 0.70710677
        %v5368 = vmul.f32 %v3090, 0.70710677
        %v5369 = vmul.f32 %v3092, 0.70710677
        %v5370 = vmul.f32 %v3476, 0.70710677
        %v5371 = vmul.f32 %v3478, 0.70710677
        %v5372 = vmul.f32 %v3862, 0.70710677
        %v5373 = vmul.f32 %v3864, 0.70710677
        %v5374 = vmul.f32 %v4248, 0.70710677
        %v5375 = vmul.f32 %v4250, 0.70710677
        %v5376 = vmul.f32 %v4634, 0.70710677
        %v5377 = vmul.f32 %v4636, 0.70710677
        %v5378 = vmul.f32 %v2710, 0.70710677
        %v5379 = vmul.f32 %v2712, 0.70710677
        %v5380 = vmul.f32 %v3096, 0.70710677
        %v5381 = vmul.f32 %v3098, 0.70710677
        %v5382 = vmul.f32 %v3482, 0.70710677
        %v5383 = vmul.f32 %v3484, 0.70710677
        %v5384 = vmul.f32 %v3868, 0.70710677
        %v5385 = vmul.f32 %v3870, 0.70710677
        %v5386 = vmul.f32 %v4254, 0.70710677
        %v5387 = vmul.f32 %v4256, 0.70710677
        %v5388 = vmul.f32 %v4640, 0.70710677
        %v5389 = vmul.f32 %v4642, 0.70710677
        %v5390 = vmul.f32 %v2714, 0.70710677
        %v5391 = vmul.f32 %v2716, 0.70710677
        %v5392 = vmul.f32 %v3100, 0.70710677
        %v5393 = vmul.f32 %v3102, 0.70710677
        %v5394 = vmul.f32 %v3486, 0.70710677
        %v5395 = vmul.f32 %v3488, 0.70710677
        %v5396 = vmul.f32 %v3872, 0.70710677
        %v5397 = vmul.f32 %v3874, 0.70710677
        %v5398 = vmul.f32 %v4258, 0.70710677
        %v5399 = vmul.f32 %v4260, 0.70710677
        %v5400 = vmul.f32 %v4644, 0.70710677
        %v5401 = vmul.f32 %v4646, 0.70710677
        %v5402 = vmul.f32 %v2720, 0.70710677
        %v5403 = vmul.f32 %v2722, 0.70710677
        %v5404 = vmul.f32 %v3106, 0.70710677
        %v5405 = vmul.f32 %v3108, 0.70710677
        %v5406 = vmul.f32 %v3492, 0.70710677
        %v5407 = vmul.f32 %v3494, 0.70710677
        %v5408 = vmul.f32 %v3878, 0.70710677
        %v5409 = vmul.f32 %v3880, 0.70710677
        %v5410 = vmul.f32 %v4264, 0.70710677
        %v5411 = vmul.f32 %v4266, 0.70710677
        %v5412 = vmul.f32 %v4650, 0.70710677
        %v5413 = vmul.f32 %v4652, 0.70710677
        %v5414 = vmul.f32 %v2724, 0.70710677
        %v5415 = vmul.f32 %v2726, 0.70710677
        %v5416 = vmul.f32 %v3110, 0.70710677
        %v5417 = vmul.f32 %v3112, 0.70710677
        %v5418 = vmul.f32 %v3496, 0.70710677
        %v5419 = vmul.f32 %v3498, 0.70710677
        %v5420 = vmul.f32 %v3882, 0.70710677
        %v5421 = vmul.f32 %v3884, 0.70710677
        %v5422 = vmul.f32 %v4268, 0.70710677
        %v5423 = vmul.f32 %v4270, 0.70710677
        %v5424 = vmul.f32 %v4654, 0.70710677
        %v5425 = vmul.f32 %v4656, 0.70710677
        %v5426 = verf.f32.pop %v5042
        %v5427 = verf.f32.pop %v5043
        %v5428 = verf.f32.pop %v5044
        %v5429 = verf.f32.pop %v5045
        %v5430 = verf.f32.pop %v5046
        %v5431 = verf.f32.pop %v5047
        %v5432 = verf.f32.pop %v5048
        %v5433 = verf.f32.pop %v5049
        %v5434 = verf.f32.pop %v5050
        %v5435 = verf.f32.pop %v5051
        %v5436 = verf.f32.pop %v5052
        %v5437 = verf.f32.pop %v5053
        %v5438 = verf.f32.pop %v5054
        %v5439 = verf.f32.pop %v5055
        %v5440 = verf.f32.pop %v5056
        %v5441 = verf.f32.pop %v5057
        %v5442 = verf.f32.pop %v5058
        %v5443 = verf.f32.pop %v5059
        %v5444 = verf.f32.pop %v5060
        %v5445 = verf.f32.pop %v5061
        %v5446 = verf.f32.pop %v5062
        %v5447 = verf.f32.pop %v5063
        %v5448 = verf.f32.pop %v5064
        %v5449 = verf.f32.pop %v5065
        %v5450 = verf.f32.pop %v5066
        %v5451 = verf.f32.pop %v5067
        %v5452 = verf.f32.pop %v5068
        %v5453 = verf.f32.pop %v5069
        %v5454 = verf.f32.pop %v5070
        %v5455 = verf.f32.pop %v5071
        %v5456 = verf.f32.pop %v5072
        %v5457 = verf.f32.pop %v5073
        %v5458 = verf.f32.pop %v5074
        %v5459 = verf.f32.pop %v5075
        %v5460 = verf.f32.pop %v5076
        %v5461 = verf.f32.pop %v5077
        %v5462 = verf.f32.pop %v5078
        %v5463 = verf.f32.pop %v5079
        %v5464 = verf.f32.pop %v5080
        %v5465 = verf.f32.pop %v5081
        %v5466 = verf.f32.pop %v5082
        %v5467 = verf.f32.pop %v5083
        %v5468 = verf.f32.pop %v5084
        %v5469 = verf.f32.pop %v5085
        %v5470 = verf.f32.pop %v5086
        %v5471 = verf.f32.pop %v5087
        %v5472 = verf.f32.pop %v5088
        %v5473 = verf.f32.pop %v5089
        %v5474 = verf.f32.pop %v5090
        %v5475 = verf.f32.pop %v5091
        %v5476 = verf.f32.pop %v5092
        %v5477 = verf.f32.pop %v5093
        %v5478 = verf.f32.pop %v5094
        %v5479 = verf.f32.pop %v5095
        %v5480 = verf.f32.pop %v5096
        %v5481 = verf.f32.pop %v5097
        %v5482 = verf.f32.pop %v5098
        %v5483 = verf.f32.pop %v5099
        %v5484 = verf.f32.pop %v5100
        %v5485 = verf.f32.pop %v5101
        %v5486 = verf.f32.pop %v5102
        %v5487 = verf.f32.pop %v5103
        %v5488 = verf.f32.pop %v5104
        %v5489 = verf.f32.pop %v5105
        %v5490 = verf.f32.pop %v5106
        %v5491 = verf.f32.pop %v5107
        %v5492 = verf.f32.pop %v5108
        %v5493 = verf.f32.pop %v5109
        %v5494 = verf.f32.pop %v5110
        %v5495 = verf.f32.pop %v5111
        %v5496 = verf.f32.pop %v5112
        %v5497 = verf.f32.pop %v5113
        %v5498 = verf.f32.pop %v5114
        %v5499 = verf.f32.pop %v5115
        %v5500 = verf.f32.pop %v5116
        %v5501 = verf.f32.pop %v5117
        %v5502 = verf.f32.pop %v5118
        %v5503 = verf.f32.pop %v5119
        %v5504 = verf.f32.pop %v5120
        %v5505 = verf.f32.pop %v5121
        %v5506 = verf.f32.pop %v5122
        %v5507 = verf.f32.pop %v5123
        %v5508 = verf.f32.pop %v5124
        %v5509 = verf.f32.pop %v5125
        %v5510 = verf.f32.pop %v5126
        %v5511 = verf.f32.pop %v5127
        %v5512 = verf.f32.pop %v5128
        %v5513 = verf.f32.pop %v5129
        %v5514 = verf.f32.pop %v5130
        %v5515 = verf.f32.pop %v5131
        %v5516 = verf.f32.pop %v5132
        %v5517 = verf.f32.pop %v5133
        %v5518 = verf.f32.pop %v5134
        %v5519 = verf.f32.pop %v5135
        %v5520 = verf.f32.pop %v5136
        %v5521 = verf.f32.pop %v5137
        %v5522 = verf.f32.pop %v5138
        %v5523 = verf.f32.pop %v5139
        %v5524 = verf.f32.pop %v5140
        %v5525 = verf.f32.pop %v5141
        %v5526 = verf.f32.pop %v5142
        %v5527 = verf.f32.pop %v5143
        %v5528 = verf.f32.pop %v5144
        %v5529 = verf.f32.pop %v5145
        %v5530 = verf.f32.pop %v5146
        %v5531 = verf.f32.pop %v5147
        %v5532 = verf.f32.pop %v5148
        %v5533 = verf.f32.pop %v5149
        %v5534 = verf.f32.pop %v5150
        %v5535 = verf.f32.pop %v5151
        %v5536 = verf.f32.pop %v5152
        %v5537 = verf.f32.pop %v5153
        %v5538 = verf.f32.pop %v5154
        %v5539 = verf.f32.pop %v5155
        %v5540 = verf.f32.pop %v5156
        %v5541 = verf.f32.pop %v5157
        %v5542 = verf.f32.pop %v5158
        %v5543 = verf.f32.pop %v5159
        %v5544 = verf.f32.pop %v5160
        %v5545 = verf.f32.pop %v5161
        %v5546 = verf.f32.pop %v5162
        %v5547 = verf.f32.pop %v5163
        %v5548 = verf.f32.pop %v5164
        %v5549 = verf.f32.pop %v5165
        %v5550 = verf.f32.pop %v5166
        %v5551 = verf.f32.pop %v5167
        %v5552 = verf.f32.pop %v5168
        %v5553 = verf.f32.pop %v5169
        %v5554 = verf.f32.pop %v5170
        %v5555 = verf.f32.pop %v5171
        %v5556 = verf.f32.pop %v5172
        %v5557 = verf.f32.pop %v5173
        %v5558 = verf.f32.pop %v5174
        %v5559 = verf.f32.pop %v5175
        %v5560 = verf.f32.pop %v5176
        %v5561 = verf.f32.pop %v5177
        %v5562 = verf.f32.pop %v5178
        %v5563 = verf.f32.pop %v5179
        %v5564 = verf.f32.pop %v5180
        %v5565 = verf.f32.pop %v5181
        %v5566 = verf.f32.pop %v5182
        %v5567 = verf.f32.pop %v5183
        %v5568 = verf.f32.pop %v5184
        %v5569 = verf.f32.pop %v5185
        %v5570 = verf.f32.pop %v5186
        %v5571 = verf.f32.pop %v5187
        %v5572 = verf.f32.pop %v5188
        %v5573 = verf.f32.pop %v5189
        %v5574 = verf.f32.pop %v5190
        %v5575 = verf.f32.pop %v5191
        %v5576 = verf.f32.pop %v5192
        %v5577 = verf.f32.pop %v5193
        %v5578 = verf.f32.pop %v5194
        %v5579 = verf.f32.pop %v5195
        %v5580 = verf.f32.pop %v5196
        %v5581 = verf.f32.pop %v5197
        %v5582 = verf.f32.pop %v5198
        %v5583 = verf.f32.pop %v5199
        %v5584 = verf.f32.pop %v5200
        %v5585 = verf.f32.pop %v5201
        %v5586 = verf.f32.pop %v5202
        %v5587 = verf.f32.pop %v5203
        %v5588 = verf.f32.pop %v5204
        %v5589 = verf.f32.pop %v5205
        %v5590 = verf.f32.pop %v5206
        %v5591 = verf.f32.pop %v5207
        %v5592 = verf.f32.pop %v5208
        %v5593 = verf.f32.pop %v5209
        %v5594 = verf.f32.pop %v5210
        %v5595 = verf.f32.pop %v5211
        %v5596 = verf.f32.pop %v5212
        %v5597 = verf.f32.pop %v5213
        %v5598 = verf.f32.pop %v5214
        %v5599 = verf.f32.pop %v5215
        %v5600 = verf.f32.pop %v5216
        %v5601 = verf.f32.pop %v5217
        %v5602 = verf.f32.pop %v5218
        %v5603 = verf.f32.pop %v5219
        %v5604 = verf.f32.pop %v5220
        %v5605 = verf.f32.pop %v5221
        %v5606 = verf.f32.pop %v5222
        %v5607 = verf.f32.pop %v5223
        %v5608 = verf.f32.pop %v5224
        %v5609 = verf.f32.pop %v5225
        %v5610 = verf.f32.pop %v5226
        %v5611 = verf.f32.pop %v5227
        %v5612 = verf.f32.pop %v5228
        %v5613 = verf.f32.pop %v5229
        %v5614 = verf.f32.pop %v5230
        %v5615 = verf.f32.pop %v5231
        %v5616 = verf.f32.pop %v5232
        %v5617 = verf.f32.pop %v5233
        %v5618 = verf.f32.pop %v5234
        %v5619 = verf.f32.pop %v5235
        %v5620 = verf.f32.pop %v5236
        %v5621 = verf.f32.pop %v5237
        %v5622 = verf.f32.pop %v5238
        %v5623 = verf.f32.pop %v5239
        %v5624 = verf.f32.pop %v5240
        %v5625 = verf.f32.pop %v5241
        %v5626 = verf.f32.pop %v5242
        %v5627 = verf.f32.pop %v5243
        %v5628 = verf.f32.pop %v5244
        %v5629 = verf.f32.pop %v5245
        %v5630 = verf.f32.pop %v5246
        %v5631 = verf.f32.pop %v5247
        %v5632 = verf.f32.pop %v5248
        %v5633 = verf.f32.pop %v5249
        %v5634 = verf.f32.pop %v5250
        %v5635 = verf.f32.pop %v5251
        %v5636 = verf.f32.pop %v5252
        %v5637 = verf.f32.pop %v5253
        %v5638 = verf.f32.pop %v5254
        %v5639 = verf.f32.pop %v5255
        %v5640 = verf.f32.pop %v5256
        %v5641 = verf.f32.pop %v5257
        %v5642 = verf.f32.pop %v5258
        %v5643 = verf.f32.pop %v5259
        %v5644 = verf.f32.pop %v5260
        %v5645 = verf.f32.pop %v5261
        %v5646 = verf.f32.pop %v5262
        %v5647 = verf.f32.pop %v5263
        %v5648 = verf.f32.pop %v5264
        %v5649 = verf.f32.pop %v5265
        %v5650 = verf.f32.pop %v5266
        %v5651 = verf.f32.pop %v5267
        %v5652 = verf.f32.pop %v5268
        %v5653 = verf.f32.pop %v5269
        %v5654 = verf.f32.pop %v5270
        %v5655 = verf.f32.pop %v5271
        %v5656 = verf.f32.pop %v5272
        %v5657 = verf.f32.pop %v5273
        %v5658 = verf.f32.pop %v5274
        %v5659 = verf.f32.pop %v5275
        %v5660 = verf.f32.pop %v5276
        %v5661 = verf.f32.pop %v5277
        %v5662 = verf.f32.pop %v5278
        %v5663 = verf.f32.pop %v5279
        %v5664 = verf.f32.pop %v5280
        %v5665 = verf.f32.pop %v5281
        %v5666 = verf.f32.pop %v5282
        %v5667 = verf.f32.pop %v5283
        %v5668 = verf.f32.pop %v5284
        %v5669 = verf.f32.pop %v5285
        %v5670 = verf.f32.pop %v5286
        %v5671 = verf.f32.pop %v5287
        %v5672 = verf.f32.pop %v5288
        %v5673 = verf.f32.pop %v5289
        %v5674 = verf.f32.pop %v5290
        %v5675 = verf.f32.pop %v5291
        %v5676 = verf.f32.pop %v5292
        %v5677 = verf.f32.pop %v5293
        %v5678 = verf.f32.pop %v5294
        %v5679 = verf.f32.pop %v5295
        %v5680 = verf.f32.pop %v5296
        %v5681 = verf.f32.pop %v5297
        %v5682 = verf.f32.pop %v5298
        %v5683 = verf.f32.pop %v5299
        %v5684 = verf.f32.pop %v5300
        %v5685 = verf.f32.pop %v5301
        %v5686 = verf.f32.pop %v5302
        %v5687 = verf.f32.pop %v5303
        %v5688 = verf.f32.pop %v5304
        %v5689 = verf.f32.pop %v5305
        %v5690 = verf.f32.pop %v5306
        %v5691 = verf.f32.pop %v5307
        %v5692 = verf.f32.pop %v5308
        %v5693 = verf.f32.pop %v5309
        %v5694 = verf.f32.pop %v5310
        %v5695 = verf.f32.pop %v5311
        %v5696 = verf.f32.pop %v5312
        %v5697 = verf.f32.pop %v5313
        %v5698 = verf.f32.pop %v5314
        %v5699 = verf.f32.pop %v5315
        %v5700 = verf.f32.pop %v5316
        %v5701 = verf.f32.pop %v5317
        %v5702 = verf.f32.pop %v5318
        %v5703 = verf.f32.pop %v5319
        %v5704 = verf.f32.pop %v5320
        %v5705 = verf.f32.pop %v5321
        %v5706 = verf.f32.pop %v5322
        %v5707 = verf.f32.pop %v5323
        %v5708 = verf.f32.pop %v5324
        %v5709 = verf.f32.pop %v5325
        %v5710 = verf.f32.pop %v5326
        %v5711 = verf.f32.pop %v5327
        %v5712 = verf.f32.pop %v5328
        %v5713 = verf.f32.pop %v5329
        %v5714 = verf.f32.pop %v5330
        %v5715 = verf.f32.pop %v5331
        %v5716 = verf.f32.pop %v5332
        %v5717 = verf.f32.pop %v5333
        %v5718 = verf.f32.pop %v5334
        %v5719 = verf.f32.pop %v5335
        %v5720 = verf.f32.pop %v5336
        %v5721 = verf.f32.pop %v5337
        %v5722 = verf.f32.pop %v5338
        %v5723 = verf.f32.pop %v5339
        %v5724 = verf.f32.pop %v5340
        %v5725 = verf.f32.pop %v5341
        %v5726 = verf.f32.pop %v5342
        %v5727 = verf.f32.pop %v5343
        %v5728 = verf.f32.pop %v5344
        %v5729 = verf.f32.pop %v5345
        %v5730 = verf.f32.pop %v5346
        %v5731 = verf.f32.pop %v5347
        %v5732 = verf.f32.pop %v5348
        %v5733 = verf.f32.pop %v5349
        %v5734 = verf.f32.pop %v5350
        %v5735 = verf.f32.pop %v5351
        %v5736 = verf.f32.pop %v5352
        %v5737 = verf.f32.pop %v5353
        %v5738 = verf.f32.pop %v5354
        %v5739 = verf.f32.pop %v5355
        %v5740 = verf.f32.pop %v5356
        %v5741 = verf.f32.pop %v5357
        %v5742 = verf.f32.pop %v5358
        %v5743 = verf.f32.pop %v5359
        %v5744 = verf.f32.pop %v5360
        %v5745 = verf.f32.pop %v5361
        %v5746 = verf.f32.pop %v5362
        %v5747 = verf.f32.pop %v5363
        %v5748 = verf.f32.pop %v5364
        %v5749 = verf.f32.pop %v5365
        %v5750 = verf.f32.pop %v5366
        %v5751 = verf.f32.pop %v5367
        %v5752 = verf.f32.pop %v5368
        %v5753 = verf.f32.pop %v5369
        %v5754 = verf.f32.pop %v5370
        %v5755 = verf.f32.pop %v5371
        %v5756 = verf.f32.pop %v5372
        %v5757 = verf.f32.pop %v5373
        %v5758 = verf.f32.pop %v5374
        %v5759 = verf.f32.pop %v5375
        %v5760 = verf.f32.pop %v5376
        %v5761 = verf.f32.pop %v5377
        %v5762 = verf.f32.pop %v5378
        %v5763 = verf.f32.pop %v5379
        %v5764 = verf.f32.pop %v5380
        %v5765 = verf.f32.pop %v5381
        %v5766 = verf.f32.pop %v5382
        %v5767 = verf.f32.pop %v5383
        %v5768 = verf.f32.pop %v5384
        %v5769 = verf.f32.pop %v5385
        %v5770 = verf.f32.pop %v5386
        %v5771 = verf.f32.pop %v5387
        %v5772 = verf.f32.pop %v5388
        %v5773 = verf.f32.pop %v5389
        %v5774 = verf.f32.pop %v5390
        %v5775 = verf.f32.pop %v5391
        %v5776 = verf.f32.pop %v5392
        %v5777 = verf.f32.pop %v5393
        %v5778 = verf.f32.pop %v5394
        %v5779 = verf.f32.pop %v5395
        %v5780 = verf.f32.pop %v5396
        %v5781 = verf.f32.pop %v5397
        %v5782 = verf.f32.pop %v5398
        %v5783 = verf.f32.pop %v5399
        %v5784 = verf.f32.pop %v5400
        %v5785 = verf.f32.pop %v5401
        %v5786 = verf.f32.pop %v5402
        %v5787 = verf.f32.pop %v5403
        %v5788 = verf.f32.pop %v5404
        %v5789 = verf.f32.pop %v5405
        %v5790 = verf.f32.pop %v5406
        %v5791 = verf.f32.pop %v5407
        %v5792 = verf.f32.pop %v5408
        %v5793 = verf.f32.pop %v5409
        %v5794 = verf.f32.pop %v5410
        %v5795 = verf.f32.pop %v5411
        %v5796 = verf.f32.pop %v5412
        %v5797 = verf.f32.pop %v5413
        %v5798 = verf.f32.pop %v5414
        %v5799 = verf.f32.pop %v5415
        %v5800 = verf.f32.pop %v5416
        %v5801 = verf.f32.pop %v5417
        %v5802 = verf.f32.pop %v5418
        %v5803 = verf.f32.pop %v5419
        %v5804 = verf.f32.pop %v5420
        %v5805 = verf.f32.pop %v5421
        %v5806 = verf.f32.pop %v5422
        %v5807 = verf.f32.pop %v5423
        %v5808 = verf.f32.pop %v5424
        %v5809 = verf.f32.pop %v5425
        %v5810 = vadd.f32 %v5426, 1.0
        %v5811 = vadd.f32 %v5427, 1.0
        %v5812 = vadd.f32 %v5428, 1.0
        %v5813 = vadd.f32 %v5429, 1.0
        %v5814 = vadd.f32 %v5430, 1.0
        %v5815 = vadd.f32 %v5431, 1.0
        %v5816 = vadd.f32 %v5432, 1.0
        %v5817 = vadd.f32 %v5433, 1.0
        %v5818 = vadd.f32 %v5434, 1.0
        %v5819 = vadd.f32 %v5435, 1.0
        %v5820 = vadd.f32 %v5436, 1.0
        %v5821 = vadd.f32 %v5437, 1.0
        %v5822 = vadd.f32 %v5438, 1.0
        %v5823 = vadd.f32 %v5439, 1.0
        %v5824 = vadd.f32 %v5440, 1.0
        %v5825 = vadd.f32 %v5441, 1.0
        %v5826 = vadd.f32 %v5442, 1.0
        %v5827 = vadd.f32 %v5443, 1.0
        %v5828 = vadd.f32 %v5444, 1.0
        %v5829 = vadd.f32 %v5445, 1.0
        %v5830 = vadd.f32 %v5446, 1.0
        %v5831 = vadd.f32 %v5447, 1.0
        %v5832 = vadd.f32 %v5448, 1.0
        %v5833 = vadd.f32 %v5449, 1.0
        %v5834 = vadd.f32 %v5450, 1.0
        %v5835 = vadd.f32 %v5451, 1.0
        %v5836 = vadd.f32 %v5452, 1.0
        %v5837 = vadd.f32 %v5453, 1.0
        %v5838 = vadd.f32 %v5454, 1.0
        %v5839 = vadd.f32 %v5455, 1.0
        %v5840 = vadd.f32 %v5456, 1.0
        %v5841 = vadd.f32 %v5457, 1.0
        %v5842 = vadd.f32 %v5458, 1.0
        %v5843 = vadd.f32 %v5459, 1.0
        %v5844 = vadd.f32 %v5460, 1.0
        %v5845 = vadd.f32 %v5461, 1.0
        %v5846 = vadd.f32 %v5462, 1.0
        %v5847 = vadd.f32 %v5463, 1.0
        %v5848 = vadd.f32 %v5464, 1.0
        %v5849 = vadd.f32 %v5465, 1.0
        %v5850 = vadd.f32 %v5466, 1.0
        %v5851 = vadd.f32 %v5467, 1.0
        %v5852 = vadd.f32 %v5468, 1.0
        %v5853 = vadd.f32 %v5469, 1.0
        %v5854 = vadd.f32 %v5470, 1.0
        %v5855 = vadd.f32 %v5471, 1.0
        %v5856 = vadd.f32 %v5472, 1.0
        %v5857 = vadd.f32 %v5473, 1.0
        %v5858 = vadd.f32 %v5474, 1.0
        %v5859 = vadd.f32 %v5475, 1.0
        %v5860 = vadd.f32 %v5476, 1.0
        %v5861 = vadd.f32 %v5477, 1.0
        %v5862 = vadd.f32 %v5478, 1.0
        %v5863 = vadd.f32 %v5479, 1.0
        %v5864 = vadd.f32 %v5480, 1.0
        %v5865 = vadd.f32 %v5481, 1.0
        %v5866 = vadd.f32 %v5482, 1.0
        %v5867 = vadd.f32 %v5483, 1.0
        %v5868 = vadd.f32 %v5484, 1.0
        %v5869 = vadd.f32 %v5485, 1.0
        %v5870 = vadd.f32 %v5486, 1.0
        %v5871 = vadd.f32 %v5487, 1.0
        %v5872 = vadd.f32 %v5488, 1.0
        %v5873 = vadd.f32 %v5489, 1.0
        %v5874 = vadd.f32 %v5490, 1.0
        %v5875 = vadd.f32 %v5491, 1.0
        %v5876 = vadd.f32 %v5492, 1.0
        %v5877 = vadd.f32 %v5493, 1.0
        %v5878 = vadd.f32 %v5494, 1.0
        %v5879 = vadd.f32 %v5495, 1.0
        %v5880 = vadd.f32 %v5496, 1.0
        %v5881 = vadd.f32 %v5497, 1.0
        %v5882 = vadd.f32 %v5498, 1.0
        %v5883 = vadd.f32 %v5499, 1.0
        %v5884 = vadd.f32 %v5500, 1.0
        %v5885 = vadd.f32 %v5501, 1.0
        %v5886 = vadd.f32 %v5502, 1.0
        %v5887 = vadd.f32 %v5503, 1.0
        %v5888 = vadd.f32 %v5504, 1.0
        %v5889 = vadd.f32 %v5505, 1.0
        %v5890 = vadd.f32 %v5506, 1.0
        %v5891 = vadd.f32 %v5507, 1.0
        %v5892 = vadd.f32 %v5508, 1.0
        %v5893 = vadd.f32 %v5509, 1.0
        %v5894 = vadd.f32 %v5510, 1.0
        %v5895 = vadd.f32 %v5511, 1.0
        %v5896 = vadd.f32 %v5512, 1.0
        %v5897 = vadd.f32 %v5513, 1.0
        %v5898 = vadd.f32 %v5514, 1.0
        %v5899 = vadd.f32 %v5515, 1.0
        %v5900 = vadd.f32 %v5516, 1.0
        %v5901 = vadd.f32 %v5517, 1.0
        %v5902 = vadd.f32 %v5518, 1.0
        %v5903 = vadd.f32 %v5519, 1.0
        %v5904 = vadd.f32 %v5520, 1.0
        %v5905 = vadd.f32 %v5521, 1.0
        %v5906 = vadd.f32 %v5522, 1.0
        %v5907 = vadd.f32 %v5523, 1.0
        %v5908 = vadd.f32 %v5524, 1.0
        %v5909 = vadd.f32 %v5525, 1.0
        %v5910 = vadd.f32 %v5526, 1.0
        %v5911 = vadd.f32 %v5527, 1.0
        %v5912 = vadd.f32 %v5528, 1.0
        %v5913 = vadd.f32 %v5529, 1.0
        %v5914 = vadd.f32 %v5530, 1.0
        %v5915 = vadd.f32 %v5531, 1.0
        %v5916 = vadd.f32 %v5532, 1.0
        %v5917 = vadd.f32 %v5533, 1.0
        %v5918 = vadd.f32 %v5534, 1.0
        %v5919 = vadd.f32 %v5535, 1.0
        %v5920 = vadd.f32 %v5536, 1.0
        %v5921 = vadd.f32 %v5537, 1.0
        %v5922 = vadd.f32 %v5538, 1.0
        %v5923 = vadd.f32 %v5539, 1.0
        %v5924 = vadd.f32 %v5540, 1.0
        %v5925 = vadd.f32 %v5541, 1.0
        %v5926 = vadd.f32 %v5542, 1.0
        %v5927 = vadd.f32 %v5543, 1.0
        %v5928 = vadd.f32 %v5544, 1.0
        %v5929 = vadd.f32 %v5545, 1.0
        %v5930 = vadd.f32 %v5546, 1.0
        %v5931 = vadd.f32 %v5547, 1.0
        %v5932 = vadd.f32 %v5548, 1.0
        %v5933 = vadd.f32 %v5549, 1.0
        %v5934 = vadd.f32 %v5550, 1.0
        %v5935 = vadd.f32 %v5551, 1.0
        %v5936 = vadd.f32 %v5552, 1.0
        %v5937 = vadd.f32 %v5553, 1.0
        %v5938 = vadd.f32 %v5554, 1.0
        %v5939 = vadd.f32 %v5555, 1.0
        %v5940 = vadd.f32 %v5556, 1.0
        %v5941 = vadd.f32 %v5557, 1.0
        %v5942 = vadd.f32 %v5558, 1.0
        %v5943 = vadd.f32 %v5559, 1.0
        %v5944 = vadd.f32 %v5560, 1.0
        %v5945 = vadd.f32 %v5561, 1.0
        %v5946 = vadd.f32 %v5562, 1.0
        %v5947 = vadd.f32 %v5563, 1.0
        %v5948 = vadd.f32 %v5564, 1.0
        %v5949 = vadd.f32 %v5565, 1.0
        %v5950 = vadd.f32 %v5566, 1.0
        %v5951 = vadd.f32 %v5567, 1.0
        %v5952 = vadd.f32 %v5568, 1.0
        %v5953 = vadd.f32 %v5569, 1.0
        %v5954 = vadd.f32 %v5570, 1.0
        %v5955 = vadd.f32 %v5571, 1.0
        %v5956 = vadd.f32 %v5572, 1.0
        %v5957 = vadd.f32 %v5573, 1.0
        %v5958 = vadd.f32 %v5574, 1.0
        %v5959 = vadd.f32 %v5575, 1.0
        %v5960 = vadd.f32 %v5576, 1.0
        %v5961 = vadd.f32 %v5577, 1.0
        %v5962 = vadd.f32 %v5578, 1.0
        %v5963 = vadd.f32 %v5579, 1.0
        %v5964 = vadd.f32 %v5580, 1.0
        %v5965 = vadd.f32 %v5581, 1.0
        %v5966 = vadd.f32 %v5582, 1.0
        %v5967 = vadd.f32 %v5583, 1.0
        %v5968 = vadd.f32 %v5584, 1.0
        %v5969 = vadd.f32 %v5585, 1.0
        %v5970 = vadd.f32 %v5586, 1.0
        %v5971 = vadd.f32 %v5587, 1.0
        %v5972 = vadd.f32 %v5588, 1.0
        %v5973 = vadd.f32 %v5589, 1.0
        %v5974 = vadd.f32 %v5590, 1.0
        %v5975 = vadd.f32 %v5591, 1.0
        %v5976 = vadd.f32 %v5592, 1.0
        %v5977 = vadd.f32 %v5593, 1.0
        %v5978 = vadd.f32 %v5594, 1.0
        %v5979 = vadd.f32 %v5595, 1.0
        %v5980 = vadd.f32 %v5596, 1.0
        %v5981 = vadd.f32 %v5597, 1.0
        %v5982 = vadd.f32 %v5598, 1.0
        %v5983 = vadd.f32 %v5599, 1.0
        %v5984 = vadd.f32 %v5600, 1.0
        %v5985 = vadd.f32 %v5601, 1.0
        %v5986 = vadd.f32 %v5602, 1.0
        %v5987 = vadd.f32 %v5603, 1.0
        %v5988 = vadd.f32 %v5604, 1.0
        %v5989 = vadd.f32 %v5605, 1.0
        %v5990 = vadd.f32 %v5606, 1.0
        %v5991 = vadd.f32 %v5607, 1.0
        %v5992 = vadd.f32 %v5608, 1.0
        %v5993 = vadd.f32 %v5609, 1.0
        %v5994 = vadd.f32 %v5610, 1.0
        %v5995 = vadd.f32 %v5611, 1.0
        %v5996 = vadd.f32 %v5612, 1.0
        %v5997 = vadd.f32 %v5613, 1.0
        %v5998 = vadd.f32 %v5614, 1.0
        %v5999 = vadd.f32 %v5615, 1.0
        %v6000 = vadd.f32 %v5616, 1.0
        %v6001 = vadd.f32 %v5617, 1.0
        %v6002 = vadd.f32 %v5618, 1.0
        %v6003 = vadd.f32 %v5619, 1.0
        %v6004 = vadd.f32 %v5620, 1.0
        %v6005 = vadd.f32 %v5621, 1.0
        %v6006 = vadd.f32 %v5622, 1.0
        %v6007 = vadd.f32 %v5623, 1.0
        %v6008 = vadd.f32 %v5624, 1.0
        %v6009 = vadd.f32 %v5625, 1.0
        %v6010 = vadd.f32 %v5626, 1.0
        %v6011 = vadd.f32 %v5627, 1.0
        %v6012 = vadd.f32 %v5628, 1.0
        %v6013 = vadd.f32 %v5629, 1.0
        %v6014 = vadd.f32 %v5630, 1.0
        %v6015 = vadd.f32 %v5631, 1.0
        %v6016 = vadd.f32 %v5632, 1.0
        %v6017 = vadd.f32 %v5633, 1.0
        %v6018 = vadd.f32 %v5634, 1.0
        %v6019 = vadd.f32 %v5635, 1.0
        %v6020 = vadd.f32 %v5636, 1.0
        %v6021 = vadd.f32 %v5637, 1.0
        %v6022 = vadd.f32 %v5638, 1.0
        %v6023 = vadd.f32 %v5639, 1.0
        %v6024 = vadd.f32 %v5640, 1.0
        %v6025 = vadd.f32 %v5641, 1.0
        %v6026 = vadd.f32 %v5642, 1.0
        %v6027 = vadd.f32 %v5643, 1.0
        %v6028 = vadd.f32 %v5644, 1.0
        %v6029 = vadd.f32 %v5645, 1.0
        %v6030 = vadd.f32 %v5646, 1.0
        %v6031 = vadd.f32 %v5647, 1.0
        %v6032 = vadd.f32 %v5648, 1.0
        %v6033 = vadd.f32 %v5649, 1.0
        %v6034 = vadd.f32 %v5650, 1.0
        %v6035 = vadd.f32 %v5651, 1.0
        %v6036 = vadd.f32 %v5652, 1.0
        %v6037 = vadd.f32 %v5653, 1.0
        %v6038 = vadd.f32 %v5654, 1.0
        %v6039 = vadd.f32 %v5655, 1.0
        %v6040 = vadd.f32 %v5656, 1.0
        %v6041 = vadd.f32 %v5657, 1.0
        %v6042 = vadd.f32 %v5658, 1.0
        %v6043 = vadd.f32 %v5659, 1.0
        %v6044 = vadd.f32 %v5660, 1.0
        %v6045 = vadd.f32 %v5661, 1.0
        %v6046 = vadd.f32 %v5662, 1.0
        %v6047 = vadd.f32 %v5663, 1.0
        %v6048 = vadd.f32 %v5664, 1.0
        %v6049 = vadd.f32 %v5665, 1.0
        %v6050 = vadd.f32 %v5666, 1.0
        %v6051 = vadd.f32 %v5667, 1.0
        %v6052 = vadd.f32 %v5668, 1.0
        %v6053 = vadd.f32 %v5669, 1.0
        %v6054 = vadd.f32 %v5670, 1.0
        %v6055 = vadd.f32 %v5671, 1.0
        %v6056 = vadd.f32 %v5672, 1.0
        %v6057 = vadd.f32 %v5673, 1.0
        %v6058 = vadd.f32 %v5674, 1.0
        %v6059 = vadd.f32 %v5675, 1.0
        %v6060 = vadd.f32 %v5676, 1.0
        %v6061 = vadd.f32 %v5677, 1.0
        %v6062 = vadd.f32 %v5678, 1.0
        %v6063 = vadd.f32 %v5679, 1.0
        %v6064 = vadd.f32 %v5680, 1.0
        %v6065 = vadd.f32 %v5681, 1.0
        %v6066 = vadd.f32 %v5682, 1.0
        %v6067 = vadd.f32 %v5683, 1.0
        %v6068 = vadd.f32 %v5684, 1.0
        %v6069 = vadd.f32 %v5685, 1.0
        %v6070 = vadd.f32 %v5686, 1.0
        %v6071 = vadd.f32 %v5687, 1.0
        %v6072 = vadd.f32 %v5688, 1.0
        %v6073 = vadd.f32 %v5689, 1.0
        %v6074 = vadd.f32 %v5690, 1.0
        %v6075 = vadd.f32 %v5691, 1.0
        %v6076 = vadd.f32 %v5692, 1.0
        %v6077 = vadd.f32 %v5693, 1.0
        %v6078 = vadd.f32 %v5694, 1.0
        %v6079 = vadd.f32 %v5695, 1.0
        %v6080 = vadd.f32 %v5696, 1.0
        %v6081 = vadd.f32 %v5697, 1.0
        %v6082 = vadd.f32 %v5698, 1.0
        %v6083 = vadd.f32 %v5699, 1.0
        %v6084 = vadd.f32 %v5700, 1.0
        %v6085 = vadd.f32 %v5701, 1.0
        %v6086 = vadd.f32 %v5702, 1.0
        %v6087 = vadd.f32 %v5703, 1.0
        %v6088 = vadd.f32 %v5704, 1.0
        %v6089 = vadd.f32 %v5705, 1.0
        %v6090 = vadd.f32 %v5706, 1.0
        %v6091 = vadd.f32 %v5707, 1.0
        %v6092 = vadd.f32 %v5708, 1.0
        %v6093 = vadd.f32 %v5709, 1.0
        %v6094 = vadd.f32 %v5710, 1.0
        %v6095 = vadd.f32 %v5711, 1.0
        %v6096 = vadd.f32 %v5712, 1.0
        %v6097 = vadd.f32 %v5713, 1.0
        %v6098 = vadd.f32 %v5714, 1.0
        %v6099 = vadd.f32 %v5715, 1.0
        %v6100 = vadd.f32 %v5716, 1.0
        %v6101 = vadd.f32 %v5717, 1.0
        %v6102 = vadd.f32 %v5718, 1.0
        %v6103 = vadd.f32 %v5719, 1.0
        %v6104 = vadd.f32 %v5720, 1.0
        %v6105 = vadd.f32 %v5721, 1.0
        %v6106 = vadd.f32 %v5722, 1.0
        %v6107 = vadd.f32 %v5723, 1.0
        %v6108 = vadd.f32 %v5724, 1.0
        %v6109 = vadd.f32 %v5725, 1.0
        %v6110 = vadd.f32 %v5726, 1.0
        %v6111 = vadd.f32 %v5727, 1.0
        %v6112 = vadd.f32 %v5728, 1.0
        %v6113 = vadd.f32 %v5729, 1.0
        %v6114 = vadd.f32 %v5730, 1.0
        %v6115 = vadd.f32 %v5731, 1.0
        %v6116 = vadd.f32 %v5732, 1.0
        %v6117 = vadd.f32 %v5733, 1.0
        %v6118 = vadd.f32 %v5734, 1.0
        %v6119 = vadd.f32 %v5735, 1.0
        %v6120 = vadd.f32 %v5736, 1.0
        %v6121 = vadd.f32 %v5737, 1.0
        %v6122 = vadd.f32 %v5738, 1.0
        %v6123 = vadd.f32 %v5739, 1.0
        %v6124 = vadd.f32 %v5740, 1.0
        %v6125 = vadd.f32 %v5741, 1.0
        %v6126 = vadd.f32 %v5742, 1.0
        %v6127 = vadd.f32 %v5743, 1.0
        %v6128 = vadd.f32 %v5744, 1.0
        %v6129 = vadd.f32 %v5745, 1.0
        %v6130 = vadd.f32 %v5746, 1.0
        %v6131 = vadd.f32 %v5747, 1.0
        %v6132 = vadd.f32 %v5748, 1.0
        %v6133 = vadd.f32 %v5749, 1.0
        %v6134 = vadd.f32 %v5750, 1.0
        %v6135 = vadd.f32 %v5751, 1.0
        %v6136 = vadd.f32 %v5752, 1.0
        %v6137 = vadd.f32 %v5753, 1.0
        %v6138 = vadd.f32 %v5754, 1.0
        %v6139 = vadd.f32 %v5755, 1.0
        %v6140 = vadd.f32 %v5756, 1.0
        %v6141 = vadd.f32 %v5757, 1.0
        %v6142 = vadd.f32 %v5758, 1.0
        %v6143 = vadd.f32 %v5759, 1.0
        %v6144 = vadd.f32 %v5760, 1.0
        %v6145 = vadd.f32 %v5761, 1.0
        %v6146 = vadd.f32 %v5762, 1.0
        %v6147 = vadd.f32 %v5763, 1.0
        %v6148 = vadd.f32 %v5764, 1.0
        %v6149 = vadd.f32 %v5765, 1.0
        %v6150 = vadd.f32 %v5766, 1.0
        %v6151 = vadd.f32 %v5767, 1.0
        %v6152 = vadd.f32 %v5768, 1.0
        %v6153 = vadd.f32 %v5769, 1.0
        %v6154 = vadd.f32 %v5770, 1.0
        %v6155 = vadd.f32 %v5771, 1.0
        %v6156 = vadd.f32 %v5772, 1.0
        %v6157 = vadd.f32 %v5773, 1.0
        %v6158 = vadd.f32 %v5774, 1.0
        %v6159 = vadd.f32 %v5775, 1.0
        %v6160 = vadd.f32 %v5776, 1.0
        %v6161 = vadd.f32 %v5777, 1.0
        %v6162 = vadd.f32 %v5778, 1.0
        %v6163 = vadd.f32 %v5779, 1.0
        %v6164 = vadd.f32 %v5780, 1.0
        %v6165 = vadd.f32 %v5781, 1.0
        %v6166 = vadd.f32 %v5782, 1.0
        %v6167 = vadd.f32 %v5783, 1.0
        %v6168 = vadd.f32 %v5784, 1.0
        %v6169 = vadd.f32 %v5785, 1.0
        %v6170 = vadd.f32 %v5786, 1.0
        %v6171 = vadd.f32 %v5787, 1.0
        %v6172 = vadd.f32 %v5788, 1.0
        %v6173 = vadd.f32 %v5789, 1.0
        %v6174 = vadd.f32 %v5790, 1.0
        %v6175 = vadd.f32 %v5791, 1.0
        %v6176 = vadd.f32 %v5792, 1.0
        %v6177 = vadd.f32 %v5793, 1.0
        %v6178 = vadd.f32 %v5794, 1.0
        %v6179 = vadd.f32 %v5795, 1.0
        %v6180 = vadd.f32 %v5796, 1.0
        %v6181 = vadd.f32 %v5797, 1.0
        %v6182 = vadd.f32 %v5798, 1.0
        %v6183 = vadd.f32 %v5799, 1.0
        %v6184 = vadd.f32 %v5800, 1.0
        %v6185 = vadd.f32 %v5801, 1.0
        %v6186 = vadd.f32 %v5802, 1.0
        %v6187 = vadd.f32 %v5803, 1.0
        %v6188 = vadd.f32 %v5804, 1.0
        %v6189 = vadd.f32 %v5805, 1.0
        %v6190 = vadd.f32 %v5806, 1.0
        %v6191 = vadd.f32 %v5807, 1.0
        %v6192 = vadd.f32 %v5808, 1.0
        %v6193 = vadd.f32 %v5809, 1.0
        %v6194 = vmul.f32 %v4658, %v5810
        %v6195 = vmul.f32 %v4659, %v5811
        %v6196 = vmul.f32 %v4660, %v5812
        %v6197 = vmul.f32 %v4661, %v5813
        %v6198 = vmul.f32 %v4662, %v5814
        %v6199 = vmul.f32 %v4663, %v5815
        %v6200 = vmul.f32 %v4664, %v5816
        %v6201 = vmul.f32 %v4665, %v5817
        %v6202 = vmul.f32 %v4666, %v5818
        %v6203 = vmul.f32 %v4667, %v5819
        %v6204 = vmul.f32 %v4668, %v5820
        %v6205 = vmul.f32 %v4669, %v5821
        %v6206 = vmul.f32 %v4670, %v5822
        %v6207 = vmul.f32 %v4671, %v5823
        %v6208 = vmul.f32 %v4672, %v5824
        %v6209 = vmul.f32 %v4673, %v5825
        %v6210 = vmul.f32 %v4674, %v5826
        %v6211 = vmul.f32 %v4675, %v5827
        %v6212 = vmul.f32 %v4676, %v5828
        %v6213 = vmul.f32 %v4677, %v5829
        %v6214 = vmul.f32 %v4678, %v5830
        %v6215 = vmul.f32 %v4679, %v5831
        %v6216 = vmul.f32 %v4680, %v5832
        %v6217 = vmul.f32 %v4681, %v5833
        %v6218 = vmul.f32 %v4682, %v5834
        %v6219 = vmul.f32 %v4683, %v5835
        %v6220 = vmul.f32 %v4684, %v5836
        %v6221 = vmul.f32 %v4685, %v5837
        %v6222 = vmul.f32 %v4686, %v5838
        %v6223 = vmul.f32 %v4687, %v5839
        %v6224 = vmul.f32 %v4688, %v5840
        %v6225 = vmul.f32 %v4689, %v5841
        %v6226 = vmul.f32 %v4690, %v5842
        %v6227 = vmul.f32 %v4691, %v5843
        %v6228 = vmul.f32 %v4692, %v5844
        %v6229 = vmul.f32 %v4693, %v5845
        %v6230 = vmul.f32 %v4694, %v5846
        %v6231 = vmul.f32 %v4695, %v5847
        %v6232 = vmul.f32 %v4696, %v5848
        %v6233 = vmul.f32 %v4697, %v5849
        %v6234 = vmul.f32 %v4698, %v5850
        %v6235 = vmul.f32 %v4699, %v5851
        %v6236 = vmul.f32 %v4700, %v5852
        %v6237 = vmul.f32 %v4701, %v5853
        %v6238 = vmul.f32 %v4702, %v5854
        %v6239 = vmul.f32 %v4703, %v5855
        %v6240 = vmul.f32 %v4704, %v5856
        %v6241 = vmul.f32 %v4705, %v5857
        %v6242 = vmul.f32 %v4706, %v5858
        %v6243 = vmul.f32 %v4707, %v5859
        %v6244 = vmul.f32 %v4708, %v5860
        %v6245 = vmul.f32 %v4709, %v5861
        %v6246 = vmul.f32 %v4710, %v5862
        %v6247 = vmul.f32 %v4711, %v5863
        %v6248 = vmul.f32 %v4712, %v5864
        %v6249 = vmul.f32 %v4713, %v5865
        %v6250 = vmul.f32 %v4714, %v5866
        %v6251 = vmul.f32 %v4715, %v5867
        %v6252 = vmul.f32 %v4716, %v5868
        %v6253 = vmul.f32 %v4717, %v5869
        %v6254 = vmul.f32 %v4718, %v5870
        %v6255 = vmul.f32 %v4719, %v5871
        %v6256 = vmul.f32 %v4720, %v5872
        %v6257 = vmul.f32 %v4721, %v5873
        %v6258 = vmul.f32 %v4722, %v5874
        %v6259 = vmul.f32 %v4723, %v5875
        %v6260 = vmul.f32 %v4724, %v5876
        %v6261 = vmul.f32 %v4725, %v5877
        %v6262 = vmul.f32 %v4726, %v5878
        %v6263 = vmul.f32 %v4727, %v5879
        %v6264 = vmul.f32 %v4728, %v5880
        %v6265 = vmul.f32 %v4729, %v5881
        %v6266 = vmul.f32 %v4730, %v5882
        %v6267 = vmul.f32 %v4731, %v5883
        %v6268 = vmul.f32 %v4732, %v5884
        %v6269 = vmul.f32 %v4733, %v5885
        %v6270 = vmul.f32 %v4734, %v5886
        %v6271 = vmul.f32 %v4735, %v5887
        %v6272 = vmul.f32 %v4736, %v5888
        %v6273 = vmul.f32 %v4737, %v5889
        %v6274 = vmul.f32 %v4738, %v5890
        %v6275 = vmul.f32 %v4739, %v5891
        %v6276 = vmul.f32 %v4740, %v5892
        %v6277 = vmul.f32 %v4741, %v5893
        %v6278 = vmul.f32 %v4742, %v5894
        %v6279 = vmul.f32 %v4743, %v5895
        %v6280 = vmul.f32 %v4744, %v5896
        %v6281 = vmul.f32 %v4745, %v5897
        %v6282 = vmul.f32 %v4746, %v5898
        %v6283 = vmul.f32 %v4747, %v5899
        %v6284 = vmul.f32 %v4748, %v5900
        %v6285 = vmul.f32 %v4749, %v5901
        %v6286 = vmul.f32 %v4750, %v5902
        %v6287 = vmul.f32 %v4751, %v5903
        %v6288 = vmul.f32 %v4752, %v5904
        %v6289 = vmul.f32 %v4753, %v5905
        %v6290 = vmul.f32 %v4754, %v5906
        %v6291 = vmul.f32 %v4755, %v5907
        %v6292 = vmul.f32 %v4756, %v5908
        %v6293 = vmul.f32 %v4757, %v5909
        %v6294 = vmul.f32 %v4758, %v5910
        %v6295 = vmul.f32 %v4759, %v5911
        %v6296 = vmul.f32 %v4760, %v5912
        %v6297 = vmul.f32 %v4761, %v5913
        %v6298 = vmul.f32 %v4762, %v5914
        %v6299 = vmul.f32 %v4763, %v5915
        %v6300 = vmul.f32 %v4764, %v5916
        %v6301 = vmul.f32 %v4765, %v5917
        %v6302 = vmul.f32 %v4766, %v5918
        %v6303 = vmul.f32 %v4767, %v5919
        %v6304 = vmul.f32 %v4768, %v5920
        %v6305 = vmul.f32 %v4769, %v5921
        %v6306 = vmul.f32 %v4770, %v5922
        %v6307 = vmul.f32 %v4771, %v5923
        %v6308 = vmul.f32 %v4772, %v5924
        %v6309 = vmul.f32 %v4773, %v5925
        %v6310 = vmul.f32 %v4774, %v5926
        %v6311 = vmul.f32 %v4775, %v5927
        %v6312 = vmul.f32 %v4776, %v5928
        %v6313 = vmul.f32 %v4777, %v5929
        %v6314 = vmul.f32 %v4778, %v5930
        %v6315 = vmul.f32 %v4779, %v5931
        %v6316 = vmul.f32 %v4780, %v5932
        %v6317 = vmul.f32 %v4781, %v5933
        %v6318 = vmul.f32 %v4782, %v5934
        %v6319 = vmul.f32 %v4783, %v5935
        %v6320 = vmul.f32 %v4784, %v5936
        %v6321 = vmul.f32 %v4785, %v5937
        %v6322 = vmul.f32 %v4786, %v5938
        %v6323 = vmul.f32 %v4787, %v5939
        %v6324 = vmul.f32 %v4788, %v5940
        %v6325 = vmul.f32 %v4789, %v5941
        %v6326 = vmul.f32 %v4790, %v5942
        %v6327 = vmul.f32 %v4791, %v5943
        %v6328 = vmul.f32 %v4792, %v5944
        %v6329 = vmul.f32 %v4793, %v5945
        %v6330 = vmul.f32 %v4794, %v5946
        %v6331 = vmul.f32 %v4795, %v5947
        %v6332 = vmul.f32 %v4796, %v5948
        %v6333 = vmul.f32 %v4797, %v5949
        %v6334 = vmul.f32 %v4798, %v5950
        %v6335 = vmul.f32 %v4799, %v5951
        %v6336 = vmul.f32 %v4800, %v5952
        %v6337 = vmul.f32 %v4801, %v5953
        %v6338 = vmul.f32 %v4802, %v5954
        %v6339 = vmul.f32 %v4803, %v5955
        %v6340 = vmul.f32 %v4804, %v5956
        %v6341 = vmul.f32 %v4805, %v5957
        %v6342 = vmul.f32 %v4806, %v5958
        %v6343 = vmul.f32 %v4807, %v5959
        %v6344 = vmul.f32 %v4808, %v5960
        %v6345 = vmul.f32 %v4809, %v5961
        %v6346 = vmul.f32 %v4810, %v5962
        %v6347 = vmul.f32 %v4811, %v5963
        %v6348 = vmul.f32 %v4812, %v5964
        %v6349 = vmul.f32 %v4813, %v5965
        %v6350 = vmul.f32 %v4814, %v5966
        %v6351 = vmul.f32 %v4815, %v5967
        %v6352 = vmul.f32 %v4816, %v5968
        %v6353 = vmul.f32 %v4817, %v5969
        %v6354 = vmul.f32 %v4818, %v5970
        %v6355 = vmul.f32 %v4819, %v5971
        %v6356 = vmul.f32 %v4820, %v5972
        %v6357 = vmul.f32 %v4821, %v5973
        %v6358 = vmul.f32 %v4822, %v5974
        %v6359 = vmul.f32 %v4823, %v5975
        %v6360 = vmul.f32 %v4824, %v5976
        %v6361 = vmul.f32 %v4825, %v5977
        %v6362 = vmul.f32 %v4826, %v5978
        %v6363 = vmul.f32 %v4827, %v5979
        %v6364 = vmul.f32 %v4828, %v5980
        %v6365 = vmul.f32 %v4829, %v5981
        %v6366 = vmul.f32 %v4830, %v5982
        %v6367 = vmul.f32 %v4831, %v5983
        %v6368 = vmul.f32 %v4832, %v5984
        %v6369 = vmul.f32 %v4833, %v5985
        %v6370 = vmul.f32 %v4834, %v5986
        %v6371 = vmul.f32 %v4835, %v5987
        %v6372 = vmul.f32 %v4836, %v5988
        %v6373 = vmul.f32 %v4837, %v5989
        %v6374 = vmul.f32 %v4838, %v5990
        %v6375 = vmul.f32 %v4839, %v5991
        %v6376 = vmul.f32 %v4840, %v5992
        %v6377 = vmul.f32 %v4841, %v5993
        %v6378 = vmul.f32 %v4842, %v5994
        %v6379 = vmul.f32 %v4843, %v5995
        %v6380 = vmul.f32 %v4844, %v5996
        %v6381 = vmul.f32 %v4845, %v5997
        %v6382 = vmul.f32 %v4846, %v5998
        %v6383 = vmul.f32 %v4847, %v5999
        %v6384 = vmul.f32 %v4848, %v6000
        %v6385 = vmul.f32 %v4849, %v6001
        %v6386 = vmul.f32 %v4850, %v6002
        %v6387 = vmul.f32 %v4851, %v6003
        %v6388 = vmul.f32 %v4852, %v6004
        %v6389 = vmul.f32 %v4853, %v6005
        %v6390 = vmul.f32 %v4854, %v6006
        %v6391 = vmul.f32 %v4855, %v6007
        %v6392 = vmul.f32 %v4856, %v6008
        %v6393 = vmul.f32 %v4857, %v6009
        %v6394 = vmul.f32 %v4858, %v6010
        %v6395 = vmul.f32 %v4859, %v6011
        %v6396 = vmul.f32 %v4860, %v6012
        %v6397 = vmul.f32 %v4861, %v6013
        %v6398 = vmul.f32 %v4862, %v6014
        %v6399 = vmul.f32 %v4863, %v6015
        %v6400 = vmul.f32 %v4864, %v6016
        %v6401 = vmul.f32 %v4865, %v6017
        %v6402 = vmul.f32 %v4866, %v6018
        %v6403 = vmul.f32 %v4867, %v6019
        %v6404 = vmul.f32 %v4868, %v6020
        %v6405 = vmul.f32 %v4869, %v6021
        %v6406 = vmul.f32 %v4870, %v6022
        %v6407 = vmul.f32 %v4871, %v6023
        %v6408 = vmul.f32 %v4872, %v6024
        %v6409 = vmul.f32 %v4873, %v6025
        %v6410 = vmul.f32 %v4874, %v6026
        %v6411 = vmul.f32 %v4875, %v6027
        %v6412 = vmul.f32 %v4876, %v6028
        %v6413 = vmul.f32 %v4877, %v6029
        %v6414 = vmul.f32 %v4878, %v6030
        %v6415 = vmul.f32 %v4879, %v6031
        %v6416 = vmul.f32 %v4880, %v6032
        %v6417 = vmul.f32 %v4881, %v6033
        %v6418 = vmul.f32 %v4882, %v6034
        %v6419 = vmul.f32 %v4883, %v6035
        %v6420 = vmul.f32 %v4884, %v6036
        %v6421 = vmul.f32 %v4885, %v6037
        %v6422 = vmul.f32 %v4886, %v6038
        %v6423 = vmul.f32 %v4887, %v6039
        %v6424 = vmul.f32 %v4888, %v6040
        %v6425 = vmul.f32 %v4889, %v6041
        %v6426 = vmul.f32 %v4890, %v6042
        %v6427 = vmul.f32 %v4891, %v6043
        %v6428 = vmul.f32 %v4892, %v6044
        %v6429 = vmul.f32 %v4893, %v6045
        %v6430 = vmul.f32 %v4894, %v6046
        %v6431 = vmul.f32 %v4895, %v6047
        %v6432 = vmul.f32 %v4896, %v6048
        %v6433 = vmul.f32 %v4897, %v6049
        %v6434 = vmul.f32 %v4898, %v6050
        %v6435 = vmul.f32 %v4899, %v6051
        %v6436 = vmul.f32 %v4900, %v6052
        %v6437 = vmul.f32 %v4901, %v6053
        %v6438 = vmul.f32 %v4902, %v6054
        %v6439 = vmul.f32 %v4903, %v6055
        %v6440 = vmul.f32 %v4904, %v6056
        %v6441 = vmul.f32 %v4905, %v6057
        %v6442 = vmul.f32 %v4906, %v6058
        %v6443 = vmul.f32 %v4907, %v6059
        %v6444 = vmul.f32 %v4908, %v6060
        %v6445 = vmul.f32 %v4909, %v6061
        %v6446 = vmul.f32 %v4910, %v6062
        %v6447 = vmul.f32 %v4911, %v6063
        %v6448 = vmul.f32 %v4912, %v6064
        %v6449 = vmul.f32 %v4913, %v6065
        %v6450 = vmul.f32 %v4914, %v6066
        %v6451 = vmul.f32 %v4915, %v6067
        %v6452 = vmul.f32 %v4916, %v6068
        %v6453 = vmul.f32 %v4917, %v6069
        %v6454 = vmul.f32 %v4918, %v6070
        %v6455 = vmul.f32 %v4919, %v6071
        %v6456 = vmul.f32 %v4920, %v6072
        %v6457 = vmul.f32 %v4921, %v6073
        %v6458 = vmul.f32 %v4922, %v6074
        %v6459 = vmul.f32 %v4923, %v6075
        %v6460 = vmul.f32 %v4924, %v6076
        %v6461 = vmul.f32 %v4925, %v6077
        %v6462 = vmul.f32 %v4926, %v6078
        %v6463 = vmul.f32 %v4927, %v6079
        %v6464 = vmul.f32 %v4928, %v6080
        %v6465 = vmul.f32 %v4929, %v6081
        %v6466 = vmul.f32 %v4930, %v6082
        %v6467 = vmul.f32 %v4931, %v6083
        %v6468 = vmul.f32 %v4932, %v6084
        %v6469 = vmul.f32 %v4933, %v6085
        %v6470 = vmul.f32 %v4934, %v6086
        %v6471 = vmul.f32 %v4935, %v6087
        %v6472 = vmul.f32 %v4936, %v6088
        %v6473 = vmul.f32 %v4937, %v6089
        %v6474 = vmul.f32 %v4938, %v6090
        %v6475 = vmul.f32 %v4939, %v6091
        %v6476 = vmul.f32 %v4940, %v6092
        %v6477 = vmul.f32 %v4941, %v6093
        %v6478 = vmul.f32 %v4942, %v6094
        %v6479 = vmul.f32 %v4943, %v6095
        %v6480 = vmul.f32 %v4944, %v6096
        %v6481 = vmul.f32 %v4945, %v6097
        %v6482 = vmul.f32 %v4946, %v6098
        %v6483 = vmul.f32 %v4947, %v6099
        %v6484 = vmul.f32 %v4948, %v6100
        %v6485 = vmul.f32 %v4949, %v6101
        %v6486 = vmul.f32 %v4950, %v6102
        %v6487 = vmul.f32 %v4951, %v6103
        %v6488 = vmul.f32 %v4952, %v6104
        %v6489 = vmul.f32 %v4953, %v6105
        %v6490 = vmul.f32 %v4954, %v6106
        %v6491 = vmul.f32 %v4955, %v6107
        %v6492 = vmul.f32 %v4956, %v6108
        %v6493 = vmul.f32 %v4957, %v6109
        %v6494 = vmul.f32 %v4958, %v6110
        %v6495 = vmul.f32 %v4959, %v6111
        %v6496 = vmul.f32 %v4960, %v6112
        %v6497 = vmul.f32 %v4961, %v6113
        %v6498 = vmul.f32 %v4962, %v6114
        %v6499 = vmul.f32 %v4963, %v6115
        %v6500 = vmul.f32 %v4964, %v6116
        %v6501 = vmul.f32 %v4965, %v6117
        %v6502 = vmul.f32 %v4966, %v6118
        %v6503 = vmul.f32 %v4967, %v6119
        %v6504 = vmul.f32 %v4968, %v6120
        %v6505 = vmul.f32 %v4969, %v6121
        %v6506 = vmul.f32 %v4970, %v6122
        %v6507 = vmul.f32 %v4971, %v6123
        %v6508 = vmul.f32 %v4972, %v6124
        %v6509 = vmul.f32 %v4973, %v6125
        %v6510 = vmul.f32 %v4974, %v6126
        %v6511 = vmul.f32 %v4975, %v6127
        %v6512 = vmul.f32 %v4976, %v6128
        %v6513 = vmul.f32 %v4977, %v6129
        %v6514 = vmul.f32 %v4978, %v6130
        %v6515 = vmul.f32 %v4979, %v6131
        %v6516 = vmul.f32 %v4980, %v6132
        %v6517 = vmul.f32 %v4981, %v6133
        %v6518 = vmul.f32 %v4982, %v6134
        %v6519 = vmul.f32 %v4983, %v6135
        %v6520 = vmul.f32 %v4984, %v6136
        %v6521 = vmul.f32 %v4985, %v6137
        %v6522 = vmul.f32 %v4986, %v6138
        %v6523 = vmul.f32 %v4987, %v6139
        %v6524 = vmul.f32 %v4988, %v6140
        %v6525 = vmul.f32 %v4989, %v6141
        %v6526 = vmul.f32 %v4990, %v6142
        %v6527 = vmul.f32 %v4991, %v6143
        %v6528 = vmul.f32 %v4992, %v6144
        %v6529 = vmul.f32 %v4993, %v6145
        %v6530 = vmul.f32 %v4994, %v6146
        %v6531 = vmul.f32 %v4995, %v6147
        %v6532 = vmul.f32 %v4996, %v6148
        %v6533 = vmul.f32 %v4997, %v6149
        %v6534 = vmul.f32 %v4998, %v6150
        %v6535 = vmul.f32 %v4999, %v6151
        %v6536 = vmul.f32 %v5000, %v6152
        %v6537 = vmul.f32 %v5001, %v6153
        %v6538 = vmul.f32 %v5002, %v6154
        %v6539 = vmul.f32 %v5003, %v6155
        %v6540 = vmul.f32 %v5004, %v6156
        %v6541 = vmul.f32 %v5005, %v6157
        %v6542 = vmul.f32 %v5006, %v6158
        %v6543 = vmul.f32 %v5007, %v6159
        %v6544 = vmul.f32 %v5008, %v6160
        %v6545 = vmul.f32 %v5009, %v6161
        %v6546 = vmul.f32 %v5010, %v6162
        %v6547 = vmul.f32 %v5011, %v6163
        %v6548 = vmul.f32 %v5012, %v6164
        %v6549 = vmul.f32 %v5013, %v6165
        %v6550 = vmul.f32 %v5014, %v6166
        %v6551 = vmul.f32 %v5015, %v6167
        %v6552 = vmul.f32 %v5016, %v6168
        %v6553 = vmul.f32 %v5017, %v6169
        %v6554 = vmul.f32 %v5018, %v6170
        %v6555 = vmul.f32 %v5019, %v6171
        %v6556 = vmul.f32 %v5020, %v6172
        %v6557 = vmul.f32 %v5021, %v6173
        %v6558 = vmul.f32 %v5022, %v6174
        %v6559 = vmul.f32 %v5023, %v6175
        %v6560 = vmul.f32 %v5024, %v6176
        %v6561 = vmul.f32 %v5025, %v6177
        %v6562 = vmul.f32 %v5026, %v6178
        %v6563 = vmul.f32 %v5027, %v6179
        %v6564 = vmul.f32 %v5028, %v6180
        %v6565 = vmul.f32 %v5029, %v6181
        %v6566 = vmul.f32 %v5030, %v6182
        %v6567 = vmul.f32 %v5031, %v6183
        %v6568 = vmul.f32 %v5032, %v6184
        %v6569 = vmul.f32 %v5033, %v6185
        %v6570 = vmul.f32 %v5034, %v6186
        %v6571 = vmul.f32 %v5035, %v6187
        %v6572 = vmul.f32 %v5036, %v6188
        %v6573 = vmul.f32 %v5037, %v6189
        %v6574 = vmul.f32 %v5038, %v6190
        %v6575 = vmul.f32 %v5039, %v6191
        %v6576 = vmul.f32 %v5040, %v6192
        %v6577 = vmul.f32 %v5041, %v6193
        %v6578 = vpack.c.bf16 %v6206, %v6194
        %v6579 = vpack.c.bf16 %v6207, %v6195
        %v6580 = vpack.c.bf16 %v6208, %v6196
        %v6581 = vpack.c.bf16 %v6209, %v6197
        %v6582 = vpack.c.bf16 %v6210, %v6198
        %v6583 = vpack.c.bf16 %v6211, %v6199
        %v6584 = vpack.c.bf16 %v6212, %v6200
        %v6585 = vpack.c.bf16 %v6213, %v6201
        %v6586 = vpack.c.bf16 %v6214, %v6202
        %v6587 = vpack.c.bf16 %v6215, %v6203
        %v6588 = vpack.c.bf16 %v6216, %v6204
        %v6589 = vpack.c.bf16 %v6217, %v6205
        %v6590 = vpack.c.bf16 %v6230, %v6218
        %v6591 = vpack.c.bf16 %v6231, %v6219
        %v6592 = vpack.c.bf16 %v6232, %v6220
        %v6593 = vpack.c.bf16 %v6233, %v6221
        %v6594 = vpack.c.bf16 %v6234, %v6222
        %v6595 = vpack.c.bf16 %v6235, %v6223
        %v6596 = vpack.c.bf16 %v6236, %v6224
        %v6597 = vpack.c.bf16 %v6237, %v6225
        %v6598 = vpack.c.bf16 %v6238, %v6226
        %v6599 = vpack.c.bf16 %v6239, %v6227
        %v6600 = vpack.c.bf16 %v6240, %v6228
        %v6601 = vpack.c.bf16 %v6241, %v6229
        %v6602 = vpack.c.bf16 %v6254, %v6242
        %v6603 = vpack.c.bf16 %v6255, %v6243
        %v6604 = vpack.c.bf16 %v6256, %v6244
        %v6605 = vpack.c.bf16 %v6257, %v6245
        %v6606 = vpack.c.bf16 %v6258, %v6246
        %v6607 = vpack.c.bf16 %v6259, %v6247
        %v6608 = vpack.c.bf16 %v6260, %v6248
        %v6609 = vpack.c.bf16 %v6261, %v6249
        %v6610 = vpack.c.bf16 %v6262, %v6250
        %v6611 = vpack.c.bf16 %v6263, %v6251
        %v6612 = vpack.c.bf16 %v6264, %v6252
        %v6613 = vpack.c.bf16 %v6265, %v6253
        %v6614 = vpack.c.bf16 %v6278, %v6266
        %v6615 = vpack.c.bf16 %v6279, %v6267
        %v6616 = vpack.c.bf16 %v6280, %v6268
        %v6617 = vpack.c.bf16 %v6281, %v6269
        %v6618 = vpack.c.bf16 %v6282, %v6270
        %v6619 = vpack.c.bf16 %v6283, %v6271
        %v6620 = vpack.c.bf16 %v6284, %v6272
        %v6621 = vpack.c.bf16 %v6285, %v6273
        %v6622 = vpack.c.bf16 %v6286, %v6274
        %v6623 = vpack.c.bf16 %v6287, %v6275
        %v6624 = vpack.c.bf16 %v6288, %v6276
        %v6625 = vpack.c.bf16 %v6289, %v6277
        %v6626 = vpack.c.bf16 %v6302, %v6290
        %v6627 = vpack.c.bf16 %v6303, %v6291
        %v6628 = vpack.c.bf16 %v6304, %v6292
        %v6629 = vpack.c.bf16 %v6305, %v6293
        %v6630 = vpack.c.bf16 %v6306, %v6294
        %v6631 = vpack.c.bf16 %v6307, %v6295
        %v6632 = vpack.c.bf16 %v6308, %v6296
        %v6633 = vpack.c.bf16 %v6309, %v6297
        %v6634 = vpack.c.bf16 %v6310, %v6298
        %v6635 = vpack.c.bf16 %v6311, %v6299
        %v6636 = vpack.c.bf16 %v6312, %v6300
        %v6637 = vpack.c.bf16 %v6313, %v6301
        %v6638 = vpack.c.bf16 %v6326, %v6314
        %v6639 = vpack.c.bf16 %v6327, %v6315
        %v6640 = vpack.c.bf16 %v6328, %v6316
        %v6641 = vpack.c.bf16 %v6329, %v6317
        %v6642 = vpack.c.bf16 %v6330, %v6318
        %v6643 = vpack.c.bf16 %v6331, %v6319
        %v6644 = vpack.c.bf16 %v6332, %v6320
        %v6645 = vpack.c.bf16 %v6333, %v6321
        %v6646 = vpack.c.bf16 %v6334, %v6322
        %v6647 = vpack.c.bf16 %v6335, %v6323
        %v6648 = vpack.c.bf16 %v6336, %v6324
        %v6649 = vpack.c.bf16 %v6337, %v6325
        %v6650 = vpack.c.bf16 %v6350, %v6338
        %v6651 = vpack.c.bf16 %v6351, %v6339
        %v6652 = vpack.c.bf16 %v6352, %v6340
        %v6653 = vpack.c.bf16 %v6353, %v6341
        %v6654 = vpack.c.bf16 %v6354, %v6342
        %v6655 = vpack.c.bf16 %v6355, %v6343
        %v6656 = vpack.c.bf16 %v6356, %v6344
        %v6657 = vpack.c.bf16 %v6357, %v6345
        %v6658 = vpack.c.bf16 %v6358, %v6346
        %v6659 = vpack.c.bf16 %v6359, %v6347
        %v6660 = vpack.c.bf16 %v6360, %v6348
        %v6661 = vpack.c.bf16 %v6361, %v6349
        %v6662 = vpack.c.bf16 %v6374, %v6362
        %v6663 = vpack.c.bf16 %v6375, %v6363
        %v6664 = vpack.c.bf16 %v6376, %v6364
        %v6665 = vpack.c.bf16 %v6377, %v6365
        %v6666 = vpack.c.bf16 %v6378, %v6366
        %v6667 = vpack.c.bf16 %v6379, %v6367
        %v6668 = vpack.c.bf16 %v6380, %v6368
        %v6669 = vpack.c.bf16 %v6381, %v6369
        %v6670 = vpack.c.bf16 %v6382, %v6370
        %v6671 = vpack.c.bf16 %v6383, %v6371
        %v6672 = vpack.c.bf16 %v6384, %v6372
        %v6673 = vpack.c.bf16 %v6385, %v6373
        %v6674 = vpack.c.bf16 %v6398, %v6386
        %v6675 = vpack.c.bf16 %v6399, %v6387
        %v6676 = vpack.c.bf16 %v6400, %v6388
        %v6677 = vpack.c.bf16 %v6401, %v6389
        %v6678 = vpack.c.bf16 %v6402, %v6390
        %v6679 = vpack.c.bf16 %v6403, %v6391
        %v6680 = vpack.c.bf16 %v6404, %v6392
        %v6681 = vpack.c.bf16 %v6405, %v6393
        %v6682 = vpack.c.bf16 %v6406, %v6394
        %v6683 = vpack.c.bf16 %v6407, %v6395
        %v6684 = vpack.c.bf16 %v6408, %v6396
        %v6685 = vpack.c.bf16 %v6409, %v6397
        %v6686 = vpack.c.bf16 %v6422, %v6410
        %v6687 = vpack.c.bf16 %v6423, %v6411
        %v6688 = vpack.c.bf16 %v6424, %v6412
        %v6689 = vpack.c.bf16 %v6425, %v6413
        %v6690 = vpack.c.bf16 %v6426, %v6414
        %v6691 = vpack.c.bf16 %v6427, %v6415
        %v6692 = vpack.c.bf16 %v6428, %v6416
        %v6693 = vpack.c.bf16 %v6429, %v6417
        %v6694 = vpack.c.bf16 %v6430, %v6418
        %v6695 = vpack.c.bf16 %v6431, %v6419
        %v6696 = vpack.c.bf16 %v6432, %v6420
        %v6697 = vpack.c.bf16 %v6433, %v6421
        %v6698 = vpack.c.bf16 %v6446, %v6434
        %v6699 = vpack.c.bf16 %v6447, %v6435
        %v6700 = vpack.c.bf16 %v6448, %v6436
        %v6701 = vpack.c.bf16 %v6449, %v6437
        %v6702 = vpack.c.bf16 %v6450, %v6438
        %v6703 = vpack.c.bf16 %v6451, %v6439
        %v6704 = vpack.c.bf16 %v6452, %v6440
        %v6705 = vpack.c.bf16 %v6453, %v6441
        %v6706 = vpack.c.bf16 %v6454, %v6442
        %v6707 = vpack.c.bf16 %v6455, %v6443
        %v6708 = vpack.c.bf16 %v6456, %v6444
        %v6709 = vpack.c.bf16 %v6457, %v6445
        %v6710 = vpack.c.bf16 %v6470, %v6458
        %v6711 = vpack.c.bf16 %v6471, %v6459
        %v6712 = vpack.c.bf16 %v6472, %v6460
        %v6713 = vpack.c.bf16 %v6473, %v6461
        %v6714 = vpack.c.bf16 %v6474, %v6462
        %v6715 = vpack.c.bf16 %v6475, %v6463
        %v6716 = vpack.c.bf16 %v6476, %v6464
        %v6717 = vpack.c.bf16 %v6477, %v6465
        %v6718 = vpack.c.bf16 %v6478, %v6466
        %v6719 = vpack.c.bf16 %v6479, %v6467
        %v6720 = vpack.c.bf16 %v6480, %v6468
        %v6721 = vpack.c.bf16 %v6481, %v6469
        %v6722 = vpack.c.bf16 %v6494, %v6482
        %v6723 = vpack.c.bf16 %v6495, %v6483
        %v6724 = vpack.c.bf16 %v6496, %v6484
        %v6725 = vpack.c.bf16 %v6497, %v6485
        %v6726 = vpack.c.bf16 %v6498, %v6486
        %v6727 = vpack.c.bf16 %v6499, %v6487
        %v6728 = vpack.c.bf16 %v6500, %v6488
        %v6729 = vpack.c.bf16 %v6501, %v6489
        %v6730 = vpack.c.bf16 %v6502, %v6490
        %v6731 = vpack.c.bf16 %v6503, %v6491
        %v6732 = vpack.c.bf16 %v6504, %v6492
        %v6733 = vpack.c.bf16 %v6505, %v6493
        %v6734 = vpack.c.bf16 %v6518, %v6506
        %v6735 = vpack.c.bf16 %v6519, %v6507
        %v6736 = vpack.c.bf16 %v6520, %v6508
        %v6737 = vpack.c.bf16 %v6521, %v6509
        %v6738 = vpack.c.bf16 %v6522, %v6510
        %v6739 = vpack.c.bf16 %v6523, %v6511
        %v6740 = vpack.c.bf16 %v6524, %v6512
        %v6741 = vpack.c.bf16 %v6525, %v6513
        %v6742 = vpack.c.bf16 %v6526, %v6514
        %v6743 = vpack.c.bf16 %v6527, %v6515
        %v6744 = vpack.c.bf16 %v6528, %v6516
        %v6745 = vpack.c.bf16 %v6529, %v6517
        %v6746 = vpack.c.bf16 %v6542, %v6530
        %v6747 = vpack.c.bf16 %v6543, %v6531
        %v6748 = vpack.c.bf16 %v6544, %v6532
        %v6749 = vpack.c.bf16 %v6545, %v6533
        %v6750 = vpack.c.bf16 %v6546, %v6534
        %v6751 = vpack.c.bf16 %v6547, %v6535
        %v6752 = vpack.c.bf16 %v6548, %v6536
        %v6753 = vpack.c.bf16 %v6549, %v6537
        %v6754 = vpack.c.bf16 %v6550, %v6538
        %v6755 = vpack.c.bf16 %v6551, %v6539
        %v6756 = vpack.c.bf16 %v6552, %v6540
        %v6757 = vpack.c.bf16 %v6553, %v6541
        %v6758 = vpack.c.bf16 %v6566, %v6554
        %v6759 = vpack.c.bf16 %v6567, %v6555
        %v6760 = vpack.c.bf16 %v6568, %v6556
        %v6761 = vpack.c.bf16 %v6569, %v6557
        %v6762 = vpack.c.bf16 %v6570, %v6558
        %v6763 = vpack.c.bf16 %v6571, %v6559
        %v6764 = vpack.c.bf16 %v6572, %v6560
        %v6765 = vpack.c.bf16 %v6573, %v6561
        %v6766 = vpack.c.bf16 %v6574, %v6562
        %v6767 = vpack.c.bf16 %v6575, %v6563
        %v6768 = vpack.c.bf16 %v6576, %v6564
        %v6769 = vpack.c.bf16 %v6577, %v6565
        %v6770 = vld [vmem:[%s3] sm:$0xff]
        %v6771 = vld [vmem:[%s3 + $0x8] sm:$0xf]
        %v6772 = vld [vmem:[%s3 + $0xc] sm:$0xff]
        %v6773 = vld [vmem:[%s3 + $0x14] sm:$0xf]
        %v6774 = vld [vmem:[%s3 + $0x18] sm:$0xff]
        %v6775 = vld [vmem:[%s3 + $0x20] sm:$0xf]
        %v6776 = vld [vmem:[%s3 + $0x24] sm:$0xff]
        %v6777 = vld [vmem:[%s3 + $0x2c] sm:$0xf]
        %v6778 = vld [vmem:[%s3 + $0x30] sm:$0xff]
        %v6779 = vld [vmem:[%s3 + $0x38] sm:$0xf]
        %v6780 = vld [vmem:[%s3 + $0x3c] sm:$0xff]
        %v6781 = vld [vmem:[%s3 + $0x44] sm:$0xf]
        %v6782 = vld [vmem:[%s3 + $0x48] sm:$0xff]
        %v6783 = vld [vmem:[%s3 + $0x50] sm:$0xf]
        %v6784 = vld [vmem:[%s3 + $0x54] sm:$0xff]
        %v6785 = vld [vmem:[%s3 + $0x5c] sm:$0xf]
        %v6786 = vld [vmem:[%s3 + $0x60] sm:$0xff]
        %v6787 = vld [vmem:[%s3 + $0x68] sm:$0xf]
        %v6788 = vld [vmem:[%s3 + $0x6c] sm:$0xff]
        %v6789 = vld [vmem:[%s3 + $0x74] sm:$0xf]
        %v6790 = vld [vmem:[%s3 + $0x78] sm:$0xff]
        %v6791 = vld [vmem:[%s3 + $0x80] sm:$0xf]
        %v6792 = vld [vmem:[%s3 + $0x84] sm:$0xff]
        %v6793 = vld [vmem:[%s3 + $0x8c] sm:$0xf]
        %v6794 = vld [vmem:[%s3 + $0x90] sm:$0xff]
        %v6795 = vld [vmem:[%s3 + $0x98] sm:$0xf]
        %v6796 = vld [vmem:[%s3 + $0x9c] sm:$0xff]
        %v6797 = vld [vmem:[%s3 + $0xa4] sm:$0xf]
        %v6798 = vld [vmem:[%s3 + $0xa8] sm:$0xff]
        %v6799 = vld [vmem:[%s3 + $0xb0] sm:$0xf]
        %v6800 = vld [vmem:[%s3 + $0xb4] sm:$0xff]
        %v6801 = vld [vmem:[%s3 + $0xbc] sm:$0xf]
        %v6802 = vld [vmem:[%s3 + $0xc0] sm:$0xff]
        %v6803 = vld [vmem:[%s3 + $0xc8] sm:$0xf]
        %v6804 = vld [vmem:[%s3 + $0xcc] sm:$0xff]
        %v6805 = vld [vmem:[%s3 + $0xd4] sm:$0xf]
        %v6806 = vld [vmem:[%s3 + $0xd8] sm:$0xff]
        %v6807 = vld [vmem:[%s3 + $0xe0] sm:$0xf]
        %v6808 = vld [vmem:[%s3 + $0xe4] sm:$0xff]
        %v6809 = vld [vmem:[%s3 + $0xec] sm:$0xf]
        %v6810 = vld [vmem:[%s3 + $0xf0] sm:$0xff]
        %v6811 = vld [vmem:[%s3 + $0xf8] sm:$0xf]
        %v6812 = vld [vmem:[%s3 + $0xfc] sm:$0xff]
        %v6813 = vld [vmem:[%s3 + $0x104] sm:$0xf]
        %v6814 = vld [vmem:[%s3 + $0x108] sm:$0xff]
        %v6815 = vld [vmem:[%s3 + $0x110] sm:$0xf]
        %v6816 = vld [vmem:[%s3 + $0x114] sm:$0xff]
        %v6817 = vld [vmem:[%s3 + $0x11c] sm:$0xf]
        %v6818 = vld [vmem:[%s3 + $0x120] sm:$0xff]
        %v6819 = vld [vmem:[%s3 + $0x128] sm:$0xf]
        %v6820 = vld [vmem:[%s3 + $0x12c] sm:$0xff]
        %v6821 = vld [vmem:[%s3 + $0x134] sm:$0xf]
        %v6822 = vld [vmem:[%s3 + $0x138] sm:$0xff]
        %v6823 = vld [vmem:[%s3 + $0x140] sm:$0xf]
        %v6824 = vld [vmem:[%s3 + $0x144] sm:$0xff]
        %v6825 = vld [vmem:[%s3 + $0x14c] sm:$0xf]
        %v6826 = vld [vmem:[%s3 + $0x150] sm:$0xff]
        %v6827 = vld [vmem:[%s3 + $0x158] sm:$0xf]
        %v6828 = vld [vmem:[%s3 + $0x15c] sm:$0xff]
        %v6829 = vld [vmem:[%s3 + $0x164] sm:$0xf]
        %v6830 = vld [vmem:[%s3 + $0x168] sm:$0xff]
        %v6831 = vld [vmem:[%s3 + $0x170] sm:$0xf]
        %v6832 = vld [vmem:[%s3 + $0x174] sm:$0xff]
        %v6833 = vld [vmem:[%s3 + $0x17c] sm:$0xf]
        %v6834 = vld [vmem:[%s3 + $0x180] sm:$0xff]
        %v6835 = vld [vmem:[%s3 + $0x188] sm:$0xf]
        %v6836 = vld [vmem:[%s3 + $0x18c] sm:$0xff]
        %v6837 = vld [vmem:[%s3 + $0x194] sm:$0xf]
        %v6838 = vld [vmem:[%s3 + $0x198] sm:$0xff]
        %v6839 = vld [vmem:[%s3 + $0x1a0] sm:$0xf]
        %v6840 = vld [vmem:[%s3 + $0x1a4] sm:$0xff]
        %v6841 = vld [vmem:[%s3 + $0x1ac] sm:$0xf]
        %v6842 = vld [vmem:[%s3 + $0x1b0] sm:$0xff]
        %v6843 = vld [vmem:[%s3 + $0x1b8] sm:$0xf]
        %v6844 = vld [vmem:[%s3 + $0x1bc] sm:$0xff]
        %v6845 = vld [vmem:[%s3 + $0x1c4] sm:$0xf]
        %v6846 = vld [vmem:[%s3 + $0x1c8] sm:$0xff]
        %v6847 = vld [vmem:[%s3 + $0x1d0] sm:$0xf]
        %v6848 = vld [vmem:[%s3 + $0x1d4] sm:$0xff]
        %v6849 = vld [vmem:[%s3 + $0x1dc] sm:$0xf]
        %v6850 = vld [vmem:[%s3 + $0x1e0] sm:$0xff]
        %v6851 = vld [vmem:[%s3 + $0x1e8] sm:$0xf]
        %v6852 = vld [vmem:[%s3 + $0x1ec] sm:$0xff]
        %v6853 = vld [vmem:[%s3 + $0x1f4] sm:$0xf]
        %v6854 = vld [vmem:[%s3 + $0x1f8] sm:$0xff]
        %v6855 = vld [vmem:[%s3 + $0x200] sm:$0xf]
        %v6856 = vld [vmem:[%s3 + $0x204] sm:$0xff]
        %v6857 = vld [vmem:[%s3 + $0x20c] sm:$0xf]
        %v6858 = vld [vmem:[%s3 + $0x210] sm:$0xff]
        %v6859 = vld [vmem:[%s3 + $0x218] sm:$0xf]
        %v6860 = vld [vmem:[%s3 + $0x21c] sm:$0xff]
        %v6861 = vld [vmem:[%s3 + $0x224] sm:$0xf]
        %v6862 = vld [vmem:[%s3 + $0x228] sm:$0xff]
        %v6863 = vld [vmem:[%s3 + $0x230] sm:$0xf]
        %v6864 = vld [vmem:[%s3 + $0x234] sm:$0xff]
        %v6865 = vld [vmem:[%s3 + $0x23c] sm:$0xf]
        %v6866 = vld [vmem:[%s3 + $0x240] sm:$0xff]
        %v6867 = vld [vmem:[%s3 + $0x248] sm:$0xf]
        %v6868 = vld [vmem:[%s3 + $0x24c] sm:$0xff]
        %v6869 = vld [vmem:[%s3 + $0x254] sm:$0xf]
        %v6870 = vld [vmem:[%s3 + $0x258] sm:$0xff]
        %v6871 = vld [vmem:[%s3 + $0x260] sm:$0xf]
        %v6872 = vld [vmem:[%s3 + $0x264] sm:$0xff]
        %v6873 = vld [vmem:[%s3 + $0x26c] sm:$0xf]
        %v6874 = vld [vmem:[%s3 + $0x270] sm:$0xff]
        %v6875 = vld [vmem:[%s3 + $0x278] sm:$0xf]
        %v6876 = vld [vmem:[%s3 + $0x27c] sm:$0xff]
        %v6877 = vld [vmem:[%s3 + $0x284] sm:$0xf]
        %v6878 = vld [vmem:[%s3 + $0x288] sm:$0xff]
        %v6879 = vld [vmem:[%s3 + $0x290] sm:$0xf]
        %v6880 = vld [vmem:[%s3 + $0x294] sm:$0xff]
        %v6881 = vld [vmem:[%s3 + $0x29c] sm:$0xf]
        %v6882 = vld [vmem:[%s3 + $0x2a0] sm:$0xff]
        %v6883 = vld [vmem:[%s3 + $0x2a8] sm:$0xf]
        %v6884 = vld [vmem:[%s3 + $0x2ac] sm:$0xff]
        %v6885 = vld [vmem:[%s3 + $0x2b4] sm:$0xf]
        %v6886 = vld [vmem:[%s3 + $0x2b8] sm:$0xff]
        %v6887 = vld [vmem:[%s3 + $0x2c0] sm:$0xf]
        %v6888 = vld [vmem:[%s3 + $0x2c4] sm:$0xff]
        %v6889 = vld [vmem:[%s3 + $0x2cc] sm:$0xf]
        %v6890 = vld [vmem:[%s3 + $0x2d0] sm:$0xff]
        %v6891 = vld [vmem:[%s3 + $0x2d8] sm:$0xf]
        %v6892 = vld [vmem:[%s3 + $0x2dc] sm:$0xff]
        %v6893 = vld [vmem:[%s3 + $0x2e4] sm:$0xf]
        %v6894 = vld [vmem:[%s3 + $0x2e8] sm:$0xff]
        %v6895 = vld [vmem:[%s3 + $0x2f0] sm:$0xf]
        %v6896 = vld [vmem:[%s3 + $0x2f4] sm:$0xff]
        %v6897 = vld [vmem:[%s3 + $0x2fc] sm:$0xf]
        %v6898 = vld [vmem:[%s3 + $0x300] sm:$0xff]
        %v6899 = vld [vmem:[%s3 + $0x308] sm:$0xf]
        %v6900 = vld [vmem:[%s3 + $0x30c] sm:$0xff]
        %v6901 = vld [vmem:[%s3 + $0x314] sm:$0xf]
        %v6902 = vld [vmem:[%s3 + $0x318] sm:$0xff]
        %v6903 = vld [vmem:[%s3 + $0x320] sm:$0xf]
        %v6904 = vld [vmem:[%s3 + $0x324] sm:$0xff]
        %v6905 = vld [vmem:[%s3 + $0x32c] sm:$0xf]
        %v6906 = vld [vmem:[%s3 + $0x330] sm:$0xff]
        %v6907 = vld [vmem:[%s3 + $0x338] sm:$0xf]
        %v6908 = vld [vmem:[%s3 + $0x33c] sm:$0xff]
        %v6909 = vld [vmem:[%s3 + $0x344] sm:$0xf]
        %v6910 = vld [vmem:[%s3 + $0x348] sm:$0xff]
        %v6911 = vld [vmem:[%s3 + $0x350] sm:$0xf]
        %v6912 = vld [vmem:[%s3 + $0x354] sm:$0xff]
        %v6913 = vld [vmem:[%s3 + $0x35c] sm:$0xf]
        %v6914 = vld [vmem:[%s3 + $0x360] sm:$0xff]
        %v6915 = vld [vmem:[%s3 + $0x368] sm:$0xf]
        %v6916 = vld [vmem:[%s3 + $0x36c] sm:$0xff]
        %v6917 = vld [vmem:[%s3 + $0x374] sm:$0xf]
        %v6918 = vld [vmem:[%s3 + $0x378] sm:$0xff]
        %v6919 = vld [vmem:[%s3 + $0x380] sm:$0xf]
        %v6920 = vld [vmem:[%s3 + $0x384] sm:$0xff]
        %v6921 = vld [vmem:[%s3 + $0x38c] sm:$0xf]
        %v6922 = vld [vmem:[%s3 + $0x390] sm:$0xff]
        %v6923 = vld [vmem:[%s3 + $0x398] sm:$0xf]
        %v6924 = vld [vmem:[%s3 + $0x39c] sm:$0xff]
        %v6925 = vld [vmem:[%s3 + $0x3a4] sm:$0xf]
        %v6926 = vld [vmem:[%s3 + $0x3a8] sm:$0xff]
        %v6927 = vld [vmem:[%s3 + $0x3b0] sm:$0xf]
        %v6928 = vld [vmem:[%s3 + $0x3b4] sm:$0xff]
        %v6929 = vld [vmem:[%s3 + $0x3bc] sm:$0xf]
        %v6930 = vld [vmem:[%s3 + $0x3c0] sm:$0xff]
        %v6931 = vld [vmem:[%s3 + $0x3c8] sm:$0xf]
        %v6932 = vld [vmem:[%s3 + $0x3cc] sm:$0xff]
        %v6933 = vld [vmem:[%s3 + $0x3d4] sm:$0xf]
        %v6934 = vld [vmem:[%s3 + $0x3d8] sm:$0xff]
        %v6935 = vld [vmem:[%s3 + $0x3e0] sm:$0xf]
        %v6936 = vld [vmem:[%s3 + $0x3e4] sm:$0xff]
        %v6937 = vld [vmem:[%s3 + $0x3ec] sm:$0xf]
        %v6938 = vld [vmem:[%s3 + $0x3f0] sm:$0xff]
        %v6939 = vld [vmem:[%s3 + $0x3f8] sm:$0xf]
        %v6940 = vld [vmem:[%s3 + $0x3fc] sm:$0xff]
        %v6941 = vld [vmem:[%s3 + $0x404] sm:$0xf]
        %v6942 = vld [vmem:[%s3 + $0x408] sm:$0xff]
        %v6943 = vld [vmem:[%s3 + $0x410] sm:$0xf]
        %v6944 = vld [vmem:[%s3 + $0x414] sm:$0xff]
        %v6945 = vld [vmem:[%s3 + $0x41c] sm:$0xf]
        %v6946 = vld [vmem:[%s3 + $0x420] sm:$0xff]
        %v6947 = vld [vmem:[%s3 + $0x428] sm:$0xf]
        %v6948 = vld [vmem:[%s3 + $0x42c] sm:$0xff]
        %v6949 = vld [vmem:[%s3 + $0x434] sm:$0xf]
        %v6950 = vld [vmem:[%s3 + $0x438] sm:$0xff]
        %v6951 = vld [vmem:[%s3 + $0x440] sm:$0xf]
        %v6952 = vld [vmem:[%s3 + $0x444] sm:$0xff]
        %v6953 = vld [vmem:[%s3 + $0x44c] sm:$0xf]
        %v6954 = vld [vmem:[%s3 + $0x450] sm:$0xff]
        %v6955 = vld [vmem:[%s3 + $0x458] sm:$0xf]
        %v6956 = vld [vmem:[%s3 + $0x45c] sm:$0xff]
        %v6957 = vld [vmem:[%s3 + $0x464] sm:$0xf]
        %v6958 = vld [vmem:[%s3 + $0x468] sm:$0xff]
        %v6959 = vld [vmem:[%s3 + $0x470] sm:$0xf]
        %v6960 = vld [vmem:[%s3 + $0x474] sm:$0xff]
        %v6961 = vld [vmem:[%s3 + $0x47c] sm:$0xf]
        %v6962 = vld [vmem:[%s3 + $0x480] sm:$0xff]
        %v6963 = vld [vmem:[%s3 + $0x488] sm:$0xf]
        %v6964 = vld [vmem:[%s3 + $0x48c] sm:$0xff]
        %v6965 = vld [vmem:[%s3 + $0x494] sm:$0xf]
        %v6966 = vld [vmem:[%s3 + $0x498] sm:$0xff]
        %v6967 = vld [vmem:[%s3 + $0x4a0] sm:$0xf]
        %v6968 = vld [vmem:[%s3 + $0x4a4] sm:$0xff]
        %v6969 = vld [vmem:[%s3 + $0x4ac] sm:$0xf]
        %v6970 = vld [vmem:[%s3 + $0x4b0] sm:$0xff]
        %v6971 = vld [vmem:[%s3 + $0x4b8] sm:$0xf]
        %v6972 = vld [vmem:[%s3 + $0x4bc] sm:$0xff]
        %v6973 = vld [vmem:[%s3 + $0x4c4] sm:$0xf]
        %v6974 = vld [vmem:[%s3 + $0x4c8] sm:$0xff]
        %v6975 = vld [vmem:[%s3 + $0x4d0] sm:$0xf]
        %v6976 = vld [vmem:[%s3 + $0x4d4] sm:$0xff]
        %v6977 = vld [vmem:[%s3 + $0x4dc] sm:$0xf]
        %v6978 = vld [vmem:[%s3 + $0x4e0] sm:$0xff]
        %v6979 = vld [vmem:[%s3 + $0x4e8] sm:$0xf]
        %v6980 = vld [vmem:[%s3 + $0x4ec] sm:$0xff]
        %v6981 = vld [vmem:[%s3 + $0x4f4] sm:$0xf]
        %v6982 = vld [vmem:[%s3 + $0x4f8] sm:$0xff]
        %v6983 = vld [vmem:[%s3 + $0x500] sm:$0xf]
        %v6984 = vld [vmem:[%s3 + $0x504] sm:$0xff]
        %v6985 = vld [vmem:[%s3 + $0x50c] sm:$0xf]
        %v6986 = vld [vmem:[%s3 + $0x510] sm:$0xff]
        %v6987 = vld [vmem:[%s3 + $0x518] sm:$0xf]
        %v6988 = vld [vmem:[%s3 + $0x51c] sm:$0xff]
        %v6989 = vld [vmem:[%s3 + $0x524] sm:$0xf]
        %v6990 = vld [vmem:[%s3 + $0x528] sm:$0xff]
        %v6991 = vld [vmem:[%s3 + $0x530] sm:$0xf]
        %v6992 = vld [vmem:[%s3 + $0x534] sm:$0xff]
        %v6993 = vld [vmem:[%s3 + $0x53c] sm:$0xf]
        %v6994 = vld [vmem:[%s3 + $0x540] sm:$0xff]
        %v6995 = vld [vmem:[%s3 + $0x548] sm:$0xf]
        %v6996 = vld [vmem:[%s3 + $0x54c] sm:$0xff]
        %v6997 = vld [vmem:[%s3 + $0x554] sm:$0xf]
        %v6998 = vld [vmem:[%s3 + $0x558] sm:$0xff]
        %v6999 = vld [vmem:[%s3 + $0x560] sm:$0xf]
        %v7000 = vld [vmem:[%s3 + $0x564] sm:$0xff]
        %v7001 = vld [vmem:[%s3 + $0x56c] sm:$0xf]
        %v7002 = vld [vmem:[%s3 + $0x570] sm:$0xff]
        %v7003 = vld [vmem:[%s3 + $0x578] sm:$0xf]
        %v7004 = vld [vmem:[%s3 + $0x57c] sm:$0xff]
        %v7005 = vld [vmem:[%s3 + $0x584] sm:$0xf]
        %v7006 = vld [vmem:[%s3 + $0x588] sm:$0xff]
        %v7007 = vld [vmem:[%s3 + $0x590] sm:$0xf]
        %v7008 = vld [vmem:[%s3 + $0x594] sm:$0xff]
        %v7009 = vld [vmem:[%s3 + $0x59c] sm:$0xf]
        %v7010 = vld [vmem:[%s3 + $0x5a0] sm:$0xff]
        %v7011 = vld [vmem:[%s3 + $0x5a8] sm:$0xf]
        %v7012 = vld [vmem:[%s3 + $0x5ac] sm:$0xff]
        %v7013 = vld [vmem:[%s3 + $0x5b4] sm:$0xf]
        %v7014 = vld [vmem:[%s3 + $0x5b8] sm:$0xff]
        %v7015 = vld [vmem:[%s3 + $0x5c0] sm:$0xf]
        %v7016 = vld [vmem:[%s3 + $0x5c4] sm:$0xff]
        %v7017 = vld [vmem:[%s3 + $0x5cc] sm:$0xf]
        %v7018 = vld [vmem:[%s3 + $0x5d0] sm:$0xff]
        %v7019 = vld [vmem:[%s3 + $0x5d8] sm:$0xf]
        %v7020 = vld [vmem:[%s3 + $0x5dc] sm:$0xff]
        %v7021 = vld [vmem:[%s3 + $0x5e4] sm:$0xf]
        %v7022 = vld [vmem:[%s3 + $0x5e8] sm:$0xff]
        %v7023 = vld [vmem:[%s3 + $0x5f0] sm:$0xf]
        %v7024 = vld [vmem:[%s3 + $0x5f4] sm:$0xff]
        %v7025 = vld [vmem:[%s3 + $0x5fc] sm:$0xf]
        %v7026 = vld [vmem:[%s3 + $0x600] sm:$0xff]
        %v7027 = vld [vmem:[%s3 + $0x608] sm:$0xf]
        %v7028 = vld [vmem:[%s3 + $0x60c] sm:$0xff]
        %v7029 = vld [vmem:[%s3 + $0x614] sm:$0xf]
        %v7030 = vld [vmem:[%s3 + $0x618] sm:$0xff]
        %v7031 = vld [vmem:[%s3 + $0x620] sm:$0xf]
        %v7032 = vld [vmem:[%s3 + $0x624] sm:$0xff]
        %v7033 = vld [vmem:[%s3 + $0x62c] sm:$0xf]
        %v7034 = vld [vmem:[%s3 + $0x630] sm:$0xff]
        %v7035 = vld [vmem:[%s3 + $0x638] sm:$0xf]
        %v7036 = vld [vmem:[%s3 + $0x63c] sm:$0xff]
        %v7037 = vld [vmem:[%s3 + $0x644] sm:$0xf]
        %v7038 = vld [vmem:[%s3 + $0x648] sm:$0xff]
        %v7039 = vld [vmem:[%s3 + $0x650] sm:$0xf]
        %v7040 = vld [vmem:[%s3 + $0x654] sm:$0xff]
        %v7041 = vld [vmem:[%s3 + $0x65c] sm:$0xf]
        %v7042 = vld [vmem:[%s3 + $0x660] sm:$0xff]
        %v7043 = vld [vmem:[%s3 + $0x668] sm:$0xf]
        %v7044 = vld [vmem:[%s3 + $0x66c] sm:$0xff]
        %v7045 = vld [vmem:[%s3 + $0x674] sm:$0xf]
        %v7046 = vld [vmem:[%s3 + $0x678] sm:$0xff]
        %v7047 = vld [vmem:[%s3 + $0x680] sm:$0xf]
        %v7048 = vld [vmem:[%s3 + $0x684] sm:$0xff]
        %v7049 = vld [vmem:[%s3 + $0x68c] sm:$0xf]
        %v7050 = vld [vmem:[%s3 + $0x690] sm:$0xff]
        %v7051 = vld [vmem:[%s3 + $0x698] sm:$0xf]
        %v7052 = vld [vmem:[%s3 + $0x69c] sm:$0xff]
        %v7053 = vld [vmem:[%s3 + $0x6a4] sm:$0xf]
        %v7054 = vld [vmem:[%s3 + $0x6a8] sm:$0xff]
        %v7055 = vld [vmem:[%s3 + $0x6b0] sm:$0xf]
        %v7056 = vld [vmem:[%s3 + $0x6b4] sm:$0xff]
        %v7057 = vld [vmem:[%s3 + $0x6bc] sm:$0xf]
        %v7058 = vld [vmem:[%s3 + $0x6c0] sm:$0xff]
        %v7059 = vld [vmem:[%s3 + $0x6c8] sm:$0xf]
        %v7060 = vld [vmem:[%s3 + $0x6cc] sm:$0xff]
        %v7061 = vld [vmem:[%s3 + $0x6d4] sm:$0xf]
        %v7062 = vld [vmem:[%s3 + $0x6d8] sm:$0xff]
        %v7063 = vld [vmem:[%s3 + $0x6e0] sm:$0xf]
        %v7064 = vld [vmem:[%s3 + $0x6e4] sm:$0xff]
        %v7065 = vld [vmem:[%s3 + $0x6ec] sm:$0xf]
        %v7066 = vld [vmem:[%s3 + $0x6f0] sm:$0xff]
        %v7067 = vld [vmem:[%s3 + $0x6f8] sm:$0xf]
        %v7068 = vld [vmem:[%s3 + $0x6fc] sm:$0xff]
        %v7069 = vld [vmem:[%s3 + $0x704] sm:$0xf]
        %v7070 = vld [vmem:[%s3 + $0x708] sm:$0xff]
        %v7071 = vld [vmem:[%s3 + $0x710] sm:$0xf]
        %v7072 = vld [vmem:[%s3 + $0x714] sm:$0xff]
        %v7073 = vld [vmem:[%s3 + $0x71c] sm:$0xf]
        %v7074 = vld [vmem:[%s3 + $0x720] sm:$0xff]
        %v7075 = vld [vmem:[%s3 + $0x728] sm:$0xf]
        %v7076 = vld [vmem:[%s3 + $0x72c] sm:$0xff]
        %v7077 = vld [vmem:[%s3 + $0x734] sm:$0xf]
        %v7078 = vld [vmem:[%s3 + $0x738] sm:$0xff]
        %v7079 = vld [vmem:[%s3 + $0x740] sm:$0xf]
        %v7080 = vld [vmem:[%s3 + $0x744] sm:$0xff]
        %v7081 = vld [vmem:[%s3 + $0x74c] sm:$0xf]
        %v7082 = vld [vmem:[%s3 + $0x750] sm:$0xff]
        %v7083 = vld [vmem:[%s3 + $0x758] sm:$0xf]
        %v7084 = vld [vmem:[%s3 + $0x75c] sm:$0xff]
        %v7085 = vld [vmem:[%s3 + $0x764] sm:$0xf]
        %v7086 = vld [vmem:[%s3 + $0x768] sm:$0xff]
        %v7087 = vld [vmem:[%s3 + $0x770] sm:$0xf]
        %v7088 = vld [vmem:[%s3 + $0x774] sm:$0xff]
        %v7089 = vld [vmem:[%s3 + $0x77c] sm:$0xf]
        %v7090 = vld [vmem:[%s3 + $0x780] sm:$0xff]
        %v7091 = vld [vmem:[%s3 + $0x788] sm:$0xf]
        %v7092 = vld [vmem:[%s3 + $0x78c] sm:$0xff]
        %v7093 = vld [vmem:[%s3 + $0x794] sm:$0xf]
        %v7094 = vld [vmem:[%s3 + $0x798] sm:$0xff]
        %v7095 = vld [vmem:[%s3 + $0x7a0] sm:$0xf]
        %v7096 = vld [vmem:[%s3 + $0x7a4] sm:$0xff]
        %v7097 = vld [vmem:[%s3 + $0x7ac] sm:$0xf]
        %v7098 = vld [vmem:[%s3 + $0x7b0] sm:$0xff]
        %v7099 = vld [vmem:[%s3 + $0x7b8] sm:$0xf]
        %v7100 = vld [vmem:[%s3 + $0x7bc] sm:$0xff]
        %v7101 = vld [vmem:[%s3 + $0x7c4] sm:$0xf]
        %v7102 = vld [vmem:[%s3 + $0x7c8] sm:$0xff]
        %v7103 = vld [vmem:[%s3 + $0x7d0] sm:$0xf]
        %v7104 = vld [vmem:[%s3 + $0x7d4] sm:$0xff]
        %v7105 = vld [vmem:[%s3 + $0x7dc] sm:$0xf]
        %v7106 = vld [vmem:[%s3 + $0x7e0] sm:$0xff]
        %v7107 = vld [vmem:[%s3 + $0x7e8] sm:$0xf]
        %v7108 = vld [vmem:[%s3 + $0x7ec] sm:$0xff]
        %v7109 = vld [vmem:[%s3 + $0x7f4] sm:$0xf]
        %v7110 = vld [vmem:[%s3 + $0x7f8] sm:$0xff]
        %v7111 = vld [vmem:[%s3 + $0x800] sm:$0xf]
        %v7112 = vld [vmem:[%s3 + $0x804] sm:$0xff]
        %v7113 = vld [vmem:[%s3 + $0x80c] sm:$0xf]
        %v7114 = vld [vmem:[%s3 + $0x810] sm:$0xff]
        %v7115 = vld [vmem:[%s3 + $0x818] sm:$0xf]
        %v7116 = vld [vmem:[%s3 + $0x81c] sm:$0xff]
        %v7117 = vld [vmem:[%s3 + $0x824] sm:$0xf]
        %v7118 = vld [vmem:[%s3 + $0x828] sm:$0xff]
        %v7119 = vld [vmem:[%s3 + $0x830] sm:$0xf]
        %v7120 = vld [vmem:[%s3 + $0x834] sm:$0xff]
        %v7121 = vld [vmem:[%s3 + $0x83c] sm:$0xf]
        %v7122 = vld [vmem:[%s3 + $0x840] sm:$0xff]
        %v7123 = vld [vmem:[%s3 + $0x848] sm:$0xf]
        %v7124 = vld [vmem:[%s3 + $0x84c] sm:$0xff]
        %v7125 = vld [vmem:[%s3 + $0x854] sm:$0xf]
        %v7126 = vld [vmem:[%s3 + $0x858] sm:$0xff]
        %v7127 = vld [vmem:[%s3 + $0x860] sm:$0xf]
        %v7128 = vld [vmem:[%s3 + $0x864] sm:$0xff]
        %v7129 = vld [vmem:[%s3 + $0x86c] sm:$0xf]
        %v7130 = vld [vmem:[%s3 + $0x870] sm:$0xff]
        %v7131 = vld [vmem:[%s3 + $0x878] sm:$0xf]
        %v7132 = vld [vmem:[%s3 + $0x87c] sm:$0xff]
        %v7133 = vld [vmem:[%s3 + $0x884] sm:$0xf]
        %v7134 = vld [vmem:[%s3 + $0x888] sm:$0xff]
        %v7135 = vld [vmem:[%s3 + $0x890] sm:$0xf]
        %v7136 = vld [vmem:[%s3 + $0x894] sm:$0xff]
        %v7137 = vld [vmem:[%s3 + $0x89c] sm:$0xf]
        %v7138 = vld [vmem:[%s3 + $0x8a0] sm:$0xff]
        %v7139 = vld [vmem:[%s3 + $0x8a8] sm:$0xf]
        %v7140 = vld [vmem:[%s3 + $0x8ac] sm:$0xff]
        %v7141 = vld [vmem:[%s3 + $0x8b4] sm:$0xf]
        %v7142 = vld [vmem:[%s3 + $0x8b8] sm:$0xff]
        %v7143 = vld [vmem:[%s3 + $0x8c0] sm:$0xf]
        %v7144 = vld [vmem:[%s3 + $0x8c4] sm:$0xff]
        %v7145 = vld [vmem:[%s3 + $0x8cc] sm:$0xf]
        %v7146 = vld [vmem:[%s3 + $0x8d0] sm:$0xff]
        %v7147 = vld [vmem:[%s3 + $0x8d8] sm:$0xf]
        %v7148 = vld [vmem:[%s3 + $0x8dc] sm:$0xff]
        %v7149 = vld [vmem:[%s3 + $0x8e4] sm:$0xf]
        %v7150 = vld [vmem:[%s3 + $0x8e8] sm:$0xff]
        %v7151 = vld [vmem:[%s3 + $0x8f0] sm:$0xf]
        %v7152 = vld [vmem:[%s3 + $0x8f4] sm:$0xff]
        %v7153 = vld [vmem:[%s3 + $0x8fc] sm:$0xf]
        %v7154 = vld [vmem:[%s4] sm:$0x7]
        %v7156 = vlaneseq
        %v7157 = vshrl.u32 %v7156, 7
        %v7158 = vsub.s32 0, %v7157
        %v7159 = vrot.slane %v7154, %v7158
        %v7160 = vlaneseq
        %v7161 = vshrl.u32 %v7160, 7
        %v7162 = vsub.s32 1, %v7161
        %v7163 = vrot.slane %v7154, %v7162
        %v7164 = vlaneseq
        %v7165 = vshrl.u32 %v7164, 7
        %v7166 = vsub.s32 2, %v7165
        %v7167 = vrot.slane %v7154, %v7166
        %v7555 = vunpack.c.l.b16 %v6770
        %v7556 = vunpack.c.h.b16 %v6770
        %v7557 = vunpack.c.l.b16 %v6771
        %v7558 = vunpack.c.l.b16 %v6772
        %v7559 = vunpack.c.h.b16 %v6772
        %v7560 = vunpack.c.l.b16 %v6773
        %v7561 = vunpack.c.l.b16 %v6774
        %v7562 = vunpack.c.h.b16 %v6774
        %v7563 = vunpack.c.l.b16 %v6775
        %v7564 = vunpack.c.l.b16 %v6776
        %v7565 = vunpack.c.h.b16 %v6776
        %v7566 = vunpack.c.l.b16 %v6777
        %v7567 = vunpack.c.l.b16 %v6778
        %v7568 = vunpack.c.h.b16 %v6778
        %v7569 = vunpack.c.l.b16 %v6779
        %v7570 = vunpack.c.l.b16 %v6780
        %v7571 = vunpack.c.h.b16 %v6780
        %v7572 = vunpack.c.l.b16 %v6781
        %v7573 = vunpack.c.l.b16 %v6782
        %v7574 = vunpack.c.h.b16 %v6782
        %v7575 = vunpack.c.l.b16 %v6783
        %v7576 = vunpack.c.l.b16 %v6784
        %v7577 = vunpack.c.h.b16 %v6784
        %v7578 = vunpack.c.l.b16 %v6785
        %v7579 = vunpack.c.l.b16 %v6786
        %v7580 = vunpack.c.h.b16 %v6786
        %v7581 = vunpack.c.l.b16 %v6787
        %v7582 = vunpack.c.l.b16 %v6788
        %v7583 = vunpack.c.h.b16 %v6788
        %v7584 = vunpack.c.l.b16 %v6789
        %v7585 = vunpack.c.l.b16 %v6790
        %v7586 = vunpack.c.h.b16 %v6790
        %v7587 = vunpack.c.l.b16 %v6791
        %v7588 = vunpack.c.l.b16 %v6792
        %v7589 = vunpack.c.h.b16 %v6792
        %v7590 = vunpack.c.l.b16 %v6793
        %v7591 = vunpack.c.l.b16 %v6794
        %v7592 = vunpack.c.h.b16 %v6794
        %v7593 = vunpack.c.l.b16 %v6795
        %v7594 = vunpack.c.l.b16 %v6796
        %v7595 = vunpack.c.h.b16 %v6796
        %v7596 = vunpack.c.l.b16 %v6797
        %v7597 = vunpack.c.l.b16 %v6798
        %v7598 = vunpack.c.h.b16 %v6798
        %v7599 = vunpack.c.l.b16 %v6799
        %v7600 = vunpack.c.l.b16 %v6800
        %v7601 = vunpack.c.h.b16 %v6800
        %v7602 = vunpack.c.l.b16 %v6801
        %v7603 = vunpack.c.l.b16 %v6802
        %v7604 = vunpack.c.h.b16 %v6802
        %v7605 = vunpack.c.l.b16 %v6803
        %v7606 = vunpack.c.l.b16 %v6804
        %v7607 = vunpack.c.h.b16 %v6804
        %v7608 = vunpack.c.l.b16 %v6805
        %v7609 = vunpack.c.l.b16 %v6806
        %v7610 = vunpack.c.h.b16 %v6806
        %v7611 = vunpack.c.l.b16 %v6807
        %v7612 = vunpack.c.l.b16 %v6808
        %v7613 = vunpack.c.h.b16 %v6808
        %v7614 = vunpack.c.l.b16 %v6809
        %v7615 = vunpack.c.l.b16 %v6810
        %v7616 = vunpack.c.h.b16 %v6810
        %v7617 = vunpack.c.l.b16 %v6811
        %v7618 = vunpack.c.l.b16 %v6812
        %v7619 = vunpack.c.h.b16 %v6812
        %v7620 = vunpack.c.l.b16 %v6813
        %v7621 = vunpack.c.l.b16 %v6814
        %v7622 = vunpack.c.h.b16 %v6814
        %v7623 = vunpack.c.l.b16 %v6815
        %v7624 = vunpack.c.l.b16 %v6816
        %v7625 = vunpack.c.h.b16 %v6816
        %v7626 = vunpack.c.l.b16 %v6817
        %v7627 = vunpack.c.l.b16 %v6818
        %v7628 = vunpack.c.h.b16 %v6818
        %v7629 = vunpack.c.l.b16 %v6819
        %v7630 = vunpack.c.l.b16 %v6820
        %v7631 = vunpack.c.h.b16 %v6820
        %v7632 = vunpack.c.l.b16 %v6821
        %v7633 = vunpack.c.l.b16 %v6822
        %v7634 = vunpack.c.h.b16 %v6822
        %v7635 = vunpack.c.l.b16 %v6823
        %v7636 = vunpack.c.l.b16 %v6824
        %v7637 = vunpack.c.h.b16 %v6824
        %v7638 = vunpack.c.l.b16 %v6825
        %v7639 = vunpack.c.l.b16 %v6826
        %v7640 = vunpack.c.h.b16 %v6826
        %v7641 = vunpack.c.l.b16 %v6827
        %v7642 = vunpack.c.l.b16 %v6828
        %v7643 = vunpack.c.h.b16 %v6828
        %v7644 = vunpack.c.l.b16 %v6829
        %v7645 = vunpack.c.l.b16 %v6830
        %v7646 = vunpack.c.h.b16 %v6830
        %v7647 = vunpack.c.l.b16 %v6831
        %v7648 = vunpack.c.l.b16 %v6832
        %v7649 = vunpack.c.h.b16 %v6832
        %v7650 = vunpack.c.l.b16 %v6833
        %v7651 = vunpack.c.l.b16 %v6834
        %v7652 = vunpack.c.h.b16 %v6834
        %v7653 = vunpack.c.l.b16 %v6835
        %v7654 = vunpack.c.l.b16 %v6836
        %v7655 = vunpack.c.h.b16 %v6836
        %v7656 = vunpack.c.l.b16 %v6837
        %v7657 = vunpack.c.l.b16 %v6838
        %v7658 = vunpack.c.h.b16 %v6838
        %v7659 = vunpack.c.l.b16 %v6839
        %v7660 = vunpack.c.l.b16 %v6840
        %v7661 = vunpack.c.h.b16 %v6840
        %v7662 = vunpack.c.l.b16 %v6841
        %v7663 = vunpack.c.l.b16 %v6842
        %v7664 = vunpack.c.h.b16 %v6842
        %v7665 = vunpack.c.l.b16 %v6843
        %v7666 = vunpack.c.l.b16 %v6844
        %v7667 = vunpack.c.h.b16 %v6844
        %v7668 = vunpack.c.l.b16 %v6845
        %v7669 = vunpack.c.l.b16 %v6846
        %v7670 = vunpack.c.h.b16 %v6846
        %v7671 = vunpack.c.l.b16 %v6847
        %v7672 = vunpack.c.l.b16 %v6848
        %v7673 = vunpack.c.h.b16 %v6848
        %v7674 = vunpack.c.l.b16 %v6849
        %v7675 = vunpack.c.l.b16 %v6850
        %v7676 = vunpack.c.h.b16 %v6850
        %v7677 = vunpack.c.l.b16 %v6851
        %v7678 = vunpack.c.l.b16 %v6852
        %v7679 = vunpack.c.h.b16 %v6852
        %v7680 = vunpack.c.l.b16 %v6853
        %v7681 = vunpack.c.l.b16 %v6854
        %v7682 = vunpack.c.h.b16 %v6854
        %v7683 = vunpack.c.l.b16 %v6855
        %v7684 = vunpack.c.l.b16 %v6856
        %v7685 = vunpack.c.h.b16 %v6856
        %v7686 = vunpack.c.l.b16 %v6857
        %v7687 = vunpack.c.l.b16 %v6858
        %v7688 = vunpack.c.h.b16 %v6858
        %v7689 = vunpack.c.l.b16 %v6859
        %v7690 = vunpack.c.l.b16 %v6860
        %v7691 = vunpack.c.h.b16 %v6860
        %v7692 = vunpack.c.l.b16 %v6861
        %v7693 = vunpack.c.l.b16 %v6862
        %v7694 = vunpack.c.h.b16 %v6862
        %v7695 = vunpack.c.l.b16 %v6863
        %v7696 = vunpack.c.l.b16 %v6864
        %v7697 = vunpack.c.h.b16 %v6864
        %v7698 = vunpack.c.l.b16 %v6865
        %v7699 = vunpack.c.l.b16 %v6866
        %v7700 = vunpack.c.h.b16 %v6866
        %v7701 = vunpack.c.l.b16 %v6867
        %v7702 = vunpack.c.l.b16 %v6868
        %v7703 = vunpack.c.h.b16 %v6868
        %v7704 = vunpack.c.l.b16 %v6869
        %v7705 = vunpack.c.l.b16 %v6870
        %v7706 = vunpack.c.h.b16 %v6870
        %v7707 = vunpack.c.l.b16 %v6871
        %v7708 = vunpack.c.l.b16 %v6872
        %v7709 = vunpack.c.h.b16 %v6872
        %v7710 = vunpack.c.l.b16 %v6873
        %v7711 = vunpack.c.l.b16 %v6874
        %v7712 = vunpack.c.h.b16 %v6874
        %v7713 = vunpack.c.l.b16 %v6875
        %v7714 = vunpack.c.l.b16 %v6876
        %v7715 = vunpack.c.h.b16 %v6876
        %v7716 = vunpack.c.l.b16 %v6877
        %v7717 = vunpack.c.l.b16 %v6878
        %v7718 = vunpack.c.h.b16 %v6878
        %v7719 = vunpack.c.l.b16 %v6879
        %v7720 = vunpack.c.l.b16 %v6880
        %v7721 = vunpack.c.h.b16 %v6880
        %v7722 = vunpack.c.l.b16 %v6881
        %v7723 = vunpack.c.l.b16 %v6882
        %v7724 = vunpack.c.h.b16 %v6882
        %v7725 = vunpack.c.l.b16 %v6883
        %v7726 = vunpack.c.l.b16 %v6884
        %v7727 = vunpack.c.h.b16 %v6884
        %v7728 = vunpack.c.l.b16 %v6885
        %v7729 = vunpack.c.l.b16 %v6886
        %v7730 = vunpack.c.h.b16 %v6886
        %v7731 = vunpack.c.l.b16 %v6887
        %v7732 = vunpack.c.l.b16 %v6888
        %v7733 = vunpack.c.h.b16 %v6888
        %v7734 = vunpack.c.l.b16 %v6889
        %v7735 = vunpack.c.l.b16 %v6890
        %v7736 = vunpack.c.h.b16 %v6890
        %v7737 = vunpack.c.l.b16 %v6891
        %v7738 = vunpack.c.l.b16 %v6892
        %v7739 = vunpack.c.h.b16 %v6892
        %v7740 = vunpack.c.l.b16 %v6893
        %v7741 = vunpack.c.l.b16 %v6894
        %v7742 = vunpack.c.h.b16 %v6894
        %v7743 = vunpack.c.l.b16 %v6895
        %v7744 = vunpack.c.l.b16 %v6896
        %v7745 = vunpack.c.h.b16 %v6896
        %v7746 = vunpack.c.l.b16 %v6897
        %v7747 = vunpack.c.l.b16 %v6898
        %v7748 = vunpack.c.h.b16 %v6898
        %v7749 = vunpack.c.l.b16 %v6899
        %v7750 = vunpack.c.l.b16 %v6900
        %v7751 = vunpack.c.h.b16 %v6900
        %v7752 = vunpack.c.l.b16 %v6901
        %v7753 = vunpack.c.l.b16 %v6902
        %v7754 = vunpack.c.h.b16 %v6902
        %v7755 = vunpack.c.l.b16 %v6903
        %v7756 = vunpack.c.l.b16 %v6904
        %v7757 = vunpack.c.h.b16 %v6904
        %v7758 = vunpack.c.l.b16 %v6905
        %v7759 = vunpack.c.l.b16 %v6906
        %v7760 = vunpack.c.h.b16 %v6906
        %v7761 = vunpack.c.l.b16 %v6907
        %v7762 = vunpack.c.l.b16 %v6908
        %v7763 = vunpack.c.h.b16 %v6908
        %v7764 = vunpack.c.l.b16 %v6909
        %v7765 = vunpack.c.l.b16 %v6910
        %v7766 = vunpack.c.h.b16 %v6910
        %v7767 = vunpack.c.l.b16 %v6911
        %v7768 = vunpack.c.l.b16 %v6912
        %v7769 = vunpack.c.h.b16 %v6912
        %v7770 = vunpack.c.l.b16 %v6913
        %v7771 = vunpack.c.l.b16 %v6914
        %v7772 = vunpack.c.h.b16 %v6914
        %v7773 = vunpack.c.l.b16 %v6915
        %v7774 = vunpack.c.l.b16 %v6916
        %v7775 = vunpack.c.h.b16 %v6916
        %v7776 = vunpack.c.l.b16 %v6917
        %v7777 = vunpack.c.l.b16 %v6918
        %v7778 = vunpack.c.h.b16 %v6918
        %v7779 = vunpack.c.l.b16 %v6919
        %v7780 = vunpack.c.l.b16 %v6920
        %v7781 = vunpack.c.h.b16 %v6920
        %v7782 = vunpack.c.l.b16 %v6921
        %v7783 = vunpack.c.l.b16 %v6922
        %v7784 = vunpack.c.h.b16 %v6922
        %v7785 = vunpack.c.l.b16 %v6923
        %v7786 = vunpack.c.l.b16 %v6924
        %v7787 = vunpack.c.h.b16 %v6924
        %v7788 = vunpack.c.l.b16 %v6925
        %v7789 = vunpack.c.l.b16 %v6926
        %v7790 = vunpack.c.h.b16 %v6926
        %v7791 = vunpack.c.l.b16 %v6927
        %v7792 = vunpack.c.l.b16 %v6928
        %v7793 = vunpack.c.h.b16 %v6928
        %v7794 = vunpack.c.l.b16 %v6929
        %v7795 = vunpack.c.l.b16 %v6930
        %v7796 = vunpack.c.h.b16 %v6930
        %v7797 = vunpack.c.l.b16 %v6931
        %v7798 = vunpack.c.l.b16 %v6932
        %v7799 = vunpack.c.h.b16 %v6932
        %v7800 = vunpack.c.l.b16 %v6933
        %v7801 = vunpack.c.l.b16 %v6934
        %v7802 = vunpack.c.h.b16 %v6934
        %v7803 = vunpack.c.l.b16 %v6935
        %v7804 = vunpack.c.l.b16 %v6936
        %v7805 = vunpack.c.h.b16 %v6936
        %v7806 = vunpack.c.l.b16 %v6937
        %v7807 = vunpack.c.l.b16 %v6938
        %v7808 = vunpack.c.h.b16 %v6938
        %v7809 = vunpack.c.l.b16 %v6939
        %v7810 = vunpack.c.l.b16 %v6940
        %v7811 = vunpack.c.h.b16 %v6940
        %v7812 = vunpack.c.l.b16 %v6941
        %v7813 = vunpack.c.l.b16 %v6942
        %v7814 = vunpack.c.h.b16 %v6942
        %v7815 = vunpack.c.l.b16 %v6943
        %v7816 = vunpack.c.l.b16 %v6944
        %v7817 = vunpack.c.h.b16 %v6944
        %v7818 = vunpack.c.l.b16 %v6945
        %v7819 = vunpack.c.l.b16 %v6946
        %v7820 = vunpack.c.h.b16 %v6946
        %v7821 = vunpack.c.l.b16 %v6947
        %v7822 = vunpack.c.l.b16 %v6948
        %v7823 = vunpack.c.h.b16 %v6948
        %v7824 = vunpack.c.l.b16 %v6949
        %v7825 = vunpack.c.l.b16 %v6950
        %v7826 = vunpack.c.h.b16 %v6950
        %v7827 = vunpack.c.l.b16 %v6951
        %v7828 = vunpack.c.l.b16 %v6952
        %v7829 = vunpack.c.h.b16 %v6952
        %v7830 = vunpack.c.l.b16 %v6953
        %v7831 = vunpack.c.l.b16 %v6954
        %v7832 = vunpack.c.h.b16 %v6954
        %v7833 = vunpack.c.l.b16 %v6955
        %v7834 = vunpack.c.l.b16 %v6956
        %v7835 = vunpack.c.h.b16 %v6956
        %v7836 = vunpack.c.l.b16 %v6957
        %v7837 = vunpack.c.l.b16 %v6958
        %v7838 = vunpack.c.h.b16 %v6958
        %v7839 = vunpack.c.l.b16 %v6959
        %v7840 = vunpack.c.l.b16 %v6960
        %v7841 = vunpack.c.h.b16 %v6960
        %v7842 = vunpack.c.l.b16 %v6961
        %v7843 = vunpack.c.l.b16 %v6962
        %v7844 = vunpack.c.h.b16 %v6962
        %v7845 = vunpack.c.l.b16 %v6963
        %v7846 = vunpack.c.l.b16 %v6964
        %v7847 = vunpack.c.h.b16 %v6964
        %v7848 = vunpack.c.l.b16 %v6965
        %v7849 = vunpack.c.l.b16 %v6966
        %v7850 = vunpack.c.h.b16 %v6966
        %v7851 = vunpack.c.l.b16 %v6967
        %v7852 = vunpack.c.l.b16 %v6968
        %v7853 = vunpack.c.h.b16 %v6968
        %v7854 = vunpack.c.l.b16 %v6969
        %v7855 = vunpack.c.l.b16 %v6970
        %v7856 = vunpack.c.h.b16 %v6970
        %v7857 = vunpack.c.l.b16 %v6971
        %v7858 = vunpack.c.l.b16 %v6972
        %v7859 = vunpack.c.h.b16 %v6972
        %v7860 = vunpack.c.l.b16 %v6973
        %v7861 = vunpack.c.l.b16 %v6974
        %v7862 = vunpack.c.h.b16 %v6974
        %v7863 = vunpack.c.l.b16 %v6975
        %v7864 = vunpack.c.l.b16 %v6976
        %v7865 = vunpack.c.h.b16 %v6976
        %v7866 = vunpack.c.l.b16 %v6977
        %v7867 = vunpack.c.l.b16 %v6978
        %v7868 = vunpack.c.h.b16 %v6978
        %v7869 = vunpack.c.l.b16 %v6979
        %v7870 = vunpack.c.l.b16 %v6980
        %v7871 = vunpack.c.h.b16 %v6980
        %v7872 = vunpack.c.l.b16 %v6981
        %v7873 = vunpack.c.l.b16 %v6982
        %v7874 = vunpack.c.h.b16 %v6982
        %v7875 = vunpack.c.l.b16 %v6983
        %v7876 = vunpack.c.l.b16 %v6984
        %v7877 = vunpack.c.h.b16 %v6984
        %v7878 = vunpack.c.l.b16 %v6985
        %v7879 = vunpack.c.l.b16 %v6986
        %v7880 = vunpack.c.h.b16 %v6986
        %v7881 = vunpack.c.l.b16 %v6987
        %v7882 = vunpack.c.l.b16 %v6988
        %v7883 = vunpack.c.h.b16 %v6988
        %v7884 = vunpack.c.l.b16 %v6989
        %v7885 = vunpack.c.l.b16 %v6990
        %v7886 = vunpack.c.h.b16 %v6990
        %v7887 = vunpack.c.l.b16 %v6991
        %v7888 = vunpack.c.l.b16 %v6992
        %v7889 = vunpack.c.h.b16 %v6992
        %v7890 = vunpack.c.l.b16 %v6993
        %v7891 = vunpack.c.l.b16 %v6994
        %v7892 = vunpack.c.h.b16 %v6994
        %v7893 = vunpack.c.l.b16 %v6995
        %v7894 = vunpack.c.l.b16 %v6996
        %v7895 = vunpack.c.h.b16 %v6996
        %v7896 = vunpack.c.l.b16 %v6997
        %v7897 = vunpack.c.l.b16 %v6998
        %v7898 = vunpack.c.h.b16 %v6998
        %v7899 = vunpack.c.l.b16 %v6999
        %v7900 = vunpack.c.l.b16 %v7000
        %v7901 = vunpack.c.h.b16 %v7000
        %v7902 = vunpack.c.l.b16 %v7001
        %v7903 = vunpack.c.l.b16 %v7002
        %v7904 = vunpack.c.h.b16 %v7002
        %v7905 = vunpack.c.l.b16 %v7003
        %v7906 = vunpack.c.l.b16 %v7004
        %v7907 = vunpack.c.h.b16 %v7004
        %v7908 = vunpack.c.l.b16 %v7005
        %v7909 = vunpack.c.l.b16 %v7006
        %v7910 = vunpack.c.h.b16 %v7006
        %v7911 = vunpack.c.l.b16 %v7007
        %v7912 = vunpack.c.l.b16 %v7008
        %v7913 = vunpack.c.h.b16 %v7008
        %v7914 = vunpack.c.l.b16 %v7009
        %v7915 = vunpack.c.l.b16 %v7010
        %v7916 = vunpack.c.h.b16 %v7010
        %v7917 = vunpack.c.l.b16 %v7011
        %v7918 = vunpack.c.l.b16 %v7012
        %v7919 = vunpack.c.h.b16 %v7012
        %v7920 = vunpack.c.l.b16 %v7013
        %v7921 = vunpack.c.l.b16 %v7014
        %v7922 = vunpack.c.h.b16 %v7014
        %v7923 = vunpack.c.l.b16 %v7015
        %v7924 = vunpack.c.l.b16 %v7016
        %v7925 = vunpack.c.h.b16 %v7016
        %v7926 = vunpack.c.l.b16 %v7017
        %v7927 = vunpack.c.l.b16 %v7018
        %v7928 = vunpack.c.h.b16 %v7018
        %v7929 = vunpack.c.l.b16 %v7019
        %v7930 = vunpack.c.l.b16 %v7020
        %v7931 = vunpack.c.h.b16 %v7020
        %v7932 = vunpack.c.l.b16 %v7021
        %v7933 = vunpack.c.l.b16 %v7022
        %v7934 = vunpack.c.h.b16 %v7022
        %v7935 = vunpack.c.l.b16 %v7023
        %v7936 = vunpack.c.l.b16 %v7024
        %v7937 = vunpack.c.h.b16 %v7024
        %v7938 = vunpack.c.l.b16 %v7025
        %v7939 = vunpack.c.l.b16 %v7026
        %v7940 = vunpack.c.h.b16 %v7026
        %v7941 = vunpack.c.l.b16 %v7027
        %v7942 = vunpack.c.l.b16 %v7028
        %v7943 = vunpack.c.h.b16 %v7028
        %v7944 = vunpack.c.l.b16 %v7029
        %v7945 = vunpack.c.l.b16 %v7030
        %v7946 = vunpack.c.h.b16 %v7030
        %v7947 = vunpack.c.l.b16 %v7031
        %v7948 = vunpack.c.l.b16 %v7032
        %v7949 = vunpack.c.h.b16 %v7032
        %v7950 = vunpack.c.l.b16 %v7033
        %v7951 = vunpack.c.l.b16 %v7034
        %v7952 = vunpack.c.h.b16 %v7034
        %v7953 = vunpack.c.l.b16 %v7035
        %v7954 = vunpack.c.l.b16 %v7036
        %v7955 = vunpack.c.h.b16 %v7036
        %v7956 = vunpack.c.l.b16 %v7037
        %v7957 = vunpack.c.l.b16 %v7038
        %v7958 = vunpack.c.h.b16 %v7038
        %v7959 = vunpack.c.l.b16 %v7039
        %v7960 = vunpack.c.l.b16 %v7040
        %v7961 = vunpack.c.h.b16 %v7040
        %v7962 = vunpack.c.l.b16 %v7041
        %v7963 = vunpack.c.l.b16 %v7042
        %v7964 = vunpack.c.h.b16 %v7042
        %v7965 = vunpack.c.l.b16 %v7043
        %v7966 = vunpack.c.l.b16 %v7044
        %v7967 = vunpack.c.h.b16 %v7044
        %v7968 = vunpack.c.l.b16 %v7045
        %v7969 = vunpack.c.l.b16 %v7046
        %v7970 = vunpack.c.h.b16 %v7046
        %v7971 = vunpack.c.l.b16 %v7047
        %v7972 = vunpack.c.l.b16 %v7048
        %v7973 = vunpack.c.h.b16 %v7048
        %v7974 = vunpack.c.l.b16 %v7049
        %v7975 = vunpack.c.l.b16 %v7050
        %v7976 = vunpack.c.h.b16 %v7050
        %v7977 = vunpack.c.l.b16 %v7051
        %v7978 = vunpack.c.l.b16 %v7052
        %v7979 = vunpack.c.h.b16 %v7052
        %v7980 = vunpack.c.l.b16 %v7053
        %v7981 = vunpack.c.l.b16 %v7054
        %v7982 = vunpack.c.h.b16 %v7054
        %v7983 = vunpack.c.l.b16 %v7055
        %v7984 = vunpack.c.l.b16 %v7056
        %v7985 = vunpack.c.h.b16 %v7056
        %v7986 = vunpack.c.l.b16 %v7057
        %v7987 = vunpack.c.l.b16 %v7058
        %v7988 = vunpack.c.h.b16 %v7058
        %v7989 = vunpack.c.l.b16 %v7059
        %v7990 = vunpack.c.l.b16 %v7060
        %v7991 = vunpack.c.h.b16 %v7060
        %v7992 = vunpack.c.l.b16 %v7061
        %v7993 = vunpack.c.l.b16 %v7062
        %v7994 = vunpack.c.h.b16 %v7062
        %v7995 = vunpack.c.l.b16 %v7063
        %v7996 = vunpack.c.l.b16 %v7064
        %v7997 = vunpack.c.h.b16 %v7064
        %v7998 = vunpack.c.l.b16 %v7065
        %v7999 = vunpack.c.l.b16 %v7066
        %v8000 = vunpack.c.h.b16 %v7066
        %v8001 = vunpack.c.l.b16 %v7067
        %v8002 = vunpack.c.l.b16 %v7068
        %v8003 = vunpack.c.h.b16 %v7068
        %v8004 = vunpack.c.l.b16 %v7069
        %v8005 = vunpack.c.l.b16 %v7070
        %v8006 = vunpack.c.h.b16 %v7070
        %v8007 = vunpack.c.l.b16 %v7071
        %v8008 = vunpack.c.l.b16 %v7072
        %v8009 = vunpack.c.h.b16 %v7072
        %v8010 = vunpack.c.l.b16 %v7073
        %v8011 = vunpack.c.l.b16 %v7074
        %v8012 = vunpack.c.h.b16 %v7074
        %v8013 = vunpack.c.l.b16 %v7075
        %v8014 = vunpack.c.l.b16 %v7076
        %v8015 = vunpack.c.h.b16 %v7076
        %v8016 = vunpack.c.l.b16 %v7077
        %v8017 = vunpack.c.l.b16 %v7078
        %v8018 = vunpack.c.h.b16 %v7078
        %v8019 = vunpack.c.l.b16 %v7079
        %v8020 = vunpack.c.l.b16 %v7080
        %v8021 = vunpack.c.h.b16 %v7080
        %v8022 = vunpack.c.l.b16 %v7081
        %v8023 = vunpack.c.l.b16 %v7082
        %v8024 = vunpack.c.h.b16 %v7082
        %v8025 = vunpack.c.l.b16 %v7083
        %v8026 = vunpack.c.l.b16 %v7084
        %v8027 = vunpack.c.h.b16 %v7084
        %v8028 = vunpack.c.l.b16 %v7085
        %v8029 = vunpack.c.l.b16 %v7086
        %v8030 = vunpack.c.h.b16 %v7086
        %v8031 = vunpack.c.l.b16 %v7087
        %v8032 = vunpack.c.l.b16 %v7088
        %v8033 = vunpack.c.h.b16 %v7088
        %v8034 = vunpack.c.l.b16 %v7089
        %v8035 = vunpack.c.l.b16 %v7090
        %v8036 = vunpack.c.h.b16 %v7090
        %v8037 = vunpack.c.l.b16 %v7091
        %v8038 = vunpack.c.l.b16 %v7092
        %v8039 = vunpack.c.h.b16 %v7092
        %v8040 = vunpack.c.l.b16 %v7093
        %v8041 = vunpack.c.l.b16 %v7094
        %v8042 = vunpack.c.h.b16 %v7094
        %v8043 = vunpack.c.l.b16 %v7095
        %v8044 = vunpack.c.l.b16 %v7096
        %v8045 = vunpack.c.h.b16 %v7096
        %v8046 = vunpack.c.l.b16 %v7097
        %v8047 = vunpack.c.l.b16 %v7098
        %v8048 = vunpack.c.h.b16 %v7098
        %v8049 = vunpack.c.l.b16 %v7099
        %v8050 = vunpack.c.l.b16 %v7100
        %v8051 = vunpack.c.h.b16 %v7100
        %v8052 = vunpack.c.l.b16 %v7101
        %v8053 = vunpack.c.l.b16 %v7102
        %v8054 = vunpack.c.h.b16 %v7102
        %v8055 = vunpack.c.l.b16 %v7103
        %v8056 = vunpack.c.l.b16 %v7104
        %v8057 = vunpack.c.h.b16 %v7104
        %v8058 = vunpack.c.l.b16 %v7105
        %v8059 = vunpack.c.l.b16 %v7106
        %v8060 = vunpack.c.h.b16 %v7106
        %v8061 = vunpack.c.l.b16 %v7107
        %v8062 = vunpack.c.l.b16 %v7108
        %v8063 = vunpack.c.h.b16 %v7108
        %v8064 = vunpack.c.l.b16 %v7109
        %v8065 = vunpack.c.l.b16 %v7110
        %v8066 = vunpack.c.h.b16 %v7110
        %v8067 = vunpack.c.l.b16 %v7111
        %v8068 = vunpack.c.l.b16 %v7112
        %v8069 = vunpack.c.h.b16 %v7112
        %v8070 = vunpack.c.l.b16 %v7113
        %v8071 = vunpack.c.l.b16 %v7114
        %v8072 = vunpack.c.h.b16 %v7114
        %v8073 = vunpack.c.l.b16 %v7115
        %v8074 = vunpack.c.l.b16 %v7116
        %v8075 = vunpack.c.h.b16 %v7116
        %v8076 = vunpack.c.l.b16 %v7117
        %v8077 = vunpack.c.l.b16 %v7118
        %v8078 = vunpack.c.h.b16 %v7118
        %v8079 = vunpack.c.l.b16 %v7119
        %v8080 = vunpack.c.l.b16 %v7120
        %v8081 = vunpack.c.h.b16 %v7120
        %v8082 = vunpack.c.l.b16 %v7121
        %v8083 = vunpack.c.l.b16 %v7122
        %v8084 = vunpack.c.h.b16 %v7122
        %v8085 = vunpack.c.l.b16 %v7123
        %v8086 = vunpack.c.l.b16 %v7124
        %v8087 = vunpack.c.h.b16 %v7124
        %v8088 = vunpack.c.l.b16 %v7125
        %v8089 = vunpack.c.l.b16 %v7126
        %v8090 = vunpack.c.h.b16 %v7126
        %v8091 = vunpack.c.l.b16 %v7127
        %v8092 = vunpack.c.l.b16 %v7128
        %v8093 = vunpack.c.h.b16 %v7128
        %v8094 = vunpack.c.l.b16 %v7129
        %v8095 = vunpack.c.l.b16 %v7130
        %v8096 = vunpack.c.h.b16 %v7130
        %v8097 = vunpack.c.l.b16 %v7131
        %v8098 = vunpack.c.l.b16 %v7132
        %v8099 = vunpack.c.h.b16 %v7132
        %v8100 = vunpack.c.l.b16 %v7133
        %v8101 = vunpack.c.l.b16 %v7134
        %v8102 = vunpack.c.h.b16 %v7134
        %v8103 = vunpack.c.l.b16 %v7135
        %v8104 = vunpack.c.l.b16 %v7136
        %v8105 = vunpack.c.h.b16 %v7136
        %v8106 = vunpack.c.l.b16 %v7137
        %v8107 = vunpack.c.l.b16 %v7138
        %v8108 = vunpack.c.h.b16 %v7138
        %v8109 = vunpack.c.l.b16 %v7139
        %v8110 = vunpack.c.l.b16 %v7140
        %v8111 = vunpack.c.h.b16 %v7140
        %v8112 = vunpack.c.l.b16 %v7141
        %v8113 = vunpack.c.l.b16 %v7142
        %v8114 = vunpack.c.h.b16 %v7142
        %v8115 = vunpack.c.l.b16 %v7143
        %v8116 = vunpack.c.l.b16 %v7144
        %v8117 = vunpack.c.h.b16 %v7144
        %v8118 = vunpack.c.l.b16 %v7145
        %v8119 = vunpack.c.l.b16 %v7146
        %v8120 = vunpack.c.h.b16 %v7146
        %v8121 = vunpack.c.l.b16 %v7147
        %v8122 = vunpack.c.l.b16 %v7148
        %v8123 = vunpack.c.h.b16 %v7148
        %v8124 = vunpack.c.l.b16 %v7149
        %v8125 = vunpack.c.l.b16 %v7150
        %v8126 = vunpack.c.h.b16 %v7150
        %v8127 = vunpack.c.l.b16 %v7151
        %v8128 = vunpack.c.l.b16 %v7152
        %v8129 = vunpack.c.h.b16 %v7152
        %v8130 = vunpack.c.l.b16 %v7153
        %v8131 = vpack.c.b16 %v7558, %v7555
        %v8132 = vpack.c.b16 %v7559, %v7556
        %v8133 = vpack.c.b16 %v7560, %v7557
        %v8134 = vpack.c.b16 %v7564, %v7561
        %v8135 = vpack.c.b16 %v7565, %v7562
        %v8136 = vpack.c.b16 %v7566, %v7563
        %v8137 = vpack.c.b16 %v7570, %v7567
        %v8138 = vpack.c.b16 %v7571, %v7568
        %v8139 = vpack.c.b16 %v7572, %v7569
        %v8140 = vpack.c.b16 %v7576, %v7573
        %v8141 = vpack.c.b16 %v7577, %v7574
        %v8142 = vpack.c.b16 %v7578, %v7575
        %v8143 = vpack.c.b16 %v7582, %v7579
        %v8144 = vpack.c.b16 %v7583, %v7580
        %v8145 = vpack.c.b16 %v7584, %v7581
        %v8146 = vpack.c.b16 %v7588, %v7585
        %v8147 = vpack.c.b16 %v7589, %v7586
        %v8148 = vpack.c.b16 %v7590, %v7587
        %v8149 = vpack.c.b16 %v7594, %v7591
        %v8150 = vpack.c.b16 %v7595, %v7592
        %v8151 = vpack.c.b16 %v7596, %v7593
        %v8152 = vpack.c.b16 %v7600, %v7597
        %v8153 = vpack.c.b16 %v7601, %v7598
        %v8154 = vpack.c.b16 %v7602, %v7599
        %v8155 = vpack.c.b16 %v7606, %v7603
        %v8156 = vpack.c.b16 %v7607, %v7604
        %v8157 = vpack.c.b16 %v7608, %v7605
        %v8158 = vpack.c.b16 %v7612, %v7609
        %v8159 = vpack.c.b16 %v7613, %v7610
        %v8160 = vpack.c.b16 %v7614, %v7611
        %v8161 = vpack.c.b16 %v7618, %v7615
        %v8162 = vpack.c.b16 %v7619, %v7616
        %v8163 = vpack.c.b16 %v7620, %v7617
        %v8164 = vpack.c.b16 %v7624, %v7621
        %v8165 = vpack.c.b16 %v7625, %v7622
        %v8166 = vpack.c.b16 %v7626, %v7623
        %v8167 = vpack.c.b16 %v7630, %v7627
        %v8168 = vpack.c.b16 %v7631, %v7628
        %v8169 = vpack.c.b16 %v7632, %v7629
        %v8170 = vpack.c.b16 %v7636, %v7633
        %v8171 = vpack.c.b16 %v7637, %v7634
        %v8172 = vpack.c.b16 %v7638, %v7635
        %v8173 = vpack.c.b16 %v7642, %v7639
        %v8174 = vpack.c.b16 %v7643, %v7640
        %v8175 = vpack.c.b16 %v7644, %v7641
        %v8176 = vpack.c.b16 %v7648, %v7645
        %v8177 = vpack.c.b16 %v7649, %v7646
        %v8178 = vpack.c.b16 %v7650, %v7647
        %v8179 = vpack.c.b16 %v7654, %v7651
        %v8180 = vpack.c.b16 %v7655, %v7652
        %v8181 = vpack.c.b16 %v7656, %v7653
        %v8182 = vpack.c.b16 %v7660, %v7657
        %v8183 = vpack.c.b16 %v7661, %v7658
        %v8184 = vpack.c.b16 %v7662, %v7659
        %v8185 = vpack.c.b16 %v7666, %v7663
        %v8186 = vpack.c.b16 %v7667, %v7664
        %v8187 = vpack.c.b16 %v7668, %v7665
        %v8188 = vpack.c.b16 %v7672, %v7669
        %v8189 = vpack.c.b16 %v7673, %v7670
        %v8190 = vpack.c.b16 %v7674, %v7671
        %v8191 = vpack.c.b16 %v7678, %v7675
        %v8192 = vpack.c.b16 %v7679, %v7676
        %v8193 = vpack.c.b16 %v7680, %v7677
        %v8194 = vpack.c.b16 %v7684, %v7681
        %v8195 = vpack.c.b16 %v7685, %v7682
        %v8196 = vpack.c.b16 %v7686, %v7683
        %v8197 = vpack.c.b16 %v7690, %v7687
        %v8198 = vpack.c.b16 %v7691, %v7688
        %v8199 = vpack.c.b16 %v7692, %v7689
        %v8200 = vpack.c.b16 %v7696, %v7693
        %v8201 = vpack.c.b16 %v7697, %v7694
        %v8202 = vpack.c.b16 %v7698, %v7695
        %v8203 = vpack.c.b16 %v7702, %v7699
        %v8204 = vpack.c.b16 %v7703, %v7700
        %v8205 = vpack.c.b16 %v7704, %v7701
        %v8206 = vpack.c.b16 %v7708, %v7705
        %v8207 = vpack.c.b16 %v7709, %v7706
        %v8208 = vpack.c.b16 %v7710, %v7707
        %v8209 = vpack.c.b16 %v7714, %v7711
        %v8210 = vpack.c.b16 %v7715, %v7712
        %v8211 = vpack.c.b16 %v7716, %v7713
        %v8212 = vpack.c.b16 %v7720, %v7717
        %v8213 = vpack.c.b16 %v7721, %v7718
        %v8214 = vpack.c.b16 %v7722, %v7719
        %v8215 = vpack.c.b16 %v7726, %v7723
        %v8216 = vpack.c.b16 %v7727, %v7724
        %v8217 = vpack.c.b16 %v7728, %v7725
        %v8218 = vpack.c.b16 %v7732, %v7729
        %v8219 = vpack.c.b16 %v7733, %v7730
        %v8220 = vpack.c.b16 %v7734, %v7731
        %v8221 = vpack.c.b16 %v7738, %v7735
        %v8222 = vpack.c.b16 %v7739, %v7736
        %v8223 = vpack.c.b16 %v7740, %v7737
        %v8224 = vpack.c.b16 %v7744, %v7741
        %v8225 = vpack.c.b16 %v7745, %v7742
        %v8226 = vpack.c.b16 %v7746, %v7743
        %v8227 = vpack.c.b16 %v7750, %v7747
        %v8228 = vpack.c.b16 %v7751, %v7748
        %v8229 = vpack.c.b16 %v7752, %v7749
        %v8230 = vpack.c.b16 %v7756, %v7753
        %v8231 = vpack.c.b16 %v7757, %v7754
        %v8232 = vpack.c.b16 %v7758, %v7755
        %v8233 = vpack.c.b16 %v7762, %v7759
        %v8234 = vpack.c.b16 %v7763, %v7760
        %v8235 = vpack.c.b16 %v7764, %v7761
        %v8236 = vpack.c.b16 %v7768, %v7765
        %v8237 = vpack.c.b16 %v7769, %v7766
        %v8238 = vpack.c.b16 %v7770, %v7767
        %v8239 = vpack.c.b16 %v7774, %v7771
        %v8240 = vpack.c.b16 %v7775, %v7772
        %v8241 = vpack.c.b16 %v7776, %v7773
        %v8242 = vpack.c.b16 %v7780, %v7777
        %v8243 = vpack.c.b16 %v7781, %v7778
        %v8244 = vpack.c.b16 %v7782, %v7779
        %v8245 = vpack.c.b16 %v7786, %v7783
        %v8246 = vpack.c.b16 %v7787, %v7784
        %v8247 = vpack.c.b16 %v7788, %v7785
        %v8248 = vpack.c.b16 %v7792, %v7789
        %v8249 = vpack.c.b16 %v7793, %v7790
        %v8250 = vpack.c.b16 %v7794, %v7791
        %v8251 = vpack.c.b16 %v7798, %v7795
        %v8252 = vpack.c.b16 %v7799, %v7796
        %v8253 = vpack.c.b16 %v7800, %v7797
        %v8254 = vpack.c.b16 %v7804, %v7801
        %v8255 = vpack.c.b16 %v7805, %v7802
        %v8256 = vpack.c.b16 %v7806, %v7803
        %v8257 = vpack.c.b16 %v7810, %v7807
        %v8258 = vpack.c.b16 %v7811, %v7808
        %v8259 = vpack.c.b16 %v7812, %v7809
        %v8260 = vpack.c.b16 %v7816, %v7813
        %v8261 = vpack.c.b16 %v7817, %v7814
        %v8262 = vpack.c.b16 %v7818, %v7815
        %v8263 = vpack.c.b16 %v7822, %v7819
        %v8264 = vpack.c.b16 %v7823, %v7820
        %v8265 = vpack.c.b16 %v7824, %v7821
        %v8266 = vpack.c.b16 %v7828, %v7825
        %v8267 = vpack.c.b16 %v7829, %v7826
        %v8268 = vpack.c.b16 %v7830, %v7827
        %v8269 = vpack.c.b16 %v7834, %v7831
        %v8270 = vpack.c.b16 %v7835, %v7832
        %v8271 = vpack.c.b16 %v7836, %v7833
        %v8272 = vpack.c.b16 %v7840, %v7837
        %v8273 = vpack.c.b16 %v7841, %v7838
        %v8274 = vpack.c.b16 %v7842, %v7839
        %v8275 = vpack.c.b16 %v7846, %v7843
        %v8276 = vpack.c.b16 %v7847, %v7844
        %v8277 = vpack.c.b16 %v7848, %v7845
        %v8278 = vpack.c.b16 %v7852, %v7849
        %v8279 = vpack.c.b16 %v7853, %v7850
        %v8280 = vpack.c.b16 %v7854, %v7851
        %v8281 = vpack.c.b16 %v7858, %v7855
        %v8282 = vpack.c.b16 %v7859, %v7856
        %v8283 = vpack.c.b16 %v7860, %v7857
        %v8284 = vpack.c.b16 %v7864, %v7861
        %v8285 = vpack.c.b16 %v7865, %v7862
        %v8286 = vpack.c.b16 %v7866, %v7863
        %v8287 = vpack.c.b16 %v7870, %v7867
        %v8288 = vpack.c.b16 %v7871, %v7868
        %v8289 = vpack.c.b16 %v7872, %v7869
        %v8290 = vpack.c.b16 %v7876, %v7873
        %v8291 = vpack.c.b16 %v7877, %v7874
        %v8292 = vpack.c.b16 %v7878, %v7875
        %v8293 = vpack.c.b16 %v7882, %v7879
        %v8294 = vpack.c.b16 %v7883, %v7880
        %v8295 = vpack.c.b16 %v7884, %v7881
        %v8296 = vpack.c.b16 %v7888, %v7885
        %v8297 = vpack.c.b16 %v7889, %v7886
        %v8298 = vpack.c.b16 %v7890, %v7887
        %v8299 = vpack.c.b16 %v7894, %v7891
        %v8300 = vpack.c.b16 %v7895, %v7892
        %v8301 = vpack.c.b16 %v7896, %v7893
        %v8302 = vpack.c.b16 %v7900, %v7897
        %v8303 = vpack.c.b16 %v7901, %v7898
        %v8304 = vpack.c.b16 %v7902, %v7899
        %v8305 = vpack.c.b16 %v7906, %v7903
        %v8306 = vpack.c.b16 %v7907, %v7904
        %v8307 = vpack.c.b16 %v7908, %v7905
        %v8308 = vpack.c.b16 %v7912, %v7909
        %v8309 = vpack.c.b16 %v7913, %v7910
        %v8310 = vpack.c.b16 %v7914, %v7911
        %v8311 = vpack.c.b16 %v7918, %v7915
        %v8312 = vpack.c.b16 %v7919, %v7916
        %v8313 = vpack.c.b16 %v7920, %v7917
        %v8314 = vpack.c.b16 %v7924, %v7921
        %v8315 = vpack.c.b16 %v7925, %v7922
        %v8316 = vpack.c.b16 %v7926, %v7923
        %v8317 = vpack.c.b16 %v7930, %v7927
        %v8318 = vpack.c.b16 %v7931, %v7928
        %v8319 = vpack.c.b16 %v7932, %v7929
        %v8320 = vpack.c.b16 %v7936, %v7933
        %v8321 = vpack.c.b16 %v7937, %v7934
        %v8322 = vpack.c.b16 %v7938, %v7935
        %v8323 = vpack.c.b16 %v7942, %v7939
        %v8324 = vpack.c.b16 %v7943, %v7940
        %v8325 = vpack.c.b16 %v7944, %v7941
        %v8326 = vpack.c.b16 %v7948, %v7945
        %v8327 = vpack.c.b16 %v7949, %v7946
        %v8328 = vpack.c.b16 %v7950, %v7947
        %v8329 = vpack.c.b16 %v7954, %v7951
        %v8330 = vpack.c.b16 %v7955, %v7952
        %v8331 = vpack.c.b16 %v7956, %v7953
        %v8332 = vpack.c.b16 %v7960, %v7957
        %v8333 = vpack.c.b16 %v7961, %v7958
        %v8334 = vpack.c.b16 %v7962, %v7959
        %v8335 = vpack.c.b16 %v7966, %v7963
        %v8336 = vpack.c.b16 %v7967, %v7964
        %v8337 = vpack.c.b16 %v7968, %v7965
        %v8338 = vpack.c.b16 %v7972, %v7969
        %v8339 = vpack.c.b16 %v7973, %v7970
        %v8340 = vpack.c.b16 %v7974, %v7971
        %v8341 = vpack.c.b16 %v7978, %v7975
        %v8342 = vpack.c.b16 %v7979, %v7976
        %v8343 = vpack.c.b16 %v7980, %v7977
        %v8344 = vpack.c.b16 %v7984, %v7981
        %v8345 = vpack.c.b16 %v7985, %v7982
        %v8346 = vpack.c.b16 %v7986, %v7983
        %v8347 = vpack.c.b16 %v7990, %v7987
        %v8348 = vpack.c.b16 %v7991, %v7988
        %v8349 = vpack.c.b16 %v7992, %v7989
        %v8350 = vpack.c.b16 %v7996, %v7993
        %v8351 = vpack.c.b16 %v7997, %v7994
        %v8352 = vpack.c.b16 %v7998, %v7995
        %v8353 = vpack.c.b16 %v8002, %v7999
        %v8354 = vpack.c.b16 %v8003, %v8000
        %v8355 = vpack.c.b16 %v8004, %v8001
        %v8356 = vpack.c.b16 %v8008, %v8005
        %v8357 = vpack.c.b16 %v8009, %v8006
        %v8358 = vpack.c.b16 %v8010, %v8007
        %v8359 = vpack.c.b16 %v8014, %v8011
        %v8360 = vpack.c.b16 %v8015, %v8012
        %v8361 = vpack.c.b16 %v8016, %v8013
        %v8362 = vpack.c.b16 %v8020, %v8017
        %v8363 = vpack.c.b16 %v8021, %v8018
        %v8364 = vpack.c.b16 %v8022, %v8019
        %v8365 = vpack.c.b16 %v8026, %v8023
        %v8366 = vpack.c.b16 %v8027, %v8024
        %v8367 = vpack.c.b16 %v8028, %v8025
        %v8368 = vpack.c.b16 %v8032, %v8029
        %v8369 = vpack.c.b16 %v8033, %v8030
        %v8370 = vpack.c.b16 %v8034, %v8031
        %v8371 = vpack.c.b16 %v8038, %v8035
        %v8372 = vpack.c.b16 %v8039, %v8036
        %v8373 = vpack.c.b16 %v8040, %v8037
        %v8374 = vpack.c.b16 %v8044, %v8041
        %v8375 = vpack.c.b16 %v8045, %v8042
        %v8376 = vpack.c.b16 %v8046, %v8043
        %v8377 = vpack.c.b16 %v8050, %v8047
        %v8378 = vpack.c.b16 %v8051, %v8048
        %v8379 = vpack.c.b16 %v8052, %v8049
        %v8380 = vpack.c.b16 %v8056, %v8053
        %v8381 = vpack.c.b16 %v8057, %v8054
        %v8382 = vpack.c.b16 %v8058, %v8055
        %v8383 = vpack.c.b16 %v8062, %v8059
        %v8384 = vpack.c.b16 %v8063, %v8060
        %v8385 = vpack.c.b16 %v8064, %v8061
        %v8386 = vpack.c.b16 %v8068, %v8065
        %v8387 = vpack.c.b16 %v8069, %v8066
        %v8388 = vpack.c.b16 %v8070, %v8067
        %v8389 = vpack.c.b16 %v8074, %v8071
        %v8390 = vpack.c.b16 %v8075, %v8072
        %v8391 = vpack.c.b16 %v8076, %v8073
        %v8392 = vpack.c.b16 %v8080, %v8077
        %v8393 = vpack.c.b16 %v8081, %v8078
        %v8394 = vpack.c.b16 %v8082, %v8079
        %v8395 = vpack.c.b16 %v8086, %v8083
        %v8396 = vpack.c.b16 %v8087, %v8084
        %v8397 = vpack.c.b16 %v8088, %v8085
        %v8398 = vpack.c.b16 %v8092, %v8089
        %v8399 = vpack.c.b16 %v8093, %v8090
        %v8400 = vpack.c.b16 %v8094, %v8091
        %v8401 = vpack.c.b16 %v8098, %v8095
        %v8402 = vpack.c.b16 %v8099, %v8096
        %v8403 = vpack.c.b16 %v8100, %v8097
        %v8404 = vpack.c.b16 %v8104, %v8101
        %v8405 = vpack.c.b16 %v8105, %v8102
        %v8406 = vpack.c.b16 %v8106, %v8103
        %v8407 = vpack.c.b16 %v8110, %v8107
        %v8408 = vpack.c.b16 %v8111, %v8108
        %v8409 = vpack.c.b16 %v8112, %v8109
        %v8410 = vpack.c.b16 %v8116, %v8113
        %v8411 = vpack.c.b16 %v8117, %v8114
        %v8412 = vpack.c.b16 %v8118, %v8115
        %v8413 = vpack.c.b16 %v8122, %v8119
        %v8414 = vpack.c.b16 %v8123, %v8120
        %v8415 = vpack.c.b16 %v8124, %v8121
        %v8416 = vpack.c.b16 %v8128, %v8125
        %v8417 = vpack.c.b16 %v8129, %v8126
        %v8418 = vpack.c.b16 %v8130, %v8127
        %8707 = vmatprep.subr.bf16.mxu0 %v8132
        %8708 = vmatpush1.bf16.msra.mxu0 %v8131
        %8709 = vmatprep.subr.bf16.mxu0 %v8135
        %8710 = vmatpush1.bf16.msra.mxu0 %v8134
        %8711 = vmatprep.subr.bf16.mxu0 %v8138
        %8712 = vmatpush1.bf16.msra.mxu0 %v8137
        %8713 = vmatprep.subr.bf16.mxu0 %v8141
        %8714 = vmatpush1.bf16.msra.mxu0 %v8140
        %8715 = vmatprep.subr.bf16.mxu0 %v8144
        %8716 = vmatpush1.bf16.msra.mxu0 %v8143
        %8717 = vmatprep.subr.bf16.mxu0 %v8147
        %8718 = vmatpush1.bf16.msra.mxu0 %v8146
        %8719 = vmatprep.subr.bf16.mxu0 %v8150
        %8720 = vmatpush1.bf16.msra.mxu0 %v8149
        %8721 = vmatprep.subr.bf16.mxu0 %v8153
        %8722 = vmatpush1.bf16.msra.mxu0 %v8152
        %8723 = vmatprep.subr.bf16.mxu0 %v8156
        %8724 = vmatpush1.bf16.msra.mxu0 %v8155
        %8725 = vmatprep.subr.bf16.mxu0 %v8159
        %8726 = vmatpush1.bf16.msra.mxu0 %v8158
        %8727 = vmatprep.subr.bf16.mxu0 %v8162
        %8728 = vmatpush1.bf16.msra.mxu0 %v8161
        %8729 = vmatprep.subr.bf16.mxu0 %v8165
        %8730 = vmatpush1.bf16.msra.mxu0 %v8164
        %8731 = vmatprep.subr.bf16.mxu0 %v8168
        %8732 = vmatpush1.bf16.msra.mxu0 %v8167
        %8733 = vmatprep.subr.bf16.mxu0 %v8171
        %8734 = vmatpush1.bf16.msra.mxu0 %v8170
        %8735 = vmatprep.subr.bf16.mxu0 %v8174
        %8736 = vmatpush1.bf16.msra.mxu0 %v8173
        %8737 = vmatprep.subr.bf16.mxu0 %v8177
        %8738 = vmatpush1.bf16.msra.mxu0 %v8176
        %8739 = vmatprep.mubr.bf16.mxu0 %v6579
        %8740 = vmatmul.mubr.bf16.gmra.mrb[0].mxu0 %v6578
        %v8741 = vpop.f32.mrb[0].mxu0
        %v8742 = vadd.f32 %v7159, %v8741
        %v8743 = vpop.f32.mrb[0].mxu0
        %v8744 = vadd.f32 %v7163, %v8743
        %v8745 = vpop.f32.mrb[0].mxu0
        %v8746 = vadd.f32 %v7159, %v8745
        %v8747 = vpop.f32.mrb[0].mxu0
        %v8748 = vadd.f32 %v7163, %v8747
        %8749 = vmatprep.mubr.bf16.mxu0 %v6591
        %8750 = vmatmul.mubr.bf16.gmra.mrb[0].mxu0 %v6590
        %v8751 = vpop.f32.mrb[0].mxu0
        %v8752 = vadd.f32 %v7159, %v8751
        %v8753 = vpop.f32.mrb[0].mxu0
        %v8754 = vadd.f32 %v7163, %v8753
        %v8755 = vpop.f32.mrb[0].mxu0
        %v8756 = vadd.f32 %v7159, %v8755
        %v8757 = vpop.f32.mrb[0].mxu0
        %v8758 = vadd.f32 %v7163, %v8757
        %8759 = vmatprep.mubr.bf16.mxu0 %v6603
        %8760 = vmatmul.mubr.bf16.gmra.mrb[0].mxu0 %v6602
        %v8761 = vpop.f32.mrb[0].mxu0
        %v8762 = vadd.f32 %v7159, %v8761
        %v8763 = vpop.f32.mrb[0].mxu0
        %v8764 = vadd.f32 %v7163, %v8763
        %v8765 = vpop.f32.mrb[0].mxu0
        %v8766 = vadd.f32 %v7159, %v8765
        %v8767 = vpop.f32.mrb[0].mxu0
        %v8768 = vadd.f32 %v7163, %v8767
        %8769 = vmatprep.mubr.bf16.mxu0 %v6615
        %8770 = vmatmul.mubr.bf16.gmra.mrb[0].mxu0 %v6614
        %v8771 = vpop.f32.mrb[0].mxu0
        %v8772 = vadd.f32 %v7159, %v8771
        %v8773 = vpop.f32.mrb[0].mxu0
        %v8774 = vadd.f32 %v7163, %v8773
        %v8775 = vpop.f32.mrb[0].mxu0
        %v8776 = vadd.f32 %v7159, %v8775
        %v8777 = vpop.f32.mrb[0].mxu0
        %v8778 = vadd.f32 %v7163, %v8777
        %8779 = vmatprep.mubr.bf16.mxu0 %v6627
        %8780 = vmatmul.mubr.bf16.gmra.mrb[0].mxu0 %v6626
        %v8781 = vpop.f32.mrb[0].mxu0
        %v8782 = vadd.f32 %v7159, %v8781
        %v8783 = vpop.f32.mrb[0].mxu0
        %v8784 = vadd.f32 %v7163, %v8783
        %v8785 = vpop.f32.mrb[0].mxu0
        %v8786 = vadd.f32 %v7159, %v8785
        %v8787 = vpop.f32.mrb[0].mxu0
        %v8788 = vadd.f32 %v7163, %v8787
        %8789 = vmatprep.mubr.bf16.mxu0 %v6639
        %8790 = vmatmul.mubr.bf16.gmra.mrb[0].mxu0 %v6638
        %v8791 = vpop.f32.mrb[0].mxu0
        %v8792 = vadd.f32 %v7159, %v8791
        %v8793 = vpop.f32.mrb[0].mxu0
        %v8794 = vadd.f32 %v7163, %v8793
        %v8795 = vpop.f32.mrb[0].mxu0
        %v8796 = vadd.f32 %v7159, %v8795
        %v8797 = vpop.f32.mrb[0].mxu0
        %v8798 = vadd.f32 %v7163, %v8797
        %8799 = vmatprep.mubr.bf16.mxu0 %v6651
        %8800 = vmatmul.mubr.bf16.gmra.mrb[0].mxu0 %v6650
        %v8801 = vpop.f32.mrb[0].mxu0
        %v8802 = vadd.f32 %v7159, %v8801
        %v8803 = vpop.f32.mrb[0].mxu0
        %v8804 = vadd.f32 %v7163, %v8803
        %v8805 = vpop.f32.mrb[0].mxu0
        %v8806 = vadd.f32 %v7159, %v8805
        %v8807 = vpop.f32.mrb[0].mxu0
        %v8808 = vadd.f32 %v7163, %v8807
        %8809 = vmatprep.mubr.bf16.mxu0 %v6663
        %8810 = vmatmul.mubr.bf16.gmra.mrb[0].mxu0 %v6662
        %v8811 = vpop.f32.mrb[0].mxu0
        %v8812 = vadd.f32 %v7159, %v8811
        %v8813 = vpop.f32.mrb[0].mxu0
        %v8814 = vadd.f32 %v7163, %v8813
        %v8815 = vpop.f32.mrb[0].mxu0
        %v8816 = vadd.f32 %v7159, %v8815
        %v8817 = vpop.f32.mrb[0].mxu0
        %v8818 = vadd.f32 %v7163, %v8817
        %8819 = vmatprep.mubr.bf16.mxu0 %v6675
        %8820 = vmatmul.mubr.bf16.gmra.mrb[0].mxu0 %v6674
        %v8821 = vpop.f32.mrb[0].mxu0
        %v8822 = vadd.f32 %v7159, %v8821
        %v8823 = vpop.f32.mrb[0].mxu0
        %v8824 = vadd.f32 %v7163, %v8823
        %v8825 = vpop.f32.mrb[0].mxu0
        %v8826 = vadd.f32 %v7159, %v8825
        %v8827 = vpop.f32.mrb[0].mxu0
        %v8828 = vadd.f32 %v7163, %v8827
        %8829 = vmatprep.mubr.bf16.mxu0 %v6687
        %8830 = vmatmul.mubr.bf16.gmra.mrb[0].mxu0 %v6686
        %v8831 = vpop.f32.mrb[0].mxu0
        %v8832 = vadd.f32 %v7159, %v8831
        %v8833 = vpop.f32.mrb[0].mxu0
        %v8834 = vadd.f32 %v7163, %v8833
        %v8835 = vpop.f32.mrb[0].mxu0
        %v8836 = vadd.f32 %v7159, %v8835
        %v8837 = vpop.f32.mrb[0].mxu0
        %v8838 = vadd.f32 %v7163, %v8837
        %8839 = vmatprep.mubr.bf16.mxu0 %v6699
        %8840 = vmatmul.mubr.bf16.gmra.mrb[0].mxu0 %v6698
        %v8841 = vpop.f32.mrb[0].mxu0
        %v8842 = vadd.f32 %v7159, %v8841
        %v8843 = vpop.f32.mrb[0].mxu0
        %v8844 = vadd.f32 %v7163, %v8843
        %v8845 = vpop.f32.mrb[0].mxu0
        %v8846 = vadd.f32 %v7159, %v8845
        %v8847 = vpop.f32.mrb[0].mxu0
        %v8848 = vadd.f32 %v7163, %v8847
        %8849 = vmatprep.mubr.bf16.mxu0 %v6711
        %8850 = vmatmul.mubr.bf16.gmra.mrb[0].mxu0 %v6710
        %v8851 = vpop.f32.mrb[0].mxu0
        %v8852 = vadd.f32 %v7159, %v8851
        %v8853 = vpop.f32.mrb[0].mxu0
        %v8854 = vadd.f32 %v7163, %v8853
        %v8855 = vpop.f32.mrb[0].mxu0
        %v8856 = vadd.f32 %v7159, %v8855
        %v8857 = vpop.f32.mrb[0].mxu0
        %v8858 = vadd.f32 %v7163, %v8857
        %8859 = vmatprep.mubr.bf16.mxu0 %v6723
        %8860 = vmatmul.mubr.bf16.gmra.mrb[0].mxu0 %v6722
        %v8861 = vpop.f32.mrb[0].mxu0
        %v8862 = vadd.f32 %v7159, %v8861
        %v8863 = vpop.f32.mrb[0].mxu0
        %v8864 = vadd.f32 %v7163, %v8863
        %v8865 = vpop.f32.mrb[0].mxu0
        %v8866 = vadd.f32 %v7159, %v8865
        %v8867 = vpop.f32.mrb[0].mxu0
        %v8868 = vadd.f32 %v7163, %v8867
        %8869 = vmatprep.mubr.bf16.mxu0 %v6735
        %8870 = vmatmul.mubr.bf16.gmra.mrb[0].mxu0 %v6734
        %v8871 = vpop.f32.mrb[0].mxu0
        %v8872 = vadd.f32 %v7159, %v8871
        %v8873 = vpop.f32.mrb[0].mxu0
        %v8874 = vadd.f32 %v7163, %v8873
        %v8875 = vpop.f32.mrb[0].mxu0
        %v8876 = vadd.f32 %v7159, %v8875
        %v8877 = vpop.f32.mrb[0].mxu0
        %v8878 = vadd.f32 %v7163, %v8877
        %8879 = vmatprep.mubr.bf16.mxu0 %v6747
        %8880 = vmatmul.mubr.bf16.gmra.mrb[0].mxu0 %v6746
        %v8881 = vpop.f32.mrb[0].mxu0
        %v8882 = vadd.f32 %v7159, %v8881
        %v8883 = vpop.f32.mrb[0].mxu0
        %v8884 = vadd.f32 %v7163, %v8883
        %v8885 = vpop.f32.mrb[0].mxu0
        %v8886 = vadd.f32 %v7159, %v8885
        %v8887 = vpop.f32.mrb[0].mxu0
        %v8888 = vadd.f32 %v7163, %v8887
        %8889 = vmatprep.mubr.bf16.mxu0 %v6759
        %8890 = vmatmul.mubr.bf16.gmra.mrb[0].mxu0 %v6758
        %v8891 = vpop.f32.mrb[0].mxu0
        %v8892 = vadd.f32 %v7159, %v8891
        %v8893 = vpop.f32.mrb[0].mxu0
        %v8894 = vadd.f32 %v7163, %v8893
        %v8895 = vpop.f32.mrb[0].mxu0
        %v8896 = vadd.f32 %v7159, %v8895
        %v8897 = vpop.f32.mrb[0].mxu0
        %v8898 = vadd.f32 %v7163, %v8897
        %8899 = vdwg.mxu0
        %8900 = vmatprep.subr.bf16.mxu0 %v8180
        %8901 = vmatpush1.bf16.msra.mxu0 %v8179
        %8902 = vmatprep.subr.bf16.mxu0 %v8183
        %8903 = vmatpush1.bf16.msra.mxu0 %v8182
        %8904 = vmatprep.subr.bf16.mxu0 %v8186
        %8905 = vmatpush1.bf16.msra.mxu0 %v8185
        %8906 = vmatprep.subr.bf16.mxu0 %v8189
        %8907 = vmatpush1.bf16.msra.mxu0 %v8188
        %8908 = vmatprep.subr.bf16.mxu0 %v8192
        %8909 = vmatpush1.bf16.msra.mxu0 %v8191
        %8910 = vmatprep.subr.bf16.mxu0 %v8195
        %8911 = vmatpush1.bf16.msra.mxu0 %v8194
        %8912 = vmatprep.subr.bf16.mxu0 %v8198
        %8913 = vmatpush1.bf16.msra.mxu0 %v8197
        %8914 = vmatprep.subr.bf16.mxu0 %v8201
        %8915 = vmatpush1.bf16.msra.mxu0 %v8200
        %8916 = vmatprep.subr.bf16.mxu0 %v8204
        %8917 = vmatpush1.bf16.msra.mxu0 %v8203
        %8918 = vmatprep.subr.bf16.mxu0 %v8207
        %8919 = vmatpush1.bf16.msra.mxu0 %v8206
        %8920 = vmatprep.subr.bf16.mxu0 %v8210
        %8921 = vmatpush1.bf16.msra.mxu0 %v8209
        %8922 = vmatprep.subr.bf16.mxu0 %v8213
        %8923 = vmatpush1.bf16.msra.mxu0 %v8212
        %8924 = vmatprep.subr.bf16.mxu0 %v8216
        %8925 = vmatpush1.bf16.msra.mxu0 %v8215
        %8926 = vmatprep.subr.bf16.mxu0 %v8219
        %8927 = vmatpush1.bf16.msra.mxu0 %v8218
        %8928 = vmatprep.subr.bf16.mxu0 %v8222
        %8929 = vmatpush1.bf16.msra.mxu0 %v8221
        %8930 = vmatprep.subr.bf16.mxu0 %v8225
        %8931 = vmatpush1.bf16.msra.mxu0 %v8224
        %8932 = vmatprep.mubr.bf16.mxu0 %v6581
        %8933 = vmatmul.mubr.bf16.gmra.mrb[0].mxu0 %v6580
        %v8934 = vpop.f32.mrb[0].mxu0
        %v8935 = vadd.f32 %v8742, %v8934
        %v8936 = vpop.f32.mrb[0].mxu0
        %v8937 = vadd.f32 %v8744, %v8936
        %v8938 = vpop.f32.mrb[0].mxu0
        %v8939 = vadd.f32 %v8746, %v8938
        %v8940 = vpop.f32.mrb[0].mxu0
        %v8941 = vadd.f32 %v8748, %v8940
        %8942 = vmatprep.mubr.bf16.mxu0 %v6593
        %8943 = vmatmul.mubr.bf16.gmra.mrb[0].mxu0 %v6592
        %v8944 = vpop.f32.mrb[0].mxu0
        %v8945 = vadd.f32 %v8752, %v8944
        %v8946 = vpop.f32.mrb[0].mxu0
        %v8947 = vadd.f32 %v8754, %v8946
        %v8948 = vpop.f32.mrb[0].mxu0
        %v8949 = vadd.f32 %v8756, %v8948
        %v8950 = vpop.f32.mrb[0].mxu0
        %v8951 = vadd.f32 %v8758, %v8950
        %8952 = vmatprep.mubr.bf16.mxu0 %v6605
        %8953 = vmatmul.mubr.bf16.gmra.mrb[0].mxu0 %v6604
        %v8954 = vpop.f32.mrb[0].mxu0
        %v8955 = vadd.f32 %v8762, %v8954
        %v8956 = vpop.f32.mrb[0].mxu0
        %v8957 = vadd.f32 %v8764, %v8956
        %v8958 = vpop.f32.mrb[0].mxu0
        %v8959 = vadd.f32 %v8766, %v8958
        %v8960 = vpop.f32.mrb[0].mxu0
        %v8961 = vadd.f32 %v8768, %v8960
        %8962 = vmatprep.mubr.bf16.mxu0 %v6617
        %8963 = vmatmul.mubr.bf16.gmra.mrb[0].mxu0 %v6616
        %v8964 = vpop.f32.mrb[0].mxu0
        %v8965 = vadd.f32 %v8772, %v8964
        %v8966 = vpop.f32.mrb[0].mxu0
        %v8967 = vadd.f32 %v8774, %v8966
        %v8968 = vpop.f32.mrb[0].mxu0
        %v8969 = vadd.f32 %v8776, %v8968
        %v8970 = vpop.f32.mrb[0].mxu0
        %v8971 = vadd.f32 %v8778, %v8970
        %8972 = vmatprep.mubr.bf16.mxu0 %v6629
        %8973 = vmatmul.mubr.bf16.gmra.mrb[0].mxu0 %v6628
        %v8974 = vpop.f32.mrb[0].mxu0
        %v8975 = vadd.f32 %v8782, %v8974
        %v8976 = vpop.f32.mrb[0].mxu0
        %v8977 = vadd.f32 %v8784, %v8976
        %v8978 = vpop.f32.mrb[0].mxu0
        %v8979 = vadd.f32 %v8786, %v8978
        %v8980 = vpop.f32.mrb[0].mxu0
        %v8981 = vadd.f32 %v8788, %v8980
        %8982 = vmatprep.mubr.bf16.mxu0 %v6641
        %8983 = vmatmul.mubr.bf16.gmra.mrb[0].mxu0 %v6640
        %v8984 = vpop.f32.mrb[0].mxu0
        %v8985 = vadd.f32 %v8792, %v8984
        %v8986 = vpop.f32.mrb[0].mxu0
        %v8987 = vadd.f32 %v8794, %v8986
        %v8988 = vpop.f32.mrb[0].mxu0
        %v8989 = vadd.f32 %v8796, %v8988
        %v8990 = vpop.f32.mrb[0].mxu0
        %v8991 = vadd.f32 %v8798, %v8990
        %8992 = vmatprep.mubr.bf16.mxu0 %v6653
        %8993 = vmatmul.mubr.bf16.gmra.mrb[0].mxu0 %v6652
        %v8994 = vpop.f32.mrb[0].mxu0
        %v8995 = vadd.f32 %v8802, %v8994
        %v8996 = vpop.f32.mrb[0].mxu0
        %v8997 = vadd.f32 %v8804, %v8996
        %v8998 = vpop.f32.mrb[0].mxu0
        %v8999 = vadd.f32 %v8806, %v8998
        %v9000 = vpop.f32.mrb[0].mxu0
        %v9001 = vadd.f32 %v8808, %v9000
        %9002 = vmatprep.mubr.bf16.mxu0 %v6665
        %9003 = vmatmul.mubr.bf16.gmra.mrb[0].mxu0 %v6664
        %v9004 = vpop.f32.mrb[0].mxu0
        %v9005 = vadd.f32 %v8812, %v9004
        %v9006 = vpop.f32.mrb[0].mxu0
        %v9007 = vadd.f32 %v8814, %v9006
        %v9008 = vpop.f32.mrb[0].mxu0
        %v9009 = vadd.f32 %v8816, %v9008
        %v9010 = vpop.f32.mrb[0].mxu0
        %v9011 = vadd.f32 %v8818, %v9010
        %9012 = vmatprep.mubr.bf16.mxu0 %v6677
        %9013 = vmatmul.mubr.bf16.gmra.mrb[0].mxu0 %v6676
        %v9014 = vpop.f32.mrb[0].mxu0
        %v9015 = vadd.f32 %v8822, %v9014
        %v9016 = vpop.f32.mrb[0].mxu0
        %v9017 = vadd.f32 %v8824, %v9016
        %v9018 = vpop.f32.mrb[0].mxu0
        %v9019 = vadd.f32 %v8826, %v9018
        %v9020 = vpop.f32.mrb[0].mxu0
        %v9021 = vadd.f32 %v8828, %v9020
        %9022 = vmatprep.mubr.bf16.mxu0 %v6689
        %9023 = vmatmul.mubr.bf16.gmra.mrb[0].mxu0 %v6688
        %v9024 = vpop.f32.mrb[0].mxu0
        %v9025 = vadd.f32 %v8832, %v9024
        %v9026 = vpop.f32.mrb[0].mxu0
        %v9027 = vadd.f32 %v8834, %v9026
        %v9028 = vpop.f32.mrb[0].mxu0
        %v9029 = vadd.f32 %v8836, %v9028
        %v9030 = vpop.f32.mrb[0].mxu0
        %v9031 = vadd.f32 %v8838, %v9030
        %9032 = vmatprep.mubr.bf16.mxu0 %v6701
        %9033 = vmatmul.mubr.bf16.gmra.mrb[0].mxu0 %v6700
        %v9034 = vpop.f32.mrb[0].mxu0
        %v9035 = vadd.f32 %v8842, %v9034
        %v9036 = vpop.f32.mrb[0].mxu0
        %v9037 = vadd.f32 %v8844, %v9036
        %v9038 = vpop.f32.mrb[0].mxu0
        %v9039 = vadd.f32 %v8846, %v9038
        %v9040 = vpop.f32.mrb[0].mxu0
        %v9041 = vadd.f32 %v8848, %v9040
        %9042 = vmatprep.mubr.bf16.mxu0 %v6713
        %9043 = vmatmul.mubr.bf16.gmra.mrb[0].mxu0 %v6712
        %v9044 = vpop.f32.mrb[0].mxu0
        %v9045 = vadd.f32 %v8852, %v9044
        %v9046 = vpop.f32.mrb[0].mxu0
        %v9047 = vadd.f32 %v8854, %v9046
        %v9048 = vpop.f32.mrb[0].mxu0
        %v9049 = vadd.f32 %v8856, %v9048
        %v9050 = vpop.f32.mrb[0].mxu0
        %v9051 = vadd.f32 %v8858, %v9050
        %9052 = vmatprep.mubr.bf16.mxu0 %v6725
        %9053 = vmatmul.mubr.bf16.gmra.mrb[0].mxu0 %v6724
        %v9054 = vpop.f32.mrb[0].mxu0
        %v9055 = vadd.f32 %v8862, %v9054
        %v9056 = vpop.f32.mrb[0].mxu0
        %v9057 = vadd.f32 %v8864, %v9056
        %v9058 = vpop.f32.mrb[0].mxu0
        %v9059 = vadd.f32 %v8866, %v9058
        %v9060 = vpop.f32.mrb[0].mxu0
        %v9061 = vadd.f32 %v8868, %v9060
        %9062 = vmatprep.mubr.bf16.mxu0 %v6737
        %9063 = vmatmul.mubr.bf16.gmra.mrb[0].mxu0 %v6736
        %v9064 = vpop.f32.mrb[0].mxu0
        %v9065 = vadd.f32 %v8872, %v9064
        %v9066 = vpop.f32.mrb[0].mxu0
        %v9067 = vadd.f32 %v8874, %v9066
        %v9068 = vpop.f32.mrb[0].mxu0
        %v9069 = vadd.f32 %v8876, %v9068
        %v9070 = vpop.f32.mrb[0].mxu0
        %v9071 = vadd.f32 %v8878, %v9070
        %9072 = vmatprep.mubr.bf16.mxu0 %v6749
        %9073 = vmatmul.mubr.bf16.gmra.mrb[0].mxu0 %v6748
        %v9074 = vpop.f32.mrb[0].mxu0
        %v9075 = vadd.f32 %v8882, %v9074
        %v9076 = vpop.f32.mrb[0].mxu0
        %v9077 = vadd.f32 %v8884, %v9076
        %v9078 = vpop.f32.mrb[0].mxu0
        %v9079 = vadd.f32 %v8886, %v9078
        %v9080 = vpop.f32.mrb[0].mxu0
        %v9081 = vadd.f32 %v8888, %v9080
        %9082 = vmatprep.mubr.bf16.mxu0 %v6761
        %9083 = vmatmul.mubr.bf16.gmra.mrb[0].mxu0 %v6760
        %v9084 = vpop.f32.mrb[0].mxu0
        %v9085 = vadd.f32 %v8892, %v9084
        %v9086 = vpop.f32.mrb[0].mxu0
        %v9087 = vadd.f32 %v8894, %v9086
        %v9088 = vpop.f32.mrb[0].mxu0
        %v9089 = vadd.f32 %v8896, %v9088
        %v9090 = vpop.f32.mrb[0].mxu0
        %v9091 = vadd.f32 %v8898, %v9090
        %9092 = vdwg.mxu0
        %9093 = vmatprep.subr.bf16.mxu0 %v8228
        %9094 = vmatpush1.bf16.msra.mxu0 %v8227
        %9095 = vmatprep.subr.bf16.mxu0 %v8231
        %9096 = vmatpush1.bf16.msra.mxu0 %v8230
        %9097 = vmatprep.subr.bf16.mxu0 %v8234
        %9098 = vmatpush1.bf16.msra.mxu0 %v8233
        %9099 = vmatprep.subr.bf16.mxu0 %v8237
        %9100 = vmatpush1.bf16.msra.mxu0 %v8236
        %9101 = vmatprep.subr.bf16.mxu0 %v8240
        %9102 = vmatpush1.bf16.msra.mxu0 %v8239
        %9103 = vmatprep.subr.bf16.mxu0 %v8243
        %9104 = vmatpush1.bf16.msra.mxu0 %v8242
        %9105 = vmatprep.subr.bf16.mxu0 %v8246
        %9106 = vmatpush1.bf16.msra.mxu0 %v8245
        %9107 = vmatprep.subr.bf16.mxu0 %v8249
        %9108 = vmatpush1.bf16.msra.mxu0 %v8248
        %9109 = vmatprep.subr.bf16.mxu0 %v8252
        %9110 = vmatpush1.bf16.msra.mxu0 %v8251
        %9111 = vmatprep.subr.bf16.mxu0 %v8255
        %9112 = vmatpush1.bf16.msra.mxu0 %v8254
        %9113 = vmatprep.subr.bf16.mxu0 %v8258
        %9114 = vmatpush1.bf16.msra.mxu0 %v8257
        %9115 = vmatprep.subr.bf16.mxu0 %v8261
        %9116 = vmatpush1.bf16.msra.mxu0 %v8260
        %9117 = vmatprep.subr.bf16.mxu0 %v8264
        %9118 = vmatpush1.bf16.msra.mxu0 %v8263
        %9119 = vmatprep.subr.bf16.mxu0 %v8267
        %9120 = vmatpush1.bf16.msra.mxu0 %v8266
        %9121 = vmatprep.subr.bf16.mxu0 %v8270
        %9122 = vmatpush1.bf16.msra.mxu0 %v8269
        %9123 = vmatprep.subr.bf16.mxu0 %v8273
        %9124 = vmatpush1.bf16.msra.mxu0 %v8272
        %9125 = vmatprep.mubr.bf16.mxu0 %v6583
        %9126 = vmatmul.mubr.bf16.gmra.mrb[0].mxu0 %v6582
        %v9127 = vpop.f32.mrb[0].mxu0
        %v9128 = vadd.f32 %v8935, %v9127
        %v9129 = vpop.f32.mrb[0].mxu0
        %v9130 = vadd.f32 %v8937, %v9129
        %v9131 = vpop.f32.mrb[0].mxu0
        %v9132 = vadd.f32 %v8939, %v9131
        %v9133 = vpop.f32.mrb[0].mxu0
        %v9134 = vadd.f32 %v8941, %v9133
        %9135 = vmatprep.mubr.bf16.mxu0 %v6595
        %9136 = vmatmul.mubr.bf16.gmra.mrb[0].mxu0 %v6594
        %v9137 = vpop.f32.mrb[0].mxu0
        %v9138 = vadd.f32 %v8945, %v9137
        %v9139 = vpop.f32.mrb[0].mxu0
        %v9140 = vadd.f32 %v8947, %v9139
        %v9141 = vpop.f32.mrb[0].mxu0
        %v9142 = vadd.f32 %v8949, %v9141
        %v9143 = vpop.f32.mrb[0].mxu0
        %v9144 = vadd.f32 %v8951, %v9143
        %9145 = vmatprep.mubr.bf16.mxu0 %v6607
        %9146 = vmatmul.mubr.bf16.gmra.mrb[0].mxu0 %v6606
        %v9147 = vpop.f32.mrb[0].mxu0
        %v9148 = vadd.f32 %v8955, %v9147
        %v9149 = vpop.f32.mrb[0].mxu0
        %v9150 = vadd.f32 %v8957, %v9149
        %v9151 = vpop.f32.mrb[0].mxu0
        %v9152 = vadd.f32 %v8959, %v9151
        %v9153 = vpop.f32.mrb[0].mxu0
        %v9154 = vadd.f32 %v8961, %v9153
        %9155 = vmatprep.mubr.bf16.mxu0 %v6619
        %9156 = vmatmul.mubr.bf16.gmra.mrb[0].mxu0 %v6618
        %v9157 = vpop.f32.mrb[0].mxu0
        %v9158 = vadd.f32 %v8965, %v9157
        %v9159 = vpop.f32.mrb[0].mxu0
        %v9160 = vadd.f32 %v8967, %v9159
        %v9161 = vpop.f32.mrb[0].mxu0
        %v9162 = vadd.f32 %v8969, %v9161
        %v9163 = vpop.f32.mrb[0].mxu0
        %v9164 = vadd.f32 %v8971, %v9163
        %9165 = vmatprep.mubr.bf16.mxu0 %v6631
        %9166 = vmatmul.mubr.bf16.gmra.mrb[0].mxu0 %v6630
        %v9167 = vpop.f32.mrb[0].mxu0
        %v9168 = vadd.f32 %v8975, %v9167
        %v9169 = vpop.f32.mrb[0].mxu0
        %v9170 = vadd.f32 %v8977, %v9169
        %v9171 = vpop.f32.mrb[0].mxu0
        %v9172 = vadd.f32 %v8979, %v9171
        %v9173 = vpop.f32.mrb[0].mxu0
        %v9174 = vadd.f32 %v8981, %v9173
        %9175 = vmatprep.mubr.bf16.mxu0 %v6643
        %9176 = vmatmul.mubr.bf16.gmra.mrb[0].mxu0 %v6642
        %v9177 = vpop.f32.mrb[0].mxu0
        %v9178 = vadd.f32 %v8985, %v9177
        %v9179 = vpop.f32.mrb[0].mxu0
        %v9180 = vadd.f32 %v8987, %v9179
        %v9181 = vpop.f32.mrb[0].mxu0
        %v9182 = vadd.f32 %v8989, %v9181
        %v9183 = vpop.f32.mrb[0].mxu0
        %v9184 = vadd.f32 %v8991, %v9183
        %9185 = vmatprep.mubr.bf16.mxu0 %v6655
        %9186 = vmatmul.mubr.bf16.gmra.mrb[0].mxu0 %v6654
        %v9187 = vpop.f32.mrb[0].mxu0
        %v9188 = vadd.f32 %v8995, %v9187
        %v9189 = vpop.f32.mrb[0].mxu0
        %v9190 = vadd.f32 %v8997, %v9189
        %v9191 = vpop.f32.mrb[0].mxu0
        %v9192 = vadd.f32 %v8999, %v9191
        %v9193 = vpop.f32.mrb[0].mxu0
        %v9194 = vadd.f32 %v9001, %v9193
        %9195 = vmatprep.mubr.bf16.mxu0 %v6667
        %9196 = vmatmul.mubr.bf16.gmra.mrb[0].mxu0 %v6666
        %v9197 = vpop.f32.mrb[0].mxu0
        %v9198 = vadd.f32 %v9005, %v9197
        %v9199 = vpop.f32.mrb[0].mxu0
        %v9200 = vadd.f32 %v9007, %v9199
        %v9201 = vpop.f32.mrb[0].mxu0
        %v9202 = vadd.f32 %v9009, %v9201
        %v9203 = vpop.f32.mrb[0].mxu0
        %v9204 = vadd.f32 %v9011, %v9203
        %9205 = vmatprep.mubr.bf16.mxu0 %v6679
        %9206 = vmatmul.mubr.bf16.gmra.mrb[0].mxu0 %v6678
        %v9207 = vpop.f32.mrb[0].mxu0
        %v9208 = vadd.f32 %v9015, %v9207
        %v9209 = vpop.f32.mrb[0].mxu0
        %v9210 = vadd.f32 %v9017, %v9209
        %v9211 = vpop.f32.mrb[0].mxu0
        %v9212 = vadd.f32 %v9019, %v9211
        %v9213 = vpop.f32.mrb[0].mxu0
        %v9214 = vadd.f32 %v9021, %v9213
        %9215 = vmatprep.mubr.bf16.mxu0 %v6691
        %9216 = vmatmul.mubr.bf16.gmra.mrb[0].mxu0 %v6690
        %v9217 = vpop.f32.mrb[0].mxu0
        %v9218 = vadd.f32 %v9025, %v9217
        %v9219 = vpop.f32.mrb[0].mxu0
        %v9220 = vadd.f32 %v9027, %v9219
        %v9221 = vpop.f32.mrb[0].mxu0
        %v9222 = vadd.f32 %v9029, %v9221
        %v9223 = vpop.f32.mrb[0].mxu0
        %v9224 = vadd.f32 %v9031, %v9223
        %9225 = vmatprep.mubr.bf16.mxu0 %v6703
        %9226 = vmatmul.mubr.bf16.gmra.mrb[0].mxu0 %v6702
        %v9227 = vpop.f32.mrb[0].mxu0
        %v9228 = vadd.f32 %v9035, %v9227
        %v9229 = vpop.f32.mrb[0].mxu0
        %v9230 = vadd.f32 %v9037, %v9229
        %v9231 = vpop.f32.mrb[0].mxu0
        %v9232 = vadd.f32 %v9039, %v9231
        %v9233 = vpop.f32.mrb[0].mxu0
        %v9234 = vadd.f32 %v9041, %v9233
        %9235 = vmatprep.mubr.bf16.mxu0 %v6715
        %9236 = vmatmul.mubr.bf16.gmra.mrb[0].mxu0 %v6714
        %v9237 = vpop.f32.mrb[0].mxu0
        %v9238 = vadd.f32 %v9045, %v9237
        %v9239 = vpop.f32.mrb[0].mxu0
        %v9240 = vadd.f32 %v9047, %v9239
        %v9241 = vpop.f32.mrb[0].mxu0
        %v9242 = vadd.f32 %v9049, %v9241
        %v9243 = vpop.f32.mrb[0].mxu0
        %v9244 = vadd.f32 %v9051, %v9243
        %9245 = vmatprep.mubr.bf16.mxu0 %v6727
        %9246 = vmatmul.mubr.bf16.gmra.mrb[0].mxu0 %v6726
        %v9247 = vpop.f32.mrb[0].mxu0
        %v9248 = vadd.f32 %v9055, %v9247
        %v9249 = vpop.f32.mrb[0].mxu0
        %v9250 = vadd.f32 %v9057, %v9249
        %v9251 = vpop.f32.mrb[0].mxu0
        %v9252 = vadd.f32 %v9059, %v9251
        %v9253 = vpop.f32.mrb[0].mxu0
        %v9254 = vadd.f32 %v9061, %v9253
        %9255 = vmatprep.mubr.bf16.mxu0 %v6739
        %9256 = vmatmul.mubr.bf16.gmra.mrb[0].mxu0 %v6738
        %v9257 = vpop.f32.mrb[0].mxu0
        %v9258 = vadd.f32 %v9065, %v9257
        %v9259 = vpop.f32.mrb[0].mxu0
        %v9260 = vadd.f32 %v9067, %v9259
        %v9261 = vpop.f32.mrb[0].mxu0
        %v9262 = vadd.f32 %v9069, %v9261
        %v9263 = vpop.f32.mrb[0].mxu0
        %v9264 = vadd.f32 %v9071, %v9263
        %9265 = vmatprep.mubr.bf16.mxu0 %v6751
        %9266 = vmatmul.mubr.bf16.gmra.mrb[0].mxu0 %v6750
        %v9267 = vpop.f32.mrb[0].mxu0
        %v9268 = vadd.f32 %v9075, %v9267
        %v9269 = vpop.f32.mrb[0].mxu0
        %v9270 = vadd.f32 %v9077, %v9269
        %v9271 = vpop.f32.mrb[0].mxu0
        %v9272 = vadd.f32 %v9079, %v9271
        %v9273 = vpop.f32.mrb[0].mxu0
        %v9274 = vadd.f32 %v9081, %v9273
        %9275 = vmatprep.mubr.bf16.mxu0 %v6763
        %9276 = vmatmul.mubr.bf16.gmra.mrb[0].mxu0 %v6762
        %v9277 = vpop.f32.mrb[0].mxu0
        %v9278 = vadd.f32 %v9085, %v9277
        %v9279 = vpop.f32.mrb[0].mxu0
        %v9280 = vadd.f32 %v9087, %v9279
        %v9281 = vpop.f32.mrb[0].mxu0
        %v9282 = vadd.f32 %v9089, %v9281
        %v9283 = vpop.f32.mrb[0].mxu0
        %v9284 = vadd.f32 %v9091, %v9283
        %9285 = vdwg.mxu0
        %9286 = vmatprep.subr.bf16.mxu0 %v8276
        %9287 = vmatpush1.bf16.msra.mxu0 %v8275
        %9288 = vmatprep.subr.bf16.mxu0 %v8279
        %9289 = vmatpush1.bf16.msra.mxu0 %v8278
        %9290 = vmatprep.subr.bf16.mxu0 %v8282
        %9291 = vmatpush1.bf16.msra.mxu0 %v8281
        %9292 = vmatprep.subr.bf16.mxu0 %v8285
        %9293 = vmatpush1.bf16.msra.mxu0 %v8284
        %9294 = vmatprep.subr.bf16.mxu0 %v8288
        %9295 = vmatpush1.bf16.msra.mxu0 %v8287
        %9296 = vmatprep.subr.bf16.mxu0 %v8291
        %9297 = vmatpush1.bf16.msra.mxu0 %v8290
        %9298 = vmatprep.subr.bf16.mxu0 %v8294
        %9299 = vmatpush1.bf16.msra.mxu0 %v8293
        %9300 = vmatprep.subr.bf16.mxu0 %v8297
        %9301 = vmatpush1.bf16.msra.mxu0 %v8296
        %9302 = vmatprep.subr.bf16.mxu0 %v8300
        %9303 = vmatpush1.bf16.msra.mxu0 %v8299
        %9304 = vmatprep.subr.bf16.mxu0 %v8303
        %9305 = vmatpush1.bf16.msra.mxu0 %v8302
        %9306 = vmatprep.subr.bf16.mxu0 %v8306
        %9307 = vmatpush1.bf16.msra.mxu0 %v8305
        %9308 = vmatprep.subr.bf16.mxu0 %v8309
        %9309 = vmatpush1.bf16.msra.mxu0 %v8308
        %9310 = vmatprep.subr.bf16.mxu0 %v8312
        %9311 = vmatpush1.bf16.msra.mxu0 %v8311
        %9312 = vmatprep.subr.bf16.mxu0 %v8315
        %9313 = vmatpush1.bf16.msra.mxu0 %v8314
        %9314 = vmatprep.subr.bf16.mxu0 %v8318
        %9315 = vmatpush1.bf16.msra.mxu0 %v8317
        %9316 = vmatprep.subr.bf16.mxu0 %v8321
        %9317 = vmatpush1.bf16.msra.mxu0 %v8320
        %9318 = vmatprep.mubr.bf16.mxu0 %v6585
        %9319 = vmatmul.mubr.bf16.gmra.mrb[0].mxu0 %v6584
        %v9320 = vpop.f32.mrb[0].mxu0
        %v9321 = vadd.f32 %v9128, %v9320
        %v9322 = vpop.f32.mrb[0].mxu0
        %v9323 = vadd.f32 %v9130, %v9322
        %v9324 = vpop.f32.mrb[0].mxu0
        %v9325 = vadd.f32 %v9132, %v9324
        %v9326 = vpop.f32.mrb[0].mxu0
        %v9327 = vadd.f32 %v9134, %v9326
        %9328 = vmatprep.mubr.bf16.mxu0 %v6597
        %9329 = vmatmul.mubr.bf16.gmra.mrb[0].mxu0 %v6596
        %v9330 = vpop.f32.mrb[0].mxu0
        %v9331 = vadd.f32 %v9138, %v9330
        %v9332 = vpop.f32.mrb[0].mxu0
        %v9333 = vadd.f32 %v9140, %v9332
        %v9334 = vpop.f32.mrb[0].mxu0
        %v9335 = vadd.f32 %v9142, %v9334
        %v9336 = vpop.f32.mrb[0].mxu0
        %v9337 = vadd.f32 %v9144, %v9336
        %9338 = vmatprep.mubr.bf16.mxu0 %v6609
        %9339 = vmatmul.mubr.bf16.gmra.mrb[0].mxu0 %v6608
        %v9340 = vpop.f32.mrb[0].mxu0
        %v9341 = vadd.f32 %v9148, %v9340
        %v9342 = vpop.f32.mrb[0].mxu0
        %v9343 = vadd.f32 %v9150, %v9342
        %v9344 = vpop.f32.mrb[0].mxu0
        %v9345 = vadd.f32 %v9152, %v9344
        %v9346 = vpop.f32.mrb[0].mxu0
        %v9347 = vadd.f32 %v9154, %v9346
        %9348 = vmatprep.mubr.bf16.mxu0 %v6621
        %9349 = vmatmul.mubr.bf16.gmra.mrb[0].mxu0 %v6620
        %v9350 = vpop.f32.mrb[0].mxu0
        %v9351 = vadd.f32 %v9158, %v9350
        %v9352 = vpop.f32.mrb[0].mxu0
        %v9353 = vadd.f32 %v9160, %v9352
        %v9354 = vpop.f32.mrb[0].mxu0
        %v9355 = vadd.f32 %v9162, %v9354
        %v9356 = vpop.f32.mrb[0].mxu0
        %v9357 = vadd.f32 %v9164, %v9356
        %9358 = vmatprep.mubr.bf16.mxu0 %v6633
        %9359 = vmatmul.mubr.bf16.gmra.mrb[0].mxu0 %v6632
        %v9360 = vpop.f32.mrb[0].mxu0
        %v9361 = vadd.f32 %v9168, %v9360
        %v9362 = vpop.f32.mrb[0].mxu0
        %v9363 = vadd.f32 %v9170, %v9362
        %v9364 = vpop.f32.mrb[0].mxu0
        %v9365 = vadd.f32 %v9172, %v9364
        %v9366 = vpop.f32.mrb[0].mxu0
        %v9367 = vadd.f32 %v9174, %v9366
        %9368 = vmatprep.mubr.bf16.mxu0 %v6645
        %9369 = vmatmul.mubr.bf16.gmra.mrb[0].mxu0 %v6644
        %v9370 = vpop.f32.mrb[0].mxu0
        %v9371 = vadd.f32 %v9178, %v9370
        %v9372 = vpop.f32.mrb[0].mxu0
        %v9373 = vadd.f32 %v9180, %v9372
        %v9374 = vpop.f32.mrb[0].mxu0
        %v9375 = vadd.f32 %v9182, %v9374
        %v9376 = vpop.f32.mrb[0].mxu0
        %v9377 = vadd.f32 %v9184, %v9376
        %9378 = vmatprep.mubr.bf16.mxu0 %v6657
        %9379 = vmatmul.mubr.bf16.gmra.mrb[0].mxu0 %v6656
        %v9380 = vpop.f32.mrb[0].mxu0
        %v9381 = vadd.f32 %v9188, %v9380
        %v9382 = vpop.f32.mrb[0].mxu0
        %v9383 = vadd.f32 %v9190, %v9382
        %v9384 = vpop.f32.mrb[0].mxu0
        %v9385 = vadd.f32 %v9192, %v9384
        %v9386 = vpop.f32.mrb[0].mxu0
        %v9387 = vadd.f32 %v9194, %v9386
        %9388 = vmatprep.mubr.bf16.mxu0 %v6669
        %9389 = vmatmul.mubr.bf16.gmra.mrb[0].mxu0 %v6668
        %v9390 = vpop.f32.mrb[0].mxu0
        %v9391 = vadd.f32 %v9198, %v9390
        %v9392 = vpop.f32.mrb[0].mxu0
        %v9393 = vadd.f32 %v9200, %v9392
        %v9394 = vpop.f32.mrb[0].mxu0
        %v9395 = vadd.f32 %v9202, %v9394
        %v9396 = vpop.f32.mrb[0].mxu0
        %v9397 = vadd.f32 %v9204, %v9396
        %9398 = vmatprep.mubr.bf16.mxu0 %v6681
        %9399 = vmatmul.mubr.bf16.gmra.mrb[0].mxu0 %v6680
        %v9400 = vpop.f32.mrb[0].mxu0
        %v9401 = vadd.f32 %v9208, %v9400
        %v9402 = vpop.f32.mrb[0].mxu0
        %v9403 = vadd.f32 %v9210, %v9402
        %v9404 = vpop.f32.mrb[0].mxu0
        %v9405 = vadd.f32 %v9212, %v9404
        %v9406 = vpop.f32.mrb[0].mxu0
        %v9407 = vadd.f32 %v9214, %v9406
        %9408 = vmatprep.mubr.bf16.mxu0 %v6693
        %9409 = vmatmul.mubr.bf16.gmra.mrb[0].mxu0 %v6692
        %v9410 = vpop.f32.mrb[0].mxu0
        %v9411 = vadd.f32 %v9218, %v9410
        %v9412 = vpop.f32.mrb[0].mxu0
        %v9413 = vadd.f32 %v9220, %v9412
        %v9414 = vpop.f32.mrb[0].mxu0
        %v9415 = vadd.f32 %v9222, %v9414
        %v9416 = vpop.f32.mrb[0].mxu0
        %v9417 = vadd.f32 %v9224, %v9416
        %9418 = vmatprep.mubr.bf16.mxu0 %v6705
        %9419 = vmatmul.mubr.bf16.gmra.mrb[0].mxu0 %v6704
        %v9420 = vpop.f32.mrb[0].mxu0
        %v9421 = vadd.f32 %v9228, %v9420
        %v9422 = vpop.f32.mrb[0].mxu0
        %v9423 = vadd.f32 %v9230, %v9422
        %v9424 = vpop.f32.mrb[0].mxu0
        %v9425 = vadd.f32 %v9232, %v9424
        %v9426 = vpop.f32.mrb[0].mxu0
        %v9427 = vadd.f32 %v9234, %v9426
        %9428 = vmatprep.mubr.bf16.mxu0 %v6717
        %9429 = vmatmul.mubr.bf16.gmra.mrb[0].mxu0 %v6716
        %v9430 = vpop.f32.mrb[0].mxu0
        %v9431 = vadd.f32 %v9238, %v9430
        %v9432 = vpop.f32.mrb[0].mxu0
        %v9433 = vadd.f32 %v9240, %v9432
        %v9434 = vpop.f32.mrb[0].mxu0
        %v9435 = vadd.f32 %v9242, %v9434
        %v9436 = vpop.f32.mrb[0].mxu0
        %v9437 = vadd.f32 %v9244, %v9436
        %9438 = vmatprep.mubr.bf16.mxu0 %v6729
        %9439 = vmatmul.mubr.bf16.gmra.mrb[0].mxu0 %v6728
        %v9440 = vpop.f32.mrb[0].mxu0
        %v9441 = vadd.f32 %v9248, %v9440
        %v9442 = vpop.f32.mrb[0].mxu0
        %v9443 = vadd.f32 %v9250, %v9442
        %v9444 = vpop.f32.mrb[0].mxu0
        %v9445 = vadd.f32 %v9252, %v9444
        %v9446 = vpop.f32.mrb[0].mxu0
        %v9447 = vadd.f32 %v9254, %v9446
        %9448 = vmatprep.mubr.bf16.mxu0 %v6741
        %9449 = vmatmul.mubr.bf16.gmra.mrb[0].mxu0 %v6740
        %v9450 = vpop.f32.mrb[0].mxu0
        %v9451 = vadd.f32 %v9258, %v9450
        %v9452 = vpop.f32.mrb[0].mxu0
        %v9453 = vadd.f32 %v9260, %v9452
        %v9454 = vpop.f32.mrb[0].mxu0
        %v9455 = vadd.f32 %v9262, %v9454
        %v9456 = vpop.f32.mrb[0].mxu0
        %v9457 = vadd.f32 %v9264, %v9456
        %9458 = vmatprep.mubr.bf16.mxu0 %v6753
        %9459 = vmatmul.mubr.bf16.gmra.mrb[0].mxu0 %v6752
        %v9460 = vpop.f32.mrb[0].mxu0
        %v9461 = vadd.f32 %v9268, %v9460
        %v9462 = vpop.f32.mrb[0].mxu0
        %v9463 = vadd.f32 %v9270, %v9462
        %v9464 = vpop.f32.mrb[0].mxu0
        %v9465 = vadd.f32 %v9272, %v9464
        %v9466 = vpop.f32.mrb[0].mxu0
        %v9467 = vadd.f32 %v9274, %v9466
        %9468 = vmatprep.mubr.bf16.mxu0 %v6765
        %9469 = vmatmul.mubr.bf16.gmra.mrb[0].mxu0 %v6764
        %v9470 = vpop.f32.mrb[0].mxu0
        %v9471 = vadd.f32 %v9278, %v9470
        %v9472 = vpop.f32.mrb[0].mxu0
        %v9473 = vadd.f32 %v9280, %v9472
        %v9474 = vpop.f32.mrb[0].mxu0
        %v9475 = vadd.f32 %v9282, %v9474
        %v9476 = vpop.f32.mrb[0].mxu0
        %v9477 = vadd.f32 %v9284, %v9476
        %9478 = vdwg.mxu0
        %9479 = vmatprep.subr.bf16.mxu0 %v8324
        %9480 = vmatpush1.bf16.msra.mxu0 %v8323
        %9481 = vmatprep.subr.bf16.mxu0 %v8327
        %9482 = vmatpush1.bf16.msra.mxu0 %v8326
        %9483 = vmatprep.subr.bf16.mxu0 %v8330
        %9484 = vmatpush1.bf16.msra.mxu0 %v8329
        %9485 = vmatprep.subr.bf16.mxu0 %v8333
        %9486 = vmatpush1.bf16.msra.mxu0 %v8332
        %9487 = vmatprep.subr.bf16.mxu0 %v8336
        %9488 = vmatpush1.bf16.msra.mxu0 %v8335
        %9489 = vmatprep.subr.bf16.mxu0 %v8339
        %9490 = vmatpush1.bf16.msra.mxu0 %v8338
        %9491 = vmatprep.subr.bf16.mxu0 %v8342
        %9492 = vmatpush1.bf16.msra.mxu0 %v8341
        %9493 = vmatprep.subr.bf16.mxu0 %v8345
        %9494 = vmatpush1.bf16.msra.mxu0 %v8344
        %9495 = vmatprep.subr.bf16.mxu0 %v8348
        %9496 = vmatpush1.bf16.msra.mxu0 %v8347
        %9497 = vmatprep.subr.bf16.mxu0 %v8351
        %9498 = vmatpush1.bf16.msra.mxu0 %v8350
        %9499 = vmatprep.subr.bf16.mxu0 %v8354
        %9500 = vmatpush1.bf16.msra.mxu0 %v8353
        %9501 = vmatprep.subr.bf16.mxu0 %v8357
        %9502 = vmatpush1.bf16.msra.mxu0 %v8356
        %9503 = vmatprep.subr.bf16.mxu0 %v8360
        %9504 = vmatpush1.bf16.msra.mxu0 %v8359
        %9505 = vmatprep.subr.bf16.mxu0 %v8363
        %9506 = vmatpush1.bf16.msra.mxu0 %v8362
        %9507 = vmatprep.subr.bf16.mxu0 %v8366
        %9508 = vmatpush1.bf16.msra.mxu0 %v8365
        %9509 = vmatprep.subr.bf16.mxu0 %v8369
        %9510 = vmatpush1.bf16.msra.mxu0 %v8368
        %9511 = vmatprep.mubr.bf16.mxu0 %v6587
        %9512 = vmatmul.mubr.bf16.gmra.mrb[0].mxu0 %v6586
        %v9513 = vpop.f32.mrb[0].mxu0
        %v9514 = vadd.f32 %v9321, %v9513
        %v9515 = vpop.f32.mrb[0].mxu0
        %v9516 = vadd.f32 %v9323, %v9515
        %v9517 = vpop.f32.mrb[0].mxu0
        %v9518 = vadd.f32 %v9325, %v9517
        %v9519 = vpop.f32.mrb[0].mxu0
        %v9520 = vadd.f32 %v9327, %v9519
        %9521 = vmatprep.mubr.bf16.mxu0 %v6599
        %9522 = vmatmul.mubr.bf16.gmra.mrb[0].mxu0 %v6598
        %v9523 = vpop.f32.mrb[0].mxu0
        %v9524 = vadd.f32 %v9331, %v9523
        %v9525 = vpop.f32.mrb[0].mxu0
        %v9526 = vadd.f32 %v9333, %v9525
        %v9527 = vpop.f32.mrb[0].mxu0
        %v9528 = vadd.f32 %v9335, %v9527
        %v9529 = vpop.f32.mrb[0].mxu0
        %v9530 = vadd.f32 %v9337, %v9529
        %9531 = vmatprep.mubr.bf16.mxu0 %v6611
        %9532 = vmatmul.mubr.bf16.gmra.mrb[0].mxu0 %v6610
        %v9533 = vpop.f32.mrb[0].mxu0
        %v9534 = vadd.f32 %v9341, %v9533
        %v9535 = vpop.f32.mrb[0].mxu0
        %v9536 = vadd.f32 %v9343, %v9535
        %v9537 = vpop.f32.mrb[0].mxu0
        %v9538 = vadd.f32 %v9345, %v9537
        %v9539 = vpop.f32.mrb[0].mxu0
        %v9540 = vadd.f32 %v9347, %v9539
        %9541 = vmatprep.mubr.bf16.mxu0 %v6623
        %9542 = vmatmul.mubr.bf16.gmra.mrb[0].mxu0 %v6622
        %v9543 = vpop.f32.mrb[0].mxu0
        %v9544 = vadd.f32 %v9351, %v9543
        %v9545 = vpop.f32.mrb[0].mxu0
        %v9546 = vadd.f32 %v9353, %v9545
        %v9547 = vpop.f32.mrb[0].mxu0
        %v9548 = vadd.f32 %v9355, %v9547
        %v9549 = vpop.f32.mrb[0].mxu0
        %v9550 = vadd.f32 %v9357, %v9549
        %9551 = vmatprep.mubr.bf16.mxu0 %v6635
        %9552 = vmatmul.mubr.bf16.gmra.mrb[0].mxu0 %v6634
        %v9553 = vpop.f32.mrb[0].mxu0
        %v9554 = vadd.f32 %v9361, %v9553
        %v9555 = vpop.f32.mrb[0].mxu0
        %v9556 = vadd.f32 %v9363, %v9555
        %v9557 = vpop.f32.mrb[0].mxu0
        %v9558 = vadd.f32 %v9365, %v9557
        %v9559 = vpop.f32.mrb[0].mxu0
        %v9560 = vadd.f32 %v9367, %v9559
        %9561 = vmatprep.mubr.bf16.mxu0 %v6647
        %9562 = vmatmul.mubr.bf16.gmra.mrb[0].mxu0 %v6646
        %v9563 = vpop.f32.mrb[0].mxu0
        %v9564 = vadd.f32 %v9371, %v9563
        %v9565 = vpop.f32.mrb[0].mxu0
        %v9566 = vadd.f32 %v9373, %v9565
        %v9567 = vpop.f32.mrb[0].mxu0
        %v9568 = vadd.f32 %v9375, %v9567
        %v9569 = vpop.f32.mrb[0].mxu0
        %v9570 = vadd.f32 %v9377, %v9569
        %9571 = vmatprep.mubr.bf16.mxu0 %v6659
        %9572 = vmatmul.mubr.bf16.gmra.mrb[0].mxu0 %v6658
        %v9573 = vpop.f32.mrb[0].mxu0
        %v9574 = vadd.f32 %v9381, %v9573
        %v9575 = vpop.f32.mrb[0].mxu0
        %v9576 = vadd.f32 %v9383, %v9575
        %v9577 = vpop.f32.mrb[0].mxu0
        %v9578 = vadd.f32 %v9385, %v9577
        %v9579 = vpop.f32.mrb[0].mxu0
        %v9580 = vadd.f32 %v9387, %v9579
        %9581 = vmatprep.mubr.bf16.mxu0 %v6671
        %9582 = vmatmul.mubr.bf16.gmra.mrb[0].mxu0 %v6670
        %v9583 = vpop.f32.mrb[0].mxu0
        %v9584 = vadd.f32 %v9391, %v9583
        %v9585 = vpop.f32.mrb[0].mxu0
        %v9586 = vadd.f32 %v9393, %v9585
        %v9587 = vpop.f32.mrb[0].mxu0
        %v9588 = vadd.f32 %v9395, %v9587
        %v9589 = vpop.f32.mrb[0].mxu0
        %v9590 = vadd.f32 %v9397, %v9589
        %9591 = vmatprep.mubr.bf16.mxu0 %v6683
        %9592 = vmatmul.mubr.bf16.gmra.mrb[0].mxu0 %v6682
        %v9593 = vpop.f32.mrb[0].mxu0
        %v9594 = vadd.f32 %v9401, %v9593
        %v9595 = vpop.f32.mrb[0].mxu0
        %v9596 = vadd.f32 %v9403, %v9595
        %v9597 = vpop.f32.mrb[0].mxu0
        %v9598 = vadd.f32 %v9405, %v9597
        %v9599 = vpop.f32.mrb[0].mxu0
        %v9600 = vadd.f32 %v9407, %v9599
        %9601 = vmatprep.mubr.bf16.mxu0 %v6695
        %9602 = vmatmul.mubr.bf16.gmra.mrb[0].mxu0 %v6694
        %v9603 = vpop.f32.mrb[0].mxu0
        %v9604 = vadd.f32 %v9411, %v9603
        %v9605 = vpop.f32.mrb[0].mxu0
        %v9606 = vadd.f32 %v9413, %v9605
        %v9607 = vpop.f32.mrb[0].mxu0
        %v9608 = vadd.f32 %v9415, %v9607
        %v9609 = vpop.f32.mrb[0].mxu0
        %v9610 = vadd.f32 %v9417, %v9609
        %9611 = vmatprep.mubr.bf16.mxu0 %v6707
        %9612 = vmatmul.mubr.bf16.gmra.mrb[0].mxu0 %v6706
        %v9613 = vpop.f32.mrb[0].mxu0
        %v9614 = vadd.f32 %v9421, %v9613
        %v9615 = vpop.f32.mrb[0].mxu0
        %v9616 = vadd.f32 %v9423, %v9615
        %v9617 = vpop.f32.mrb[0].mxu0
        %v9618 = vadd.f32 %v9425, %v9617
        %v9619 = vpop.f32.mrb[0].mxu0
        %v9620 = vadd.f32 %v9427, %v9619
        %9621 = vmatprep.mubr.bf16.mxu0 %v6719
        %9622 = vmatmul.mubr.bf16.gmra.mrb[0].mxu0 %v6718
        %v9623 = vpop.f32.mrb[0].mxu0
        %v9624 = vadd.f32 %v9431, %v9623
        %v9625 = vpop.f32.mrb[0].mxu0
        %v9626 = vadd.f32 %v9433, %v9625
        %v9627 = vpop.f32.mrb[0].mxu0
        %v9628 = vadd.f32 %v9435, %v9627
        %v9629 = vpop.f32.mrb[0].mxu0
        %v9630 = vadd.f32 %v9437, %v9629
        %9631 = vmatprep.mubr.bf16.mxu0 %v6731
        %9632 = vmatmul.mubr.bf16.gmra.mrb[0].mxu0 %v6730
        %v9633 = vpop.f32.mrb[0].mxu0
        %v9634 = vadd.f32 %v9441, %v9633
        %v9635 = vpop.f32.mrb[0].mxu0
        %v9636 = vadd.f32 %v9443, %v9635
        %v9637 = vpop.f32.mrb[0].mxu0
        %v9638 = vadd.f32 %v9445, %v9637
        %v9639 = vpop.f32.mrb[0].mxu0
        %v9640 = vadd.f32 %v9447, %v9639
        %9641 = vmatprep.mubr.bf16.mxu0 %v6743
        %9642 = vmatmul.mubr.bf16.gmra.mrb[0].mxu0 %v6742
        %v9643 = vpop.f32.mrb[0].mxu0
        %v9644 = vadd.f32 %v9451, %v9643
        %v9645 = vpop.f32.mrb[0].mxu0
        %v9646 = vadd.f32 %v9453, %v9645
        %v9647 = vpop.f32.mrb[0].mxu0
        %v9648 = vadd.f32 %v9455, %v9647
        %v9649 = vpop.f32.mrb[0].mxu0
        %v9650 = vadd.f32 %v9457, %v9649
        %9651 = vmatprep.mubr.bf16.mxu0 %v6755
        %9652 = vmatmul.mubr.bf16.gmra.mrb[0].mxu0 %v6754
        %v9653 = vpop.f32.mrb[0].mxu0
        %v9654 = vadd.f32 %v9461, %v9653
        %v9655 = vpop.f32.mrb[0].mxu0
        %v9656 = vadd.f32 %v9463, %v9655
        %v9657 = vpop.f32.mrb[0].mxu0
        %v9658 = vadd.f32 %v9465, %v9657
        %v9659 = vpop.f32.mrb[0].mxu0
        %v9660 = vadd.f32 %v9467, %v9659
        %9661 = vmatprep.mubr.bf16.mxu0 %v6767
        %9662 = vmatmul.mubr.bf16.gmra.mrb[0].mxu0 %v6766
        %v9663 = vpop.f32.mrb[0].mxu0
        %v9664 = vadd.f32 %v9471, %v9663
        %v9665 = vpop.f32.mrb[0].mxu0
        %v9666 = vadd.f32 %v9473, %v9665
        %v9667 = vpop.f32.mrb[0].mxu0
        %v9668 = vadd.f32 %v9475, %v9667
        %v9669 = vpop.f32.mrb[0].mxu0
        %v9670 = vadd.f32 %v9477, %v9669
        %9671 = vdwg.mxu0
        %9672 = vmatprep.subr.bf16.mxu0 %v8372
        %9673 = vmatpush1.bf16.msra.mxu0 %v8371
        %9674 = vmatprep.subr.bf16.mxu0 %v8375
        %9675 = vmatpush1.bf16.msra.mxu0 %v8374
        %9676 = vmatprep.subr.bf16.mxu0 %v8378
        %9677 = vmatpush1.bf16.msra.mxu0 %v8377
        %9678 = vmatprep.subr.bf16.mxu0 %v8381
        %9679 = vmatpush1.bf16.msra.mxu0 %v8380
        %9680 = vmatprep.subr.bf16.mxu0 %v8384
        %9681 = vmatpush1.bf16.msra.mxu0 %v8383
        %9682 = vmatprep.subr.bf16.mxu0 %v8387
        %9683 = vmatpush1.bf16.msra.mxu0 %v8386
        %9684 = vmatprep.subr.bf16.mxu0 %v8390
        %9685 = vmatpush1.bf16.msra.mxu0 %v8389
        %9686 = vmatprep.subr.bf16.mxu0 %v8393
        %9687 = vmatpush1.bf16.msra.mxu0 %v8392
        %9688 = vmatprep.subr.bf16.mxu0 %v8396
        %9689 = vmatpush1.bf16.msra.mxu0 %v8395
        %9690 = vmatprep.subr.bf16.mxu0 %v8399
        %9691 = vmatpush1.bf16.msra.mxu0 %v8398
        %9692 = vmatprep.subr.bf16.mxu0 %v8402
        %9693 = vmatpush1.bf16.msra.mxu0 %v8401
        %9694 = vmatprep.subr.bf16.mxu0 %v8405
        %9695 = vmatpush1.bf16.msra.mxu0 %v8404
        %9696 = vmatprep.subr.bf16.mxu0 %v8408
        %9697 = vmatpush1.bf16.msra.mxu0 %v8407
        %9698 = vmatprep.subr.bf16.mxu0 %v8411
        %9699 = vmatpush1.bf16.msra.mxu0 %v8410
        %9700 = vmatprep.subr.bf16.mxu0 %v8414
        %9701 = vmatpush1.bf16.msra.mxu0 %v8413
        %9702 = vmatprep.subr.bf16.mxu0 %v8417
        %9703 = vmatpush1.bf16.msra.mxu0 %v8416
        %9704 = vmatprep.mubr.bf16.mxu0 %v6589
        %9705 = vmatmul.mubr.bf16.gmra.mrb[0].mxu0 %v6588
        %v9706 = vpop.f32.mrb[0].mxu0
        %v9707 = vadd.f32 %v9514, %v9706
        %v9708 = vpop.f32.mrb[0].mxu0
        %v9709 = vadd.f32 %v9516, %v9708
        %v9710 = vpop.f32.mrb[0].mxu0
        %v9711 = vadd.f32 %v9518, %v9710
        %v9712 = vpop.f32.mrb[0].mxu0
        %v9713 = vadd.f32 %v9520, %v9712
        %9714 = vmatprep.mubr.bf16.mxu0 %v6601
        %9715 = vmatmul.mubr.bf16.gmra.mrb[0].mxu0 %v6600
        %v9716 = vpop.f32.mrb[0].mxu0
        %v9717 = vadd.f32 %v9524, %v9716
        %v9718 = vpop.f32.mrb[0].mxu0
        %v9719 = vadd.f32 %v9526, %v9718
        %v9720 = vpop.f32.mrb[0].mxu0
        %v9721 = vadd.f32 %v9528, %v9720
        %v9722 = vpop.f32.mrb[0].mxu0
        %v9723 = vadd.f32 %v9530, %v9722
        %9724 = vmatprep.mubr.bf16.mxu0 %v6613
        %9725 = vmatmul.mubr.bf16.gmra.mrb[0].mxu0 %v6612
        %v9726 = vpop.f32.mrb[0].mxu0
        %v9727 = vadd.f32 %v9534, %v9726
        %v9728 = vpop.f32.mrb[0].mxu0
        %v9729 = vadd.f32 %v9536, %v9728
        %v9730 = vpop.f32.mrb[0].mxu0
        %v9731 = vadd.f32 %v9538, %v9730
        %v9732 = vpop.f32.mrb[0].mxu0
        %v9733 = vadd.f32 %v9540, %v9732
        %9734 = vmatprep.mubr.bf16.mxu0 %v6625
        %9735 = vmatmul.mubr.bf16.gmra.mrb[0].mxu0 %v6624
        %v9736 = vpop.f32.mrb[0].mxu0
        %v9737 = vadd.f32 %v9544, %v9736
        %v9738 = vpop.f32.mrb[0].mxu0
        %v9739 = vadd.f32 %v9546, %v9738
        %v9740 = vpop.f32.mrb[0].mxu0
        %v9741 = vadd.f32 %v9548, %v9740
        %v9742 = vpop.f32.mrb[0].mxu0
        %v9743 = vadd.f32 %v9550, %v9742
        %9744 = vmatprep.mubr.bf16.mxu0 %v6637
        %9745 = vmatmul.mubr.bf16.gmra.mrb[0].mxu0 %v6636
        %v9746 = vpop.f32.mrb[0].mxu0
        %v9747 = vadd.f32 %v9554, %v9746
        %v9748 = vpop.f32.mrb[0].mxu0
        %v9749 = vadd.f32 %v9556, %v9748
        %v9750 = vpop.f32.mrb[0].mxu0
        %v9751 = vadd.f32 %v9558, %v9750
        %v9752 = vpop.f32.mrb[0].mxu0
        %v9753 = vadd.f32 %v9560, %v9752
        %9754 = vmatprep.mubr.bf16.mxu0 %v6649
        %9755 = vmatmul.mubr.bf16.gmra.mrb[0].mxu0 %v6648
        %v9756 = vpop.f32.mrb[0].mxu0
        %v9757 = vadd.f32 %v9564, %v9756
        %v9758 = vpop.f32.mrb[0].mxu0
        %v9759 = vadd.f32 %v9566, %v9758
        %v9760 = vpop.f32.mrb[0].mxu0
        %v9761 = vadd.f32 %v9568, %v9760
        %v9762 = vpop.f32.mrb[0].mxu0
        %v9763 = vadd.f32 %v9570, %v9762
        %9764 = vmatprep.mubr.bf16.mxu0 %v6661
        %9765 = vmatmul.mubr.bf16.gmra.mrb[0].mxu0 %v6660
        %v9766 = vpop.f32.mrb[0].mxu0
        %v9767 = vadd.f32 %v9574, %v9766
        %v9768 = vpop.f32.mrb[0].mxu0
        %v9769 = vadd.f32 %v9576, %v9768
        %v9770 = vpop.f32.mrb[0].mxu0
        %v9771 = vadd.f32 %v9578, %v9770
        %v9772 = vpop.f32.mrb[0].mxu0
        %v9773 = vadd.f32 %v9580, %v9772
        %9774 = vmatprep.mubr.bf16.mxu0 %v6673
        %9775 = vmatmul.mubr.bf16.gmra.mrb[0].mxu0 %v6672
        %v9776 = vpop.f32.mrb[0].mxu0
        %v9777 = vadd.f32 %v9584, %v9776
        %v9778 = vpop.f32.mrb[0].mxu0
        %v9779 = vadd.f32 %v9586, %v9778
        %v9780 = vpop.f32.mrb[0].mxu0
        %v9781 = vadd.f32 %v9588, %v9780
        %v9782 = vpop.f32.mrb[0].mxu0
        %v9783 = vadd.f32 %v9590, %v9782
        %9784 = vmatprep.mubr.bf16.mxu0 %v6685
        %9785 = vmatmul.mubr.bf16.gmra.mrb[0].mxu0 %v6684
        %v9786 = vpop.f32.mrb[0].mxu0
        %v9787 = vadd.f32 %v9594, %v9786
        %v9788 = vpop.f32.mrb[0].mxu0
        %v9789 = vadd.f32 %v9596, %v9788
        %v9790 = vpop.f32.mrb[0].mxu0
        %v9791 = vadd.f32 %v9598, %v9790
        %v9792 = vpop.f32.mrb[0].mxu0
        %v9793 = vadd.f32 %v9600, %v9792
        %9794 = vmatprep.mubr.bf16.mxu0 %v6697
        %9795 = vmatmul.mubr.bf16.gmra.mrb[0].mxu0 %v6696
        %v9796 = vpop.f32.mrb[0].mxu0
        %v9797 = vadd.f32 %v9604, %v9796
        %v9798 = vpop.f32.mrb[0].mxu0
        %v9799 = vadd.f32 %v9606, %v9798
        %v9800 = vpop.f32.mrb[0].mxu0
        %v9801 = vadd.f32 %v9608, %v9800
        %v9802 = vpop.f32.mrb[0].mxu0
        %v9803 = vadd.f32 %v9610, %v9802
        %9804 = vmatprep.mubr.bf16.mxu0 %v6709
        %9805 = vmatmul.mubr.bf16.gmra.mrb[0].mxu0 %v6708
        %v9806 = vpop.f32.mrb[0].mxu0
        %v9807 = vadd.f32 %v9614, %v9806
        %v9808 = vpop.f32.mrb[0].mxu0
        %v9809 = vadd.f32 %v9616, %v9808
        %v9810 = vpop.f32.mrb[0].mxu0
        %v9811 = vadd.f32 %v9618, %v9810
        %v9812 = vpop.f32.mrb[0].mxu0
        %v9813 = vadd.f32 %v9620, %v9812
        %9814 = vmatprep.mubr.bf16.mxu0 %v6721
        %9815 = vmatmul.mubr.bf16.gmra.mrb[0].mxu0 %v6720
        %v9816 = vpop.f32.mrb[0].mxu0
        %v9817 = vadd.f32 %v9624, %v9816
        %v9818 = vpop.f32.mrb[0].mxu0
        %v9819 = vadd.f32 %v9626, %v9818
        %v9820 = vpop.f32.mrb[0].mxu0
        %v9821 = vadd.f32 %v9628, %v9820
        %v9822 = vpop.f32.mrb[0].mxu0
        %v9823 = vadd.f32 %v9630, %v9822
        %9824 = vmatprep.mubr.bf16.mxu0 %v6733
        %9825 = vmatmul.mubr.bf16.gmra.mrb[0].mxu0 %v6732
        %v9826 = vpop.f32.mrb[0].mxu0
        %v9827 = vadd.f32 %v9634, %v9826
        %v9828 = vpop.f32.mrb[0].mxu0
        %v9829 = vadd.f32 %v9636, %v9828
        %v9830 = vpop.f32.mrb[0].mxu0
        %v9831 = vadd.f32 %v9638, %v9830
        %v9832 = vpop.f32.mrb[0].mxu0
        %v9833 = vadd.f32 %v9640, %v9832
        %9834 = vmatprep.mubr.bf16.mxu0 %v6745
        %9835 = vmatmul.mubr.bf16.gmra.mrb[0].mxu0 %v6744
        %v9836 = vpop.f32.mrb[0].mxu0
        %v9837 = vadd.f32 %v9644, %v9836
        %v9838 = vpop.f32.mrb[0].mxu0
        %v9839 = vadd.f32 %v9646, %v9838
        %v9840 = vpop.f32.mrb[0].mxu0
        %v9841 = vadd.f32 %v9648, %v9840
        %v9842 = vpop.f32.mrb[0].mxu0
        %v9843 = vadd.f32 %v9650, %v9842
        %9844 = vmatprep.mubr.bf16.mxu0 %v6757
        %9845 = vmatmul.mubr.bf16.gmra.mrb[0].mxu0 %v6756
        %v9846 = vpop.f32.mrb[0].mxu0
        %v9847 = vadd.f32 %v9654, %v9846
        %v9848 = vpop.f32.mrb[0].mxu0
        %v9849 = vadd.f32 %v9656, %v9848
        %v9850 = vpop.f32.mrb[0].mxu0
        %v9851 = vadd.f32 %v9658, %v9850
        %v9852 = vpop.f32.mrb[0].mxu0
        %v9853 = vadd.f32 %v9660, %v9852
        %9854 = vmatprep.mubr.bf16.mxu0 %v6769
        %9855 = vmatmul.mubr.bf16.gmra.mrb[0].mxu0 %v6768
        %v9856 = vpop.f32.mrb[0].mxu0
        %v9857 = vadd.f32 %v9664, %v9856
        %v9858 = vpop.f32.mrb[0].mxu0
        %v9859 = vadd.f32 %v9666, %v9858
        %v9860 = vpop.f32.mrb[0].mxu0
        %v9861 = vadd.f32 %v9668, %v9860
        %v9862 = vpop.f32.mrb[0].mxu0
        %v9863 = vadd.f32 %v9670, %v9862
        %9864 = vdwg.mxu0
        %9865 = vmatprep.subr.bf16.mxu0 0
        %9866 = vmatpush1.bf16.msra.mxu0 %v8133
        %9867 = vmatprep.subr.bf16.mxu0 0
        %9868 = vmatpush1.bf16.msra.mxu0 %v8136
        %9869 = vmatprep.subr.bf16.mxu0 0
        %9870 = vmatpush1.bf16.msra.mxu0 %v8139
        %9871 = vmatprep.subr.bf16.mxu0 0
        %9872 = vmatpush1.bf16.msra.mxu0 %v8142
        %9873 = vmatprep.subr.bf16.mxu0 0
        %9874 = vmatpush1.bf16.msra.mxu0 %v8145
        %9875 = vmatprep.subr.bf16.mxu0 0
        %9876 = vmatpush1.bf16.msra.mxu0 %v8148
        %9877 = vmatprep.subr.bf16.mxu0 0
        %9878 = vmatpush1.bf16.msra.mxu0 %v8151
        %9879 = vmatprep.subr.bf16.mxu0 0
        %9880 = vmatpush1.bf16.msra.mxu0 %v8154
        %9881 = vmatprep.subr.bf16.mxu0 0
        %9882 = vmatpush1.bf16.msra.mxu0 %v8157
        %9883 = vmatprep.subr.bf16.mxu0 0
        %9884 = vmatpush1.bf16.msra.mxu0 %v8160
        %9885 = vmatprep.subr.bf16.mxu0 0
        %9886 = vmatpush1.bf16.msra.mxu0 %v8163
        %9887 = vmatprep.subr.bf16.mxu0 0
        %9888 = vmatpush1.bf16.msra.mxu0 %v8166
        %9889 = vmatprep.subr.bf16.mxu0 0
        %9890 = vmatpush1.bf16.msra.mxu0 %v8169
        %9891 = vmatprep.subr.bf16.mxu0 0
        %9892 = vmatpush1.bf16.msra.mxu0 %v8172
        %9893 = vmatprep.subr.bf16.mxu0 0
        %9894 = vmatpush1.bf16.msra.mxu0 %v8175
        %9895 = vmatprep.subr.bf16.mxu0 0
        %9896 = vmatpush1.bf16.msra.mxu0 %v8178
        %9897 = vmatprep.mubr.bf16.mxu0 %v6579
        %9898 = vmatmul.mubr.bf16.gmra.mrb[0].mxu0 %v6578
        %v9899 = vpop.f32.mrb[0].mxu0
        %v9900 = vadd.f32 %v7167, %v9899
        %v9901 = vpop.f32.mrb[0].mxu0
        %v9902 = vpop.f32.mrb[0].mxu0
        %v9903 = vadd.f32 %v7167, %v9902
        %v9904 = vpop.f32.mrb[0].mxu0
        %9905 = vmatprep.mubr.bf16.mxu0 %v6591
        %9906 = vmatmul.mubr.bf16.gmra.mrb[0].mxu0 %v6590
        %v9907 = vpop.f32.mrb[0].mxu0
        %v9908 = vadd.f32 %v7167, %v9907
        %v9909 = vpop.f32.mrb[0].mxu0
        %v9910 = vpop.f32.mrb[0].mxu0
        %v9911 = vadd.f32 %v7167, %v9910
        %v9912 = vpop.f32.mrb[0].mxu0
        %9913 = vmatprep.mubr.bf16.mxu0 %v6603
        %9914 = vmatmul.mubr.bf16.gmra.mrb[0].mxu0 %v6602
        %v9915 = vpop.f32.mrb[0].mxu0
        %v9916 = vadd.f32 %v7167, %v9915
        %v9917 = vpop.f32.mrb[0].mxu0
        %v9918 = vpop.f32.mrb[0].mxu0
        %v9919 = vadd.f32 %v7167, %v9918
        %v9920 = vpop.f32.mrb[0].mxu0
        %9921 = vmatprep.mubr.bf16.mxu0 %v6615
        %9922 = vmatmul.mubr.bf16.gmra.mrb[0].mxu0 %v6614
        %v9923 = vpop.f32.mrb[0].mxu0
        %v9924 = vadd.f32 %v7167, %v9923
        %v9925 = vpop.f32.mrb[0].mxu0
        %v9926 = vpop.f32.mrb[0].mxu0
        %v9927 = vadd.f32 %v7167, %v9926
        %v9928 = vpop.f32.mrb[0].mxu0
        %9929 = vmatprep.mubr.bf16.mxu0 %v6627
        %9930 = vmatmul.mubr.bf16.gmra.mrb[0].mxu0 %v6626
        %v9931 = vpop.f32.mrb[0].mxu0
        %v9932 = vadd.f32 %v7167, %v9931
        %v9933 = vpop.f32.mrb[0].mxu0
        %v9934 = vpop.f32.mrb[0].mxu0
        %v9935 = vadd.f32 %v7167, %v9934
        %v9936 = vpop.f32.mrb[0].mxu0
        %9937 = vmatprep.mubr.bf16.mxu0 %v6639
        %9938 = vmatmul.mubr.bf16.gmra.mrb[0].mxu0 %v6638
        %v9939 = vpop.f32.mrb[0].mxu0
        %v9940 = vadd.f32 %v7167, %v9939
        %v9941 = vpop.f32.mrb[0].mxu0
        %v9942 = vpop.f32.mrb[0].mxu0
        %v9943 = vadd.f32 %v7167, %v9942
        %v9944 = vpop.f32.mrb[0].mxu0
        %9945 = vmatprep.mubr.bf16.mxu0 %v6651
        %9946 = vmatmul.mubr.bf16.gmra.mrb[0].mxu0 %v6650
        %v9947 = vpop.f32.mrb[0].mxu0
        %v9948 = vadd.f32 %v7167, %v9947
        %v9949 = vpop.f32.mrb[0].mxu0
        %v9950 = vpop.f32.mrb[0].mxu0
        %v9951 = vadd.f32 %v7167, %v9950
        %v9952 = vpop.f32.mrb[0].mxu0
        %9953 = vmatprep.mubr.bf16.mxu0 %v6663
        %9954 = vmatmul.mubr.bf16.gmra.mrb[0].mxu0 %v6662
        %v9955 = vpop.f32.mrb[0].mxu0
        %v9956 = vadd.f32 %v7167, %v9955
        %v9957 = vpop.f32.mrb[0].mxu0
        %v9958 = vpop.f32.mrb[0].mxu0
        %v9959 = vadd.f32 %v7167, %v9958
        %v9960 = vpop.f32.mrb[0].mxu0
        %9961 = vmatprep.mubr.bf16.mxu0 %v6675
        %9962 = vmatmul.mubr.bf16.gmra.mrb[0].mxu0 %v6674
        %v9963 = vpop.f32.mrb[0].mxu0
        %v9964 = vadd.f32 %v7167, %v9963
        %v9965 = vpop.f32.mrb[0].mxu0
        %v9966 = vpop.f32.mrb[0].mxu0
        %v9967 = vadd.f32 %v7167, %v9966
        %v9968 = vpop.f32.mrb[0].mxu0
        %9969 = vmatprep.mubr.bf16.mxu0 %v6687
        %9970 = vmatmul.mubr.bf16.gmra.mrb[0].mxu0 %v6686
        %v9971 = vpop.f32.mrb[0].mxu0
        %v9972 = vadd.f32 %v7167, %v9971
        %v9973 = vpop.f32.mrb[0].mxu0
        %v9974 = vpop.f32.mrb[0].mxu0
        %v9975 = vadd.f32 %v7167, %v9974
        %v9976 = vpop.f32.mrb[0].mxu0
        %9977 = vmatprep.mubr.bf16.mxu0 %v6699
        %9978 = vmatmul.mubr.bf16.gmra.mrb[0].mxu0 %v6698
        %v9979 = vpop.f32.mrb[0].mxu0
        %v9980 = vadd.f32 %v7167, %v9979
        %v9981 = vpop.f32.mrb[0].mxu0
        %v9982 = vpop.f32.mrb[0].mxu0
        %v9983 = vadd.f32 %v7167, %v9982
        %v9984 = vpop.f32.mrb[0].mxu0
        %9985 = vmatprep.mubr.bf16.mxu0 %v6711
        %9986 = vmatmul.mubr.bf16.gmra.mrb[0].mxu0 %v6710
        %v9987 = vpop.f32.mrb[0].mxu0
        %v9988 = vadd.f32 %v7167, %v9987
        %v9989 = vpop.f32.mrb[0].mxu0
        %v9990 = vpop.f32.mrb[0].mxu0
        %v9991 = vadd.f32 %v7167, %v9990
        %v9992 = vpop.f32.mrb[0].mxu0
        %9993 = vmatprep.mubr.bf16.mxu0 %v6723
        %9994 = vmatmul.mubr.bf16.gmra.mrb[0].mxu0 %v6722
        %v9995 = vpop.f32.mrb[0].mxu0
        %v9996 = vadd.f32 %v7167, %v9995
        %v9997 = vpop.f32.mrb[0].mxu0
        %v9998 = vpop.f32.mrb[0].mxu0
        %v9999 = vadd.f32 %v7167, %v9998
        %v10000 = vpop.f32.mrb[0].mxu0
        %10001 = vmatprep.mubr.bf16.mxu0 %v6735
        %10002 = vmatmul.mubr.bf16.gmra.mrb[0].mxu0 %v6734
        %v10003 = vpop.f32.mrb[0].mxu0
        %v10004 = vadd.f32 %v7167, %v10003
        %v10005 = vpop.f32.mrb[0].mxu0
        %v10006 = vpop.f32.mrb[0].mxu0
        %v10007 = vadd.f32 %v7167, %v10006
        %v10008 = vpop.f32.mrb[0].mxu0
        %10009 = vmatprep.mubr.bf16.mxu0 %v6747
        %10010 = vmatmul.mubr.bf16.gmra.mrb[0].mxu0 %v6746
        %v10011 = vpop.f32.mrb[0].mxu0
        %v10012 = vadd.f32 %v7167, %v10011
        %v10013 = vpop.f32.mrb[0].mxu0
        %v10014 = vpop.f32.mrb[0].mxu0
        %v10015 = vadd.f32 %v7167, %v10014
        %v10016 = vpop.f32.mrb[0].mxu0
        %10017 = vmatprep.mubr.bf16.mxu0 %v6759
        %10018 = vmatmul.mubr.bf16.gmra.mrb[0].mxu0 %v6758
        %v10019 = vpop.f32.mrb[0].mxu0
        %v10020 = vadd.f32 %v7167, %v10019
        %v10021 = vpop.f32.mrb[0].mxu0
        %v10022 = vpop.f32.mrb[0].mxu0
        %v10023 = vadd.f32 %v7167, %v10022
        %v10024 = vpop.f32.mrb[0].mxu0
        %10025 = vdwg.mxu0
        %10026 = vmatprep.subr.bf16.mxu0 0
        %10027 = vmatpush1.bf16.msra.mxu0 %v8181
        %10028 = vmatprep.subr.bf16.mxu0 0
        %10029 = vmatpush1.bf16.msra.mxu0 %v8184
        %10030 = vmatprep.subr.bf16.mxu0 0
        %10031 = vmatpush1.bf16.msra.mxu0 %v8187
        %10032 = vmatprep.subr.bf16.mxu0 0
        %10033 = vmatpush1.bf16.msra.mxu0 %v8190
        %10034 = vmatprep.subr.bf16.mxu0 0
        %10035 = vmatpush1.bf16.msra.mxu0 %v8193
        %10036 = vmatprep.subr.bf16.mxu0 0
        %10037 = vmatpush1.bf16.msra.mxu0 %v8196
        %10038 = vmatprep.subr.bf16.mxu0 0
        %10039 = vmatpush1.bf16.msra.mxu0 %v8199
        %10040 = vmatprep.subr.bf16.mxu0 0
        %10041 = vmatpush1.bf16.msra.mxu0 %v8202
        %10042 = vmatprep.subr.bf16.mxu0 0
        %10043 = vmatpush1.bf16.msra.mxu0 %v8205
        %10044 = vmatprep.subr.bf16.mxu0 0
        %10045 = vmatpush1.bf16.msra.mxu0 %v8208
        %10046 = vmatprep.subr.bf16.mxu0 0
        %10047 = vmatpush1.bf16.msra.mxu0 %v8211
        %10048 = vmatprep.subr.bf16.mxu0 0
        %10049 = vmatpush1.bf16.msra.mxu0 %v8214
        %10050 = vmatprep.subr.bf16.mxu0 0
        %10051 = vmatpush1.bf16.msra.mxu0 %v8217
        %10052 = vmatprep.subr.bf16.mxu0 0
        %10053 = vmatpush1.bf16.msra.mxu0 %v8220
        %10054 = vmatprep.subr.bf16.mxu0 0
        %10055 = vmatpush1.bf16.msra.mxu0 %v8223
        %10056 = vmatprep.subr.bf16.mxu0 0
        %10057 = vmatpush1.bf16.msra.mxu0 %v8226
        %10058 = vmatprep.mubr.bf16.mxu0 %v6581
        %10059 = vmatmul.mubr.bf16.gmra.mrb[0].mxu0 %v6580
        %v10060 = vpop.f32.mrb[0].mxu0
        %v10061 = vadd.f32 %v9900, %v10060
        %v10062 = vpop.f32.mrb[0].mxu0
        %v10063 = vpop.f32.mrb[0].mxu0
        %v10064 = vadd.f32 %v9903, %v10063
        %v10065 = vpop.f32.mrb[0].mxu0
        %10066 = vmatprep.mubr.bf16.mxu0 %v6593
        %10067 = vmatmul.mubr.bf16.gmra.mrb[0].mxu0 %v6592
        %v10068 = vpop.f32.mrb[0].mxu0
        %v10069 = vadd.f32 %v9908, %v10068
        %v10070 = vpop.f32.mrb[0].mxu0
        %v10071 = vpop.f32.mrb[0].mxu0
        %v10072 = vadd.f32 %v9911, %v10071
        %v10073 = vpop.f32.mrb[0].mxu0
        %10074 = vmatprep.mubr.bf16.mxu0 %v6605
        %10075 = vmatmul.mubr.bf16.gmra.mrb[0].mxu0 %v6604
        %v10076 = vpop.f32.mrb[0].mxu0
        %v10077 = vadd.f32 %v9916, %v10076
        %v10078 = vpop.f32.mrb[0].mxu0
        %v10079 = vpop.f32.mrb[0].mxu0
        %v10080 = vadd.f32 %v9919, %v10079
        %v10081 = vpop.f32.mrb[0].mxu0
        %10082 = vmatprep.mubr.bf16.mxu0 %v6617
        %10083 = vmatmul.mubr.bf16.gmra.mrb[0].mxu0 %v6616
        %v10084 = vpop.f32.mrb[0].mxu0
        %v10085 = vadd.f32 %v9924, %v10084
        %v10086 = vpop.f32.mrb[0].mxu0
        %v10087 = vpop.f32.mrb[0].mxu0
        %v10088 = vadd.f32 %v9927, %v10087
        %v10089 = vpop.f32.mrb[0].mxu0
        %10090 = vmatprep.mubr.bf16.mxu0 %v6629
        %10091 = vmatmul.mubr.bf16.gmra.mrb[0].mxu0 %v6628
        %v10092 = vpop.f32.mrb[0].mxu0
        %v10093 = vadd.f32 %v9932, %v10092
        %v10094 = vpop.f32.mrb[0].mxu0
        %v10095 = vpop.f32.mrb[0].mxu0
        %v10096 = vadd.f32 %v9935, %v10095
        %v10097 = vpop.f32.mrb[0].mxu0
        %10098 = vmatprep.mubr.bf16.mxu0 %v6641
        %10099 = vmatmul.mubr.bf16.gmra.mrb[0].mxu0 %v6640
        %v10100 = vpop.f32.mrb[0].mxu0
        %v10101 = vadd.f32 %v9940, %v10100
        %v10102 = vpop.f32.mrb[0].mxu0
        %v10103 = vpop.f32.mrb[0].mxu0
        %v10104 = vadd.f32 %v9943, %v10103
        %v10105 = vpop.f32.mrb[0].mxu0
        %10106 = vmatprep.mubr.bf16.mxu0 %v6653
        %10107 = vmatmul.mubr.bf16.gmra.mrb[0].mxu0 %v6652
        %v10108 = vpop.f32.mrb[0].mxu0
        %v10109 = vadd.f32 %v9948, %v10108
        %v10110 = vpop.f32.mrb[0].mxu0
        %v10111 = vpop.f32.mrb[0].mxu0
        %v10112 = vadd.f32 %v9951, %v10111
        %v10113 = vpop.f32.mrb[0].mxu0
        %10114 = vmatprep.mubr.bf16.mxu0 %v6665
        %10115 = vmatmul.mubr.bf16.gmra.mrb[0].mxu0 %v6664
        %v10116 = vpop.f32.mrb[0].mxu0
        %v10117 = vadd.f32 %v9956, %v10116
        %v10118 = vpop.f32.mrb[0].mxu0
        %v10119 = vpop.f32.mrb[0].mxu0
        %v10120 = vadd.f32 %v9959, %v10119
        %v10121 = vpop.f32.mrb[0].mxu0
        %10122 = vmatprep.mubr.bf16.mxu0 %v6677
        %10123 = vmatmul.mubr.bf16.gmra.mrb[0].mxu0 %v6676
        %v10124 = vpop.f32.mrb[0].mxu0
        %v10125 = vadd.f32 %v9964, %v10124
        %v10126 = vpop.f32.mrb[0].mxu0
        %v10127 = vpop.f32.mrb[0].mxu0
        %v10128 = vadd.f32 %v9967, %v10127
        %v10129 = vpop.f32.mrb[0].mxu0
        %10130 = vmatprep.mubr.bf16.mxu0 %v6689
        %10131 = vmatmul.mubr.bf16.gmra.mrb[0].mxu0 %v6688
        %v10132 = vpop.f32.mrb[0].mxu0
        %v10133 = vadd.f32 %v9972, %v10132
        %v10134 = vpop.f32.mrb[0].mxu0
        %v10135 = vpop.f32.mrb[0].mxu0
        %v10136 = vadd.f32 %v9975, %v10135
        %v10137 = vpop.f32.mrb[0].mxu0
        %10138 = vmatprep.mubr.bf16.mxu0 %v6701
        %10139 = vmatmul.mubr.bf16.gmra.mrb[0].mxu0 %v6700
        %v10140 = vpop.f32.mrb[0].mxu0
        %v10141 = vadd.f32 %v9980, %v10140
        %v10142 = vpop.f32.mrb[0].mxu0
        %v10143 = vpop.f32.mrb[0].mxu0
        %v10144 = vadd.f32 %v9983, %v10143
        %v10145 = vpop.f32.mrb[0].mxu0
        %10146 = vmatprep.mubr.bf16.mxu0 %v6713
        %10147 = vmatmul.mubr.bf16.gmra.mrb[0].mxu0 %v6712
        %v10148 = vpop.f32.mrb[0].mxu0
        %v10149 = vadd.f32 %v9988, %v10148
        %v10150 = vpop.f32.mrb[0].mxu0
        %v10151 = vpop.f32.mrb[0].mxu0
        %v10152 = vadd.f32 %v9991, %v10151
        %v10153 = vpop.f32.mrb[0].mxu0
        %10154 = vmatprep.mubr.bf16.mxu0 %v6725
        %10155 = vmatmul.mubr.bf16.gmra.mrb[0].mxu0 %v6724
        %v10156 = vpop.f32.mrb[0].mxu0
        %v10157 = vadd.f32 %v9996, %v10156
        %v10158 = vpop.f32.mrb[0].mxu0
        %v10159 = vpop.f32.mrb[0].mxu0
        %v10160 = vadd.f32 %v9999, %v10159
        %v10161 = vpop.f32.mrb[0].mxu0
        %10162 = vmatprep.mubr.bf16.mxu0 %v6737
        %10163 = vmatmul.mubr.bf16.gmra.mrb[0].mxu0 %v6736
        %v10164 = vpop.f32.mrb[0].mxu0
        %v10165 = vadd.f32 %v10004, %v10164
        %v10166 = vpop.f32.mrb[0].mxu0
        %v10167 = vpop.f32.mrb[0].mxu0
        %v10168 = vadd.f32 %v10007, %v10167
        %v10169 = vpop.f32.mrb[0].mxu0
        %10170 = vmatprep.mubr.bf16.mxu0 %v6749
        %10171 = vmatmul.mubr.bf16.gmra.mrb[0].mxu0 %v6748
        %v10172 = vpop.f32.mrb[0].mxu0
        %v10173 = vadd.f32 %v10012, %v10172
        %v10174 = vpop.f32.mrb[0].mxu0
        %v10175 = vpop.f32.mrb[0].mxu0
        %v10176 = vadd.f32 %v10015, %v10175
        %v10177 = vpop.f32.mrb[0].mxu0
        %10178 = vmatprep.mubr.bf16.mxu0 %v6761
        %10179 = vmatmul.mubr.bf16.gmra.mrb[0].mxu0 %v6760
        %v10180 = vpop.f32.mrb[0].mxu0
        %v10181 = vadd.f32 %v10020, %v10180
        %v10182 = vpop.f32.mrb[0].mxu0
        %v10183 = vpop.f32.mrb[0].mxu0
        %v10184 = vadd.f32 %v10023, %v10183
        %v10185 = vpop.f32.mrb[0].mxu0
        %10186 = vdwg.mxu0
        %10187 = vmatprep.subr.bf16.mxu0 0
        %10188 = vmatpush1.bf16.msra.mxu0 %v8229
        %10189 = vmatprep.subr.bf16.mxu0 0
        %10190 = vmatpush1.bf16.msra.mxu0 %v8232
        %10191 = vmatprep.subr.bf16.mxu0 0
        %10192 = vmatpush1.bf16.msra.mxu0 %v8235
        %10193 = vmatprep.subr.bf16.mxu0 0
        %10194 = vmatpush1.bf16.msra.mxu0 %v8238
        %10195 = vmatprep.subr.bf16.mxu0 0
        %10196 = vmatpush1.bf16.msra.mxu0 %v8241
        %10197 = vmatprep.subr.bf16.mxu0 0
        %10198 = vmatpush1.bf16.msra.mxu0 %v8244
        %10199 = vmatprep.subr.bf16.mxu0 0
        %10200 = vmatpush1.bf16.msra.mxu0 %v8247
        %10201 = vmatprep.subr.bf16.mxu0 0
        %10202 = vmatpush1.bf16.msra.mxu0 %v8250
        %10203 = vmatprep.subr.bf16.mxu0 0
        %10204 = vmatpush1.bf16.msra.mxu0 %v8253
        %10205 = vmatprep.subr.bf16.mxu0 0
        %10206 = vmatpush1.bf16.msra.mxu0 %v8256
        %10207 = vmatprep.subr.bf16.mxu0 0
        %10208 = vmatpush1.bf16.msra.mxu0 %v8259
        %10209 = vmatprep.subr.bf16.mxu0 0
        %10210 = vmatpush1.bf16.msra.mxu0 %v8262
        %10211 = vmatprep.subr.bf16.mxu0 0
        %10212 = vmatpush1.bf16.msra.mxu0 %v8265
        %10213 = vmatprep.subr.bf16.mxu0 0
        %10214 = vmatpush1.bf16.msra.mxu0 %v8268
        %10215 = vmatprep.subr.bf16.mxu0 0
        %10216 = vmatpush1.bf16.msra.mxu0 %v8271
        %10217 = vmatprep.subr.bf16.mxu0 0
        %10218 = vmatpush1.bf16.msra.mxu0 %v8274
        %10219 = vmatprep.mubr.bf16.mxu0 %v6583
        %10220 = vmatmul.mubr.bf16.gmra.mrb[0].mxu0 %v6582
        %v10221 = vpop.f32.mrb[0].mxu0
        %v10222 = vadd.f32 %v10061, %v10221
        %v10223 = vpop.f32.mrb[0].mxu0
        %v10224 = vpop.f32.mrb[0].mxu0
        %v10225 = vadd.f32 %v10064, %v10224
        %v10226 = vpop.f32.mrb[0].mxu0
        %10227 = vmatprep.mubr.bf16.mxu0 %v6595
        %10228 = vmatmul.mubr.bf16.gmra.mrb[0].mxu0 %v6594
        %v10229 = vpop.f32.mrb[0].mxu0
        %v10230 = vadd.f32 %v10069, %v10229
        %v10231 = vpop.f32.mrb[0].mxu0
        %v10232 = vpop.f32.mrb[0].mxu0
        %v10233 = vadd.f32 %v10072, %v10232
        %v10234 = vpop.f32.mrb[0].mxu0
        %10235 = vmatprep.mubr.bf16.mxu0 %v6607
        %10236 = vmatmul.mubr.bf16.gmra.mrb[0].mxu0 %v6606
        %v10237 = vpop.f32.mrb[0].mxu0
        %v10238 = vadd.f32 %v10077, %v10237
        %v10239 = vpop.f32.mrb[0].mxu0
        %v10240 = vpop.f32.mrb[0].mxu0
        %v10241 = vadd.f32 %v10080, %v10240
        %v10242 = vpop.f32.mrb[0].mxu0
        %10243 = vmatprep.mubr.bf16.mxu0 %v6619
        %10244 = vmatmul.mubr.bf16.gmra.mrb[0].mxu0 %v6618
        %v10245 = vpop.f32.mrb[0].mxu0
        %v10246 = vadd.f32 %v10085, %v10245
        %v10247 = vpop.f32.mrb[0].mxu0
        %v10248 = vpop.f32.mrb[0].mxu0
        %v10249 = vadd.f32 %v10088, %v10248
        %v10250 = vpop.f32.mrb[0].mxu0
        %10251 = vmatprep.mubr.bf16.mxu0 %v6631
        %10252 = vmatmul.mubr.bf16.gmra.mrb[0].mxu0 %v6630
        %v10253 = vpop.f32.mrb[0].mxu0
        %v10254 = vadd.f32 %v10093, %v10253
        %v10255 = vpop.f32.mrb[0].mxu0
        %v10256 = vpop.f32.mrb[0].mxu0
        %v10257 = vadd.f32 %v10096, %v10256
        %v10258 = vpop.f32.mrb[0].mxu0
        %10259 = vmatprep.mubr.bf16.mxu0 %v6643
        %10260 = vmatmul.mubr.bf16.gmra.mrb[0].mxu0 %v6642
        %v10261 = vpop.f32.mrb[0].mxu0
        %v10262 = vadd.f32 %v10101, %v10261
        %v10263 = vpop.f32.mrb[0].mxu0
        %v10264 = vpop.f32.mrb[0].mxu0
        %v10265 = vadd.f32 %v10104, %v10264
        %v10266 = vpop.f32.mrb[0].mxu0
        %10267 = vmatprep.mubr.bf16.mxu0 %v6655
        %10268 = vmatmul.mubr.bf16.gmra.mrb[0].mxu0 %v6654
        %v10269 = vpop.f32.mrb[0].mxu0
        %v10270 = vadd.f32 %v10109, %v10269
        %v10271 = vpop.f32.mrb[0].mxu0
        %v10272 = vpop.f32.mrb[0].mxu0
        %v10273 = vadd.f32 %v10112, %v10272
        %v10274 = vpop.f32.mrb[0].mxu0
        %10275 = vmatprep.mubr.bf16.mxu0 %v6667
        %10276 = vmatmul.mubr.bf16.gmra.mrb[0].mxu0 %v6666
        %v10277 = vpop.f32.mrb[0].mxu0
        %v10278 = vadd.f32 %v10117, %v10277
        %v10279 = vpop.f32.mrb[0].mxu0
        %v10280 = vpop.f32.mrb[0].mxu0
        %v10281 = vadd.f32 %v10120, %v10280
        %v10282 = vpop.f32.mrb[0].mxu0
        %10283 = vmatprep.mubr.bf16.mxu0 %v6679
        %10284 = vmatmul.mubr.bf16.gmra.mrb[0].mxu0 %v6678
        %v10285 = vpop.f32.mrb[0].mxu0
        %v10286 = vadd.f32 %v10125, %v10285
        %v10287 = vpop.f32.mrb[0].mxu0
        %v10288 = vpop.f32.mrb[0].mxu0
        %v10289 = vadd.f32 %v10128, %v10288
        %v10290 = vpop.f32.mrb[0].mxu0
        %10291 = vmatprep.mubr.bf16.mxu0 %v6691
        %10292 = vmatmul.mubr.bf16.gmra.mrb[0].mxu0 %v6690
        %v10293 = vpop.f32.mrb[0].mxu0
        %v10294 = vadd.f32 %v10133, %v10293
        %v10295 = vpop.f32.mrb[0].mxu0
        %v10296 = vpop.f32.mrb[0].mxu0
        %v10297 = vadd.f32 %v10136, %v10296
        %v10298 = vpop.f32.mrb[0].mxu0
        %10299 = vmatprep.mubr.bf16.mxu0 %v6703
        %10300 = vmatmul.mubr.bf16.gmra.mrb[0].mxu0 %v6702
        %v10301 = vpop.f32.mrb[0].mxu0
        %v10302 = vadd.f32 %v10141, %v10301
        %v10303 = vpop.f32.mrb[0].mxu0
        %v10304 = vpop.f32.mrb[0].mxu0
        %v10305 = vadd.f32 %v10144, %v10304
        %v10306 = vpop.f32.mrb[0].mxu0
        %10307 = vmatprep.mubr.bf16.mxu0 %v6715
        %10308 = vmatmul.mubr.bf16.gmra.mrb[0].mxu0 %v6714
        %v10309 = vpop.f32.mrb[0].mxu0
        %v10310 = vadd.f32 %v10149, %v10309
        %v10311 = vpop.f32.mrb[0].mxu0
        %v10312 = vpop.f32.mrb[0].mxu0
        %v10313 = vadd.f32 %v10152, %v10312
        %v10314 = vpop.f32.mrb[0].mxu0
        %10315 = vmatprep.mubr.bf16.mxu0 %v6727
        %10316 = vmatmul.mubr.bf16.gmra.mrb[0].mxu0 %v6726
        %v10317 = vpop.f32.mrb[0].mxu0
        %v10318 = vadd.f32 %v10157, %v10317
        %v10319 = vpop.f32.mrb[0].mxu0
        %v10320 = vpop.f32.mrb[0].mxu0
        %v10321 = vadd.f32 %v10160, %v10320
        %v10322 = vpop.f32.mrb[0].mxu0
        %10323 = vmatprep.mubr.bf16.mxu0 %v6739
        %10324 = vmatmul.mubr.bf16.gmra.mrb[0].mxu0 %v6738
        %v10325 = vpop.f32.mrb[0].mxu0
        %v10326 = vadd.f32 %v10165, %v10325
        %v10327 = vpop.f32.mrb[0].mxu0
        %v10328 = vpop.f32.mrb[0].mxu0
        %v10329 = vadd.f32 %v10168, %v10328
        %v10330 = vpop.f32.mrb[0].mxu0
        %10331 = vmatprep.mubr.bf16.mxu0 %v6751
        %10332 = vmatmul.mubr.bf16.gmra.mrb[0].mxu0 %v6750
        %v10333 = vpop.f32.mrb[0].mxu0
        %v10334 = vadd.f32 %v10173, %v10333
        %v10335 = vpop.f32.mrb[0].mxu0
        %v10336 = vpop.f32.mrb[0].mxu0
        %v10337 = vadd.f32 %v10176, %v10336
        %v10338 = vpop.f32.mrb[0].mxu0
        %10339 = vmatprep.mubr.bf16.mxu0 %v6763
        %10340 = vmatmul.mubr.bf16.gmra.mrb[0].mxu0 %v6762
        %v10341 = vpop.f32.mrb[0].mxu0
        %v10342 = vadd.f32 %v10181, %v10341
        %v10343 = vpop.f32.mrb[0].mxu0
        %v10344 = vpop.f32.mrb[0].mxu0
        %v10345 = vadd.f32 %v10184, %v10344
        %v10346 = vpop.f32.mrb[0].mxu0
        %10347 = vdwg.mxu0
        %10348 = vmatprep.subr.bf16.mxu0 0
        %10349 = vmatpush1.bf16.msra.mxu0 %v8277
        %10350 = vmatprep.subr.bf16.mxu0 0
        %10351 = vmatpush1.bf16.msra.mxu0 %v8280
        %10352 = vmatprep.subr.bf16.mxu0 0
        %10353 = vmatpush1.bf16.msra.mxu0 %v8283
        %10354 = vmatprep.subr.bf16.mxu0 0
        %10355 = vmatpush1.bf16.msra.mxu0 %v8286
        %10356 = vmatprep.subr.bf16.mxu0 0
        %10357 = vmatpush1.bf16.msra.mxu0 %v8289
        %10358 = vmatprep.subr.bf16.mxu0 0
        %10359 = vmatpush1.bf16.msra.mxu0 %v8292
        %10360 = vmatprep.subr.bf16.mxu0 0
        %10361 = vmatpush1.bf16.msra.mxu0 %v8295
        %10362 = vmatprep.subr.bf16.mxu0 0
        %10363 = vmatpush1.bf16.msra.mxu0 %v8298
        %10364 = vmatprep.subr.bf16.mxu0 0
        %10365 = vmatpush1.bf16.msra.mxu0 %v8301
        %10366 = vmatprep.subr.bf16.mxu0 0
        %10367 = vmatpush1.bf16.msra.mxu0 %v8304
        %10368 = vmatprep.subr.bf16.mxu0 0
        %10369 = vmatpush1.bf16.msra.mxu0 %v8307
        %10370 = vmatprep.subr.bf16.mxu0 0
        %10371 = vmatpush1.bf16.msra.mxu0 %v8310
        %10372 = vmatprep.subr.bf16.mxu0 0
        %10373 = vmatpush1.bf16.msra.mxu0 %v8313
        %10374 = vmatprep.subr.bf16.mxu0 0
        %10375 = vmatpush1.bf16.msra.mxu0 %v8316
        %10376 = vmatprep.subr.bf16.mxu0 0
        %10377 = vmatpush1.bf16.msra.mxu0 %v8319
        %10378 = vmatprep.subr.bf16.mxu0 0
        %10379 = vmatpush1.bf16.msra.mxu0 %v8322
        %10380 = vmatprep.mubr.bf16.mxu0 %v6585
        %10381 = vmatmul.mubr.bf16.gmra.mrb[0].mxu0 %v6584
        %v10382 = vpop.f32.mrb[0].mxu0
        %v10383 = vadd.f32 %v10222, %v10382
        %v10384 = vpop.f32.mrb[0].mxu0
        %v10385 = vpop.f32.mrb[0].mxu0
        %v10386 = vadd.f32 %v10225, %v10385
        %v10387 = vpop.f32.mrb[0].mxu0
        %10388 = vmatprep.mubr.bf16.mxu0 %v6597
        %10389 = vmatmul.mubr.bf16.gmra.mrb[0].mxu0 %v6596
        %v10390 = vpop.f32.mrb[0].mxu0
        %v10391 = vadd.f32 %v10230, %v10390
        %v10392 = vpop.f32.mrb[0].mxu0
        %v10393 = vpop.f32.mrb[0].mxu0
        %v10394 = vadd.f32 %v10233, %v10393
        %v10395 = vpop.f32.mrb[0].mxu0
        %10396 = vmatprep.mubr.bf16.mxu0 %v6609
        %10397 = vmatmul.mubr.bf16.gmra.mrb[0].mxu0 %v6608
        %v10398 = vpop.f32.mrb[0].mxu0
        %v10399 = vadd.f32 %v10238, %v10398
        %v10400 = vpop.f32.mrb[0].mxu0
        %v10401 = vpop.f32.mrb[0].mxu0
        %v10402 = vadd.f32 %v10241, %v10401
        %v10403 = vpop.f32.mrb[0].mxu0
        %10404 = vmatprep.mubr.bf16.mxu0 %v6621
        %10405 = vmatmul.mubr.bf16.gmra.mrb[0].mxu0 %v6620
        %v10406 = vpop.f32.mrb[0].mxu0
        %v10407 = vadd.f32 %v10246, %v10406
        %v10408 = vpop.f32.mrb[0].mxu0
        %v10409 = vpop.f32.mrb[0].mxu0
        %v10410 = vadd.f32 %v10249, %v10409
        %v10411 = vpop.f32.mrb[0].mxu0
        %10412 = vmatprep.mubr.bf16.mxu0 %v6633
        %10413 = vmatmul.mubr.bf16.gmra.mrb[0].mxu0 %v6632
        %v10414 = vpop.f32.mrb[0].mxu0
        %v10415 = vadd.f32 %v10254, %v10414
        %v10416 = vpop.f32.mrb[0].mxu0
        %v10417 = vpop.f32.mrb[0].mxu0
        %v10418 = vadd.f32 %v10257, %v10417
        %v10419 = vpop.f32.mrb[0].mxu0
        %10420 = vmatprep.mubr.bf16.mxu0 %v6645
        %10421 = vmatmul.mubr.bf16.gmra.mrb[0].mxu0 %v6644
        %v10422 = vpop.f32.mrb[0].mxu0
        %v10423 = vadd.f32 %v10262, %v10422
        %v10424 = vpop.f32.mrb[0].mxu0
        %v10425 = vpop.f32.mrb[0].mxu0
        %v10426 = vadd.f32 %v10265, %v10425
        %v10427 = vpop.f32.mrb[0].mxu0
        %10428 = vmatprep.mubr.bf16.mxu0 %v6657
        %10429 = vmatmul.mubr.bf16.gmra.mrb[0].mxu0 %v6656
        %v10430 = vpop.f32.mrb[0].mxu0
        %v10431 = vadd.f32 %v10270, %v10430
        %v10432 = vpop.f32.mrb[0].mxu0
        %v10433 = vpop.f32.mrb[0].mxu0
        %v10434 = vadd.f32 %v10273, %v10433
        %v10435 = vpop.f32.mrb[0].mxu0
        %10436 = vmatprep.mubr.bf16.mxu0 %v6669
        %10437 = vmatmul.mubr.bf16.gmra.mrb[0].mxu0 %v6668
        %v10438 = vpop.f32.mrb[0].mxu0
        %v10439 = vadd.f32 %v10278, %v10438
        %v10440 = vpop.f32.mrb[0].mxu0
        %v10441 = vpop.f32.mrb[0].mxu0
        %v10442 = vadd.f32 %v10281, %v10441
        %v10443 = vpop.f32.mrb[0].mxu0
        %10444 = vmatprep.mubr.bf16.mxu0 %v6681
        %10445 = vmatmul.mubr.bf16.gmra.mrb[0].mxu0 %v6680
        %v10446 = vpop.f32.mrb[0].mxu0
        %v10447 = vadd.f32 %v10286, %v10446
        %v10448 = vpop.f32.mrb[0].mxu0
        %v10449 = vpop.f32.mrb[0].mxu0
        %v10450 = vadd.f32 %v10289, %v10449
        %v10451 = vpop.f32.mrb[0].mxu0
        %10452 = vmatprep.mubr.bf16.mxu0 %v6693
        %10453 = vmatmul.mubr.bf16.gmra.mrb[0].mxu0 %v6692
        %v10454 = vpop.f32.mrb[0].mxu0
        %v10455 = vadd.f32 %v10294, %v10454
        %v10456 = vpop.f32.mrb[0].mxu0
        %v10457 = vpop.f32.mrb[0].mxu0
        %v10458 = vadd.f32 %v10297, %v10457
        %v10459 = vpop.f32.mrb[0].mxu0
        %10460 = vmatprep.mubr.bf16.mxu0 %v6705
        %10461 = vmatmul.mubr.bf16.gmra.mrb[0].mxu0 %v6704
        %v10462 = vpop.f32.mrb[0].mxu0
        %v10463 = vadd.f32 %v10302, %v10462
        %v10464 = vpop.f32.mrb[0].mxu0
        %v10465 = vpop.f32.mrb[0].mxu0
        %v10466 = vadd.f32 %v10305, %v10465
        %v10467 = vpop.f32.mrb[0].mxu0
        %10468 = vmatprep.mubr.bf16.mxu0 %v6717
        %10469 = vmatmul.mubr.bf16.gmra.mrb[0].mxu0 %v6716
        %v10470 = vpop.f32.mrb[0].mxu0
        %v10471 = vadd.f32 %v10310, %v10470
        %v10472 = vpop.f32.mrb[0].mxu0
        %v10473 = vpop.f32.mrb[0].mxu0
        %v10474 = vadd.f32 %v10313, %v10473
        %v10475 = vpop.f32.mrb[0].mxu0
        %10476 = vmatprep.mubr.bf16.mxu0 %v6729
        %10477 = vmatmul.mubr.bf16.gmra.mrb[0].mxu0 %v6728
        %v10478 = vpop.f32.mrb[0].mxu0
        %v10479 = vadd.f32 %v10318, %v10478
        %v10480 = vpop.f32.mrb[0].mxu0
        %v10481 = vpop.f32.mrb[0].mxu0
        %v10482 = vadd.f32 %v10321, %v10481
        %v10483 = vpop.f32.mrb[0].mxu0
        %10484 = vmatprep.mubr.bf16.mxu0 %v6741
        %10485 = vmatmul.mubr.bf16.gmra.mrb[0].mxu0 %v6740
        %v10486 = vpop.f32.mrb[0].mxu0
        %v10487 = vadd.f32 %v10326, %v10486
        %v10488 = vpop.f32.mrb[0].mxu0
        %v10489 = vpop.f32.mrb[0].mxu0
        %v10490 = vadd.f32 %v10329, %v10489
        %v10491 = vpop.f32.mrb[0].mxu0
        %10492 = vmatprep.mubr.bf16.mxu0 %v6753
        %10493 = vmatmul.mubr.bf16.gmra.mrb[0].mxu0 %v6752
        %v10494 = vpop.f32.mrb[0].mxu0
        %v10495 = vadd.f32 %v10334, %v10494
        %v10496 = vpop.f32.mrb[0].mxu0
        %v10497 = vpop.f32.mrb[0].mxu0
        %v10498 = vadd.f32 %v10337, %v10497
        %v10499 = vpop.f32.mrb[0].mxu0
        %10500 = vmatprep.mubr.bf16.mxu0 %v6765
        %10501 = vmatmul.mubr.bf16.gmra.mrb[0].mxu0 %v6764
        %v10502 = vpop.f32.mrb[0].mxu0
        %v10503 = vadd.f32 %v10342, %v10502
        %v10504 = vpop.f32.mrb[0].mxu0
        %v10505 = vpop.f32.mrb[0].mxu0
        %v10506 = vadd.f32 %v10345, %v10505
        %v10507 = vpop.f32.mrb[0].mxu0
        %10508 = vdwg.mxu0
        %10509 = vmatprep.subr.bf16.mxu0 0
        %10510 = vmatpush1.bf16.msra.mxu0 %v8325
        %10511 = vmatprep.subr.bf16.mxu0 0
        %10512 = vmatpush1.bf16.msra.mxu0 %v8328
        %10513 = vmatprep.subr.bf16.mxu0 0
        %10514 = vmatpush1.bf16.msra.mxu0 %v8331
        %10515 = vmatprep.subr.bf16.mxu0 0
        %10516 = vmatpush1.bf16.msra.mxu0 %v8334
        %10517 = vmatprep.subr.bf16.mxu0 0
        %10518 = vmatpush1.bf16.msra.mxu0 %v8337
        %10519 = vmatprep.subr.bf16.mxu0 0
        %10520 = vmatpush1.bf16.msra.mxu0 %v8340
        %10521 = vmatprep.subr.bf16.mxu0 0
        %10522 = vmatpush1.bf16.msra.mxu0 %v8343
        %10523 = vmatprep.subr.bf16.mxu0 0
        %10524 = vmatpush1.bf16.msra.mxu0 %v8346
        %10525 = vmatprep.subr.bf16.mxu0 0
        %10526 = vmatpush1.bf16.msra.mxu0 %v8349
        %10527 = vmatprep.subr.bf16.mxu0 0
        %10528 = vmatpush1.bf16.msra.mxu0 %v8352
        %10529 = vmatprep.subr.bf16.mxu0 0
        %10530 = vmatpush1.bf16.msra.mxu0 %v8355
        %10531 = vmatprep.subr.bf16.mxu0 0
        %10532 = vmatpush1.bf16.msra.mxu0 %v8358
        %10533 = vmatprep.subr.bf16.mxu0 0
        %10534 = vmatpush1.bf16.msra.mxu0 %v8361
        %10535 = vmatprep.subr.bf16.mxu0 0
        %10536 = vmatpush1.bf16.msra.mxu0 %v8364
        %10537 = vmatprep.subr.bf16.mxu0 0
        %10538 = vmatpush1.bf16.msra.mxu0 %v8367
        %10539 = vmatprep.subr.bf16.mxu0 0
        %10540 = vmatpush1.bf16.msra.mxu0 %v8370
        %10541 = vmatprep.mubr.bf16.mxu0 %v6587
        %10542 = vmatmul.mubr.bf16.gmra.mrb[0].mxu0 %v6586
        %v10543 = vpop.f32.mrb[0].mxu0
        %v10544 = vadd.f32 %v10383, %v10543
        %v10545 = vpop.f32.mrb[0].mxu0
        %v10546 = vpop.f32.mrb[0].mxu0
        %v10547 = vadd.f32 %v10386, %v10546
        %v10548 = vpop.f32.mrb[0].mxu0
        %10549 = vmatprep.mubr.bf16.mxu0 %v6599
        %10550 = vmatmul.mubr.bf16.gmra.mrb[0].mxu0 %v6598
        %v10551 = vpop.f32.mrb[0].mxu0
        %v10552 = vadd.f32 %v10391, %v10551
        %v10553 = vpop.f32.mrb[0].mxu0
        %v10554 = vpop.f32.mrb[0].mxu0
        %v10555 = vadd.f32 %v10394, %v10554
        %v10556 = vpop.f32.mrb[0].mxu0
        %10557 = vmatprep.mubr.bf16.mxu0 %v6611
        %10558 = vmatmul.mubr.bf16.gmra.mrb[0].mxu0 %v6610
        %v10559 = vpop.f32.mrb[0].mxu0
        %v10560 = vadd.f32 %v10399, %v10559
        %v10561 = vpop.f32.mrb[0].mxu0
        %v10562 = vpop.f32.mrb[0].mxu0
        %v10563 = vadd.f32 %v10402, %v10562
        %v10564 = vpop.f32.mrb[0].mxu0
        %10565 = vmatprep.mubr.bf16.mxu0 %v6623
        %10566 = vmatmul.mubr.bf16.gmra.mrb[0].mxu0 %v6622
        %v10567 = vpop.f32.mrb[0].mxu0
        %v10568 = vadd.f32 %v10407, %v10567
        %v10569 = vpop.f32.mrb[0].mxu0
        %v10570 = vpop.f32.mrb[0].mxu0
        %v10571 = vadd.f32 %v10410, %v10570
        %v10572 = vpop.f32.mrb[0].mxu0
        %10573 = vmatprep.mubr.bf16.mxu0 %v6635
        %10574 = vmatmul.mubr.bf16.gmra.mrb[0].mxu0 %v6634
        %v10575 = vpop.f32.mrb[0].mxu0
        %v10576 = vadd.f32 %v10415, %v10575
        %v10577 = vpop.f32.mrb[0].mxu0
        %v10578 = vpop.f32.mrb[0].mxu0
        %v10579 = vadd.f32 %v10418, %v10578
        %v10580 = vpop.f32.mrb[0].mxu0
        %10581 = vmatprep.mubr.bf16.mxu0 %v6647
        %10582 = vmatmul.mubr.bf16.gmra.mrb[0].mxu0 %v6646
        %v10583 = vpop.f32.mrb[0].mxu0
        %v10584 = vadd.f32 %v10423, %v10583
        %v10585 = vpop.f32.mrb[0].mxu0
        %v10586 = vpop.f32.mrb[0].mxu0
        %v10587 = vadd.f32 %v10426, %v10586
        %v10588 = vpop.f32.mrb[0].mxu0
        %10589 = vmatprep.mubr.bf16.mxu0 %v6659
        %10590 = vmatmul.mubr.bf16.gmra.mrb[0].mxu0 %v6658
        %v10591 = vpop.f32.mrb[0].mxu0
        %v10592 = vadd.f32 %v10431, %v10591
        %v10593 = vpop.f32.mrb[0].mxu0
        %v10594 = vpop.f32.mrb[0].mxu0
        %v10595 = vadd.f32 %v10434, %v10594
        %v10596 = vpop.f32.mrb[0].mxu0
        %10597 = vmatprep.mubr.bf16.mxu0 %v6671
        %10598 = vmatmul.mubr.bf16.gmra.mrb[0].mxu0 %v6670
        %v10599 = vpop.f32.mrb[0].mxu0
        %v10600 = vadd.f32 %v10439, %v10599
        %v10601 = vpop.f32.mrb[0].mxu0
        %v10602 = vpop.f32.mrb[0].mxu0
        %v10603 = vadd.f32 %v10442, %v10602
        %v10604 = vpop.f32.mrb[0].mxu0
        %10605 = vmatprep.mubr.bf16.mxu0 %v6683
        %10606 = vmatmul.mubr.bf16.gmra.mrb[0].mxu0 %v6682
        %v10607 = vpop.f32.mrb[0].mxu0
        %v10608 = vadd.f32 %v10447, %v10607
        %v10609 = vpop.f32.mrb[0].mxu0
        %v10610 = vpop.f32.mrb[0].mxu0
        %v10611 = vadd.f32 %v10450, %v10610
        %v10612 = vpop.f32.mrb[0].mxu0
        %10613 = vmatprep.mubr.bf16.mxu0 %v6695
        %10614 = vmatmul.mubr.bf16.gmra.mrb[0].mxu0 %v6694
        %v10615 = vpop.f32.mrb[0].mxu0
        %v10616 = vadd.f32 %v10455, %v10615
        %v10617 = vpop.f32.mrb[0].mxu0
        %v10618 = vpop.f32.mrb[0].mxu0
        %v10619 = vadd.f32 %v10458, %v10618
        %v10620 = vpop.f32.mrb[0].mxu0
        %10621 = vmatprep.mubr.bf16.mxu0 %v6707
        %10622 = vmatmul.mubr.bf16.gmra.mrb[0].mxu0 %v6706
        %v10623 = vpop.f32.mrb[0].mxu0
        %v10624 = vadd.f32 %v10463, %v10623
        %v10625 = vpop.f32.mrb[0].mxu0
        %v10626 = vpop.f32.mrb[0].mxu0
        %v10627 = vadd.f32 %v10466, %v10626
        %v10628 = vpop.f32.mrb[0].mxu0
        %10629 = vmatprep.mubr.bf16.mxu0 %v6719
        %10630 = vmatmul.mubr.bf16.gmra.mrb[0].mxu0 %v6718
        %v10631 = vpop.f32.mrb[0].mxu0
        %v10632 = vadd.f32 %v10471, %v10631
        %v10633 = vpop.f32.mrb[0].mxu0
        %v10634 = vpop.f32.mrb[0].mxu0
        %v10635 = vadd.f32 %v10474, %v10634
        %v10636 = vpop.f32.mrb[0].mxu0
        %10637 = vmatprep.mubr.bf16.mxu0 %v6731
        %10638 = vmatmul.mubr.bf16.gmra.mrb[0].mxu0 %v6730
        %v10639 = vpop.f32.mrb[0].mxu0
        %v10640 = vadd.f32 %v10479, %v10639
        %v10641 = vpop.f32.mrb[0].mxu0
        %v10642 = vpop.f32.mrb[0].mxu0
        %v10643 = vadd.f32 %v10482, %v10642
        %v10644 = vpop.f32.mrb[0].mxu0
        %10645 = vmatprep.mubr.bf16.mxu0 %v6743
        %10646 = vmatmul.mubr.bf16.gmra.mrb[0].mxu0 %v6742
        %v10647 = vpop.f32.mrb[0].mxu0
        %v10648 = vadd.f32 %v10487, %v10647
        %v10649 = vpop.f32.mrb[0].mxu0
        %v10650 = vpop.f32.mrb[0].mxu0
        %v10651 = vadd.f32 %v10490, %v10650
        %v10652 = vpop.f32.mrb[0].mxu0
        %10653 = vmatprep.mubr.bf16.mxu0 %v6755
        %10654 = vmatmul.mubr.bf16.gmra.mrb[0].mxu0 %v6754
        %v10655 = vpop.f32.mrb[0].mxu0
        %v10656 = vadd.f32 %v10495, %v10655
        %v10657 = vpop.f32.mrb[0].mxu0
        %v10658 = vpop.f32.mrb[0].mxu0
        %v10659 = vadd.f32 %v10498, %v10658
        %v10660 = vpop.f32.mrb[0].mxu0
        %10661 = vmatprep.mubr.bf16.mxu0 %v6767
        %10662 = vmatmul.mubr.bf16.gmra.mrb[0].mxu0 %v6766
        %v10663 = vpop.f32.mrb[0].mxu0
        %v10664 = vadd.f32 %v10503, %v10663
        %v10665 = vpop.f32.mrb[0].mxu0
        %v10666 = vpop.f32.mrb[0].mxu0
        %v10667 = vadd.f32 %v10506, %v10666
        %v10668 = vpop.f32.mrb[0].mxu0
        %10669 = vdwg.mxu0
        %10670 = vmatprep.subr.bf16.mxu0 0
        %10671 = vmatpush1.bf16.msra.mxu0 %v8373
        %10672 = vmatprep.subr.bf16.mxu0 0
        %10673 = vmatpush1.bf16.msra.mxu0 %v8376
        %10674 = vmatprep.subr.bf16.mxu0 0
        %10675 = vmatpush1.bf16.msra.mxu0 %v8379
        %10676 = vmatprep.subr.bf16.mxu0 0
        %10677 = vmatpush1.bf16.msra.mxu0 %v8382
        %10678 = vmatprep.subr.bf16.mxu0 0
        %10679 = vmatpush1.bf16.msra.mxu0 %v8385
        %10680 = vmatprep.subr.bf16.mxu0 0
        %10681 = vmatpush1.bf16.msra.mxu0 %v8388
        %10682 = vmatprep.subr.bf16.mxu0 0
        %10683 = vmatpush1.bf16.msra.mxu0 %v8391
        %10684 = vmatprep.subr.bf16.mxu0 0
        %10685 = vmatpush1.bf16.msra.mxu0 %v8394
        %10686 = vmatprep.subr.bf16.mxu0 0
        %10687 = vmatpush1.bf16.msra.mxu0 %v8397
        %10688 = vmatprep.subr.bf16.mxu0 0
        %10689 = vmatpush1.bf16.msra.mxu0 %v8400
        %10690 = vmatprep.subr.bf16.mxu0 0
        %10691 = vmatpush1.bf16.msra.mxu0 %v8403
        %10692 = vmatprep.subr.bf16.mxu0 0
        %10693 = vmatpush1.bf16.msra.mxu0 %v8406
        %10694 = vmatprep.subr.bf16.mxu0 0
        %10695 = vmatpush1.bf16.msra.mxu0 %v8409
        %10696 = vmatprep.subr.bf16.mxu0 0
        %10697 = vmatpush1.bf16.msra.mxu0 %v8412
        %10698 = vmatprep.subr.bf16.mxu0 0
        %10699 = vmatpush1.bf16.msra.mxu0 %v8415
        %10700 = vmatprep.subr.bf16.mxu0 0
        %10701 = vmatpush1.bf16.msra.mxu0 %v8418
        %10702 = vmatprep.mubr.bf16.mxu0 %v6589
        %10703 = vmatmul.mubr.bf16.gmra.mrb[0].mxu0 %v6588
        %v10704 = vpop.f32.mrb[0].mxu0
        %v10705 = vadd.f32 %v10544, %v10704
        %v10706 = vpop.f32.mrb[0].mxu0
        %v10707 = vpop.f32.mrb[0].mxu0
        %v10708 = vadd.f32 %v10547, %v10707
        %v10709 = vpop.f32.mrb[0].mxu0
        %10710 = vmatprep.mubr.bf16.mxu0 %v6601
        %10711 = vmatmul.mubr.bf16.gmra.mrb[0].mxu0 %v6600
        %v10712 = vpop.f32.mrb[0].mxu0
        %v10713 = vadd.f32 %v10552, %v10712
        %v10714 = vpop.f32.mrb[0].mxu0
        %v10715 = vpop.f32.mrb[0].mxu0
        %v10716 = vadd.f32 %v10555, %v10715
        %v10717 = vpop.f32.mrb[0].mxu0
        %10718 = vmatprep.mubr.bf16.mxu0 %v6613
        %10719 = vmatmul.mubr.bf16.gmra.mrb[0].mxu0 %v6612
        %v10720 = vpop.f32.mrb[0].mxu0
        %v10721 = vadd.f32 %v10560, %v10720
        %v10722 = vpop.f32.mrb[0].mxu0
        %v10723 = vpop.f32.mrb[0].mxu0
        %v10724 = vadd.f32 %v10563, %v10723
        %v10725 = vpop.f32.mrb[0].mxu0
        %10726 = vmatprep.mubr.bf16.mxu0 %v6625
        %10727 = vmatmul.mubr.bf16.gmra.mrb[0].mxu0 %v6624
        %v10728 = vpop.f32.mrb[0].mxu0
        %v10729 = vadd.f32 %v10568, %v10728
        %v10730 = vpop.f32.mrb[0].mxu0
        %v10731 = vpop.f32.mrb[0].mxu0
        %v10732 = vadd.f32 %v10571, %v10731
        %v10733 = vpop.f32.mrb[0].mxu0
        %10734 = vmatprep.mubr.bf16.mxu0 %v6637
        %10735 = vmatmul.mubr.bf16.gmra.mrb[0].mxu0 %v6636
        %v10736 = vpop.f32.mrb[0].mxu0
        %v10737 = vadd.f32 %v10576, %v10736
        %v10738 = vpop.f32.mrb[0].mxu0
        %v10739 = vpop.f32.mrb[0].mxu0
        %v10740 = vadd.f32 %v10579, %v10739
        %v10741 = vpop.f32.mrb[0].mxu0
        %10742 = vmatprep.mubr.bf16.mxu0 %v6649
        %10743 = vmatmul.mubr.bf16.gmra.mrb[0].mxu0 %v6648
        %v10744 = vpop.f32.mrb[0].mxu0
        %v10745 = vadd.f32 %v10584, %v10744
        %v10746 = vpop.f32.mrb[0].mxu0
        %v10747 = vpop.f32.mrb[0].mxu0
        %v10748 = vadd.f32 %v10587, %v10747
        %v10749 = vpop.f32.mrb[0].mxu0
        %10750 = vmatprep.mubr.bf16.mxu0 %v6661
        %10751 = vmatmul.mubr.bf16.gmra.mrb[0].mxu0 %v6660
        %v10752 = vpop.f32.mrb[0].mxu0
        %v10753 = vadd.f32 %v10592, %v10752
        %v10754 = vpop.f32.mrb[0].mxu0
        %v10755 = vpop.f32.mrb[0].mxu0
        %v10756 = vadd.f32 %v10595, %v10755
        %v10757 = vpop.f32.mrb[0].mxu0
        %10758 = vmatprep.mubr.bf16.mxu0 %v6673
        %10759 = vmatmul.mubr.bf16.gmra.mrb[0].mxu0 %v6672
        %v10760 = vpop.f32.mrb[0].mxu0
        %v10761 = vadd.f32 %v10600, %v10760
        %v10762 = vpop.f32.mrb[0].mxu0
        %v10763 = vpop.f32.mrb[0].mxu0
        %v10764 = vadd.f32 %v10603, %v10763
        %v10765 = vpop.f32.mrb[0].mxu0
        %10766 = vmatprep.mubr.bf16.mxu0 %v6685
        %10767 = vmatmul.mubr.bf16.gmra.mrb[0].mxu0 %v6684
        %v10768 = vpop.f32.mrb[0].mxu0
        %v10769 = vadd.f32 %v10608, %v10768
        %v10770 = vpop.f32.mrb[0].mxu0
        %v10771 = vpop.f32.mrb[0].mxu0
        %v10772 = vadd.f32 %v10611, %v10771
        %v10773 = vpop.f32.mrb[0].mxu0
        %10774 = vmatprep.mubr.bf16.mxu0 %v6697
        %10775 = vmatmul.mubr.bf16.gmra.mrb[0].mxu0 %v6696
        %v10776 = vpop.f32.mrb[0].mxu0
        %v10777 = vadd.f32 %v10616, %v10776
        %v10778 = vpop.f32.mrb[0].mxu0
        %v10779 = vpop.f32.mrb[0].mxu0
        %v10780 = vadd.f32 %v10619, %v10779
        %v10781 = vpop.f32.mrb[0].mxu0
        %10782 = vmatprep.mubr.bf16.mxu0 %v6709
        %10783 = vmatmul.mubr.bf16.gmra.mrb[0].mxu0 %v6708
        %v10784 = vpop.f32.mrb[0].mxu0
        %v10785 = vadd.f32 %v10624, %v10784
        %v10786 = vpop.f32.mrb[0].mxu0
        %v10787 = vpop.f32.mrb[0].mxu0
        %v10788 = vadd.f32 %v10627, %v10787
        %v10789 = vpop.f32.mrb[0].mxu0
        %10790 = vmatprep.mubr.bf16.mxu0 %v6721
        %10791 = vmatmul.mubr.bf16.gmra.mrb[0].mxu0 %v6720
        %v10792 = vpop.f32.mrb[0].mxu0
        %v10793 = vadd.f32 %v10632, %v10792
        %v10794 = vpop.f32.mrb[0].mxu0
        %v10795 = vpop.f32.mrb[0].mxu0
        %v10796 = vadd.f32 %v10635, %v10795
        %v10797 = vpop.f32.mrb[0].mxu0
        %10798 = vmatprep.mubr.bf16.mxu0 %v6733
        %10799 = vmatmul.mubr.bf16.gmra.mrb[0].mxu0 %v6732
        %v10800 = vpop.f32.mrb[0].mxu0
        %v10801 = vadd.f32 %v10640, %v10800
        %v10802 = vpop.f32.mrb[0].mxu0
        %v10803 = vpop.f32.mrb[0].mxu0
        %v10804 = vadd.f32 %v10643, %v10803
        %v10805 = vpop.f32.mrb[0].mxu0
        %10806 = vmatprep.mubr.bf16.mxu0 %v6745
        %10807 = vmatmul.mubr.bf16.gmra.mrb[0].mxu0 %v6744
        %v10808 = vpop.f32.mrb[0].mxu0
        %v10809 = vadd.f32 %v10648, %v10808
        %v10810 = vpop.f32.mrb[0].mxu0
        %v10811 = vpop.f32.mrb[0].mxu0
        %v10812 = vadd.f32 %v10651, %v10811
        %v10813 = vpop.f32.mrb[0].mxu0
        %10814 = vmatprep.mubr.bf16.mxu0 %v6757
        %10815 = vmatmul.mubr.bf16.gmra.mrb[0].mxu0 %v6756
        %v10816 = vpop.f32.mrb[0].mxu0
        %v10817 = vadd.f32 %v10656, %v10816
        %v10818 = vpop.f32.mrb[0].mxu0
        %v10819 = vpop.f32.mrb[0].mxu0
        %v10820 = vadd.f32 %v10659, %v10819
        %v10821 = vpop.f32.mrb[0].mxu0
        %10822 = vmatprep.mubr.bf16.mxu0 %v6769
        %10823 = vmatmul.mubr.bf16.gmra.mrb[0].mxu0 %v6768
        %v10824 = vpop.f32.mrb[0].mxu0
        %v10825 = vadd.f32 %v10664, %v10824
        %v10826 = vpop.f32.mrb[0].mxu0
        %v10827 = vpop.f32.mrb[0].mxu0
        %v10828 = vadd.f32 %v10667, %v10827
        %v10829 = vpop.f32.mrb[0].mxu0
        %10830 = vdwg.mxu0
        %v10831 = vpack.c.bf16 %v9711, %v9707
        %v10832 = vpack.c.bf16 %v9713, %v9709
        %v10833 = vpack.c.bf16 %v10708, %v10705
        %v10834 = vpack.c.bf16 %v9721, %v9717
        %v10835 = vpack.c.bf16 %v9723, %v9719
        %v10836 = vpack.c.bf16 %v10716, %v10713
        %v10837 = vpack.c.bf16 %v9731, %v9727
        %v10838 = vpack.c.bf16 %v9733, %v9729
        %v10839 = vpack.c.bf16 %v10724, %v10721
        %v10840 = vpack.c.bf16 %v9741, %v9737
        %v10841 = vpack.c.bf16 %v9743, %v9739
        %v10842 = vpack.c.bf16 %v10732, %v10729
        %v10843 = vpack.c.bf16 %v9751, %v9747
        %v10844 = vpack.c.bf16 %v9753, %v9749
        %v10845 = vpack.c.bf16 %v10740, %v10737
        %v10846 = vpack.c.bf16 %v9761, %v9757
        %v10847 = vpack.c.bf16 %v9763, %v9759
        %v10848 = vpack.c.bf16 %v10748, %v10745
        %v10849 = vpack.c.bf16 %v9771, %v9767
        %v10850 = vpack.c.bf16 %v9773, %v9769
        %v10851 = vpack.c.bf16 %v10756, %v10753
        %v10852 = vpack.c.bf16 %v9781, %v9777
        %v10853 = vpack.c.bf16 %v9783, %v9779
        %v10854 = vpack.c.bf16 %v10764, %v10761
        %v10855 = vpack.c.bf16 %v9791, %v9787
        %v10856 = vpack.c.bf16 %v9793, %v9789
        %v10857 = vpack.c.bf16 %v10772, %v10769
        %v10858 = vpack.c.bf16 %v9801, %v9797
        %v10859 = vpack.c.bf16 %v9803, %v9799
        %v10860 = vpack.c.bf16 %v10780, %v10777
        %v10861 = vpack.c.bf16 %v9811, %v9807
        %v10862 = vpack.c.bf16 %v9813, %v9809
        %v10863 = vpack.c.bf16 %v10788, %v10785
        %v10864 = vpack.c.bf16 %v9821, %v9817
        %v10865 = vpack.c.bf16 %v9823, %v9819
        %v10866 = vpack.c.bf16 %v10796, %v10793
        %v10867 = vpack.c.bf16 %v9831, %v9827
        %v10868 = vpack.c.bf16 %v9833, %v9829
        %v10869 = vpack.c.bf16 %v10804, %v10801
        %v10870 = vpack.c.bf16 %v9841, %v9837
        %v10871 = vpack.c.bf16 %v9843, %v9839
        %v10872 = vpack.c.bf16 %v10812, %v10809
        %v10873 = vpack.c.bf16 %v9851, %v9847
        %v10874 = vpack.c.bf16 %v9853, %v9849
        %v10875 = vpack.c.bf16 %v10820, %v10817
        %v10876 = vpack.c.bf16 %v9861, %v9857
        %v10877 = vpack.c.bf16 %v9863, %v9859
        %v10878 = vpack.c.bf16 %v10828, %v10825
        %v10927 = vunpack.c.l.b16 %v10831
        %v10928 = vunpack.c.l.b16 %v10832
        %v10929 = vunpack.c.l.b16 %v10833
        %v10930 = vunpack.c.h.b16 %v10831
        %v10931 = vunpack.c.h.b16 %v10832
        %v10932 = vunpack.c.h.b16 %v10833
        %v10933 = vunpack.c.l.b16 %v10834
        %v10934 = vunpack.c.l.b16 %v10835
        %v10935 = vunpack.c.l.b16 %v10836
        %v10936 = vunpack.c.h.b16 %v10834
        %v10937 = vunpack.c.h.b16 %v10835
        %v10938 = vunpack.c.h.b16 %v10836
        %v10939 = vunpack.c.l.b16 %v10837
        %v10940 = vunpack.c.l.b16 %v10838
        %v10941 = vunpack.c.l.b16 %v10839
        %v10942 = vunpack.c.h.b16 %v10837
        %v10943 = vunpack.c.h.b16 %v10838
        %v10944 = vunpack.c.h.b16 %v10839
        %v10945 = vunpack.c.l.b16 %v10840
        %v10946 = vunpack.c.l.b16 %v10841
        %v10947 = vunpack.c.l.b16 %v10842
        %v10948 = vunpack.c.h.b16 %v10840
        %v10949 = vunpack.c.h.b16 %v10841
        %v10950 = vunpack.c.h.b16 %v10842
        %v10951 = vunpack.c.l.b16 %v10843
        %v10952 = vunpack.c.l.b16 %v10844
        %v10953 = vunpack.c.l.b16 %v10845
        %v10954 = vunpack.c.h.b16 %v10843
        %v10955 = vunpack.c.h.b16 %v10844
        %v10956 = vunpack.c.h.b16 %v10845
        %v10957 = vunpack.c.l.b16 %v10846
        %v10958 = vunpack.c.l.b16 %v10847
        %v10959 = vunpack.c.l.b16 %v10848
        %v10960 = vunpack.c.h.b16 %v10846
        %v10961 = vunpack.c.h.b16 %v10847
        %v10962 = vunpack.c.h.b16 %v10848
        %v10963 = vunpack.c.l.b16 %v10849
        %v10964 = vunpack.c.l.b16 %v10850
        %v10965 = vunpack.c.l.b16 %v10851
        %v10966 = vunpack.c.h.b16 %v10849
        %v10967 = vunpack.c.h.b16 %v10850
        %v10968 = vunpack.c.h.b16 %v10851
        %v10969 = vunpack.c.l.b16 %v10852
        %v10970 = vunpack.c.l.b16 %v10853
        %v10971 = vunpack.c.l.b16 %v10854
        %v10972 = vunpack.c.h.b16 %v10852
        %v10973 = vunpack.c.h.b16 %v10853
        %v10974 = vunpack.c.h.b16 %v10854
        %v10975 = vunpack.c.l.b16 %v10855
        %v10976 = vunpack.c.l.b16 %v10856
        %v10977 = vunpack.c.l.b16 %v10857
        %v10978 = vunpack.c.h.b16 %v10855
        %v10979 = vunpack.c.h.b16 %v10856
        %v10980 = vunpack.c.h.b16 %v10857
        %v10981 = vunpack.c.l.b16 %v10858
        %v10982 = vunpack.c.l.b16 %v10859
        %v10983 = vunpack.c.l.b16 %v10860
        %v10984 = vunpack.c.h.b16 %v10858
        %v10985 = vunpack.c.h.b16 %v10859
        %v10986 = vunpack.c.h.b16 %v10860
        %v10987 = vunpack.c.l.b16 %v10861
        %v10988 = vunpack.c.l.b16 %v10862
        %v10989 = vunpack.c.l.b16 %v10863
        %v10990 = vunpack.c.h.b16 %v10861
        %v10991 = vunpack.c.h.b16 %v10862
        %v10992 = vunpack.c.h.b16 %v10863
        %v10993 = vunpack.c.l.b16 %v10864
        %v10994 = vunpack.c.l.b16 %v10865
        %v10995 = vunpack.c.l.b16 %v10866
        %v10996 = vunpack.c.h.b16 %v10864
        %v10997 = vunpack.c.h.b16 %v10865
        %v10998 = vunpack.c.h.b16 %v10866
        %v10999 = vunpack.c.l.b16 %v10867
        %v11000 = vunpack.c.l.b16 %v10868
        %v11001 = vunpack.c.l.b16 %v10869
        %v11002 = vunpack.c.h.b16 %v10867
        %v11003 = vunpack.c.h.b16 %v10868
        %v11004 = vunpack.c.h.b16 %v10869
        %v11005 = vunpack.c.l.b16 %v10870
        %v11006 = vunpack.c.l.b16 %v10871
        %v11007 = vunpack.c.l.b16 %v10872
        %v11008 = vunpack.c.h.b16 %v10870
        %v11009 = vunpack.c.h.b16 %v10871
        %v11010 = vunpack.c.h.b16 %v10872
        %v11011 = vunpack.c.l.b16 %v10873
        %v11012 = vunpack.c.l.b16 %v10874
        %v11013 = vunpack.c.l.b16 %v10875
        %v11014 = vunpack.c.h.b16 %v10873
        %v11015 = vunpack.c.h.b16 %v10874
        %v11016 = vunpack.c.h.b16 %v10875
        %v11017 = vunpack.c.l.b16 %v10876
        %v11018 = vunpack.c.l.b16 %v10877
        %v11019 = vunpack.c.l.b16 %v10878
        %v11020 = vunpack.c.h.b16 %v10876
        %v11021 = vunpack.c.h.b16 %v10877
        %v11022 = vunpack.c.h.b16 %v10878
        %v11023 = vpack.c.b16 %v10928, %v10927
        %v11024 = vpack.c.b16 %v10929, %v10929
        %v11025 = vpack.c.b16 %v10931, %v10930
        %v11026 = vpack.c.b16 %v10932, %v10932
        %v11027 = vpack.c.b16 %v10934, %v10933
        %v11028 = vpack.c.b16 %v10935, %v10935
        %v11029 = vpack.c.b16 %v10937, %v10936
        %v11030 = vpack.c.b16 %v10938, %v10938
        %v11031 = vpack.c.b16 %v10940, %v10939
        %v11032 = vpack.c.b16 %v10941, %v10941
        %v11033 = vpack.c.b16 %v10943, %v10942
        %v11034 = vpack.c.b16 %v10944, %v10944
        %v11035 = vpack.c.b16 %v10946, %v10945
        %v11036 = vpack.c.b16 %v10947, %v10947
        %v11037 = vpack.c.b16 %v10949, %v10948
        %v11038 = vpack.c.b16 %v10950, %v10950
        %v11039 = vpack.c.b16 %v10952, %v10951
        %v11040 = vpack.c.b16 %v10953, %v10953
        %v11041 = vpack.c.b16 %v10955, %v10954
        %v11042 = vpack.c.b16 %v10956, %v10956
        %v11043 = vpack.c.b16 %v10958, %v10957
        %v11044 = vpack.c.b16 %v10959, %v10959
        %v11045 = vpack.c.b16 %v10961, %v10960
        %v11046 = vpack.c.b16 %v10962, %v10962
        %v11047 = vpack.c.b16 %v10964, %v10963
        %v11048 = vpack.c.b16 %v10965, %v10965
        %v11049 = vpack.c.b16 %v10967, %v10966
        %v11050 = vpack.c.b16 %v10968, %v10968
        %v11051 = vpack.c.b16 %v10970, %v10969
        %v11052 = vpack.c.b16 %v10971, %v10971
        %v11053 = vpack.c.b16 %v10973, %v10972
        %v11054 = vpack.c.b16 %v10974, %v10974
        %v11055 = vpack.c.b16 %v10976, %v10975
        %v11056 = vpack.c.b16 %v10977, %v10977
        %v11057 = vpack.c.b16 %v10979, %v10978
        %v11058 = vpack.c.b16 %v10980, %v10980
        %v11059 = vpack.c.b16 %v10982, %v10981
        %v11060 = vpack.c.b16 %v10983, %v10983
        %v11061 = vpack.c.b16 %v10985, %v10984
        %v11062 = vpack.c.b16 %v10986, %v10986
        %v11063 = vpack.c.b16 %v10988, %v10987
        %v11064 = vpack.c.b16 %v10989, %v10989
        %v11065 = vpack.c.b16 %v10991, %v10990
        %v11066 = vpack.c.b16 %v10992, %v10992
        %v11067 = vpack.c.b16 %v10994, %v10993
        %v11068 = vpack.c.b16 %v10995, %v10995
        %v11069 = vpack.c.b16 %v10997, %v10996
        %v11070 = vpack.c.b16 %v10998, %v10998
        %v11071 = vpack.c.b16 %v11000, %v10999
        %v11072 = vpack.c.b16 %v11001, %v11001
        %v11073 = vpack.c.b16 %v11003, %v11002
        %v11074 = vpack.c.b16 %v11004, %v11004
        %v11075 = vpack.c.b16 %v11006, %v11005
        %v11076 = vpack.c.b16 %v11007, %v11007
        %v11077 = vpack.c.b16 %v11009, %v11008
        %v11078 = vpack.c.b16 %v11010, %v11010
        %v11079 = vpack.c.b16 %v11012, %v11011
        %v11080 = vpack.c.b16 %v11013, %v11013
        %v11081 = vpack.c.b16 %v11015, %v11014
        %v11082 = vpack.c.b16 %v11016, %v11016
        %v11083 = vpack.c.b16 %v11018, %v11017
        %v11084 = vpack.c.b16 %v11019, %v11019
        %v11085 = vpack.c.b16 %v11021, %v11020
        %v11086 = vpack.c.b16 %v11022, %v11022
        %11151 = vst [vmem:[%s220] sm:$0xff] %v11023
        %11152 = vst [vmem:[%s220 + $0x8] sm:$0xf] %v11024
        %11153 = vst [vmem:[%s220 + $0xc] sm:$0xff] %v11025
        %11154 = vst [vmem:[%s220 + $0x14] sm:$0xf] %v11026
        %11155 = vst [vmem:[%s220 + $0x18] sm:$0xff] %v11027
        %11156 = vst [vmem:[%s220 + $0x20] sm:$0xf] %v11028
        %11157 = vst [vmem:[%s220 + $0x24] sm:$0xff] %v11029
        %11158 = vst [vmem:[%s220 + $0x2c] sm:$0xf] %v11030
        %11159 = vst [vmem:[%s220 + $0x30] sm:$0xff] %v11031
        %11160 = vst [vmem:[%s220 + $0x38] sm:$0xf] %v11032
        %11161 = vst [vmem:[%s220 + $0x3c] sm:$0xff] %v11033
        %11162 = vst [vmem:[%s220 + $0x44] sm:$0xf] %v11034
        %11163 = vst [vmem:[%s220 + $0x48] sm:$0xff] %v11035
        %11164 = vst [vmem:[%s220 + $0x50] sm:$0xf] %v11036
        %11165 = vst [vmem:[%s220 + $0x54] sm:$0xff] %v11037
        %11166 = vst [vmem:[%s220 + $0x5c] sm:$0xf] %v11038
        %11167 = vst [vmem:[%s220 + $0x60] sm:$0xff] %v11039
        %11168 = vst [vmem:[%s220 + $0x68] sm:$0xf] %v11040
        %11169 = vst [vmem:[%s220 + $0x6c] sm:$0xff] %v11041
        %11170 = vst [vmem:[%s220 + $0x74] sm:$0xf] %v11042
        %11171 = vst [vmem:[%s220 + $0x78] sm:$0xff] %v11043
        %11172 = vst [vmem:[%s220 + $0x80] sm:$0xf] %v11044
        %11173 = vst [vmem:[%s220 + $0x84] sm:$0xff] %v11045
        %11174 = vst [vmem:[%s220 + $0x8c] sm:$0xf] %v11046
        %11175 = vst [vmem:[%s220 + $0x90] sm:$0xff] %v11047
        %11176 = vst [vmem:[%s220 + $0x98] sm:$0xf] %v11048
        %11177 = vst [vmem:[%s220 + $0x9c] sm:$0xff] %v11049
        %11178 = vst [vmem:[%s220 + $0xa4] sm:$0xf] %v11050
        %11179 = vst [vmem:[%s220 + $0xa8] sm:$0xff] %v11051
        %11180 = vst [vmem:[%s220 + $0xb0] sm:$0xf] %v11052
        %11181 = vst [vmem:[%s220 + $0xb4] sm:$0xff] %v11053
        %11182 = vst [vmem:[%s220 + $0xbc] sm:$0xf] %v11054
        %11183 = vst [vmem:[%s220 + $0xc0] sm:$0xff] %v11055
        %11184 = vst [vmem:[%s220 + $0xc8] sm:$0xf] %v11056
        %11185 = vst [vmem:[%s220 + $0xcc] sm:$0xff] %v11057
        %11186 = vst [vmem:[%s220 + $0xd4] sm:$0xf] %v11058
        %11187 = vst [vmem:[%s220 + $0xd8] sm:$0xff] %v11059
        %11188 = vst [vmem:[%s220 + $0xe0] sm:$0xf] %v11060
        %11189 = vst [vmem:[%s220 + $0xe4] sm:$0xff] %v11061
        %11190 = vst [vmem:[%s220 + $0xec] sm:$0xf] %v11062
        %11191 = vst [vmem:[%s220 + $0xf0] sm:$0xff] %v11063
        %11192 = vst [vmem:[%s220 + $0xf8] sm:$0xf] %v11064
        %11193 = vst [vmem:[%s220 + $0xfc] sm:$0xff] %v11065
        %11194 = vst [vmem:[%s220 + $0x104] sm:$0xf] %v11066
        %11195 = vst [vmem:[%s220 + $0x108] sm:$0xff] %v11067
        %11196 = vst [vmem:[%s220 + $0x110] sm:$0xf] %v11068
        %11197 = vst [vmem:[%s220 + $0x114] sm:$0xff] %v11069
        %11198 = vst [vmem:[%s220 + $0x11c] sm:$0xf] %v11070
        %11199 = vst [vmem:[%s220 + $0x120] sm:$0xff] %v11071
        %11200 = vst [vmem:[%s220 + $0x128] sm:$0xf] %v11072
        %11201 = vst [vmem:[%s220 + $0x12c] sm:$0xff] %v11073
        %11202 = vst [vmem:[%s220 + $0x134] sm:$0xf] %v11074
        %11203 = vst [vmem:[%s220 + $0x138] sm:$0xff] %v11075
        %11204 = vst [vmem:[%s220 + $0x140] sm:$0xf] %v11076
        %11205 = vst [vmem:[%s220 + $0x144] sm:$0xff] %v11077
        %11206 = vst [vmem:[%s220 + $0x14c] sm:$0xf] %v11078
        %11207 = vst [vmem:[%s220 + $0x150] sm:$0xff] %v11079
        %11208 = vst [vmem:[%s220 + $0x158] sm:$0xf] %v11080
        %11209 = vst [vmem:[%s220 + $0x15c] sm:$0xff] %v11081
        %11210 = vst [vmem:[%s220 + $0x164] sm:$0xf] %v11082
        %11211 = vst [vmem:[%s220 + $0x168] sm:$0xff] %v11083
        %11212 = vst [vmem:[%s220 + $0x170] sm:$0xf] %v11084
        %11213 = vst [vmem:[%s220 + $0x174] sm:$0xff] %v11085
        %11214 = vst [vmem:[%s220 + $0x17c] sm:$0xf] %v11086
        %s11215 = sand.u32 %s137, 1
        %s11216 = scalar_lea.sflag [#allocation3], %s11215
        %s11217 = sand.u32 %s137, 1
        %s11218 = smul.addr %s11217, 384
        %s11219 = scalar_lea.vmem [#allocation2], %s11218
        // Predicated region
        $region41: #{ffnn_forward.1} parent=39 // pred_check
          %p11220 = pneg %p147
        $region42: #{ffnn_forward.1} parent=39 // pred_check_branch
          %11222 = sbr.rel (%p11220) target = $region44
        $region43: #{ffnn_forward.1} parent=39 // pred_region
          %s11223 = smul.u32 32, %s19
          %s11225 = ssub.s32 6144, 6144
          %11226 = vsyncadd %s11216, %s11225
          %s11227 = smul.addr %s11223, 3
          %s11228 = smul.addr %s11227, 64
          %s11229 = scalar_lea.hbm %s5, %s11228
          %s11230 = sshll.u32 %s11219, 4
          %s11231 = int_to_ptr.vmem [resolvable:$true] %s11230
          %11236 = dma.vmem_to_hbm [thread:$0]  %s11231, 6144, %s11229, %s11216, 192, 192, 12
        $region44: #{ffnn_forward.1} parent=39 // pred_fallthru
          _
      $region40: #{ffnn_forward.1} parent=5 // pred_fallthru
        _
      %p11237 = scmp.le.s32.totalorder 2, %s14
      // Predicated region
      $region45: #{ffnn_forward.1} parent=5 // pred_check
        %p11238 = pneg %p11237
      $region46: #{ffnn_forward.1} parent=5 // pred_check_branch
        %11240 = sbr.rel (%p11238) target = $region48
      $region47: #{ffnn_forward.1} parent=5 // pred_region
        %s11241 = ssub.s32 %s14, 2
        // Predicated region
        $region49: #{ffnn_forward.1} parent=47 // pred_check
          %p11242 = pneg %p153
        $region50: #{ffnn_forward.1} parent=47 // pred_check_branch
          %11244 = sbr.rel (%p11242) target = $region52
        $region51: #{ffnn_forward.1} parent=47 // pred_region
          %s11245 = sand.u32 %s138, 1
          %s11246 = scalar_lea.sflag [#allocation3], %s11245
          %s11247 = sand.u32 %s138, 1
          %s11248 = smul.addr %s11247, 384
          %s11249 = scalar_lea.vmem [#allocation2], %s11248
          %11250 = dma.done %s11246, 6144
        $region52: #{ffnn_forward.1} parent=47 // pred_fallthru
          _
      $region48: #{ffnn_forward.1} parent=5 // pred_fallthru
        _
    $region6: #{ffnn_forward.1} parent=1 // loop_footer
      %s18 = sadd.s32 1, %s14
    $region7: #{ffnn_forward.1} parent=1 // loop_footer_branch
      %13 = sbr.rel target = $region3
    $region8: #{ffnn_forward.1} parent=1 // loop_exit
      _
    %11251 = vsyncpa [#allocation3], 1
    %s11252 = scalar_lea.sflag [#allocation3], 1
    %11253 = vsyncpa %s11252, 1

</llo_original>
